<compile_context>
chip_gen: v7x
topology: tpu7x:2x2x1
jax: 0.10.0
libtpu: 0.0.40
codegen_flags: <defaults>
</compile_context>

<pallas_src>
import jax
import jax.numpy as jnp
from jax.experimental import pallas as pl
from jax.experimental.pallas import tpu as pltpu

EPS = 1e-5
LANE = 128


def _round_up(x, m):
    return (x + m - 1) // m * m


def _unet_block_kernel(x_ref, w1_ref, g1_ref, be1_ref, w2_ref, g2_ref, be2_ref,
                       pool_ref, feat_ref, pad1_ref, pad2_ref):
    N, H, W, Cin = x_ref.shape
    Hp, Wp = H + 2, W + 2
    C1p = w1_ref.shape[-1]
    C2p = w2_ref.shape[-1]
    NHW = N * H * W
    H2, W2 = H // 2, W // 2

    def write_padded(pad_ref, interior):
        # Zero only the 1-pixel border (not the whole buffer), then the interior.
        c = pad_ref.shape[-1]
        pad_ref[:, 0:1, :, :] = jnp.zeros((N, 1, Wp, c), jnp.float32)
        pad_ref[:, Hp - 1:Hp, :, :] = jnp.zeros((N, 1, Wp, c), jnp.float32)
        pad_ref[:, :, 0:1, :] = jnp.zeros((N, Hp, 1, c), jnp.float32)
        pad_ref[:, :, Wp - 1:Wp, :] = jnp.zeros((N, Hp, 1, c), jnp.float32)
        pad_ref[:, 1:H + 1, 1:W + 1, :] = interior

    def conv3x3_bn_relu(pad_ref, w_ref, g_ref, be_ref):
        cin = pad_ref.shape[-1]
        # im2col: gather the 9 shifted taps once -> single (NHW, 9*cin) x
        # (9*cin, Cout_p) MXU matmul, bf16 operands with f32 accumulation.
        taps = [pad_ref[:, dh:dh + H, dw:dw + W, :].astype(jnp.bfloat16)
                for dh in range(3) for dw in range(3)]
        patches = jnp.concatenate(taps, axis=-1).reshape(NHW, 9 * cin)
        acc = jnp.dot(patches, w_ref[...], preferred_element_type=jnp.float32)
        # BatchNorm2d (train-mode batch stats) folded into one FMA.  The conv
        # bias is omitted: it is cancelled exactly by the mean subtraction.
        mean = jnp.mean(acc, axis=0, keepdims=True)
        var = jnp.mean(jnp.square(acc - mean), axis=0, keepdims=True)
        scale = g_ref[...] * jax.lax.rsqrt(var + EPS)
        shift = be_ref[...] - mean * scale
        return jnp.maximum(acc * scale + shift, 0.0)          # ReLU, (NHW, Cout_p) f32

    # conv1 -> bn1 -> relu1  (padding=1 handled in-kernel)
    write_padded(pad1_ref, x_ref[...])
    h1 = conv3x3_bn_relu(pad1_ref, w1_ref, g1_ref, be1_ref)

    # conv2 -> bn2 -> relu2
    write_padded(pad2_ref, h1.reshape(N, H, W, C1p))
    h2 = conv3x3_bn_relu(pad2_ref, w2_ref, g2_ref, be2_ref)
    feat_ref[...] = h2.reshape(N, H, W, C2p)

    # MaxPool2d(kernel_size=2, stride=2): stride-2 reads along W from the
    # feature output just written; the H pairing is done in registers via a
    # layout-trivial split of the (major) H axis.  No row-max scratch.
    wmax = jnp.maximum(feat_ref[:, :, pl.ds(0, W2, 2), :],
                       feat_ref[:, :, pl.ds(1, W2, 2), :])     # (N, H, W2, C2p)
    wmax = wmax.reshape(N, H2, 2, W2, C2p)
    pool_ref[...] = jnp.maximum(wmax[:, :, 0], wmax[:, :, 1])  # (N, H2, W2, C2p)


def unet_block_forward(x_nhwc, params, is_encoder=True):
    """x_nhwc: (N, H, W, Cin) float32.  Returns (pooled, features) like the
    PyTorch module (or (features, None) for a decoder block)."""
    w1, b1, g1, be1, w2, b2, g2, be2 = params
    del b1, b2   # conv biases are mathematically cancelled by BatchNorm
    N, H, W, Cin = x_nhwc.shape
    C1 = w1.shape[-1]
    C2 = w2.shape[-1]
    C1p = _round_up(C1, LANE)
    C2p = _round_up(C2, LANE)

    # Weights as lane-dense im2col matrices (channels padded to 128), bf16 for
    # the MXU.  BN affine params are zero-padded so padded channels stay exactly
    # zero through BN/ReLU and contribute nothing to the next conv.
    w1_m = (jnp.zeros((3, 3, Cin, C1p), jnp.float32).at[..., :C1].set(w1)
            .reshape(9 * Cin, C1p).astype(jnp.bfloat16))
    w2_m = (jnp.zeros((3, 3, C1p, C2p), jnp.float32).at[:, :, :C1, :C2].set(w2)
            .reshape(9 * C1p, C2p).astype(jnp.bfloat16))
    g1_p = jnp.zeros((1, C1p), jnp.float32).at[:, :C1].set(g1)
    be1_p = jnp.zeros((1, C1p), jnp.float32).at[:, :C1].set(be1)
    g2_p = jnp.zeros((1, C2p), jnp.float32).at[:, :C2].set(g2)
    be2_p = jnp.zeros((1, C2p), jnp.float32).at[:, :C2].set(be2)

    vmem = lambda: pl.BlockSpec(memory_space=pltpu.MemorySpace.VMEM)

    pool_p, feat_p = pl.pallas_call(
        _unet_block_kernel,
        out_shape=(
            jax.ShapeDtypeStruct((N, H // 2, W // 2, C2p), jnp.float32),
            jax.ShapeDtypeStruct((N, H, W, C2p), jnp.float32),
        ),
        in_specs=[vmem() for _ in range(7)],
        out_specs=(vmem(), vmem()),
        scratch_shapes=[
            pltpu.VMEM((N, H + 2, W + 2, Cin), jnp.float32),   # padded input
            pltpu.VMEM((N, H + 2, W + 2, C1p), jnp.float32),   # padded intermediate
        ],
    )(x_nhwc, w1_m, g1_p, be1_p, w2_m, g2_p, be2_p)

    # Drop the lane-padding channels (wrapper glue back to module semantics).
    feat = feat_p[..., :C2]
    pool = pool_p[..., :C2]
    if is_encoder:
        return pool, feat
    return feat, None


def _ref_forward(x, params):
    """Pure-JAX reference with the same precision choices as the kernel
    (bf16 conv operands, f32 accumulation and BN math) for a tight check."""
    w1, b1, g1, be1, w2, b2, g2, be2 = params

    def conv_bn_relu(x, w, b, g, be):
        y = jax.lax.conv_general_dilated(
            x.astype(jnp.bfloat16), w.astype(jnp.bfloat16),
            window_strides=(1, 1), padding=((1, 1), (1, 1)),
            dimension_numbers=("NHWC", "HWIO", "NHWC"),
            preferred_element_type=jnp.float32) + b
        mean = jnp.mean(y, axis=(0, 1, 2), keepdims=True)
        var = jnp.mean(jnp.square(y - mean), axis=(0, 1, 2), keepdims=True)
        return jnp.maximum(g * (y - mean) * jax.lax.rsqrt(var + EPS) + be, 0.0)

    f = conv_bn_relu(conv_bn_relu(x, w1, b1, g1, be1), w2, b2, g2, be2)
    p = jax.lax.reduce_window(f, -jnp.inf, jax.lax.max,
                              (1, 2, 2, 1), (1, 2, 2, 1), "VALID")
    return p, f


if __name__ == "__main__":
    N, Cin, Cout, H, W = 2, 4, 8, 16, 16

    key = jax.random.PRNGKey(0)
    k = jax.random.split(key, 8)

    # Input in the module's NCHW convention, transposed to the kernel's NHWC layout.
    x_nchw = jax.random.normal(k[0], (N, Cin, H, W), jnp.float32)
    x = jnp.transpose(x_nchw, (0, 2, 3, 1))

    # Deterministic synthetic parameters (conv weights stored HWIO, i.e. the
    # transpose of PyTorch's OIHW).
    w1 = 0.1 * jax.random.normal(k[1], (3, 3, Cin, Cout), jnp.float32)   # conv1
    b1 = 0.1 * jax.random.normal(k[2], (Cout,), jnp.float32)
    g1 = 1.0 + 0.1 * jax.random.normal(k[3], (Cout,), jnp.float32)       # bn1 gamma
    be1 = 0.1 * jax.random.normal(k[4], (Cout,), jnp.float32)            # bn1 beta
    w2 = 0.1 * jax.random.normal(k[5], (3, 3, Cout, Cout), jnp.float32)  # conv2
    b2 = 0.1 * jax.random.normal(k[6], (Cout,), jnp.float32)
    g2 = 1.0 + 0.1 * jax.random.normal(k[7], (Cout,), jnp.float32)       # bn2 gamma
    be2 = jnp.zeros((Cout,), jnp.float32)                                # bn2 beta
    params = (w1, b1, g1, be1, w2, b2, g2, be2)

    pool, feat = unet_block_forward(x, params, is_encoder=True)
    jax.block_until_ready((pool, feat))

    pool_r, feat_r = _ref_forward(x, params)
    assert pool.shape == (N, H // 2, W // 2, Cout)
    assert feat.shape == (N, H, W, Cout)
    err_f = float(jnp.max(jnp.abs(feat - feat_r)))
    err_p = float(jnp.max(jnp.abs(pool - pool_r)))
    assert err_f < 2e-3 and err_p < 2e-3, (err_f, err_p)

    print("KERNEL_OK")
</pallas_src>

<mosaic_0001>
module attributes {stable_mosaic.version = 11 : i64} {
  func.func @_unet_block_kernel(%arg0: memref<2x16x16x4xf32, #tpu.memory_space<vmem>>, %arg1: memref<36x128xbf16, #tpu.memory_space<vmem>>, %arg2: memref<1x128xf32, #tpu.memory_space<vmem>>, %arg3: memref<1x128xf32, #tpu.memory_space<vmem>>, %arg4: memref<1152x128xbf16, #tpu.memory_space<vmem>>, %arg5: memref<1x128xf32, #tpu.memory_space<vmem>>, %arg6: memref<1x128xf32, #tpu.memory_space<vmem>>, %arg7: memref<2x8x8x128xf32, #tpu.memory_space<vmem>>, %arg8: memref<2x16x16x128xf32, #tpu.memory_space<vmem>>, %arg9: memref<2x18x18x4xf32, #tpu.memory_space<vmem>>, %arg10: memref<2x18x18x128xf32, #tpu.memory_space<vmem>>) attributes {dimension_semantics = [], scalar_prefetch = 0 : i64, scratch_operands = 2 : i64, tpu.core_type = #tpu.core_type<tc>} {
    %c0 = arith.constant 0 : index
    %c0_0 = arith.constant 0 : index
    %c0_1 = arith.constant 0 : index
    %c0_2 = arith.constant 0 : index
    %0 = vector.load %arg0[%c0, %c0_0, %c0_1, %c0_2] : memref<2x16x16x4xf32, #tpu.memory_space<vmem>>, vector<2x16x16x4xf32>
    %cst = arith.constant 0.000000e+00 : f32
    %1 = vector.broadcast %cst : f32 to vector<2x1x18x4xf32>
    %c0_3 = arith.constant 0 : index
    %c0_4 = arith.constant 0 : index
    %c0_5 = arith.constant 0 : index
    %c0_6 = arith.constant 0 : index
    %2 = vector.load %arg9[%c0_3, %c0_4, %c0_5, %c0_6] : memref<2x18x18x4xf32, #tpu.memory_space<vmem>>, vector<2x1x18x4xf32>
    tpu.vector_store %arg9[%c0_3, %c0_4, %c0_5, %c0_6], %1 {strides = array<i32>} : memref<2x18x18x4xf32, #tpu.memory_space<vmem>>, vector<2x1x18x4xf32>,
    %cst_7 = arith.constant 0.000000e+00 : f32
    %3 = vector.broadcast %cst_7 : f32 to vector<2x1x18x4xf32>
    %c0_8 = arith.constant 0 : index
    %c17 = arith.constant 17 : index
    %c0_9 = arith.constant 0 : index
    %c0_10 = arith.constant 0 : index
    %4 = vector.load %arg9[%c0_8, %c17, %c0_9, %c0_10] : memref<2x18x18x4xf32, #tpu.memory_space<vmem>>, vector<2x1x18x4xf32>
    tpu.vector_store %arg9[%c0_8, %c17, %c0_9, %c0_10], %3 {strides = array<i32>} : memref<2x18x18x4xf32, #tpu.memory_space<vmem>>, vector<2x1x18x4xf32>,
    %cst_11 = arith.constant 0.000000e+00 : f32
    %5 = vector.broadcast %cst_11 : f32 to vector<2x18x1x4xf32>
    %c0_12 = arith.constant 0 : index
    %c0_13 = arith.constant 0 : index
    %c0_14 = arith.constant 0 : index
    %c0_15 = arith.constant 0 : index
    %6 = vector.load %arg9[%c0_12, %c0_13, %c0_14, %c0_15] : memref<2x18x18x4xf32, #tpu.memory_space<vmem>>, vector<2x18x1x4xf32>
    tpu.vector_store %arg9[%c0_12, %c0_13, %c0_14, %c0_15], %5 {strides = array<i32>} : memref<2x18x18x4xf32, #tpu.memory_space<vmem>>, vector<2x18x1x4xf32>,
    %cst_16 = arith.constant 0.000000e+00 : f32
    %7 = vector.broadcast %cst_16 : f32 to vector<2x18x1x4xf32>
    %c0_17 = arith.constant 0 : index
    %c0_18 = arith.constant 0 : index
    %c17_19 = arith.constant 17 : index
    %c0_20 = arith.constant 0 : index
    %8 = vector.load %arg9[%c0_17, %c0_18, %c17_19, %c0_20] : memref<2x18x18x4xf32, #tpu.memory_space<vmem>>, vector<2x18x1x4xf32>
    tpu.vector_store %arg9[%c0_17, %c0_18, %c17_19, %c0_20], %7 {strides = array<i32>} : memref<2x18x18x4xf32, #tpu.memory_space<vmem>>, vector<2x18x1x4xf32>,
    %c0_21 = arith.constant 0 : index
    %c1 = arith.constant 1 : index
    %c1_22 = arith.constant 1 : index
    %c0_23 = arith.constant 0 : index
    %9 = vector.load %arg9[%c0_21, %c1, %c1_22, %c0_23] : memref<2x18x18x4xf32, #tpu.memory_space<vmem>>, vector<2x16x16x4xf32>
    tpu.vector_store %arg9[%c0_21, %c1, %c1_22, %c0_23], %0 {strides = array<i32>} : memref<2x18x18x4xf32, #tpu.memory_space<vmem>>, vector<2x16x16x4xf32>,
    %c0_24 = arith.constant 0 : index
    %c0_25 = arith.constant 0 : index
    %c0_26 = arith.constant 0 : index
    %c0_27 = arith.constant 0 : index
    %10 = vector.load %arg9[%c0_24, %c0_25, %c0_26, %c0_27] : memref<2x18x18x4xf32, #tpu.memory_space<vmem>>, vector<2x16x16x4xf32>
    %11 = arith.truncf %10 : vector<2x16x16x4xf32> to vector<2x16x16x4xbf16>
    %c0_28 = arith.constant 0 : index
    %c0_29 = arith.constant 0 : index
    %c1_30 = arith.constant 1 : index
    %c0_31 = arith.constant 0 : index
    %12 = vector.load %arg9[%c0_28, %c0_29, %c1_30, %c0_31] : memref<2x18x18x4xf32, #tpu.memory_space<vmem>>, vector<2x16x16x4xf32>
    %13 = arith.truncf %12 : vector<2x16x16x4xf32> to vector<2x16x16x4xbf16>
    %c0_32 = arith.constant 0 : index
    %c0_33 = arith.constant 0 : index
    %c2 = arith.constant 2 : index
    %c0_34 = arith.constant 0 : index
    %14 = vector.load %arg9[%c0_32, %c0_33, %c2, %c0_34] : memref<2x18x18x4xf32, #tpu.memory_space<vmem>>, vector<2x16x16x4xf32>
    %15 = arith.truncf %14 : vector<2x16x16x4xf32> to vector<2x16x16x4xbf16>
    %c0_35 = arith.constant 0 : index
    %c1_36 = arith.constant 1 : index
    %c0_37 = arith.constant 0 : index
    %c0_38 = arith.constant 0 : index
    %16 = vector.load %arg9[%c0_35, %c1_36, %c0_37, %c0_38] : memref<2x18x18x4xf32, #tpu.memory_space<vmem>>, vector<2x16x16x4xf32>
    %17 = arith.truncf %16 : vector<2x16x16x4xf32> to vector<2x16x16x4xbf16>
    %c0_39 = arith.constant 0 : index
    %c1_40 = arith.constant 1 : index
    %c1_41 = arith.constant 1 : index
    %c0_42 = arith.constant 0 : index
    %18 = vector.load %arg9[%c0_39, %c1_40, %c1_41, %c0_42] : memref<2x18x18x4xf32, #tpu.memory_space<vmem>>, vector<2x16x16x4xf32>
    %19 = arith.truncf %18 : vector<2x16x16x4xf32> to vector<2x16x16x4xbf16>
    %c0_43 = arith.constant 0 : index
    %c1_44 = arith.constant 1 : index
    %c2_45 = arith.constant 2 : index
    %c0_46 = arith.constant 0 : index
    %20 = vector.load %arg9[%c0_43, %c1_44, %c2_45, %c0_46] : memref<2x18x18x4xf32, #tpu.memory_space<vmem>>, vector<2x16x16x4xf32>
    %21 = arith.truncf %20 : vector<2x16x16x4xf32> to vector<2x16x16x4xbf16>
    %c0_47 = arith.constant 0 : index
    %c2_48 = arith.constant 2 : index
    %c0_49 = arith.constant 0 : index
    %c0_50 = arith.constant 0 : index
    %22 = vector.load %arg9[%c0_47, %c2_48, %c0_49, %c0_50] : memref<2x18x18x4xf32, #tpu.memory_space<vmem>>, vector<2x16x16x4xf32>
    %23 = arith.truncf %22 : vector<2x16x16x4xf32> to vector<2x16x16x4xbf16>
    %c0_51 = arith.constant 0 : index
    %c2_52 = arith.constant 2 : index
    %c1_53 = arith.constant 1 : index
    %c0_54 = arith.constant 0 : index
    %24 = vector.load %arg9[%c0_51, %c2_52, %c1_53, %c0_54] : memref<2x18x18x4xf32, #tpu.memory_space<vmem>>, vector<2x16x16x4xf32>
    %25 = arith.truncf %24 : vector<2x16x16x4xf32> to vector<2x16x16x4xbf16>
    %c0_55 = arith.constant 0 : index
    %c2_56 = arith.constant 2 : index
    %c2_57 = arith.constant 2 : index
    %c0_58 = arith.constant 0 : index
    %26 = vector.load %arg9[%c0_55, %c2_56, %c2_57, %c0_58] : memref<2x18x18x4xf32, #tpu.memory_space<vmem>>, vector<2x16x16x4xf32>
    %27 = arith.truncf %26 : vector<2x16x16x4xf32> to vector<2x16x16x4xbf16>
    %28 = tpu.concatenate %11, %13, %15, %17, %19, %21, %23, %25, %27 in 3 : vector<2x16x16x4xbf16>, vector<2x16x16x4xbf16>, vector<2x16x16x4xbf16>, vector<2x16x16x4xbf16>, vector<2x16x16x4xbf16>, vector<2x16x16x4xbf16>, vector<2x16x16x4xbf16>, vector<2x16x16x4xbf16>, vector<2x16x16x4xbf16> -> vector<2x16x16x36xbf16>
    %29 = vector.shape_cast %28 : vector<2x16x16x36xbf16> to vector<512x36xbf16>
    %c0_59 = arith.constant 0 : index
    %c0_60 = arith.constant 0 : index
    %30 = vector.load %arg1[%c0_59, %c0_60] : memref<36x128xbf16, #tpu.memory_space<vmem>>, vector<36x128xbf16>
    %cst_61 = arith.constant dense<0.000000e+00> : vector<512x128xf32>
    %31 = tpu.matmul %29, %30, %cst_61 {dimension_numbers = #tpu.dot_dimension_numbers<[1], [0], [0], [1], [0, 0, 1, 1], [], []>} : vector<512x36xbf16>, vector<36x128xbf16>, vector<512x128xf32> -> vector<512x128xf32>
    %cst_62 = arith.constant dense<0.000000e+00> : vector<128xf32>
    %32 = vector.multi_reduction <add>, %31, %cst_62 [0] : vector<512x128xf32> to vector<128xf32>
    %33 = vector.shape_cast %32 : vector<128xf32> to vector<1x128xf32>
    %cst_63 = arith.constant 5.120000e+02 : f32
    %34 = vector.broadcast %cst_63 : f32 to vector<1x128xf32>
    %35 = arith.divf %33, %34 : vector<1x128xf32>
    %36 = vector.broadcast %35 : vector<1x128xf32> to vector<512x128xf32>
    %37 = arith.subf %31, %36 : vector<512x128xf32>
    %38 = arith.mulf %37, %37 : vector<512x128xf32>
    %cst_64 = arith.constant dense<0.000000e+00> : vector<128xf32>
    %39 = vector.multi_reduction <add>, %38, %cst_64 [0] : vector<512x128xf32> to vector<128xf32>
    %40 = vector.shape_cast %39 : vector<128xf32> to vector<1x128xf32>
    %cst_65 = arith.constant 5.120000e+02 : f32
    %41 = vector.broadcast %cst_65 : f32 to vector<1x128xf32>
    %42 = arith.divf %40, %41 : vector<1x128xf32>
    %c0_66 = arith.constant 0 : index
    %c0_67 = arith.constant 0 : index
    %43 = vector.load %arg2[%c0_66, %c0_67] : memref<1x128xf32, #tpu.memory_space<vmem>>, vector<1x128xf32>
    %cst_68 = arith.constant 9.99999974E-6 : f32
    %44 = vector.broadcast %cst_68 : f32 to vector<1x128xf32>
    %45 = arith.addf %42, %44 : vector<1x128xf32>
    %46 = math.rsqrt %45 : vector<1x128xf32>
    %47 = arith.mulf %43, %46 : vector<1x128xf32>
    %c0_69 = arith.constant 0 : index
    %c0_70 = arith.constant 0 : index
    %48 = vector.load %arg3[%c0_69, %c0_70] : memref<1x128xf32, #tpu.memory_space<vmem>>, vector<1x128xf32>
    %49 = arith.mulf %35, %47 : vector<1x128xf32>
    %50 = arith.subf %48, %49 : vector<1x128xf32>
    %51 = vector.broadcast %47 : vector<1x128xf32> to vector<512x128xf32>
    %52 = arith.mulf %31, %51 : vector<512x128xf32>
    %53 = vector.broadcast %50 : vector<1x128xf32> to vector<512x128xf32>
    %54 = arith.addf %52, %53 : vector<512x128xf32>
    %cst_71 = arith.constant 0.000000e+00 : f32
    %55 = vector.broadcast %cst_71 : f32 to vector<512x128xf32>
    %56 = arith.maximumf %54, %55 : vector<512x128xf32>
    %57 = vector.shape_cast %56 : vector<512x128xf32> to vector<2x16x16x128xf32>
    %cst_72 = arith.constant 0.000000e+00 : f32
    %58 = vector.broadcast %cst_72 : f32 to vector<2x1x18x128xf32>
    %c0_73 = arith.constant 0 : index
    %c0_74 = arith.constant 0 : index
    %c0_75 = arith.constant 0 : index
    %c0_76 = arith.constant 0 : index
    %59 = vector.load %arg10[%c0_73, %c0_74, %c0_75, %c0_76] : memref<2x18x18x128xf32, #tpu.memory_space<vmem>>, vector<2x1x18x128xf32>
    tpu.vector_store %arg10[%c0_73, %c0_74, %c0_75, %c0_76], %58 {strides = array<i32>} : memref<2x18x18x128xf32, #tpu.memory_space<vmem>>, vector<2x1x18x128xf32>,
    %cst_77 = arith.constant 0.000000e+00 : f32
    %60 = vector.broadcast %cst_77 : f32 to vector<2x1x18x128xf32>
    %c0_78 = arith.constant 0 : index
    %c17_79 = arith.constant 17 : index
    %c0_80 = arith.constant 0 : index
    %c0_81 = arith.constant 0 : index
    %61 = vector.load %arg10[%c0_78, %c17_79, %c0_80, %c0_81] : memref<2x18x18x128xf32, #tpu.memory_space<vmem>>, vector<2x1x18x128xf32>
    tpu.vector_store %arg10[%c0_78, %c17_79, %c0_80, %c0_81], %60 {strides = array<i32>} : memref<2x18x18x128xf32, #tpu.memory_space<vmem>>, vector<2x1x18x128xf32>,
    %cst_82 = arith.constant 0.000000e+00 : f32
    %62 = vector.broadcast %cst_82 : f32 to vector<2x18x1x128xf32>
    %c0_83 = arith.constant 0 : index
    %c0_84 = arith.constant 0 : index
    %c0_85 = arith.constant 0 : index
    %c0_86 = arith.constant 0 : index
    %63 = vector.load %arg10[%c0_83, %c0_84, %c0_85, %c0_86] : memref<2x18x18x128xf32, #tpu.memory_space<vmem>>, vector<2x18x1x128xf32>
    tpu.vector_store %arg10[%c0_83, %c0_84, %c0_85, %c0_86], %62 {strides = array<i32>} : memref<2x18x18x128xf32, #tpu.memory_space<vmem>>, vector<2x18x1x128xf32>,
    %cst_87 = arith.constant 0.000000e+00 : f32
    %64 = vector.broadcast %cst_87 : f32 to vector<2x18x1x128xf32>
    %c0_88 = arith.constant 0 : index
    %c0_89 = arith.constant 0 : index
    %c17_90 = arith.constant 17 : index
    %c0_91 = arith.constant 0 : index
    %65 = vector.load %arg10[%c0_88, %c0_89, %c17_90, %c0_91] : memref<2x18x18x128xf32, #tpu.memory_space<vmem>>, vector<2x18x1x128xf32>
    tpu.vector_store %arg10[%c0_88, %c0_89, %c17_90, %c0_91], %64 {strides = array<i32>} : memref<2x18x18x128xf32, #tpu.memory_space<vmem>>, vector<2x18x1x128xf32>,
    %c0_92 = arith.constant 0 : index
    %c1_93 = arith.constant 1 : index
    %c1_94 = arith.constant 1 : index
    %c0_95 = arith.constant 0 : index
    %66 = vector.load %arg10[%c0_92, %c1_93, %c1_94, %c0_95] : memref<2x18x18x128xf32, #tpu.memory_space<vmem>>, vector<2x16x16x128xf32>
    tpu.vector_store %arg10[%c0_92, %c1_93, %c1_94, %c0_95], %57 {strides = array<i32>} : memref<2x18x18x128xf32, #tpu.memory_space<vmem>>, vector<2x16x16x128xf32>,
    %c0_96 = arith.constant 0 : index
    %c0_97 = arith.constant 0 : index
    %c0_98 = arith.constant 0 : index
    %c0_99 = arith.constant 0 : index
    %67 = vector.load %arg10[%c0_96, %c0_97, %c0_98, %c0_99] : memref<2x18x18x128xf32, #tpu.memory_space<vmem>>, vector<2x16x16x128xf32>
    %68 = arith.truncf %67 : vector<2x16x16x128xf32> to vector<2x16x16x128xbf16>
    %c0_100 = arith.constant 0 : index
    %c0_101 = arith.constant 0 : index
    %c1_102 = arith.constant 1 : index
    %c0_103 = arith.constant 0 : index
    %69 = vector.load %arg10[%c0_100, %c0_101, %c1_102, %c0_103] : memref<2x18x18x128xf32, #tpu.memory_space<vmem>>, vector<2x16x16x128xf32>
    %70 = arith.truncf %69 : vector<2x16x16x128xf32> to vector<2x16x16x128xbf16>
    %c0_104 = arith.constant 0 : index
    %c0_105 = arith.constant 0 : index
    %c2_106 = arith.constant 2 : index
    %c0_107 = arith.constant 0 : index
    %71 = vector.load %arg10[%c0_104, %c0_105, %c2_106, %c0_107] : memref<2x18x18x128xf32, #tpu.memory_space<vmem>>, vector<2x16x16x128xf32>
    %72 = arith.truncf %71 : vector<2x16x16x128xf32> to vector<2x16x16x128xbf16>
    %c0_108 = arith.constant 0 : index
    %c1_109 = arith.constant 1 : index
    %c0_110 = arith.constant 0 : index
    %c0_111 = arith.constant 0 : index
    %73 = vector.load %arg10[%c0_108, %c1_109, %c0_110, %c0_111] : memref<2x18x18x128xf32, #tpu.memory_space<vmem>>, vector<2x16x16x128xf32>
    %74 = arith.truncf %73 : vector<2x16x16x128xf32> to vector<2x16x16x128xbf16>
    %c0_112 = arith.constant 0 : index
    %c1_113 = arith.constant 1 : index
    %c1_114 = arith.constant 1 : index
    %c0_115 = arith.constant 0 : index
    %75 = vector.load %arg10[%c0_112, %c1_113, %c1_114, %c0_115] : memref<2x18x18x128xf32, #tpu.memory_space<vmem>>, vector<2x16x16x128xf32>
    %76 = arith.truncf %75 : vector<2x16x16x128xf32> to vector<2x16x16x128xbf16>
    %c0_116 = arith.constant 0 : index
    %c1_117 = arith.constant 1 : index
    %c2_118 = arith.constant 2 : index
    %c0_119 = arith.constant 0 : index
    %77 = vector.load %arg10[%c0_116, %c1_117, %c2_118, %c0_119] : memref<2x18x18x128xf32, #tpu.memory_space<vmem>>, vector<2x16x16x128xf32>
    %78 = arith.truncf %77 : vector<2x16x16x128xf32> to vector<2x16x16x128xbf16>
    %c0_120 = arith.constant 0 : index
    %c2_121 = arith.constant 2 : index
    %c0_122 = arith.constant 0 : index
    %c0_123 = arith.constant 0 : index
    %79 = vector.load %arg10[%c0_120, %c2_121, %c0_122, %c0_123] : memref<2x18x18x128xf32, #tpu.memory_space<vmem>>, vector<2x16x16x128xf32>
    %80 = arith.truncf %79 : vector<2x16x16x128xf32> to vector<2x16x16x128xbf16>
    %c0_124 = arith.constant 0 : index
    %c2_125 = arith.constant 2 : index
    %c1_126 = arith.constant 1 : index
    %c0_127 = arith.constant 0 : index
    %81 = vector.load %arg10[%c0_124, %c2_125, %c1_126, %c0_127] : memref<2x18x18x128xf32, #tpu.memory_space<vmem>>, vector<2x16x16x128xf32>
    %82 = arith.truncf %81 : vector<2x16x16x128xf32> to vector<2x16x16x128xbf16>
    %c0_128 = arith.constant 0 : index
    %c2_129 = arith.constant 2 : index
    %c2_130 = arith.constant 2 : index
    %c0_131 = arith.constant 0 : index
    %83 = vector.load %arg10[%c0_128, %c2_129, %c2_130, %c0_131] : memref<2x18x18x128xf32, #tpu.memory_space<vmem>>, vector<2x16x16x128xf32>
    %84 = arith.truncf %83 : vector<2x16x16x128xf32> to vector<2x16x16x128xbf16>
    %85 = tpu.concatenate %68, %70, %72, %74, %76, %78, %80, %82, %84 in 3 : vector<2x16x16x128xbf16>, vector<2x16x16x128xbf16>, vector<2x16x16x128xbf16>, vector<2x16x16x128xbf16>, vector<2x16x16x128xbf16>, vector<2x16x16x128xbf16>, vector<2x16x16x128xbf16>, vector<2x16x16x128xbf16>, vector<2x16x16x128xbf16> -> vector<2x16x16x1152xbf16>
    %86 = vector.shape_cast %85 : vector<2x16x16x1152xbf16> to vector<512x1152xbf16>
    %c0_132 = arith.constant 0 : index
    %c0_133 = arith.constant 0 : index
    %87 = vector.load %arg4[%c0_132, %c0_133] : memref<1152x128xbf16, #tpu.memory_space<vmem>>, vector<1152x128xbf16>
    %cst_134 = arith.constant dense<0.000000e+00> : vector<512x128xf32>
    %88 = tpu.matmul %86, %87, %cst_134 {dimension_numbers = #tpu.dot_dimension_numbers<[1], [0], [0], [1], [0, 0, 1, 1], [], []>} : vector<512x1152xbf16>, vector<1152x128xbf16>, vector<512x128xf32> -> vector<512x128xf32>
    %cst_135 = arith.constant dense<0.000000e+00> : vector<128xf32>
    %89 = vector.multi_reduction <add>, %88, %cst_135 [0] : vector<512x128xf32> to vector<128xf32>
    %90 = vector.shape_cast %89 : vector<128xf32> to vector<1x128xf32>
    %cst_136 = arith.constant 5.120000e+02 : f32
    %91 = vector.broadcast %cst_136 : f32 to vector<1x128xf32>
    %92 = arith.divf %90, %91 : vector<1x128xf32>
    %93 = vector.broadcast %92 : vector<1x128xf32> to vector<512x128xf32>
    %94 = arith.subf %88, %93 : vector<512x128xf32>
    %95 = arith.mulf %94, %94 : vector<512x128xf32>
    %cst_137 = arith.constant dense<0.000000e+00> : vector<128xf32>
    %96 = vector.multi_reduction <add>, %95, %cst_137 [0] : vector<512x128xf32> to vector<128xf32>
    %97 = vector.shape_cast %96 : vector<128xf32> to vector<1x128xf32>
    %cst_138 = arith.constant 5.120000e+02 : f32
    %98 = vector.broadcast %cst_138 : f32 to vector<1x128xf32>
    %99 = arith.divf %97, %98 : vector<1x128xf32>
    %c0_139 = arith.constant 0 : index
    %c0_140 = arith.constant 0 : index
    %100 = vector.load %arg5[%c0_139, %c0_140] : memref<1x128xf32, #tpu.memory_space<vmem>>, vector<1x128xf32>
    %cst_141 = arith.constant 9.99999974E-6 : f32
    %101 = vector.broadcast %cst_141 : f32 to vector<1x128xf32>
    %102 = arith.addf %99, %101 : vector<1x128xf32>
    %103 = math.rsqrt %102 : vector<1x128xf32>
    %104 = arith.mulf %100, %103 : vector<1x128xf32>
    %c0_142 = arith.constant 0 : index
    %c0_143 = arith.constant 0 : index
    %105 = vector.load %arg6[%c0_142, %c0_143] : memref<1x128xf32, #tpu.memory_space<vmem>>, vector<1x128xf32>
    %106 = arith.mulf %92, %104 : vector<1x128xf32>
    %107 = arith.subf %105, %106 : vector<1x128xf32>
    %108 = vector.broadcast %104 : vector<1x128xf32> to vector<512x128xf32>
    %109 = arith.mulf %88, %108 : vector<512x128xf32>
    %110 = vector.broadcast %107 : vector<1x128xf32> to vector<512x128xf32>
    %111 = arith.addf %109, %110 : vector<512x128xf32>
    %cst_144 = arith.constant 0.000000e+00 : f32
    %112 = vector.broadcast %cst_144 : f32 to vector<512x128xf32>
    %113 = arith.maximumf %111, %112 : vector<512x128xf32>
    %114 = vector.shape_cast %113 : vector<512x128xf32> to vector<2x16x16x128xf32>
    %c0_145 = arith.constant 0 : index
    %c0_146 = arith.constant 0 : index
    %c0_147 = arith.constant 0 : index
    %c0_148 = arith.constant 0 : index
    %115 = vector.load %arg8[%c0_145, %c0_146, %c0_147, %c0_148] : memref<2x16x16x128xf32, #tpu.memory_space<vmem>>, vector<2x16x16x128xf32>
    tpu.vector_store %arg8[%c0_145, %c0_146, %c0_147, %c0_148], %114 {strides = array<i32>} : memref<2x16x16x128xf32, #tpu.memory_space<vmem>>, vector<2x16x16x128xf32>,
    %c0_149 = arith.constant 0 : index
    %c0_150 = arith.constant 0 : index
    %c0_151 = arith.constant 0 : index
    %c0_152 = arith.constant 0 : index
    %116 = tpu.strided_load %arg8[%c0_149, %c0_150, %c0_151, %c0_152] {strides = array<i32: 1, 1, 2, 1>} : memref<2x16x16x128xf32, #tpu.memory_space<vmem>>, vector<2x16x8x128xf32>
    %c0_153 = arith.constant 0 : index
    %c0_154 = arith.constant 0 : index
    %c1_155 = arith.constant 1 : index
    %c0_156 = arith.constant 0 : index
    %117 = tpu.strided_load %arg8[%c0_153, %c0_154, %c1_155, %c0_156] {strides = array<i32: 1, 1, 2, 1>} : memref<2x16x16x128xf32, #tpu.memory_space<vmem>>, vector<2x16x8x128xf32>
    %118 = arith.maximumf %116, %117 : vector<2x16x8x128xf32>
    %119 = vector.shape_cast %118 : vector<2x16x8x128xf32> to vector<2x8x2x8x128xf32>
    %120 = vector.extract_strided_slice %119 {offsets = [0, 0, 0, 0, 0], sizes = [2, 8, 1, 8, 128], strides = [1, 1, 1, 1, 1]} : vector<2x8x2x8x128xf32> to vector<2x8x1x8x128xf32>
    %121 = vector.shape_cast %120 : vector<2x8x1x8x128xf32> to vector<2x8x8x128xf32>
    %122 = vector.extract_strided_slice %119 {offsets = [0, 0, 1, 0, 0], sizes = [2, 8, 1, 8, 128], strides = [1, 1, 1, 1, 1]} : vector<2x8x2x8x128xf32> to vector<2x8x1x8x128xf32>
    %123 = vector.shape_cast %122 : vector<2x8x1x8x128xf32> to vector<2x8x8x128xf32>
    %124 = arith.maximumf %121, %123 : vector<2x8x8x128xf32>
    %c0_157 = arith.constant 0 : index
    %c0_158 = arith.constant 0 : index
    %c0_159 = arith.constant 0 : index
    %c0_160 = arith.constant 0 : index
    %125 = vector.load %arg7[%c0_157, %c0_158, %c0_159, %c0_160] : memref<2x8x8x128xf32, #tpu.memory_space<vmem>>, vector<2x8x8x128xf32>
    tpu.vector_store %arg7[%c0_157, %c0_158, %c0_159, %c0_160], %124 {strides = array<i32>} : memref<2x8x8x128xf32, #tpu.memory_space<vmem>>, vector<2x8x8x128xf32>,
    return
  }
}

</mosaic_0001>

<llo_original>
// kernel: tpu_custom_call.1
$region0: #{tpu_custom_call.1}
  #allocation0 [shape = 'u32[]', space=smem, size = 0x4, offset = 0x4, fixed_abs, tag = 'smem constant byte address 0x4 - core index']
  #allocation1 [shape = 'u32[144,128]{1,0:T(1,128)}', space=vmem, size = 0x12000, scoped, tag = 'internal scratch']
  #allocation2 [shape = 'f32[2,18,18,4]{3,2,1,0:T(8,128)}', space=vmem, size = 0x6c000, scoped, tag = 'scratch operand']
  #allocation3 [shape = 'f32[2,18,18,128]{3,2,1,0:T(8,128)}', space=vmem, size = 0x6c000, scoped, tag = 'scratch operand']
  %s0 = inlined_call_operand.vmem [shape: f32[2,16,16,4], index: 0, kind: input, shape index: {}]
  %s1 = inlined_call_operand.vmem [shape: bf16[36,128], index: 1, kind: input, shape index: {}]
  %s2 = inlined_call_operand.vmem [shape: f32[1,128], index: 2, kind: input, shape index: {}]
  %s3 = inlined_call_operand.vmem [shape: f32[1,128], index: 3, kind: input, shape index: {}]
  %s4 = inlined_call_operand.vmem [shape: bf16[1152,128], index: 4, kind: input, shape index: {}]
  %s5 = inlined_call_operand.vmem [shape: f32[1,128], index: 5, kind: input, shape index: {}]
  %s6 = inlined_call_operand.vmem [shape: f32[1,128], index: 6, kind: input, shape index: {}]
  %s7 = inlined_call_operand.hbm [shape: f32[2,8,8,128], index: 7, kind: output, shape index: {0}]
  %s8 = inlined_call_operand.hbm [shape: f32[2,16,16,128], index: 8, kind: output, shape index: {1}]
  %9 = xla_tuple %s7, %s8
  %s10 = sld [smem:[#allocation0]]
  $region46: #{tpu_custom_call.1} parent=0
    _
  %s12 = ssub.s32 1, %s10
  %s13 = scalar_select 0, %s12, %s10
  $region1: #{tpu_custom_call.1} parent=0
    #allocation4 [shape = 'u8[65536]{0}', space=vmem, size = 0x10000, scoped, tag = 'output window, operand 0, single buffered']
    #allocation5 [shape = 's32[1]{0}', space=sflag, size = 0x4, scoped, tag = 'scoped memory for tpu_custom_call.1']
    #allocation6 [shape = 'u8[262144]{0}', space=vmem, size = 0x40000, scoped, tag = 'output window, operand 1, single buffered']
    #allocation7 [shape = 's32[1]{0}', space=sflag, size = 0x4, scoped, tag = 'scoped memory for tpu_custom_call.1']
    %14 = vsyncpa [#allocation5], 0
    %15 = vsyncpa [#allocation7], 0
    // Predicated region
    $region2: #{tpu_custom_call.1} parent=1 // pred_check
      _
    $region3: #{tpu_custom_call.1} parent=1 // pred_check_branch
      %17 = sbr.rel (0) target = $region5
    $region4: #{tpu_custom_call.1} parent=1 // pred_region
      _
    $region5: #{tpu_custom_call.1} parent=1 // pred_fallthru
      _
    // Predicated region
    $region6: #{tpu_custom_call.1} parent=1 // pred_check
      _
    $region7: #{tpu_custom_call.1} parent=1 // pred_check_branch
      %19 = sbr.rel (0) target = $region9
    $region8: #{tpu_custom_call.1} parent=1 // pred_region
      _
    $region9: #{tpu_custom_call.1} parent=1 // pred_fallthru
      _
    // Predicated region
    $region10: #{tpu_custom_call.1} parent=1 // pred_check
      _
    $region11: #{tpu_custom_call.1} parent=1 // pred_check_branch
      %21 = sbr.rel (0) target = $region13
    $region12: #{tpu_custom_call.1} parent=1 // pred_region
      _
    $region13: #{tpu_custom_call.1} parent=1 // pred_fallthru
      _
    // Predicated region
    $region14: #{tpu_custom_call.1} parent=1 // pred_check
      _
    $region15: #{tpu_custom_call.1} parent=1 // pred_check_branch
      %23 = sbr.rel (0) target = $region17
    $region16: #{tpu_custom_call.1} parent=1 // pred_region
      _
    $region17: #{tpu_custom_call.1} parent=1 // pred_fallthru
      _
    // Predicated region
    $region18: #{tpu_custom_call.1} parent=1 // pred_check
      _
    $region19: #{tpu_custom_call.1} parent=1 // pred_check_branch
      %25 = sbr.rel (0) target = $region21
    $region20: #{tpu_custom_call.1} parent=1 // pred_region
      _
    $region21: #{tpu_custom_call.1} parent=1 // pred_fallthru
      _
    // Predicated region
    $region22: #{tpu_custom_call.1} parent=1 // pred_check
      _
    $region23: #{tpu_custom_call.1} parent=1 // pred_check_branch
      %27 = sbr.rel (0) target = $region25
    $region24: #{tpu_custom_call.1} parent=1 // pred_region
      _
    $region25: #{tpu_custom_call.1} parent=1 // pred_fallthru
      _
    // Predicated region
    $region26: #{tpu_custom_call.1} parent=1 // pred_check
      _
    $region27: #{tpu_custom_call.1} parent=1 // pred_check_branch
      %29 = sbr.rel (0) target = $region29
    $region28: #{tpu_custom_call.1} parent=1 // pred_region
      _
    $region29: #{tpu_custom_call.1} parent=1 // pred_fallthru
      _
    %v31 = vld [vmem:[%s0] sm:$0xff]
    %v32 = vld [vmem:[%s0 + $0x8] sm:$0xff]
    %v33 = vld [vmem:[%s0 + $0x10] sm:$0xff]
    %v34 = vld [vmem:[%s0 + $0x18] sm:$0xff]
    %v35 = vld [vmem:[%s0 + $0x20] sm:$0xff]
    %v36 = vld [vmem:[%s0 + $0x28] sm:$0xff]
    %v37 = vld [vmem:[%s0 + $0x30] sm:$0xff]
    %v38 = vld [vmem:[%s0 + $0x38] sm:$0xff]
    %v39 = vld [vmem:[%s0 + $0x40] sm:$0xff]
    %v40 = vld [vmem:[%s0 + $0x48] sm:$0xff]
    %v41 = vld [vmem:[%s0 + $0x50] sm:$0xff]
    %v42 = vld [vmem:[%s0 + $0x58] sm:$0xff]
    %v43 = vld [vmem:[%s0 + $0x60] sm:$0xff]
    %v44 = vld [vmem:[%s0 + $0x68] sm:$0xff]
    %v45 = vld [vmem:[%s0 + $0x70] sm:$0xff]
    %v46 = vld [vmem:[%s0 + $0x78] sm:$0xff]
    %v47 = vld [vmem:[%s0 + $0x80] sm:$0xff]
    %v48 = vld [vmem:[%s0 + $0x88] sm:$0xff]
    %v49 = vld [vmem:[%s0 + $0x90] sm:$0xff]
    %v50 = vld [vmem:[%s0 + $0x98] sm:$0xff]
    %v51 = vld [vmem:[%s0 + $0xa0] sm:$0xff]
    %v52 = vld [vmem:[%s0 + $0xa8] sm:$0xff]
    %v53 = vld [vmem:[%s0 + $0xb0] sm:$0xff]
    %v54 = vld [vmem:[%s0 + $0xb8] sm:$0xff]
    %v55 = vld [vmem:[%s0 + $0xc0] sm:$0xff]
    %v56 = vld [vmem:[%s0 + $0xc8] sm:$0xff]
    %v57 = vld [vmem:[%s0 + $0xd0] sm:$0xff]
    %v58 = vld [vmem:[%s0 + $0xd8] sm:$0xff]
    %v59 = vld [vmem:[%s0 + $0xe0] sm:$0xff]
    %v60 = vld [vmem:[%s0 + $0xe8] sm:$0xff]
    %v61 = vld [vmem:[%s0 + $0xf0] sm:$0xff]
    %v62 = vld [vmem:[%s0 + $0xf8] sm:$0xff]
    %v63 = vld [vmem:[%s0 + $0x100] sm:$0xff]
    %v64 = vld [vmem:[%s0 + $0x108] sm:$0xff]
    %v65 = vld [vmem:[%s0 + $0x110] sm:$0xff]
    %v66 = vld [vmem:[%s0 + $0x118] sm:$0xff]
    %v67 = vld [vmem:[%s0 + $0x120] sm:$0xff]
    %v68 = vld [vmem:[%s0 + $0x128] sm:$0xff]
    %v69 = vld [vmem:[%s0 + $0x130] sm:$0xff]
    %v70 = vld [vmem:[%s0 + $0x138] sm:$0xff]
    %v71 = vld [vmem:[%s0 + $0x140] sm:$0xff]
    %v72 = vld [vmem:[%s0 + $0x148] sm:$0xff]
    %v73 = vld [vmem:[%s0 + $0x150] sm:$0xff]
    %v74 = vld [vmem:[%s0 + $0x158] sm:$0xff]
    %v75 = vld [vmem:[%s0 + $0x160] sm:$0xff]
    %v76 = vld [vmem:[%s0 + $0x168] sm:$0xff]
    %v77 = vld [vmem:[%s0 + $0x170] sm:$0xff]
    %v78 = vld [vmem:[%s0 + $0x178] sm:$0xff]
    %v79 = vld [vmem:[%s0 + $0x180] sm:$0xff]
    %v80 = vld [vmem:[%s0 + $0x188] sm:$0xff]
    %v81 = vld [vmem:[%s0 + $0x190] sm:$0xff]
    %v82 = vld [vmem:[%s0 + $0x198] sm:$0xff]
    %v83 = vld [vmem:[%s0 + $0x1a0] sm:$0xff]
    %v84 = vld [vmem:[%s0 + $0x1a8] sm:$0xff]
    %v85 = vld [vmem:[%s0 + $0x1b0] sm:$0xff]
    %v86 = vld [vmem:[%s0 + $0x1b8] sm:$0xff]
    %v87 = vld [vmem:[%s0 + $0x1c0] sm:$0xff]
    %v88 = vld [vmem:[%s0 + $0x1c8] sm:$0xff]
    %v89 = vld [vmem:[%s0 + $0x1d0] sm:$0xff]
    %v90 = vld [vmem:[%s0 + $0x1d8] sm:$0xff]
    %v91 = vld [vmem:[%s0 + $0x1e0] sm:$0xff]
    %v92 = vld [vmem:[%s0 + $0x1e8] sm:$0xff]
    %v93 = vld [vmem:[%s0 + $0x1f0] sm:$0xff]
    %v94 = vld [vmem:[%s0 + $0x1f8] sm:$0xff]
    %vm95 = vcmask 31744
    %96 = vst.msk [vmem:[#allocation2] sm:$0xff] %vm95, 0.0
    %97 = vst.msk [vmem:[#allocation2 + $0x8] sm:$0xff] %vm95, 0.0
    %vm98 = vcmask 25600
    %99 = vst.msk [vmem:[#allocation2 + $0x10] sm:$0x3] %vm98, 0.0
    %100 = vst.msk [vmem:[#allocation2 + $0x1b0] sm:$0xff] %vm95, 0.0
    %101 = vst.msk [vmem:[#allocation2 + $0x1b8] sm:$0xff] %vm95, 0.0
    %102 = vst.msk [vmem:[#allocation2 + $0x1c0] sm:$0x3] %vm98, 0.0
    %s103 = scalar_lea.vmem [#allocation2], 408
    %104 = vst.msk [vmem:[%s103] sm:$0xff] %vm95, 0.0
    %105 = vst.msk [vmem:[%s103 + $0x8] sm:$0xff] %vm95, 0.0
    %106 = vst.msk [vmem:[%s103 + $0x10] sm:$0x3] %vm98, 0.0
    %107 = vst.msk [vmem:[%s103 + $0x1b0] sm:$0xff] %vm95, 0.0
    %108 = vst.msk [vmem:[%s103 + $0x1b8] sm:$0xff] %vm95, 0.0
    %109 = vst.msk [vmem:[%s103 + $0x1c0] sm:$0x3] %vm98, 0.0
    %vm110 = vcmask 24576
    %111 = vst.msk [vmem:[#allocation2] sm:$0x1] %vm110, 0.0
    %112 = vst.msk [vmem:[#allocation2 + $0x18] sm:$0x1] %vm110, 0.0
    %113 = vst.msk [vmem:[#allocation2 + $0x30] sm:$0x1] %vm110, 0.0
    %114 = vst.msk [vmem:[#allocation2 + $0x48] sm:$0x1] %vm110, 0.0
    %115 = vst.msk [vmem:[#allocation2 + $0x60] sm:$0x1] %vm110, 0.0
    %116 = vst.msk [vmem:[#allocation2 + $0x78] sm:$0x1] %vm110, 0.0
    %117 = vst.msk [vmem:[#allocation2 + $0x90] sm:$0x1] %vm110, 0.0
    %118 = vst.msk [vmem:[#allocation2 + $0xa8] sm:$0x1] %vm110, 0.0
    %119 = vst.msk [vmem:[#allocation2 + $0xc0] sm:$0x1] %vm110, 0.0
    %120 = vst.msk [vmem:[#allocation2 + $0xd8] sm:$0x1] %vm110, 0.0
    %121 = vst.msk [vmem:[#allocation2 + $0xf0] sm:$0x1] %vm110, 0.0
    %122 = vst.msk [vmem:[#allocation2 + $0x108] sm:$0x1] %vm110, 0.0
    %123 = vst.msk [vmem:[#allocation2 + $0x120] sm:$0x1] %vm110, 0.0
    %124 = vst.msk [vmem:[#allocation2 + $0x138] sm:$0x1] %vm110, 0.0
    %125 = vst.msk [vmem:[#allocation2 + $0x150] sm:$0x1] %vm110, 0.0
    %126 = vst.msk [vmem:[#allocation2 + $0x168] sm:$0x1] %vm110, 0.0
    %127 = vst.msk [vmem:[#allocation2 + $0x180] sm:$0x1] %vm110, 0.0
    %128 = vst.msk [vmem:[#allocation2 + $0x198] sm:$0x1] %vm110, 0.0
    %129 = vst.msk [vmem:[#allocation2 + $0x1b0] sm:$0x1] %vm110, 0.0
    %130 = vst.msk [vmem:[#allocation2 + $0x1c8] sm:$0x1] %vm110, 0.0
    %131 = vst.msk [vmem:[#allocation2 + $0x1e0] sm:$0x1] %vm110, 0.0
    %132 = vst.msk [vmem:[#allocation2 + $0x1f8] sm:$0x1] %vm110, 0.0
    %133 = vst.msk [vmem:[#allocation2 + $0x210] sm:$0x1] %vm110, 0.0
    %134 = vst.msk [vmem:[#allocation2 + $0x228] sm:$0x1] %vm110, 0.0
    %135 = vst.msk [vmem:[#allocation2 + $0x240] sm:$0x1] %vm110, 0.0
    %136 = vst.msk [vmem:[#allocation2 + $0x258] sm:$0x1] %vm110, 0.0
    %137 = vst.msk [vmem:[#allocation2 + $0x270] sm:$0x1] %vm110, 0.0
    %138 = vst.msk [vmem:[#allocation2 + $0x288] sm:$0x1] %vm110, 0.0
    %139 = vst.msk [vmem:[#allocation2 + $0x2a0] sm:$0x1] %vm110, 0.0
    %140 = vst.msk [vmem:[#allocation2 + $0x2b8] sm:$0x1] %vm110, 0.0
    %141 = vst.msk [vmem:[#allocation2 + $0x2d0] sm:$0x1] %vm110, 0.0
    %142 = vst.msk [vmem:[#allocation2 + $0x2e8] sm:$0x1] %vm110, 0.0
    %143 = vst.msk [vmem:[#allocation2 + $0x300] sm:$0x1] %vm110, 0.0
    %144 = vst.msk [vmem:[#allocation2 + $0x318] sm:$0x1] %vm110, 0.0
    %145 = vst.msk [vmem:[#allocation2 + $0x330] sm:$0x1] %vm110, 0.0
    %146 = vst.msk [vmem:[#allocation2 + $0x348] sm:$0x1] %vm110, 0.0
    %147 = vst.msk [vmem:[#allocation2 + $0x11] sm:$0x1] %vm110, 0.0
    %148 = vst.msk [vmem:[#allocation2 + $0x29] sm:$0x1] %vm110, 0.0
    %149 = vst.msk [vmem:[#allocation2 + $0x41] sm:$0x1] %vm110, 0.0
    %150 = vst.msk [vmem:[#allocation2 + $0x59] sm:$0x1] %vm110, 0.0
    %151 = vst.msk [vmem:[#allocation2 + $0x71] sm:$0x1] %vm110, 0.0
    %152 = vst.msk [vmem:[#allocation2 + $0x89] sm:$0x1] %vm110, 0.0
    %153 = vst.msk [vmem:[#allocation2 + $0xa1] sm:$0x1] %vm110, 0.0
    %154 = vst.msk [vmem:[#allocation2 + $0xb9] sm:$0x1] %vm110, 0.0
    %155 = vst.msk [vmem:[#allocation2 + $0xd1] sm:$0x1] %vm110, 0.0
    %156 = vst.msk [vmem:[#allocation2 + $0xe9] sm:$0x1] %vm110, 0.0
    %157 = vst.msk [vmem:[#allocation2 + $0x101] sm:$0x1] %vm110, 0.0
    %158 = vst.msk [vmem:[#allocation2 + $0x119] sm:$0x1] %vm110, 0.0
    %159 = vst.msk [vmem:[#allocation2 + $0x131] sm:$0x1] %vm110, 0.0
    %160 = vst.msk [vmem:[#allocation2 + $0x149] sm:$0x1] %vm110, 0.0
    %161 = vst.msk [vmem:[#allocation2 + $0x161] sm:$0x1] %vm110, 0.0
    %162 = vst.msk [vmem:[#allocation2 + $0x179] sm:$0x1] %vm110, 0.0
    %163 = vst.msk [vmem:[#allocation2 + $0x191] sm:$0x1] %vm110, 0.0
    %164 = vst.msk [vmem:[#allocation2 + $0x1a9] sm:$0x1] %vm110, 0.0
    %165 = vst.msk [vmem:[#allocation2 + $0x1c1] sm:$0x1] %vm110, 0.0
    %166 = vst.msk [vmem:[#allocation2 + $0x1d9] sm:$0x1] %vm110, 0.0
    %167 = vst.msk [vmem:[#allocation2 + $0x1f1] sm:$0x1] %vm110, 0.0
    %168 = vst.msk [vmem:[#allocation2 + $0x209] sm:$0x1] %vm110, 0.0
    %169 = vst.msk [vmem:[#allocation2 + $0x221] sm:$0x1] %vm110, 0.0
    %170 = vst.msk [vmem:[#allocation2 + $0x239] sm:$0x1] %vm110, 0.0
    %171 = vst.msk [vmem:[#allocation2 + $0x251] sm:$0x1] %vm110, 0.0
    %172 = vst.msk [vmem:[#allocation2 + $0x269] sm:$0x1] %vm110, 0.0
    %173 = vst.msk [vmem:[#allocation2 + $0x281] sm:$0x1] %vm110, 0.0
    %174 = vst.msk [vmem:[#allocation2 + $0x299] sm:$0x1] %vm110, 0.0
    %175 = vst.msk [vmem:[#allocation2 + $0x2b1] sm:$0x1] %vm110, 0.0
    %176 = vst.msk [vmem:[#allocation2 + $0x2c9] sm:$0x1] %vm110, 0.0
    %177 = vst.msk [vmem:[#allocation2 + $0x2e1] sm:$0x1] %vm110, 0.0
    %178 = vst.msk [vmem:[#allocation2 + $0x2f9] sm:$0x1] %vm110, 0.0
    %179 = vst.msk [vmem:[#allocation2 + $0x311] sm:$0x1] %vm110, 0.0
    %180 = vst.msk [vmem:[#allocation2 + $0x329] sm:$0x1] %vm110, 0.0
    %181 = vst.msk [vmem:[#allocation2 + $0x341] sm:$0x1] %vm110, 0.0
    %182 = vst.msk [vmem:[#allocation2 + $0x359] sm:$0x1] %vm110, 0.0
    %s183 = scalar_lea.vmem [#allocation2], 24
    %184 = vst.msk [vmem:[%s183 + $0x1] sm:$0xff] %vm95, %v31
    %185 = vst.msk [vmem:[%s183 + $0x9] sm:$0xff] %vm95, %v32
    %186 = vst.msk [vmem:[%s183 + $0x19] sm:$0xff] %vm95, %v33
    %187 = vst.msk [vmem:[%s183 + $0x21] sm:$0xff] %vm95, %v34
    %188 = vst.msk [vmem:[%s183 + $0x31] sm:$0xff] %vm95, %v35
    %189 = vst.msk [vmem:[%s183 + $0x39] sm:$0xff] %vm95, %v36
    %190 = vst.msk [vmem:[%s183 + $0x49] sm:$0xff] %vm95, %v37
    %191 = vst.msk [vmem:[%s183 + $0x51] sm:$0xff] %vm95, %v38
    %192 = vst.msk [vmem:[%s183 + $0x61] sm:$0xff] %vm95, %v39
    %193 = vst.msk [vmem:[%s183 + $0x69] sm:$0xff] %vm95, %v40
    %194 = vst.msk [vmem:[%s183 + $0x79] sm:$0xff] %vm95, %v41
    %195 = vst.msk [vmem:[%s183 + $0x81] sm:$0xff] %vm95, %v42
    %196 = vst.msk [vmem:[%s183 + $0x91] sm:$0xff] %vm95, %v43
    %197 = vst.msk [vmem:[%s183 + $0x99] sm:$0xff] %vm95, %v44
    %198 = vst.msk [vmem:[%s183 + $0xa9] sm:$0xff] %vm95, %v45
    %199 = vst.msk [vmem:[%s183 + $0xb1] sm:$0xff] %vm95, %v46
    %200 = vst.msk [vmem:[%s183 + $0xc1] sm:$0xff] %vm95, %v47
    %201 = vst.msk [vmem:[%s183 + $0xc9] sm:$0xff] %vm95, %v48
    %202 = vst.msk [vmem:[%s183 + $0xd9] sm:$0xff] %vm95, %v49
    %203 = vst.msk [vmem:[%s183 + $0xe1] sm:$0xff] %vm95, %v50
    %204 = vst.msk [vmem:[%s183 + $0xf1] sm:$0xff] %vm95, %v51
    %205 = vst.msk [vmem:[%s183 + $0xf9] sm:$0xff] %vm95, %v52
    %206 = vst.msk [vmem:[%s183 + $0x109] sm:$0xff] %vm95, %v53
    %207 = vst.msk [vmem:[%s183 + $0x111] sm:$0xff] %vm95, %v54
    %208 = vst.msk [vmem:[%s183 + $0x121] sm:$0xff] %vm95, %v55
    %209 = vst.msk [vmem:[%s183 + $0x129] sm:$0xff] %vm95, %v56
    %210 = vst.msk [vmem:[%s183 + $0x139] sm:$0xff] %vm95, %v57
    %211 = vst.msk [vmem:[%s183 + $0x141] sm:$0xff] %vm95, %v58
    %212 = vst.msk [vmem:[%s183 + $0x151] sm:$0xff] %vm95, %v59
    %213 = vst.msk [vmem:[%s183 + $0x159] sm:$0xff] %vm95, %v60
    %214 = vst.msk [vmem:[%s183 + $0x169] sm:$0xff] %vm95, %v61
    %215 = vst.msk [vmem:[%s183 + $0x171] sm:$0xff] %vm95, %v62
    %216 = vst.msk [vmem:[%s183 + $0x1b1] sm:$0xff] %vm95, %v63
    %217 = vst.msk [vmem:[%s183 + $0x1b9] sm:$0xff] %vm95, %v64
    %218 = vst.msk [vmem:[%s183 + $0x1c9] sm:$0xff] %vm95, %v65
    %219 = vst.msk [vmem:[%s183 + $0x1d1] sm:$0xff] %vm95, %v66
    %220 = vst.msk [vmem:[%s183 + $0x1e1] sm:$0xff] %vm95, %v67
    %221 = vst.msk [vmem:[%s183 + $0x1e9] sm:$0xff] %vm95, %v68
    %222 = vst.msk [vmem:[%s183 + $0x1f9] sm:$0xff] %vm95, %v69
    %223 = vst.msk [vmem:[%s183 + $0x201] sm:$0xff] %vm95, %v70
    %224 = vst.msk [vmem:[%s183 + $0x211] sm:$0xff] %vm95, %v71
    %225 = vst.msk [vmem:[%s183 + $0x219] sm:$0xff] %vm95, %v72
    %226 = vst.msk [vmem:[%s183 + $0x229] sm:$0xff] %vm95, %v73
    %227 = vst.msk [vmem:[%s183 + $0x231] sm:$0xff] %vm95, %v74
    %228 = vst.msk [vmem:[%s183 + $0x241] sm:$0xff] %vm95, %v75
    %229 = vst.msk [vmem:[%s183 + $0x249] sm:$0xff] %vm95, %v76
    %230 = vst.msk [vmem:[%s183 + $0x259] sm:$0xff] %vm95, %v77
    %231 = vst.msk [vmem:[%s183 + $0x261] sm:$0xff] %vm95, %v78
    %232 = vst.msk [vmem:[%s183 + $0x271] sm:$0xff] %vm95, %v79
    %233 = vst.msk [vmem:[%s183 + $0x279] sm:$0xff] %vm95, %v80
    %234 = vst.msk [vmem:[%s183 + $0x289] sm:$0xff] %vm95, %v81
    %235 = vst.msk [vmem:[%s183 + $0x291] sm:$0xff] %vm95, %v82
    %236 = vst.msk [vmem:[%s183 + $0x2a1] sm:$0xff] %vm95, %v83
    %237 = vst.msk [vmem:[%s183 + $0x2a9] sm:$0xff] %vm95, %v84
    %238 = vst.msk [vmem:[%s183 + $0x2b9] sm:$0xff] %vm95, %v85
    %239 = vst.msk [vmem:[%s183 + $0x2c1] sm:$0xff] %vm95, %v86
    %240 = vst.msk [vmem:[%s183 + $0x2d1] sm:$0xff] %vm95, %v87
    %241 = vst.msk [vmem:[%s183 + $0x2d9] sm:$0xff] %vm95, %v88
    %242 = vst.msk [vmem:[%s183 + $0x2e9] sm:$0xff] %vm95, %v89
    %243 = vst.msk [vmem:[%s183 + $0x2f1] sm:$0xff] %vm95, %v90
    %244 = vst.msk [vmem:[%s183 + $0x301] sm:$0xff] %vm95, %v91
    %245 = vst.msk [vmem:[%s183 + $0x309] sm:$0xff] %vm95, %v92
    %246 = vst.msk [vmem:[%s183 + $0x319] sm:$0xff] %vm95, %v93
    %247 = vst.msk [vmem:[%s183 + $0x321] sm:$0xff] %vm95, %v94
    %v248 = vld [vmem:[#allocation2] sm:$0xff]
    %v249 = vld [vmem:[#allocation2 + $0x8] sm:$0xff]
    %v250 = vld [vmem:[#allocation2 + $0x18] sm:$0xff]
    %v251 = vld [vmem:[#allocation2 + $0x20] sm:$0xff]
    %v252 = vld [vmem:[#allocation2 + $0x30] sm:$0xff]
    %v253 = vld [vmem:[#allocation2 + $0x38] sm:$0xff]
    %v254 = vld [vmem:[#allocation2 + $0x48] sm:$0xff]
    %v255 = vld [vmem:[#allocation2 + $0x50] sm:$0xff]
    %v256 = vld [vmem:[#allocation2 + $0x60] sm:$0xff]
    %v257 = vld [vmem:[#allocation2 + $0x68] sm:$0xff]
    %v258 = vld [vmem:[#allocation2 + $0x78] sm:$0xff]
    %v259 = vld [vmem:[#allocation2 + $0x80] sm:$0xff]
    %v260 = vld [vmem:[#allocation2 + $0x90] sm:$0xff]
    %v261 = vld [vmem:[#allocation2 + $0x98] sm:$0xff]
    %v262 = vld [vmem:[#allocation2 + $0xa8] sm:$0xff]
    %v263 = vld [vmem:[#allocation2 + $0xb0] sm:$0xff]
    %v264 = vld [vmem:[#allocation2 + $0xc0] sm:$0xff]
    %v265 = vld [vmem:[#allocation2 + $0xc8] sm:$0xff]
    %v266 = vld [vmem:[#allocation2 + $0xd8] sm:$0xff]
    %v267 = vld [vmem:[#allocation2 + $0xe0] sm:$0xff]
    %v268 = vld [vmem:[#allocation2 + $0xf0] sm:$0xff]
    %v269 = vld [vmem:[#allocation2 + $0xf8] sm:$0xff]
    %v270 = vld [vmem:[#allocation2 + $0x108] sm:$0xff]
    %v271 = vld [vmem:[#allocation2 + $0x110] sm:$0xff]
    %v272 = vld [vmem:[#allocation2 + $0x120] sm:$0xff]
    %v273 = vld [vmem:[#allocation2 + $0x128] sm:$0xff]
    %v274 = vld [vmem:[#allocation2 + $0x138] sm:$0xff]
    %v275 = vld [vmem:[#allocation2 + $0x140] sm:$0xff]
    %v276 = vld [vmem:[#allocation2 + $0x150] sm:$0xff]
    %v277 = vld [vmem:[#allocation2 + $0x158] sm:$0xff]
    %v278 = vld [vmem:[#allocation2 + $0x168] sm:$0xff]
    %v279 = vld [vmem:[#allocation2 + $0x170] sm:$0xff]
    %v280 = vld [vmem:[#allocation2 + $0x1b0] sm:$0xff]
    %v281 = vld [vmem:[#allocation2 + $0x1b8] sm:$0xff]
    %v282 = vld [vmem:[#allocation2 + $0x1c8] sm:$0xff]
    %v283 = vld [vmem:[#allocation2 + $0x1d0] sm:$0xff]
    %v284 = vld [vmem:[#allocation2 + $0x1e0] sm:$0xff]
    %v285 = vld [vmem:[#allocation2 + $0x1e8] sm:$0xff]
    %v286 = vld [vmem:[#allocation2 + $0x1f8] sm:$0xff]
    %v287 = vld [vmem:[#allocation2 + $0x200] sm:$0xff]
    %v288 = vld [vmem:[#allocation2 + $0x210] sm:$0xff]
    %v289 = vld [vmem:[#allocation2 + $0x218] sm:$0xff]
    %v290 = vld [vmem:[#allocation2 + $0x228] sm:$0xff]
    %v291 = vld [vmem:[#allocation2 + $0x230] sm:$0xff]
    %v292 = vld [vmem:[#allocation2 + $0x240] sm:$0xff]
    %v293 = vld [vmem:[#allocation2 + $0x248] sm:$0xff]
    %v294 = vld [vmem:[#allocation2 + $0x258] sm:$0xff]
    %v295 = vld [vmem:[#allocation2 + $0x260] sm:$0xff]
    %v296 = vld [vmem:[#allocation2 + $0x270] sm:$0xff]
    %v297 = vld [vmem:[#allocation2 + $0x278] sm:$0xff]
    %v298 = vld [vmem:[#allocation2 + $0x288] sm:$0xff]
    %v299 = vld [vmem:[#allocation2 + $0x290] sm:$0xff]
    %v300 = vld [vmem:[#allocation2 + $0x2a0] sm:$0xff]
    %v301 = vld [vmem:[#allocation2 + $0x2a8] sm:$0xff]
    %v302 = vld [vmem:[#allocation2 + $0x2b8] sm:$0xff]
    %v303 = vld [vmem:[#allocation2 + $0x2c0] sm:$0xff]
    %v304 = vld [vmem:[#allocation2 + $0x2d0] sm:$0xff]
    %v305 = vld [vmem:[#allocation2 + $0x2d8] sm:$0xff]
    %v306 = vld [vmem:[#allocation2 + $0x2e8] sm:$0xff]
    %v307 = vld [vmem:[#allocation2 + $0x2f0] sm:$0xff]
    %v308 = vld [vmem:[#allocation2 + $0x300] sm:$0xff]
    %v309 = vld [vmem:[#allocation2 + $0x308] sm:$0xff]
    %v310 = vld [vmem:[#allocation2 + $0x318] sm:$0xff]
    %v311 = vld [vmem:[#allocation2 + $0x320] sm:$0xff]
    %v312 = vpack.c.bf16 %v249, %v248
    %v313 = vpack.c.bf16 %v251, %v250
    %v314 = vpack.c.bf16 %v253, %v252
    %v315 = vpack.c.bf16 %v255, %v254
    %v316 = vpack.c.bf16 %v257, %v256
    %v317 = vpack.c.bf16 %v259, %v258
    %v318 = vpack.c.bf16 %v261, %v260
    %v319 = vpack.c.bf16 %v263, %v262
    %v320 = vpack.c.bf16 %v265, %v264
    %v321 = vpack.c.bf16 %v267, %v266
    %v322 = vpack.c.bf16 %v269, %v268
    %v323 = vpack.c.bf16 %v271, %v270
    %v324 = vpack.c.bf16 %v273, %v272
    %v325 = vpack.c.bf16 %v275, %v274
    %v326 = vpack.c.bf16 %v277, %v276
    %v327 = vpack.c.bf16 %v279, %v278
    %v328 = vpack.c.bf16 %v281, %v280
    %v329 = vpack.c.bf16 %v283, %v282
    %v330 = vpack.c.bf16 %v285, %v284
    %v331 = vpack.c.bf16 %v287, %v286
    %v332 = vpack.c.bf16 %v289, %v288
    %v333 = vpack.c.bf16 %v291, %v290
    %v334 = vpack.c.bf16 %v293, %v292
    %v335 = vpack.c.bf16 %v295, %v294
    %v336 = vpack.c.bf16 %v297, %v296
    %v337 = vpack.c.bf16 %v299, %v298
    %v338 = vpack.c.bf16 %v301, %v300
    %v339 = vpack.c.bf16 %v303, %v302
    %v340 = vpack.c.bf16 %v305, %v304
    %v341 = vpack.c.bf16 %v307, %v306
    %v342 = vpack.c.bf16 %v309, %v308
    %v343 = vpack.c.bf16 %v311, %v310
    %v344 = vld [vmem:[#allocation2 + $0x1] sm:$0xff]
    %v345 = vld [vmem:[#allocation2 + $0x9] sm:$0xff]
    %v346 = vld [vmem:[#allocation2 + $0x19] sm:$0xff]
    %v347 = vld [vmem:[#allocation2 + $0x21] sm:$0xff]
    %v348 = vld [vmem:[#allocation2 + $0x31] sm:$0xff]
    %v349 = vld [vmem:[#allocation2 + $0x39] sm:$0xff]
    %v350 = vld [vmem:[#allocation2 + $0x49] sm:$0xff]
    %v351 = vld [vmem:[#allocation2 + $0x51] sm:$0xff]
    %v352 = vld [vmem:[#allocation2 + $0x61] sm:$0xff]
    %v353 = vld [vmem:[#allocation2 + $0x69] sm:$0xff]
    %v354 = vld [vmem:[#allocation2 + $0x79] sm:$0xff]
    %v355 = vld [vmem:[#allocation2 + $0x81] sm:$0xff]
    %v356 = vld [vmem:[#allocation2 + $0x91] sm:$0xff]
    %v357 = vld [vmem:[#allocation2 + $0x99] sm:$0xff]
    %v358 = vld [vmem:[#allocation2 + $0xa9] sm:$0xff]
    %v359 = vld [vmem:[#allocation2 + $0xb1] sm:$0xff]
    %v360 = vld [vmem:[#allocation2 + $0xc1] sm:$0xff]
    %v361 = vld [vmem:[#allocation2 + $0xc9] sm:$0xff]
    %v362 = vld [vmem:[#allocation2 + $0xd9] sm:$0xff]
    %v363 = vld [vmem:[#allocation2 + $0xe1] sm:$0xff]
    %v364 = vld [vmem:[#allocation2 + $0xf1] sm:$0xff]
    %v365 = vld [vmem:[#allocation2 + $0xf9] sm:$0xff]
    %v366 = vld [vmem:[#allocation2 + $0x109] sm:$0xff]
    %v367 = vld [vmem:[#allocation2 + $0x111] sm:$0xff]
    %v368 = vld [vmem:[#allocation2 + $0x121] sm:$0xff]
    %v369 = vld [vmem:[#allocation2 + $0x129] sm:$0xff]
    %v370 = vld [vmem:[#allocation2 + $0x139] sm:$0xff]
    %v371 = vld [vmem:[#allocation2 + $0x141] sm:$0xff]
    %v372 = vld [vmem:[#allocation2 + $0x151] sm:$0xff]
    %v373 = vld [vmem:[#allocation2 + $0x159] sm:$0xff]
    %v374 = vld [vmem:[#allocation2 + $0x169] sm:$0xff]
    %v375 = vld [vmem:[#allocation2 + $0x171] sm:$0xff]
    %v376 = vld [vmem:[#allocation2 + $0x1b1] sm:$0xff]
    %v377 = vld [vmem:[#allocation2 + $0x1b9] sm:$0xff]
    %v378 = vld [vmem:[#allocation2 + $0x1c9] sm:$0xff]
    %v379 = vld [vmem:[#allocation2 + $0x1d1] sm:$0xff]
    %v380 = vld [vmem:[#allocation2 + $0x1e1] sm:$0xff]
    %v381 = vld [vmem:[#allocation2 + $0x1e9] sm:$0xff]
    %v382 = vld [vmem:[#allocation2 + $0x1f9] sm:$0xff]
    %v383 = vld [vmem:[#allocation2 + $0x201] sm:$0xff]
    %v384 = vld [vmem:[#allocation2 + $0x211] sm:$0xff]
    %v385 = vld [vmem:[#allocation2 + $0x219] sm:$0xff]
    %v386 = vld [vmem:[#allocation2 + $0x229] sm:$0xff]
    %v387 = vld [vmem:[#allocation2 + $0x231] sm:$0xff]
    %v388 = vld [vmem:[#allocation2 + $0x241] sm:$0xff]
    %v389 = vld [vmem:[#allocation2 + $0x249] sm:$0xff]
    %v390 = vld [vmem:[#allocation2 + $0x259] sm:$0xff]
    %v391 = vld [vmem:[#allocation2 + $0x261] sm:$0xff]
    %v392 = vld [vmem:[#allocation2 + $0x271] sm:$0xff]
    %v393 = vld [vmem:[#allocation2 + $0x279] sm:$0xff]
    %v394 = vld [vmem:[#allocation2 + $0x289] sm:$0xff]
    %v395 = vld [vmem:[#allocation2 + $0x291] sm:$0xff]
    %v396 = vld [vmem:[#allocation2 + $0x2a1] sm:$0xff]
    %v397 = vld [vmem:[#allocation2 + $0x2a9] sm:$0xff]
    %v398 = vld [vmem:[#allocation2 + $0x2b9] sm:$0xff]
    %v399 = vld [vmem:[#allocation2 + $0x2c1] sm:$0xff]
    %v400 = vld [vmem:[#allocation2 + $0x2d1] sm:$0xff]
    %v401 = vld [vmem:[#allocation2 + $0x2d9] sm:$0xff]
    %v402 = vld [vmem:[#allocation2 + $0x2e9] sm:$0xff]
    %v403 = vld [vmem:[#allocation2 + $0x2f1] sm:$0xff]
    %v404 = vld [vmem:[#allocation2 + $0x301] sm:$0xff]
    %v405 = vld [vmem:[#allocation2 + $0x309] sm:$0xff]
    %v406 = vld [vmem:[#allocation2 + $0x319] sm:$0xff]
    %v407 = vld [vmem:[#allocation2 + $0x321] sm:$0xff]
    %v408 = vpack.c.bf16 %v345, %v344
    %v409 = vpack.c.bf16 %v347, %v346
    %v410 = vpack.c.bf16 %v349, %v348
    %v411 = vpack.c.bf16 %v351, %v350
    %v412 = vpack.c.bf16 %v353, %v352
    %v413 = vpack.c.bf16 %v355, %v354
    %v414 = vpack.c.bf16 %v357, %v356
    %v415 = vpack.c.bf16 %v359, %v358
    %v416 = vpack.c.bf16 %v361, %v360
    %v417 = vpack.c.bf16 %v363, %v362
    %v418 = vpack.c.bf16 %v365, %v364
    %v419 = vpack.c.bf16 %v367, %v366
    %v420 = vpack.c.bf16 %v369, %v368
    %v421 = vpack.c.bf16 %v371, %v370
    %v422 = vpack.c.bf16 %v373, %v372
    %v423 = vpack.c.bf16 %v375, %v374
    %v424 = vpack.c.bf16 %v377, %v376
    %v425 = vpack.c.bf16 %v379, %v378
    %v426 = vpack.c.bf16 %v381, %v380
    %v427 = vpack.c.bf16 %v383, %v382
    %v428 = vpack.c.bf16 %v385, %v384
    %v429 = vpack.c.bf16 %v387, %v386
    %v430 = vpack.c.bf16 %v389, %v388
    %v431 = vpack.c.bf16 %v391, %v390
    %v432 = vpack.c.bf16 %v393, %v392
    %v433 = vpack.c.bf16 %v395, %v394
    %v434 = vpack.c.bf16 %v397, %v396
    %v435 = vpack.c.bf16 %v399, %v398
    %v436 = vpack.c.bf16 %v401, %v400
    %v437 = vpack.c.bf16 %v403, %v402
    %v438 = vpack.c.bf16 %v405, %v404
    %v439 = vpack.c.bf16 %v407, %v406
    %v440 = vld [vmem:[#allocation2 + $0x2] sm:$0xff]
    %v441 = vld [vmem:[#allocation2 + $0xa] sm:$0xff]
    %v442 = vld [vmem:[#allocation2 + $0x1a] sm:$0xff]
    %v443 = vld [vmem:[#allocation2 + $0x22] sm:$0xff]
    %v444 = vld [vmem:[#allocation2 + $0x32] sm:$0xff]
    %v445 = vld [vmem:[#allocation2 + $0x3a] sm:$0xff]
    %v446 = vld [vmem:[#allocation2 + $0x4a] sm:$0xff]
    %v447 = vld [vmem:[#allocation2 + $0x52] sm:$0xff]
    %v448 = vld [vmem:[#allocation2 + $0x62] sm:$0xff]
    %v449 = vld [vmem:[#allocation2 + $0x6a] sm:$0xff]
    %v450 = vld [vmem:[#allocation2 + $0x7a] sm:$0xff]
    %v451 = vld [vmem:[#allocation2 + $0x82] sm:$0xff]
    %v452 = vld [vmem:[#allocation2 + $0x92] sm:$0xff]
    %v453 = vld [vmem:[#allocation2 + $0x9a] sm:$0xff]
    %v454 = vld [vmem:[#allocation2 + $0xaa] sm:$0xff]
    %v455 = vld [vmem:[#allocation2 + $0xb2] sm:$0xff]
    %v456 = vld [vmem:[#allocation2 + $0xc2] sm:$0xff]
    %v457 = vld [vmem:[#allocation2 + $0xca] sm:$0xff]
    %v458 = vld [vmem:[#allocation2 + $0xda] sm:$0xff]
    %v459 = vld [vmem:[#allocation2 + $0xe2] sm:$0xff]
    %v460 = vld [vmem:[#allocation2 + $0xf2] sm:$0xff]
    %v461 = vld [vmem:[#allocation2 + $0xfa] sm:$0xff]
    %v462 = vld [vmem:[#allocation2 + $0x10a] sm:$0xff]
    %v463 = vld [vmem:[#allocation2 + $0x112] sm:$0xff]
    %v464 = vld [vmem:[#allocation2 + $0x122] sm:$0xff]
    %v465 = vld [vmem:[#allocation2 + $0x12a] sm:$0xff]
    %v466 = vld [vmem:[#allocation2 + $0x13a] sm:$0xff]
    %v467 = vld [vmem:[#allocation2 + $0x142] sm:$0xff]
    %v468 = vld [vmem:[#allocation2 + $0x152] sm:$0xff]
    %v469 = vld [vmem:[#allocation2 + $0x15a] sm:$0xff]
    %v470 = vld [vmem:[#allocation2 + $0x16a] sm:$0xff]
    %v471 = vld [vmem:[#allocation2 + $0x172] sm:$0xff]
    %v472 = vld [vmem:[#allocation2 + $0x1b2] sm:$0xff]
    %v473 = vld [vmem:[#allocation2 + $0x1ba] sm:$0xff]
    %v474 = vld [vmem:[#allocation2 + $0x1ca] sm:$0xff]
    %v475 = vld [vmem:[#allocation2 + $0x1d2] sm:$0xff]
    %v476 = vld [vmem:[#allocation2 + $0x1e2] sm:$0xff]
    %v477 = vld [vmem:[#allocation2 + $0x1ea] sm:$0xff]
    %v478 = vld [vmem:[#allocation2 + $0x1fa] sm:$0xff]
    %v479 = vld [vmem:[#allocation2 + $0x202] sm:$0xff]
    %v480 = vld [vmem:[#allocation2 + $0x212] sm:$0xff]
    %v481 = vld [vmem:[#allocation2 + $0x21a] sm:$0xff]
    %v482 = vld [vmem:[#allocation2 + $0x22a] sm:$0xff]
    %v483 = vld [vmem:[#allocation2 + $0x232] sm:$0xff]
    %v484 = vld [vmem:[#allocation2 + $0x242] sm:$0xff]
    %v485 = vld [vmem:[#allocation2 + $0x24a] sm:$0xff]
    %v486 = vld [vmem:[#allocation2 + $0x25a] sm:$0xff]
    %v487 = vld [vmem:[#allocation2 + $0x262] sm:$0xff]
    %v488 = vld [vmem:[#allocation2 + $0x272] sm:$0xff]
    %v489 = vld [vmem:[#allocation2 + $0x27a] sm:$0xff]
    %v490 = vld [vmem:[#allocation2 + $0x28a] sm:$0xff]
    %v491 = vld [vmem:[#allocation2 + $0x292] sm:$0xff]
    %v492 = vld [vmem:[#allocation2 + $0x2a2] sm:$0xff]
    %v493 = vld [vmem:[#allocation2 + $0x2aa] sm:$0xff]
    %v494 = vld [vmem:[#allocation2 + $0x2ba] sm:$0xff]
    %v495 = vld [vmem:[#allocation2 + $0x2c2] sm:$0xff]
    %v496 = vld [vmem:[#allocation2 + $0x2d2] sm:$0xff]
    %v497 = vld [vmem:[#allocation2 + $0x2da] sm:$0xff]
    %v498 = vld [vmem:[#allocation2 + $0x2ea] sm:$0xff]
    %v499 = vld [vmem:[#allocation2 + $0x2f2] sm:$0xff]
    %v500 = vld [vmem:[#allocation2 + $0x302] sm:$0xff]
    %v501 = vld [vmem:[#allocation2 + $0x30a] sm:$0xff]
    %v502 = vld [vmem:[#allocation2 + $0x31a] sm:$0xff]
    %v503 = vld [vmem:[#allocation2 + $0x322] sm:$0xff]
    %v504 = vpack.c.bf16 %v441, %v440
    %v505 = vpack.c.bf16 %v443, %v442
    %v506 = vpack.c.bf16 %v445, %v444
    %v507 = vpack.c.bf16 %v447, %v446
    %v508 = vpack.c.bf16 %v449, %v448
    %v509 = vpack.c.bf16 %v451, %v450
    %v510 = vpack.c.bf16 %v453, %v452
    %v511 = vpack.c.bf16 %v455, %v454
    %v512 = vpack.c.bf16 %v457, %v456
    %v513 = vpack.c.bf16 %v459, %v458
    %v514 = vpack.c.bf16 %v461, %v460
    %v515 = vpack.c.bf16 %v463, %v462
    %v516 = vpack.c.bf16 %v465, %v464
    %v517 = vpack.c.bf16 %v467, %v466
    %v518 = vpack.c.bf16 %v469, %v468
    %v519 = vpack.c.bf16 %v471, %v470
    %v520 = vpack.c.bf16 %v473, %v472
    %v521 = vpack.c.bf16 %v475, %v474
    %v522 = vpack.c.bf16 %v477, %v476
    %v523 = vpack.c.bf16 %v479, %v478
    %v524 = vpack.c.bf16 %v481, %v480
    %v525 = vpack.c.bf16 %v483, %v482
    %v526 = vpack.c.bf16 %v485, %v484
    %v527 = vpack.c.bf16 %v487, %v486
    %v528 = vpack.c.bf16 %v489, %v488
    %v529 = vpack.c.bf16 %v491, %v490
    %v530 = vpack.c.bf16 %v493, %v492
    %v531 = vpack.c.bf16 %v495, %v494
    %v532 = vpack.c.bf16 %v497, %v496
    %v533 = vpack.c.bf16 %v499, %v498
    %v534 = vpack.c.bf16 %v501, %v500
    %v535 = vpack.c.bf16 %v503, %v502
    %v536 = vld [vmem:[%s183] sm:$0xff]
    %v537 = vld [vmem:[%s183 + $0x8] sm:$0xff]
    %v538 = vld [vmem:[%s183 + $0x18] sm:$0xff]
    %v539 = vld [vmem:[%s183 + $0x20] sm:$0xff]
    %v540 = vld [vmem:[%s183 + $0x30] sm:$0xff]
    %v541 = vld [vmem:[%s183 + $0x38] sm:$0xff]
    %v542 = vld [vmem:[%s183 + $0x48] sm:$0xff]
    %v543 = vld [vmem:[%s183 + $0x50] sm:$0xff]
    %v544 = vld [vmem:[%s183 + $0x60] sm:$0xff]
    %v545 = vld [vmem:[%s183 + $0x68] sm:$0xff]
    %v546 = vld [vmem:[%s183 + $0x78] sm:$0xff]
    %v547 = vld [vmem:[%s183 + $0x80] sm:$0xff]
    %v548 = vld [vmem:[%s183 + $0x90] sm:$0xff]
    %v549 = vld [vmem:[%s183 + $0x98] sm:$0xff]
    %v550 = vld [vmem:[%s183 + $0xa8] sm:$0xff]
    %v551 = vld [vmem:[%s183 + $0xb0] sm:$0xff]
    %v552 = vld [vmem:[%s183 + $0xc0] sm:$0xff]
    %v553 = vld [vmem:[%s183 + $0xc8] sm:$0xff]
    %v554 = vld [vmem:[%s183 + $0xd8] sm:$0xff]
    %v555 = vld [vmem:[%s183 + $0xe0] sm:$0xff]
    %v556 = vld [vmem:[%s183 + $0xf0] sm:$0xff]
    %v557 = vld [vmem:[%s183 + $0xf8] sm:$0xff]
    %v558 = vld [vmem:[%s183 + $0x108] sm:$0xff]
    %v559 = vld [vmem:[%s183 + $0x110] sm:$0xff]
    %v560 = vld [vmem:[%s183 + $0x120] sm:$0xff]
    %v561 = vld [vmem:[%s183 + $0x128] sm:$0xff]
    %v562 = vld [vmem:[%s183 + $0x138] sm:$0xff]
    %v563 = vld [vmem:[%s183 + $0x140] sm:$0xff]
    %v564 = vld [vmem:[%s183 + $0x150] sm:$0xff]
    %v565 = vld [vmem:[%s183 + $0x158] sm:$0xff]
    %v566 = vld [vmem:[%s183 + $0x168] sm:$0xff]
    %v567 = vld [vmem:[%s183 + $0x170] sm:$0xff]
    %v568 = vld [vmem:[%s183 + $0x1b0] sm:$0xff]
    %v569 = vld [vmem:[%s183 + $0x1b8] sm:$0xff]
    %v570 = vld [vmem:[%s183 + $0x1c8] sm:$0xff]
    %v571 = vld [vmem:[%s183 + $0x1d0] sm:$0xff]
    %v572 = vld [vmem:[%s183 + $0x1e0] sm:$0xff]
    %v573 = vld [vmem:[%s183 + $0x1e8] sm:$0xff]
    %v574 = vld [vmem:[%s183 + $0x1f8] sm:$0xff]
    %v575 = vld [vmem:[%s183 + $0x200] sm:$0xff]
    %v576 = vld [vmem:[%s183 + $0x210] sm:$0xff]
    %v577 = vld [vmem:[%s183 + $0x218] sm:$0xff]
    %v578 = vld [vmem:[%s183 + $0x228] sm:$0xff]
    %v579 = vld [vmem:[%s183 + $0x230] sm:$0xff]
    %v580 = vld [vmem:[%s183 + $0x240] sm:$0xff]
    %v581 = vld [vmem:[%s183 + $0x248] sm:$0xff]
    %v582 = vld [vmem:[%s183 + $0x258] sm:$0xff]
    %v583 = vld [vmem:[%s183 + $0x260] sm:$0xff]
    %v584 = vld [vmem:[%s183 + $0x270] sm:$0xff]
    %v585 = vld [vmem:[%s183 + $0x278] sm:$0xff]
    %v586 = vld [vmem:[%s183 + $0x288] sm:$0xff]
    %v587 = vld [vmem:[%s183 + $0x290] sm:$0xff]
    %v588 = vld [vmem:[%s183 + $0x2a0] sm:$0xff]
    %v589 = vld [vmem:[%s183 + $0x2a8] sm:$0xff]
    %v590 = vld [vmem:[%s183 + $0x2b8] sm:$0xff]
    %v591 = vld [vmem:[%s183 + $0x2c0] sm:$0xff]
    %v592 = vld [vmem:[%s183 + $0x2d0] sm:$0xff]
    %v593 = vld [vmem:[%s183 + $0x2d8] sm:$0xff]
    %v594 = vld [vmem:[%s183 + $0x2e8] sm:$0xff]
    %v595 = vld [vmem:[%s183 + $0x2f0] sm:$0xff]
    %v596 = vld [vmem:[%s183 + $0x300] sm:$0xff]
    %v597 = vld [vmem:[%s183 + $0x308] sm:$0xff]
    %v598 = vld [vmem:[%s183 + $0x318] sm:$0xff]
    %v599 = vld [vmem:[%s183 + $0x320] sm:$0xff]
    %v600 = vpack.c.bf16 %v537, %v536
    %v601 = vpack.c.bf16 %v539, %v538
    %v602 = vpack.c.bf16 %v541, %v540
    %v603 = vpack.c.bf16 %v543, %v542
    %v604 = vpack.c.bf16 %v545, %v544
    %v605 = vpack.c.bf16 %v547, %v546
    %v606 = vpack.c.bf16 %v549, %v548
    %v607 = vpack.c.bf16 %v551, %v550
    %v608 = vpack.c.bf16 %v553, %v552
    %v609 = vpack.c.bf16 %v555, %v554
    %v610 = vpack.c.bf16 %v557, %v556
    %v611 = vpack.c.bf16 %v559, %v558
    %v612 = vpack.c.bf16 %v561, %v560
    %v613 = vpack.c.bf16 %v563, %v562
    %v614 = vpack.c.bf16 %v565, %v564
    %v615 = vpack.c.bf16 %v567, %v566
    %v616 = vpack.c.bf16 %v569, %v568
    %v617 = vpack.c.bf16 %v571, %v570
    %v618 = vpack.c.bf16 %v573, %v572
    %v619 = vpack.c.bf16 %v575, %v574
    %v620 = vpack.c.bf16 %v577, %v576
    %v621 = vpack.c.bf16 %v579, %v578
    %v622 = vpack.c.bf16 %v581, %v580
    %v623 = vpack.c.bf16 %v583, %v582
    %v624 = vpack.c.bf16 %v585, %v584
    %v625 = vpack.c.bf16 %v587, %v586
    %v626 = vpack.c.bf16 %v589, %v588
    %v627 = vpack.c.bf16 %v591, %v590
    %v628 = vpack.c.bf16 %v593, %v592
    %v629 = vpack.c.bf16 %v595, %v594
    %v630 = vpack.c.bf16 %v597, %v596
    %v631 = vpack.c.bf16 %v599, %v598
    %v632 = vld [vmem:[%s183 + $0x1] sm:$0xff]
    %v633 = vld [vmem:[%s183 + $0x9] sm:$0xff]
    %v634 = vld [vmem:[%s183 + $0x19] sm:$0xff]
    %v635 = vld [vmem:[%s183 + $0x21] sm:$0xff]
    %v636 = vld [vmem:[%s183 + $0x31] sm:$0xff]
    %v637 = vld [vmem:[%s183 + $0x39] sm:$0xff]
    %v638 = vld [vmem:[%s183 + $0x49] sm:$0xff]
    %v639 = vld [vmem:[%s183 + $0x51] sm:$0xff]
    %v640 = vld [vmem:[%s183 + $0x61] sm:$0xff]
    %v641 = vld [vmem:[%s183 + $0x69] sm:$0xff]
    %v642 = vld [vmem:[%s183 + $0x79] sm:$0xff]
    %v643 = vld [vmem:[%s183 + $0x81] sm:$0xff]
    %v644 = vld [vmem:[%s183 + $0x91] sm:$0xff]
    %v645 = vld [vmem:[%s183 + $0x99] sm:$0xff]
    %v646 = vld [vmem:[%s183 + $0xa9] sm:$0xff]
    %v647 = vld [vmem:[%s183 + $0xb1] sm:$0xff]
    %v648 = vld [vmem:[%s183 + $0xc1] sm:$0xff]
    %v649 = vld [vmem:[%s183 + $0xc9] sm:$0xff]
    %v650 = vld [vmem:[%s183 + $0xd9] sm:$0xff]
    %v651 = vld [vmem:[%s183 + $0xe1] sm:$0xff]
    %v652 = vld [vmem:[%s183 + $0xf1] sm:$0xff]
    %v653 = vld [vmem:[%s183 + $0xf9] sm:$0xff]
    %v654 = vld [vmem:[%s183 + $0x109] sm:$0xff]
    %v655 = vld [vmem:[%s183 + $0x111] sm:$0xff]
    %v656 = vld [vmem:[%s183 + $0x121] sm:$0xff]
    %v657 = vld [vmem:[%s183 + $0x129] sm:$0xff]
    %v658 = vld [vmem:[%s183 + $0x139] sm:$0xff]
    %v659 = vld [vmem:[%s183 + $0x141] sm:$0xff]
    %v660 = vld [vmem:[%s183 + $0x151] sm:$0xff]
    %v661 = vld [vmem:[%s183 + $0x159] sm:$0xff]
    %v662 = vld [vmem:[%s183 + $0x169] sm:$0xff]
    %v663 = vld [vmem:[%s183 + $0x171] sm:$0xff]
    %v664 = vld [vmem:[%s183 + $0x1b1] sm:$0xff]
    %v665 = vld [vmem:[%s183 + $0x1b9] sm:$0xff]
    %v666 = vld [vmem:[%s183 + $0x1c9] sm:$0xff]
    %v667 = vld [vmem:[%s183 + $0x1d1] sm:$0xff]
    %v668 = vld [vmem:[%s183 + $0x1e1] sm:$0xff]
    %v669 = vld [vmem:[%s183 + $0x1e9] sm:$0xff]
    %v670 = vld [vmem:[%s183 + $0x1f9] sm:$0xff]
    %v671 = vld [vmem:[%s183 + $0x201] sm:$0xff]
    %v672 = vld [vmem:[%s183 + $0x211] sm:$0xff]
    %v673 = vld [vmem:[%s183 + $0x219] sm:$0xff]
    %v674 = vld [vmem:[%s183 + $0x229] sm:$0xff]
    %v675 = vld [vmem:[%s183 + $0x231] sm:$0xff]
    %v676 = vld [vmem:[%s183 + $0x241] sm:$0xff]
    %v677 = vld [vmem:[%s183 + $0x249] sm:$0xff]
    %v678 = vld [vmem:[%s183 + $0x259] sm:$0xff]
    %v679 = vld [vmem:[%s183 + $0x261] sm:$0xff]
    %v680 = vld [vmem:[%s183 + $0x271] sm:$0xff]
    %v681 = vld [vmem:[%s183 + $0x279] sm:$0xff]
    %v682 = vld [vmem:[%s183 + $0x289] sm:$0xff]
    %v683 = vld [vmem:[%s183 + $0x291] sm:$0xff]
    %v684 = vld [vmem:[%s183 + $0x2a1] sm:$0xff]
    %v685 = vld [vmem:[%s183 + $0x2a9] sm:$0xff]
    %v686 = vld [vmem:[%s183 + $0x2b9] sm:$0xff]
    %v687 = vld [vmem:[%s183 + $0x2c1] sm:$0xff]
    %v688 = vld [vmem:[%s183 + $0x2d1] sm:$0xff]
    %v689 = vld [vmem:[%s183 + $0x2d9] sm:$0xff]
    %v690 = vld [vmem:[%s183 + $0x2e9] sm:$0xff]
    %v691 = vld [vmem:[%s183 + $0x2f1] sm:$0xff]
    %v692 = vld [vmem:[%s183 + $0x301] sm:$0xff]
    %v693 = vld [vmem:[%s183 + $0x309] sm:$0xff]
    %v694 = vld [vmem:[%s183 + $0x319] sm:$0xff]
    %v695 = vld [vmem:[%s183 + $0x321] sm:$0xff]
    %v696 = vpack.c.bf16 %v633, %v632
    %v697 = vpack.c.bf16 %v635, %v634
    %v698 = vpack.c.bf16 %v637, %v636
    %v699 = vpack.c.bf16 %v639, %v638
    %v700 = vpack.c.bf16 %v641, %v640
    %v701 = vpack.c.bf16 %v643, %v642
    %v702 = vpack.c.bf16 %v645, %v644
    %v703 = vpack.c.bf16 %v647, %v646
    %v704 = vpack.c.bf16 %v649, %v648
    %v705 = vpack.c.bf16 %v651, %v650
    %v706 = vpack.c.bf16 %v653, %v652
    %v707 = vpack.c.bf16 %v655, %v654
    %v708 = vpack.c.bf16 %v657, %v656
    %v709 = vpack.c.bf16 %v659, %v658
    %v710 = vpack.c.bf16 %v661, %v660
    %v711 = vpack.c.bf16 %v663, %v662
    %v712 = vpack.c.bf16 %v665, %v664
    %v713 = vpack.c.bf16 %v667, %v666
    %v714 = vpack.c.bf16 %v669, %v668
    %v715 = vpack.c.bf16 %v671, %v670
    %v716 = vpack.c.bf16 %v673, %v672
    %v717 = vpack.c.bf16 %v675, %v674
    %v718 = vpack.c.bf16 %v677, %v676
    %v719 = vpack.c.bf16 %v679, %v678
    %v720 = vpack.c.bf16 %v681, %v680
    %v721 = vpack.c.bf16 %v683, %v682
    %v722 = vpack.c.bf16 %v685, %v684
    %v723 = vpack.c.bf16 %v687, %v686
    %v724 = vpack.c.bf16 %v689, %v688
    %v725 = vpack.c.bf16 %v691, %v690
    %v726 = vpack.c.bf16 %v693, %v692
    %v727 = vpack.c.bf16 %v695, %v694
    %v728 = vld [vmem:[%s183 + $0x2] sm:$0xff]
    %v729 = vld [vmem:[%s183 + $0xa] sm:$0xff]
    %v730 = vld [vmem:[%s183 + $0x1a] sm:$0xff]
    %v731 = vld [vmem:[%s183 + $0x22] sm:$0xff]
    %v732 = vld [vmem:[%s183 + $0x32] sm:$0xff]
    %v733 = vld [vmem:[%s183 + $0x3a] sm:$0xff]
    %v734 = vld [vmem:[%s183 + $0x4a] sm:$0xff]
    %v735 = vld [vmem:[%s183 + $0x52] sm:$0xff]
    %v736 = vld [vmem:[%s183 + $0x62] sm:$0xff]
    %v737 = vld [vmem:[%s183 + $0x6a] sm:$0xff]
    %v738 = vld [vmem:[%s183 + $0x7a] sm:$0xff]
    %v739 = vld [vmem:[%s183 + $0x82] sm:$0xff]
    %v740 = vld [vmem:[%s183 + $0x92] sm:$0xff]
    %v741 = vld [vmem:[%s183 + $0x9a] sm:$0xff]
    %v742 = vld [vmem:[%s183 + $0xaa] sm:$0xff]
    %v743 = vld [vmem:[%s183 + $0xb2] sm:$0xff]
    %v744 = vld [vmem:[%s183 + $0xc2] sm:$0xff]
    %v745 = vld [vmem:[%s183 + $0xca] sm:$0xff]
    %v746 = vld [vmem:[%s183 + $0xda] sm:$0xff]
    %v747 = vld [vmem:[%s183 + $0xe2] sm:$0xff]
    %v748 = vld [vmem:[%s183 + $0xf2] sm:$0xff]
    %v749 = vld [vmem:[%s183 + $0xfa] sm:$0xff]
    %v750 = vld [vmem:[%s183 + $0x10a] sm:$0xff]
    %v751 = vld [vmem:[%s183 + $0x112] sm:$0xff]
    %v752 = vld [vmem:[%s183 + $0x122] sm:$0xff]
    %v753 = vld [vmem:[%s183 + $0x12a] sm:$0xff]
    %v754 = vld [vmem:[%s183 + $0x13a] sm:$0xff]
    %v755 = vld [vmem:[%s183 + $0x142] sm:$0xff]
    %v756 = vld [vmem:[%s183 + $0x152] sm:$0xff]
    %v757 = vld [vmem:[%s183 + $0x15a] sm:$0xff]
    %v758 = vld [vmem:[%s183 + $0x16a] sm:$0xff]
    %v759 = vld [vmem:[%s183 + $0x172] sm:$0xff]
    %v760 = vld [vmem:[%s183 + $0x1b2] sm:$0xff]
    %v761 = vld [vmem:[%s183 + $0x1ba] sm:$0xff]
    %v762 = vld [vmem:[%s183 + $0x1ca] sm:$0xff]
    %v763 = vld [vmem:[%s183 + $0x1d2] sm:$0xff]
    %v764 = vld [vmem:[%s183 + $0x1e2] sm:$0xff]
    %v765 = vld [vmem:[%s183 + $0x1ea] sm:$0xff]
    %v766 = vld [vmem:[%s183 + $0x1fa] sm:$0xff]
    %v767 = vld [vmem:[%s183 + $0x202] sm:$0xff]
    %v768 = vld [vmem:[%s183 + $0x212] sm:$0xff]
    %v769 = vld [vmem:[%s183 + $0x21a] sm:$0xff]
    %v770 = vld [vmem:[%s183 + $0x22a] sm:$0xff]
    %v771 = vld [vmem:[%s183 + $0x232] sm:$0xff]
    %v772 = vld [vmem:[%s183 + $0x242] sm:$0xff]
    %v773 = vld [vmem:[%s183 + $0x24a] sm:$0xff]
    %v774 = vld [vmem:[%s183 + $0x25a] sm:$0xff]
    %v775 = vld [vmem:[%s183 + $0x262] sm:$0xff]
    %v776 = vld [vmem:[%s183 + $0x272] sm:$0xff]
    %v777 = vld [vmem:[%s183 + $0x27a] sm:$0xff]
    %v778 = vld [vmem:[%s183 + $0x28a] sm:$0xff]
    %v779 = vld [vmem:[%s183 + $0x292] sm:$0xff]
    %v780 = vld [vmem:[%s183 + $0x2a2] sm:$0xff]
    %v781 = vld [vmem:[%s183 + $0x2aa] sm:$0xff]
    %v782 = vld [vmem:[%s183 + $0x2ba] sm:$0xff]
    %v783 = vld [vmem:[%s183 + $0x2c2] sm:$0xff]
    %v784 = vld [vmem:[%s183 + $0x2d2] sm:$0xff]
    %v785 = vld [vmem:[%s183 + $0x2da] sm:$0xff]
    %v786 = vld [vmem:[%s183 + $0x2ea] sm:$0xff]
    %v787 = vld [vmem:[%s183 + $0x2f2] sm:$0xff]
    %v788 = vld [vmem:[%s183 + $0x302] sm:$0xff]
    %v789 = vld [vmem:[%s183 + $0x30a] sm:$0xff]
    %v790 = vld [vmem:[%s183 + $0x31a] sm:$0xff]
    %v791 = vld [vmem:[%s183 + $0x322] sm:$0xff]
    %v792 = vpack.c.bf16 %v729, %v728
    %v793 = vpack.c.bf16 %v731, %v730
    %v794 = vpack.c.bf16 %v733, %v732
    %v795 = vpack.c.bf16 %v735, %v734
    %v796 = vpack.c.bf16 %v737, %v736
    %v797 = vpack.c.bf16 %v739, %v738
    %v798 = vpack.c.bf16 %v741, %v740
    %v799 = vpack.c.bf16 %v743, %v742
    %v800 = vpack.c.bf16 %v745, %v744
    %v801 = vpack.c.bf16 %v747, %v746
    %v802 = vpack.c.bf16 %v749, %v748
    %v803 = vpack.c.bf16 %v751, %v750
    %v804 = vpack.c.bf16 %v753, %v752
    %v805 = vpack.c.bf16 %v755, %v754
    %v806 = vpack.c.bf16 %v757, %v756
    %v807 = vpack.c.bf16 %v759, %v758
    %v808 = vpack.c.bf16 %v761, %v760
    %v809 = vpack.c.bf16 %v763, %v762
    %v810 = vpack.c.bf16 %v765, %v764
    %v811 = vpack.c.bf16 %v767, %v766
    %v812 = vpack.c.bf16 %v769, %v768
    %v813 = vpack.c.bf16 %v771, %v770
    %v814 = vpack.c.bf16 %v773, %v772
    %v815 = vpack.c.bf16 %v775, %v774
    %v816 = vpack.c.bf16 %v777, %v776
    %v817 = vpack.c.bf16 %v779, %v778
    %v818 = vpack.c.bf16 %v781, %v780
    %v819 = vpack.c.bf16 %v783, %v782
    %v820 = vpack.c.bf16 %v785, %v784
    %v821 = vpack.c.bf16 %v787, %v786
    %v822 = vpack.c.bf16 %v789, %v788
    %v823 = vpack.c.bf16 %v791, %v790
    %s824 = scalar_lea.vmem [#allocation2], 48
    %v825 = vld [vmem:[%s824] sm:$0xff]
    %v826 = vld [vmem:[%s824 + $0x8] sm:$0xff]
    %v827 = vld [vmem:[%s824 + $0x18] sm:$0xff]
    %v828 = vld [vmem:[%s824 + $0x20] sm:$0xff]
    %v829 = vld [vmem:[%s824 + $0x30] sm:$0xff]
    %v830 = vld [vmem:[%s824 + $0x38] sm:$0xff]
    %v831 = vld [vmem:[%s824 + $0x48] sm:$0xff]
    %v832 = vld [vmem:[%s824 + $0x50] sm:$0xff]
    %v833 = vld [vmem:[%s824 + $0x60] sm:$0xff]
    %v834 = vld [vmem:[%s824 + $0x68] sm:$0xff]
    %v835 = vld [vmem:[%s824 + $0x78] sm:$0xff]
    %v836 = vld [vmem:[%s824 + $0x80] sm:$0xff]
    %v837 = vld [vmem:[%s824 + $0x90] sm:$0xff]
    %v838 = vld [vmem:[%s824 + $0x98] sm:$0xff]
    %v839 = vld [vmem:[%s824 + $0xa8] sm:$0xff]
    %v840 = vld [vmem:[%s824 + $0xb0] sm:$0xff]
    %v841 = vld [vmem:[%s824 + $0xc0] sm:$0xff]
    %v842 = vld [vmem:[%s824 + $0xc8] sm:$0xff]
    %v843 = vld [vmem:[%s824 + $0xd8] sm:$0xff]
    %v844 = vld [vmem:[%s824 + $0xe0] sm:$0xff]
    %v845 = vld [vmem:[%s824 + $0xf0] sm:$0xff]
    %v846 = vld [vmem:[%s824 + $0xf8] sm:$0xff]
    %v847 = vld [vmem:[%s824 + $0x108] sm:$0xff]
    %v848 = vld [vmem:[%s824 + $0x110] sm:$0xff]
    %v849 = vld [vmem:[%s824 + $0x120] sm:$0xff]
    %v850 = vld [vmem:[%s824 + $0x128] sm:$0xff]
    %v851 = vld [vmem:[%s824 + $0x138] sm:$0xff]
    %v852 = vld [vmem:[%s824 + $0x140] sm:$0xff]
    %v853 = vld [vmem:[%s824 + $0x150] sm:$0xff]
    %v854 = vld [vmem:[%s824 + $0x158] sm:$0xff]
    %v855 = vld [vmem:[%s824 + $0x168] sm:$0xff]
    %v856 = vld [vmem:[%s824 + $0x170] sm:$0xff]
    %v857 = vld [vmem:[%s824 + $0x1b0] sm:$0xff]
    %v858 = vld [vmem:[%s824 + $0x1b8] sm:$0xff]
    %v859 = vld [vmem:[%s824 + $0x1c8] sm:$0xff]
    %v860 = vld [vmem:[%s824 + $0x1d0] sm:$0xff]
    %v861 = vld [vmem:[%s824 + $0x1e0] sm:$0xff]
    %v862 = vld [vmem:[%s824 + $0x1e8] sm:$0xff]
    %v863 = vld [vmem:[%s824 + $0x1f8] sm:$0xff]
    %v864 = vld [vmem:[%s824 + $0x200] sm:$0xff]
    %v865 = vld [vmem:[%s824 + $0x210] sm:$0xff]
    %v866 = vld [vmem:[%s824 + $0x218] sm:$0xff]
    %v867 = vld [vmem:[%s824 + $0x228] sm:$0xff]
    %v868 = vld [vmem:[%s824 + $0x230] sm:$0xff]
    %v869 = vld [vmem:[%s824 + $0x240] sm:$0xff]
    %v870 = vld [vmem:[%s824 + $0x248] sm:$0xff]
    %v871 = vld [vmem:[%s824 + $0x258] sm:$0xff]
    %v872 = vld [vmem:[%s824 + $0x260] sm:$0xff]
    %v873 = vld [vmem:[%s824 + $0x270] sm:$0xff]
    %v874 = vld [vmem:[%s824 + $0x278] sm:$0xff]
    %v875 = vld [vmem:[%s824 + $0x288] sm:$0xff]
    %v876 = vld [vmem:[%s824 + $0x290] sm:$0xff]
    %v877 = vld [vmem:[%s824 + $0x2a0] sm:$0xff]
    %v878 = vld [vmem:[%s824 + $0x2a8] sm:$0xff]
    %v879 = vld [vmem:[%s824 + $0x2b8] sm:$0xff]
    %v880 = vld [vmem:[%s824 + $0x2c0] sm:$0xff]
    %v881 = vld [vmem:[%s824 + $0x2d0] sm:$0xff]
    %v882 = vld [vmem:[%s824 + $0x2d8] sm:$0xff]
    %v883 = vld [vmem:[%s824 + $0x2e8] sm:$0xff]
    %v884 = vld [vmem:[%s824 + $0x2f0] sm:$0xff]
    %v885 = vld [vmem:[%s824 + $0x300] sm:$0xff]
    %v886 = vld [vmem:[%s824 + $0x308] sm:$0xff]
    %v887 = vld [vmem:[%s824 + $0x318] sm:$0xff]
    %v888 = vld [vmem:[%s824 + $0x320] sm:$0xff]
    %v889 = vpack.c.bf16 %v826, %v825
    %v890 = vpack.c.bf16 %v828, %v827
    %v891 = vpack.c.bf16 %v830, %v829
    %v892 = vpack.c.bf16 %v832, %v831
    %v893 = vpack.c.bf16 %v834, %v833
    %v894 = vpack.c.bf16 %v836, %v835
    %v895 = vpack.c.bf16 %v838, %v837
    %v896 = vpack.c.bf16 %v840, %v839
    %v897 = vpack.c.bf16 %v842, %v841
    %v898 = vpack.c.bf16 %v844, %v843
    %v899 = vpack.c.bf16 %v846, %v845
    %v900 = vpack.c.bf16 %v848, %v847
    %v901 = vpack.c.bf16 %v850, %v849
    %v902 = vpack.c.bf16 %v852, %v851
    %v903 = vpack.c.bf16 %v854, %v853
    %v904 = vpack.c.bf16 %v856, %v855
    %v905 = vpack.c.bf16 %v858, %v857
    %v906 = vpack.c.bf16 %v860, %v859
    %v907 = vpack.c.bf16 %v862, %v861
    %v908 = vpack.c.bf16 %v864, %v863
    %v909 = vpack.c.bf16 %v866, %v865
    %v910 = vpack.c.bf16 %v868, %v867
    %v911 = vpack.c.bf16 %v870, %v869
    %v912 = vpack.c.bf16 %v872, %v871
    %v913 = vpack.c.bf16 %v874, %v873
    %v914 = vpack.c.bf16 %v876, %v875
    %v915 = vpack.c.bf16 %v878, %v877
    %v916 = vpack.c.bf16 %v880, %v879
    %v917 = vpack.c.bf16 %v882, %v881
    %v918 = vpack.c.bf16 %v884, %v883
    %v919 = vpack.c.bf16 %v886, %v885
    %v920 = vpack.c.bf16 %v888, %v887
    %v921 = vld [vmem:[%s824 + $0x1] sm:$0xff]
    %v922 = vld [vmem:[%s824 + $0x9] sm:$0xff]
    %v923 = vld [vmem:[%s824 + $0x19] sm:$0xff]
    %v924 = vld [vmem:[%s824 + $0x21] sm:$0xff]
    %v925 = vld [vmem:[%s824 + $0x31] sm:$0xff]
    %v926 = vld [vmem:[%s824 + $0x39] sm:$0xff]
    %v927 = vld [vmem:[%s824 + $0x49] sm:$0xff]
    %v928 = vld [vmem:[%s824 + $0x51] sm:$0xff]
    %v929 = vld [vmem:[%s824 + $0x61] sm:$0xff]
    %v930 = vld [vmem:[%s824 + $0x69] sm:$0xff]
    %v931 = vld [vmem:[%s824 + $0x79] sm:$0xff]
    %v932 = vld [vmem:[%s824 + $0x81] sm:$0xff]
    %v933 = vld [vmem:[%s824 + $0x91] sm:$0xff]
    %v934 = vld [vmem:[%s824 + $0x99] sm:$0xff]
    %v935 = vld [vmem:[%s824 + $0xa9] sm:$0xff]
    %v936 = vld [vmem:[%s824 + $0xb1] sm:$0xff]
    %v937 = vld [vmem:[%s824 + $0xc1] sm:$0xff]
    %v938 = vld [vmem:[%s824 + $0xc9] sm:$0xff]
    %v939 = vld [vmem:[%s824 + $0xd9] sm:$0xff]
    %v940 = vld [vmem:[%s824 + $0xe1] sm:$0xff]
    %v941 = vld [vmem:[%s824 + $0xf1] sm:$0xff]
    %v942 = vld [vmem:[%s824 + $0xf9] sm:$0xff]
    %v943 = vld [vmem:[%s824 + $0x109] sm:$0xff]
    %v944 = vld [vmem:[%s824 + $0x111] sm:$0xff]
    %v945 = vld [vmem:[%s824 + $0x121] sm:$0xff]
    %v946 = vld [vmem:[%s824 + $0x129] sm:$0xff]
    %v947 = vld [vmem:[%s824 + $0x139] sm:$0xff]
    %v948 = vld [vmem:[%s824 + $0x141] sm:$0xff]
    %v949 = vld [vmem:[%s824 + $0x151] sm:$0xff]
    %v950 = vld [vmem:[%s824 + $0x159] sm:$0xff]
    %v951 = vld [vmem:[%s824 + $0x169] sm:$0xff]
    %v952 = vld [vmem:[%s824 + $0x171] sm:$0xff]
    %v953 = vld [vmem:[%s824 + $0x1b1] sm:$0xff]
    %v954 = vld [vmem:[%s824 + $0x1b9] sm:$0xff]
    %v955 = vld [vmem:[%s824 + $0x1c9] sm:$0xff]
    %v956 = vld [vmem:[%s824 + $0x1d1] sm:$0xff]
    %v957 = vld [vmem:[%s824 + $0x1e1] sm:$0xff]
    %v958 = vld [vmem:[%s824 + $0x1e9] sm:$0xff]
    %v959 = vld [vmem:[%s824 + $0x1f9] sm:$0xff]
    %v960 = vld [vmem:[%s824 + $0x201] sm:$0xff]
    %v961 = vld [vmem:[%s824 + $0x211] sm:$0xff]
    %v962 = vld [vmem:[%s824 + $0x219] sm:$0xff]
    %v963 = vld [vmem:[%s824 + $0x229] sm:$0xff]
    %v964 = vld [vmem:[%s824 + $0x231] sm:$0xff]
    %v965 = vld [vmem:[%s824 + $0x241] sm:$0xff]
    %v966 = vld [vmem:[%s824 + $0x249] sm:$0xff]
    %v967 = vld [vmem:[%s824 + $0x259] sm:$0xff]
    %v968 = vld [vmem:[%s824 + $0x261] sm:$0xff]
    %v969 = vld [vmem:[%s824 + $0x271] sm:$0xff]
    %v970 = vld [vmem:[%s824 + $0x279] sm:$0xff]
    %v971 = vld [vmem:[%s824 + $0x289] sm:$0xff]
    %v972 = vld [vmem:[%s824 + $0x291] sm:$0xff]
    %v973 = vld [vmem:[%s824 + $0x2a1] sm:$0xff]
    %v974 = vld [vmem:[%s824 + $0x2a9] sm:$0xff]
    %v975 = vld [vmem:[%s824 + $0x2b9] sm:$0xff]
    %v976 = vld [vmem:[%s824 + $0x2c1] sm:$0xff]
    %v977 = vld [vmem:[%s824 + $0x2d1] sm:$0xff]
    %v978 = vld [vmem:[%s824 + $0x2d9] sm:$0xff]
    %v979 = vld [vmem:[%s824 + $0x2e9] sm:$0xff]
    %v980 = vld [vmem:[%s824 + $0x2f1] sm:$0xff]
    %v981 = vld [vmem:[%s824 + $0x301] sm:$0xff]
    %v982 = vld [vmem:[%s824 + $0x309] sm:$0xff]
    %v983 = vld [vmem:[%s824 + $0x319] sm:$0xff]
    %v984 = vld [vmem:[%s824 + $0x321] sm:$0xff]
    %v985 = vpack.c.bf16 %v922, %v921
    %v986 = vpack.c.bf16 %v924, %v923
    %v987 = vpack.c.bf16 %v926, %v925
    %v988 = vpack.c.bf16 %v928, %v927
    %v989 = vpack.c.bf16 %v930, %v929
    %v990 = vpack.c.bf16 %v932, %v931
    %v991 = vpack.c.bf16 %v934, %v933
    %v992 = vpack.c.bf16 %v936, %v935
    %v993 = vpack.c.bf16 %v938, %v937
    %v994 = vpack.c.bf16 %v940, %v939
    %v995 = vpack.c.bf16 %v942, %v941
    %v996 = vpack.c.bf16 %v944, %v943
    %v997 = vpack.c.bf16 %v946, %v945
    %v998 = vpack.c.bf16 %v948, %v947
    %v999 = vpack.c.bf16 %v950, %v949
    %v1000 = vpack.c.bf16 %v952, %v951
    %v1001 = vpack.c.bf16 %v954, %v953
    %v1002 = vpack.c.bf16 %v956, %v955
    %v1003 = vpack.c.bf16 %v958, %v957
    %v1004 = vpack.c.bf16 %v960, %v959
    %v1005 = vpack.c.bf16 %v962, %v961
    %v1006 = vpack.c.bf16 %v964, %v963
    %v1007 = vpack.c.bf16 %v966, %v965
    %v1008 = vpack.c.bf16 %v968, %v967
    %v1009 = vpack.c.bf16 %v970, %v969
    %v1010 = vpack.c.bf16 %v972, %v971
    %v1011 = vpack.c.bf16 %v974, %v973
    %v1012 = vpack.c.bf16 %v976, %v975
    %v1013 = vpack.c.bf16 %v978, %v977
    %v1014 = vpack.c.bf16 %v980, %v979
    %v1015 = vpack.c.bf16 %v982, %v981
    %v1016 = vpack.c.bf16 %v984, %v983
    %v1017 = vld [vmem:[%s824 + $0x2] sm:$0xff]
    %v1018 = vld [vmem:[%s824 + $0xa] sm:$0xff]
    %v1019 = vld [vmem:[%s824 + $0x1a] sm:$0xff]
    %v1020 = vld [vmem:[%s824 + $0x22] sm:$0xff]
    %v1021 = vld [vmem:[%s824 + $0x32] sm:$0xff]
    %v1022 = vld [vmem:[%s824 + $0x3a] sm:$0xff]
    %v1023 = vld [vmem:[%s824 + $0x4a] sm:$0xff]
    %v1024 = vld [vmem:[%s824 + $0x52] sm:$0xff]
    %v1025 = vld [vmem:[%s824 + $0x62] sm:$0xff]
    %v1026 = vld [vmem:[%s824 + $0x6a] sm:$0xff]
    %v1027 = vld [vmem:[%s824 + $0x7a] sm:$0xff]
    %v1028 = vld [vmem:[%s824 + $0x82] sm:$0xff]
    %v1029 = vld [vmem:[%s824 + $0x92] sm:$0xff]
    %v1030 = vld [vmem:[%s824 + $0x9a] sm:$0xff]
    %v1031 = vld [vmem:[%s824 + $0xaa] sm:$0xff]
    %v1032 = vld [vmem:[%s824 + $0xb2] sm:$0xff]
    %v1033 = vld [vmem:[%s824 + $0xc2] sm:$0xff]
    %v1034 = vld [vmem:[%s824 + $0xca] sm:$0xff]
    %v1035 = vld [vmem:[%s824 + $0xda] sm:$0xff]
    %v1036 = vld [vmem:[%s824 + $0xe2] sm:$0xff]
    %v1037 = vld [vmem:[%s824 + $0xf2] sm:$0xff]
    %v1038 = vld [vmem:[%s824 + $0xfa] sm:$0xff]
    %v1039 = vld [vmem:[%s824 + $0x10a] sm:$0xff]
    %v1040 = vld [vmem:[%s824 + $0x112] sm:$0xff]
    %v1041 = vld [vmem:[%s824 + $0x122] sm:$0xff]
    %v1042 = vld [vmem:[%s824 + $0x12a] sm:$0xff]
    %v1043 = vld [vmem:[%s824 + $0x13a] sm:$0xff]
    %v1044 = vld [vmem:[%s824 + $0x142] sm:$0xff]
    %v1045 = vld [vmem:[%s824 + $0x152] sm:$0xff]
    %v1046 = vld [vmem:[%s824 + $0x15a] sm:$0xff]
    %v1047 = vld [vmem:[%s824 + $0x16a] sm:$0xff]
    %v1048 = vld [vmem:[%s824 + $0x172] sm:$0xff]
    %v1049 = vld [vmem:[%s824 + $0x1b2] sm:$0xff]
    %v1050 = vld [vmem:[%s824 + $0x1ba] sm:$0xff]
    %v1051 = vld [vmem:[%s824 + $0x1ca] sm:$0xff]
    %v1052 = vld [vmem:[%s824 + $0x1d2] sm:$0xff]
    %v1053 = vld [vmem:[%s824 + $0x1e2] sm:$0xff]
    %v1054 = vld [vmem:[%s824 + $0x1ea] sm:$0xff]
    %v1055 = vld [vmem:[%s824 + $0x1fa] sm:$0xff]
    %v1056 = vld [vmem:[%s824 + $0x202] sm:$0xff]
    %v1057 = vld [vmem:[%s824 + $0x212] sm:$0xff]
    %v1058 = vld [vmem:[%s824 + $0x21a] sm:$0xff]
    %v1059 = vld [vmem:[%s824 + $0x22a] sm:$0xff]
    %v1060 = vld [vmem:[%s824 + $0x232] sm:$0xff]
    %v1061 = vld [vmem:[%s824 + $0x242] sm:$0xff]
    %v1062 = vld [vmem:[%s824 + $0x24a] sm:$0xff]
    %v1063 = vld [vmem:[%s824 + $0x25a] sm:$0xff]
    %v1064 = vld [vmem:[%s824 + $0x262] sm:$0xff]
    %v1065 = vld [vmem:[%s824 + $0x272] sm:$0xff]
    %v1066 = vld [vmem:[%s824 + $0x27a] sm:$0xff]
    %v1067 = vld [vmem:[%s824 + $0x28a] sm:$0xff]
    %v1068 = vld [vmem:[%s824 + $0x292] sm:$0xff]
    %v1069 = vld [vmem:[%s824 + $0x2a2] sm:$0xff]
    %v1070 = vld [vmem:[%s824 + $0x2aa] sm:$0xff]
    %v1071 = vld [vmem:[%s824 + $0x2ba] sm:$0xff]
    %v1072 = vld [vmem:[%s824 + $0x2c2] sm:$0xff]
    %v1073 = vld [vmem:[%s824 + $0x2d2] sm:$0xff]
    %v1074 = vld [vmem:[%s824 + $0x2da] sm:$0xff]
    %v1075 = vld [vmem:[%s824 + $0x2ea] sm:$0xff]
    %v1076 = vld [vmem:[%s824 + $0x2f2] sm:$0xff]
    %v1077 = vld [vmem:[%s824 + $0x302] sm:$0xff]
    %v1078 = vld [vmem:[%s824 + $0x30a] sm:$0xff]
    %v1079 = vld [vmem:[%s824 + $0x31a] sm:$0xff]
    %v1080 = vld [vmem:[%s824 + $0x322] sm:$0xff]
    %v1081 = vpack.c.bf16 %v1018, %v1017
    %v1082 = vpack.c.bf16 %v1020, %v1019
    %v1083 = vpack.c.bf16 %v1022, %v1021
    %v1084 = vpack.c.bf16 %v1024, %v1023
    %v1085 = vpack.c.bf16 %v1026, %v1025
    %v1086 = vpack.c.bf16 %v1028, %v1027
    %v1087 = vpack.c.bf16 %v1030, %v1029
    %v1088 = vpack.c.bf16 %v1032, %v1031
    %v1089 = vpack.c.bf16 %v1034, %v1033
    %v1090 = vpack.c.bf16 %v1036, %v1035
    %v1091 = vpack.c.bf16 %v1038, %v1037
    %v1092 = vpack.c.bf16 %v1040, %v1039
    %v1093 = vpack.c.bf16 %v1042, %v1041
    %v1094 = vpack.c.bf16 %v1044, %v1043
    %v1095 = vpack.c.bf16 %v1046, %v1045
    %v1096 = vpack.c.bf16 %v1048, %v1047
    %v1097 = vpack.c.bf16 %v1050, %v1049
    %v1098 = vpack.c.bf16 %v1052, %v1051
    %v1099 = vpack.c.bf16 %v1054, %v1053
    %v1100 = vpack.c.bf16 %v1056, %v1055
    %v1101 = vpack.c.bf16 %v1058, %v1057
    %v1102 = vpack.c.bf16 %v1060, %v1059
    %v1103 = vpack.c.bf16 %v1062, %v1061
    %v1104 = vpack.c.bf16 %v1064, %v1063
    %v1105 = vpack.c.bf16 %v1066, %v1065
    %v1106 = vpack.c.bf16 %v1068, %v1067
    %v1107 = vpack.c.bf16 %v1070, %v1069
    %v1108 = vpack.c.bf16 %v1072, %v1071
    %v1109 = vpack.c.bf16 %v1074, %v1073
    %v1110 = vpack.c.bf16 %v1076, %v1075
    %v1111 = vpack.c.bf16 %v1078, %v1077
    %v1112 = vpack.c.bf16 %v1080, %v1079
    %1145 = vrot.lane.b32.xlu0 %v408, 4
    %v1146 = vpop.permute.xlu0 %1145
    %1147 = vrot.lane.b32.xlu0 %v409, 4
    %v1148 = vpop.permute.xlu0 %1147
    %1149 = vrot.lane.b32.xlu0 %v410, 4
    %v1150 = vpop.permute.xlu0 %1149
    %1151 = vrot.lane.b32.xlu0 %v411, 4
    %v1152 = vpop.permute.xlu0 %1151
    %1153 = vrot.lane.b32.xlu0 %v412, 4
    %v1154 = vpop.permute.xlu0 %1153
    %1155 = vrot.lane.b32.xlu0 %v413, 4
    %v1156 = vpop.permute.xlu0 %1155
    %1157 = vrot.lane.b32.xlu0 %v414, 4
    %v1158 = vpop.permute.xlu0 %1157
    %1159 = vrot.lane.b32.xlu0 %v415, 4
    %v1160 = vpop.permute.xlu0 %1159
    %1161 = vrot.lane.b32.xlu0 %v416, 4
    %v1162 = vpop.permute.xlu0 %1161
    %1163 = vrot.lane.b32.xlu0 %v417, 4
    %v1164 = vpop.permute.xlu0 %1163
    %1165 = vrot.lane.b32.xlu0 %v418, 4
    %v1166 = vpop.permute.xlu0 %1165
    %1167 = vrot.lane.b32.xlu0 %v419, 4
    %v1168 = vpop.permute.xlu0 %1167
    %1169 = vrot.lane.b32.xlu0 %v420, 4
    %v1170 = vpop.permute.xlu0 %1169
    %1171 = vrot.lane.b32.xlu0 %v421, 4
    %v1172 = vpop.permute.xlu0 %1171
    %1173 = vrot.lane.b32.xlu0 %v422, 4
    %v1174 = vpop.permute.xlu0 %1173
    %1175 = vrot.lane.b32.xlu0 %v423, 4
    %v1176 = vpop.permute.xlu0 %1175
    %1177 = vrot.lane.b32.xlu0 %v424, 4
    %v1178 = vpop.permute.xlu0 %1177
    %1179 = vrot.lane.b32.xlu0 %v425, 4
    %v1180 = vpop.permute.xlu0 %1179
    %1181 = vrot.lane.b32.xlu0 %v426, 4
    %v1182 = vpop.permute.xlu0 %1181
    %1183 = vrot.lane.b32.xlu0 %v427, 4
    %v1184 = vpop.permute.xlu0 %1183
    %1185 = vrot.lane.b32.xlu0 %v428, 4
    %v1186 = vpop.permute.xlu0 %1185
    %1187 = vrot.lane.b32.xlu0 %v429, 4
    %v1188 = vpop.permute.xlu0 %1187
    %1189 = vrot.lane.b32.xlu0 %v430, 4
    %v1190 = vpop.permute.xlu0 %1189
    %1191 = vrot.lane.b32.xlu0 %v431, 4
    %v1192 = vpop.permute.xlu0 %1191
    %1193 = vrot.lane.b32.xlu0 %v432, 4
    %v1194 = vpop.permute.xlu0 %1193
    %1195 = vrot.lane.b32.xlu0 %v433, 4
    %v1196 = vpop.permute.xlu0 %1195
    %1197 = vrot.lane.b32.xlu0 %v434, 4
    %v1198 = vpop.permute.xlu0 %1197
    %1199 = vrot.lane.b32.xlu0 %v435, 4
    %v1200 = vpop.permute.xlu0 %1199
    %1201 = vrot.lane.b32.xlu0 %v436, 4
    %v1202 = vpop.permute.xlu0 %1201
    %1203 = vrot.lane.b32.xlu0 %v437, 4
    %v1204 = vpop.permute.xlu0 %1203
    %1205 = vrot.lane.b32.xlu0 %v438, 4
    %v1206 = vpop.permute.xlu0 %1205
    %1207 = vrot.lane.b32.xlu0 %v439, 4
    %v1208 = vpop.permute.xlu0 %1207
    %1241 = vrot.lane.b32.xlu0 %v504, 8
    %v1242 = vpop.permute.xlu0 %1241
    %1243 = vrot.lane.b32.xlu0 %v505, 8
    %v1244 = vpop.permute.xlu0 %1243
    %1245 = vrot.lane.b32.xlu0 %v506, 8
    %v1246 = vpop.permute.xlu0 %1245
    %1247 = vrot.lane.b32.xlu0 %v507, 8
    %v1248 = vpop.permute.xlu0 %1247
    %1249 = vrot.lane.b32.xlu0 %v508, 8
    %v1250 = vpop.permute.xlu0 %1249
    %1251 = vrot.lane.b32.xlu0 %v509, 8
    %v1252 = vpop.permute.xlu0 %1251
    %1253 = vrot.lane.b32.xlu0 %v510, 8
    %v1254 = vpop.permute.xlu0 %1253
    %1255 = vrot.lane.b32.xlu0 %v511, 8
    %v1256 = vpop.permute.xlu0 %1255
    %1257 = vrot.lane.b32.xlu0 %v512, 8
    %v1258 = vpop.permute.xlu0 %1257
    %1259 = vrot.lane.b32.xlu0 %v513, 8
    %v1260 = vpop.permute.xlu0 %1259
    %1261 = vrot.lane.b32.xlu0 %v514, 8
    %v1262 = vpop.permute.xlu0 %1261
    %1263 = vrot.lane.b32.xlu0 %v515, 8
    %v1264 = vpop.permute.xlu0 %1263
    %1265 = vrot.lane.b32.xlu0 %v516, 8
    %v1266 = vpop.permute.xlu0 %1265
    %1267 = vrot.lane.b32.xlu0 %v517, 8
    %v1268 = vpop.permute.xlu0 %1267
    %1269 = vrot.lane.b32.xlu0 %v518, 8
    %v1270 = vpop.permute.xlu0 %1269
    %1271 = vrot.lane.b32.xlu0 %v519, 8
    %v1272 = vpop.permute.xlu0 %1271
    %1273 = vrot.lane.b32.xlu0 %v520, 8
    %v1274 = vpop.permute.xlu0 %1273
    %1275 = vrot.lane.b32.xlu0 %v521, 8
    %v1276 = vpop.permute.xlu0 %1275
    %1277 = vrot.lane.b32.xlu0 %v522, 8
    %v1278 = vpop.permute.xlu0 %1277
    %1279 = vrot.lane.b32.xlu0 %v523, 8
    %v1280 = vpop.permute.xlu0 %1279
    %1281 = vrot.lane.b32.xlu0 %v524, 8
    %v1282 = vpop.permute.xlu0 %1281
    %1283 = vrot.lane.b32.xlu0 %v525, 8
    %v1284 = vpop.permute.xlu0 %1283
    %1285 = vrot.lane.b32.xlu0 %v526, 8
    %v1286 = vpop.permute.xlu0 %1285
    %1287 = vrot.lane.b32.xlu0 %v527, 8
    %v1288 = vpop.permute.xlu0 %1287
    %1289 = vrot.lane.b32.xlu0 %v528, 8
    %v1290 = vpop.permute.xlu0 %1289
    %1291 = vrot.lane.b32.xlu0 %v529, 8
    %v1292 = vpop.permute.xlu0 %1291
    %1293 = vrot.lane.b32.xlu0 %v530, 8
    %v1294 = vpop.permute.xlu0 %1293
    %1295 = vrot.lane.b32.xlu0 %v531, 8
    %v1296 = vpop.permute.xlu0 %1295
    %1297 = vrot.lane.b32.xlu0 %v532, 8
    %v1298 = vpop.permute.xlu0 %1297
    %1299 = vrot.lane.b32.xlu0 %v533, 8
    %v1300 = vpop.permute.xlu0 %1299
    %1301 = vrot.lane.b32.xlu0 %v534, 8
    %v1302 = vpop.permute.xlu0 %1301
    %1303 = vrot.lane.b32.xlu0 %v535, 8
    %v1304 = vpop.permute.xlu0 %1303
    %1337 = vrot.lane.b32.xlu0 %v600, 12
    %v1338 = vpop.permute.xlu0 %1337
    %1339 = vrot.lane.b32.xlu0 %v601, 12
    %v1340 = vpop.permute.xlu0 %1339
    %1341 = vrot.lane.b32.xlu0 %v602, 12
    %v1342 = vpop.permute.xlu0 %1341
    %1343 = vrot.lane.b32.xlu0 %v603, 12
    %v1344 = vpop.permute.xlu0 %1343
    %1345 = vrot.lane.b32.xlu0 %v604, 12
    %v1346 = vpop.permute.xlu0 %1345
    %1347 = vrot.lane.b32.xlu0 %v605, 12
    %v1348 = vpop.permute.xlu0 %1347
    %1349 = vrot.lane.b32.xlu0 %v606, 12
    %v1350 = vpop.permute.xlu0 %1349
    %1351 = vrot.lane.b32.xlu0 %v607, 12
    %v1352 = vpop.permute.xlu0 %1351
    %1353 = vrot.lane.b32.xlu0 %v608, 12
    %v1354 = vpop.permute.xlu0 %1353
    %1355 = vrot.lane.b32.xlu0 %v609, 12
    %v1356 = vpop.permute.xlu0 %1355
    %1357 = vrot.lane.b32.xlu0 %v610, 12
    %v1358 = vpop.permute.xlu0 %1357
    %1359 = vrot.lane.b32.xlu0 %v611, 12
    %v1360 = vpop.permute.xlu0 %1359
    %1361 = vrot.lane.b32.xlu0 %v612, 12
    %v1362 = vpop.permute.xlu0 %1361
    %1363 = vrot.lane.b32.xlu0 %v613, 12
    %v1364 = vpop.permute.xlu0 %1363
    %1365 = vrot.lane.b32.xlu0 %v614, 12
    %v1366 = vpop.permute.xlu0 %1365
    %1367 = vrot.lane.b32.xlu0 %v615, 12
    %v1368 = vpop.permute.xlu0 %1367
    %1369 = vrot.lane.b32.xlu0 %v616, 12
    %v1370 = vpop.permute.xlu0 %1369
    %1371 = vrot.lane.b32.xlu0 %v617, 12
    %v1372 = vpop.permute.xlu0 %1371
    %1373 = vrot.lane.b32.xlu0 %v618, 12
    %v1374 = vpop.permute.xlu0 %1373
    %1375 = vrot.lane.b32.xlu0 %v619, 12
    %v1376 = vpop.permute.xlu0 %1375
    %1377 = vrot.lane.b32.xlu0 %v620, 12
    %v1378 = vpop.permute.xlu0 %1377
    %1379 = vrot.lane.b32.xlu0 %v621, 12
    %v1380 = vpop.permute.xlu0 %1379
    %1381 = vrot.lane.b32.xlu0 %v622, 12
    %v1382 = vpop.permute.xlu0 %1381
    %1383 = vrot.lane.b32.xlu0 %v623, 12
    %v1384 = vpop.permute.xlu0 %1383
    %1385 = vrot.lane.b32.xlu0 %v624, 12
    %v1386 = vpop.permute.xlu0 %1385
    %1387 = vrot.lane.b32.xlu0 %v625, 12
    %v1388 = vpop.permute.xlu0 %1387
    %1389 = vrot.lane.b32.xlu0 %v626, 12
    %v1390 = vpop.permute.xlu0 %1389
    %1391 = vrot.lane.b32.xlu0 %v627, 12
    %v1392 = vpop.permute.xlu0 %1391
    %1393 = vrot.lane.b32.xlu0 %v628, 12
    %v1394 = vpop.permute.xlu0 %1393
    %1395 = vrot.lane.b32.xlu0 %v629, 12
    %v1396 = vpop.permute.xlu0 %1395
    %1397 = vrot.lane.b32.xlu0 %v630, 12
    %v1398 = vpop.permute.xlu0 %1397
    %1399 = vrot.lane.b32.xlu0 %v631, 12
    %v1400 = vpop.permute.xlu0 %1399
    %1433 = vrot.lane.b32.xlu0 %v696, 16
    %v1434 = vpop.permute.xlu0 %1433
    %1435 = vrot.lane.b32.xlu0 %v697, 16
    %v1436 = vpop.permute.xlu0 %1435
    %1437 = vrot.lane.b32.xlu0 %v698, 16
    %v1438 = vpop.permute.xlu0 %1437
    %1439 = vrot.lane.b32.xlu0 %v699, 16
    %v1440 = vpop.permute.xlu0 %1439
    %1441 = vrot.lane.b32.xlu0 %v700, 16
    %v1442 = vpop.permute.xlu0 %1441
    %1443 = vrot.lane.b32.xlu0 %v701, 16
    %v1444 = vpop.permute.xlu0 %1443
    %1445 = vrot.lane.b32.xlu0 %v702, 16
    %v1446 = vpop.permute.xlu0 %1445
    %1447 = vrot.lane.b32.xlu0 %v703, 16
    %v1448 = vpop.permute.xlu0 %1447
    %1449 = vrot.lane.b32.xlu0 %v704, 16
    %v1450 = vpop.permute.xlu0 %1449
    %1451 = vrot.lane.b32.xlu0 %v705, 16
    %v1452 = vpop.permute.xlu0 %1451
    %1453 = vrot.lane.b32.xlu0 %v706, 16
    %v1454 = vpop.permute.xlu0 %1453
    %1455 = vrot.lane.b32.xlu0 %v707, 16
    %v1456 = vpop.permute.xlu0 %1455
    %1457 = vrot.lane.b32.xlu0 %v708, 16
    %v1458 = vpop.permute.xlu0 %1457
    %1459 = vrot.lane.b32.xlu0 %v709, 16
    %v1460 = vpop.permute.xlu0 %1459
    %1461 = vrot.lane.b32.xlu0 %v710, 16
    %v1462 = vpop.permute.xlu0 %1461
    %1463 = vrot.lane.b32.xlu0 %v711, 16
    %v1464 = vpop.permute.xlu0 %1463
    %1465 = vrot.lane.b32.xlu0 %v712, 16
    %v1466 = vpop.permute.xlu0 %1465
    %1467 = vrot.lane.b32.xlu0 %v713, 16
    %v1468 = vpop.permute.xlu0 %1467
    %1469 = vrot.lane.b32.xlu0 %v714, 16
    %v1470 = vpop.permute.xlu0 %1469
    %1471 = vrot.lane.b32.xlu0 %v715, 16
    %v1472 = vpop.permute.xlu0 %1471
    %1473 = vrot.lane.b32.xlu0 %v716, 16
    %v1474 = vpop.permute.xlu0 %1473
    %1475 = vrot.lane.b32.xlu0 %v717, 16
    %v1476 = vpop.permute.xlu0 %1475
    %1477 = vrot.lane.b32.xlu0 %v718, 16
    %v1478 = vpop.permute.xlu0 %1477
    %1479 = vrot.lane.b32.xlu0 %v719, 16
    %v1480 = vpop.permute.xlu0 %1479
    %1481 = vrot.lane.b32.xlu0 %v720, 16
    %v1482 = vpop.permute.xlu0 %1481
    %1483 = vrot.lane.b32.xlu0 %v721, 16
    %v1484 = vpop.permute.xlu0 %1483
    %1485 = vrot.lane.b32.xlu0 %v722, 16
    %v1486 = vpop.permute.xlu0 %1485
    %1487 = vrot.lane.b32.xlu0 %v723, 16
    %v1488 = vpop.permute.xlu0 %1487
    %1489 = vrot.lane.b32.xlu0 %v724, 16
    %v1490 = vpop.permute.xlu0 %1489
    %1491 = vrot.lane.b32.xlu0 %v725, 16
    %v1492 = vpop.permute.xlu0 %1491
    %1493 = vrot.lane.b32.xlu0 %v726, 16
    %v1494 = vpop.permute.xlu0 %1493
    %1495 = vrot.lane.b32.xlu0 %v727, 16
    %v1496 = vpop.permute.xlu0 %1495
    %1529 = vrot.lane.b32.xlu0 %v792, 20
    %v1530 = vpop.permute.xlu0 %1529
    %1531 = vrot.lane.b32.xlu0 %v793, 20
    %v1532 = vpop.permute.xlu0 %1531
    %1533 = vrot.lane.b32.xlu0 %v794, 20
    %v1534 = vpop.permute.xlu0 %1533
    %1535 = vrot.lane.b32.xlu0 %v795, 20
    %v1536 = vpop.permute.xlu0 %1535
    %1537 = vrot.lane.b32.xlu0 %v796, 20
    %v1538 = vpop.permute.xlu0 %1537
    %1539 = vrot.lane.b32.xlu0 %v797, 20
    %v1540 = vpop.permute.xlu0 %1539
    %1541 = vrot.lane.b32.xlu0 %v798, 20
    %v1542 = vpop.permute.xlu0 %1541
    %1543 = vrot.lane.b32.xlu0 %v799, 20
    %v1544 = vpop.permute.xlu0 %1543
    %1545 = vrot.lane.b32.xlu0 %v800, 20
    %v1546 = vpop.permute.xlu0 %1545
    %1547 = vrot.lane.b32.xlu0 %v801, 20
    %v1548 = vpop.permute.xlu0 %1547
    %1549 = vrot.lane.b32.xlu0 %v802, 20
    %v1550 = vpop.permute.xlu0 %1549
    %1551 = vrot.lane.b32.xlu0 %v803, 20
    %v1552 = vpop.permute.xlu0 %1551
    %1553 = vrot.lane.b32.xlu0 %v804, 20
    %v1554 = vpop.permute.xlu0 %1553
    %1555 = vrot.lane.b32.xlu0 %v805, 20
    %v1556 = vpop.permute.xlu0 %1555
    %1557 = vrot.lane.b32.xlu0 %v806, 20
    %v1558 = vpop.permute.xlu0 %1557
    %1559 = vrot.lane.b32.xlu0 %v807, 20
    %v1560 = vpop.permute.xlu0 %1559
    %1561 = vrot.lane.b32.xlu0 %v808, 20
    %v1562 = vpop.permute.xlu0 %1561
    %1563 = vrot.lane.b32.xlu0 %v809, 20
    %v1564 = vpop.permute.xlu0 %1563
    %1565 = vrot.lane.b32.xlu0 %v810, 20
    %v1566 = vpop.permute.xlu0 %1565
    %1567 = vrot.lane.b32.xlu0 %v811, 20
    %v1568 = vpop.permute.xlu0 %1567
    %1569 = vrot.lane.b32.xlu0 %v812, 20
    %v1570 = vpop.permute.xlu0 %1569
    %1571 = vrot.lane.b32.xlu0 %v813, 20
    %v1572 = vpop.permute.xlu0 %1571
    %1573 = vrot.lane.b32.xlu0 %v814, 20
    %v1574 = vpop.permute.xlu0 %1573
    %1575 = vrot.lane.b32.xlu0 %v815, 20
    %v1576 = vpop.permute.xlu0 %1575
    %1577 = vrot.lane.b32.xlu0 %v816, 20
    %v1578 = vpop.permute.xlu0 %1577
    %1579 = vrot.lane.b32.xlu0 %v817, 20
    %v1580 = vpop.permute.xlu0 %1579
    %1581 = vrot.lane.b32.xlu0 %v818, 20
    %v1582 = vpop.permute.xlu0 %1581
    %1583 = vrot.lane.b32.xlu0 %v819, 20
    %v1584 = vpop.permute.xlu0 %1583
    %1585 = vrot.lane.b32.xlu0 %v820, 20
    %v1586 = vpop.permute.xlu0 %1585
    %1587 = vrot.lane.b32.xlu0 %v821, 20
    %v1588 = vpop.permute.xlu0 %1587
    %1589 = vrot.lane.b32.xlu0 %v822, 20
    %v1590 = vpop.permute.xlu0 %1589
    %1591 = vrot.lane.b32.xlu0 %v823, 20
    %v1592 = vpop.permute.xlu0 %1591
    %1625 = vrot.lane.b32.xlu0 %v889, 24
    %v1626 = vpop.permute.xlu0 %1625
    %1627 = vrot.lane.b32.xlu0 %v890, 24
    %v1628 = vpop.permute.xlu0 %1627
    %1629 = vrot.lane.b32.xlu0 %v891, 24
    %v1630 = vpop.permute.xlu0 %1629
    %1631 = vrot.lane.b32.xlu0 %v892, 24
    %v1632 = vpop.permute.xlu0 %1631
    %1633 = vrot.lane.b32.xlu0 %v893, 24
    %v1634 = vpop.permute.xlu0 %1633
    %1635 = vrot.lane.b32.xlu0 %v894, 24
    %v1636 = vpop.permute.xlu0 %1635
    %1637 = vrot.lane.b32.xlu0 %v895, 24
    %v1638 = vpop.permute.xlu0 %1637
    %1639 = vrot.lane.b32.xlu0 %v896, 24
    %v1640 = vpop.permute.xlu0 %1639
    %1641 = vrot.lane.b32.xlu0 %v897, 24
    %v1642 = vpop.permute.xlu0 %1641
    %1643 = vrot.lane.b32.xlu0 %v898, 24
    %v1644 = vpop.permute.xlu0 %1643
    %1645 = vrot.lane.b32.xlu0 %v899, 24
    %v1646 = vpop.permute.xlu0 %1645
    %1647 = vrot.lane.b32.xlu0 %v900, 24
    %v1648 = vpop.permute.xlu0 %1647
    %1649 = vrot.lane.b32.xlu0 %v901, 24
    %v1650 = vpop.permute.xlu0 %1649
    %1651 = vrot.lane.b32.xlu0 %v902, 24
    %v1652 = vpop.permute.xlu0 %1651
    %1653 = vrot.lane.b32.xlu0 %v903, 24
    %v1654 = vpop.permute.xlu0 %1653
    %1655 = vrot.lane.b32.xlu0 %v904, 24
    %v1656 = vpop.permute.xlu0 %1655
    %1657 = vrot.lane.b32.xlu0 %v905, 24
    %v1658 = vpop.permute.xlu0 %1657
    %1659 = vrot.lane.b32.xlu0 %v906, 24
    %v1660 = vpop.permute.xlu0 %1659
    %1661 = vrot.lane.b32.xlu0 %v907, 24
    %v1662 = vpop.permute.xlu0 %1661
    %1663 = vrot.lane.b32.xlu0 %v908, 24
    %v1664 = vpop.permute.xlu0 %1663
    %1665 = vrot.lane.b32.xlu0 %v909, 24
    %v1666 = vpop.permute.xlu0 %1665
    %1667 = vrot.lane.b32.xlu0 %v910, 24
    %v1668 = vpop.permute.xlu0 %1667
    %1669 = vrot.lane.b32.xlu0 %v911, 24
    %v1670 = vpop.permute.xlu0 %1669
    %1671 = vrot.lane.b32.xlu0 %v912, 24
    %v1672 = vpop.permute.xlu0 %1671
    %1673 = vrot.lane.b32.xlu0 %v913, 24
    %v1674 = vpop.permute.xlu0 %1673
    %1675 = vrot.lane.b32.xlu0 %v914, 24
    %v1676 = vpop.permute.xlu0 %1675
    %1677 = vrot.lane.b32.xlu0 %v915, 24
    %v1678 = vpop.permute.xlu0 %1677
    %1679 = vrot.lane.b32.xlu0 %v916, 24
    %v1680 = vpop.permute.xlu0 %1679
    %1681 = vrot.lane.b32.xlu0 %v917, 24
    %v1682 = vpop.permute.xlu0 %1681
    %1683 = vrot.lane.b32.xlu0 %v918, 24
    %v1684 = vpop.permute.xlu0 %1683
    %1685 = vrot.lane.b32.xlu0 %v919, 24
    %v1686 = vpop.permute.xlu0 %1685
    %1687 = vrot.lane.b32.xlu0 %v920, 24
    %v1688 = vpop.permute.xlu0 %1687
    %1721 = vrot.lane.b32.xlu0 %v985, 28
    %v1722 = vpop.permute.xlu0 %1721
    %1723 = vrot.lane.b32.xlu0 %v986, 28
    %v1724 = vpop.permute.xlu0 %1723
    %1725 = vrot.lane.b32.xlu0 %v987, 28
    %v1726 = vpop.permute.xlu0 %1725
    %1727 = vrot.lane.b32.xlu0 %v988, 28
    %v1728 = vpop.permute.xlu0 %1727
    %1729 = vrot.lane.b32.xlu0 %v989, 28
    %v1730 = vpop.permute.xlu0 %1729
    %1731 = vrot.lane.b32.xlu0 %v990, 28
    %v1732 = vpop.permute.xlu0 %1731
    %1733 = vrot.lane.b32.xlu0 %v991, 28
    %v1734 = vpop.permute.xlu0 %1733
    %1735 = vrot.lane.b32.xlu0 %v992, 28
    %v1736 = vpop.permute.xlu0 %1735
    %1737 = vrot.lane.b32.xlu0 %v993, 28
    %v1738 = vpop.permute.xlu0 %1737
    %1739 = vrot.lane.b32.xlu0 %v994, 28
    %v1740 = vpop.permute.xlu0 %1739
    %1741 = vrot.lane.b32.xlu0 %v995, 28
    %v1742 = vpop.permute.xlu0 %1741
    %1743 = vrot.lane.b32.xlu0 %v996, 28
    %v1744 = vpop.permute.xlu0 %1743
    %1745 = vrot.lane.b32.xlu0 %v997, 28
    %v1746 = vpop.permute.xlu0 %1745
    %1747 = vrot.lane.b32.xlu0 %v998, 28
    %v1748 = vpop.permute.xlu0 %1747
    %1749 = vrot.lane.b32.xlu0 %v999, 28
    %v1750 = vpop.permute.xlu0 %1749
    %1751 = vrot.lane.b32.xlu0 %v1000, 28
    %v1752 = vpop.permute.xlu0 %1751
    %1753 = vrot.lane.b32.xlu0 %v1001, 28
    %v1754 = vpop.permute.xlu0 %1753
    %1755 = vrot.lane.b32.xlu0 %v1002, 28
    %v1756 = vpop.permute.xlu0 %1755
    %1757 = vrot.lane.b32.xlu0 %v1003, 28
    %v1758 = vpop.permute.xlu0 %1757
    %1759 = vrot.lane.b32.xlu0 %v1004, 28
    %v1760 = vpop.permute.xlu0 %1759
    %1761 = vrot.lane.b32.xlu0 %v1005, 28
    %v1762 = vpop.permute.xlu0 %1761
    %1763 = vrot.lane.b32.xlu0 %v1006, 28
    %v1764 = vpop.permute.xlu0 %1763
    %1765 = vrot.lane.b32.xlu0 %v1007, 28
    %v1766 = vpop.permute.xlu0 %1765
    %1767 = vrot.lane.b32.xlu0 %v1008, 28
    %v1768 = vpop.permute.xlu0 %1767
    %1769 = vrot.lane.b32.xlu0 %v1009, 28
    %v1770 = vpop.permute.xlu0 %1769
    %1771 = vrot.lane.b32.xlu0 %v1010, 28
    %v1772 = vpop.permute.xlu0 %1771
    %1773 = vrot.lane.b32.xlu0 %v1011, 28
    %v1774 = vpop.permute.xlu0 %1773
    %1775 = vrot.lane.b32.xlu0 %v1012, 28
    %v1776 = vpop.permute.xlu0 %1775
    %1777 = vrot.lane.b32.xlu0 %v1013, 28
    %v1778 = vpop.permute.xlu0 %1777
    %1779 = vrot.lane.b32.xlu0 %v1014, 28
    %v1780 = vpop.permute.xlu0 %1779
    %1781 = vrot.lane.b32.xlu0 %v1015, 28
    %v1782 = vpop.permute.xlu0 %1781
    %1783 = vrot.lane.b32.xlu0 %v1016, 28
    %v1784 = vpop.permute.xlu0 %1783
    %1817 = vrot.lane.b32.xlu0 %v1081, 32
    %v1818 = vpop.permute.xlu0 %1817
    %1819 = vrot.lane.b32.xlu0 %v1082, 32
    %v1820 = vpop.permute.xlu0 %1819
    %1821 = vrot.lane.b32.xlu0 %v1083, 32
    %v1822 = vpop.permute.xlu0 %1821
    %1823 = vrot.lane.b32.xlu0 %v1084, 32
    %v1824 = vpop.permute.xlu0 %1823
    %1825 = vrot.lane.b32.xlu0 %v1085, 32
    %v1826 = vpop.permute.xlu0 %1825
    %1827 = vrot.lane.b32.xlu0 %v1086, 32
    %v1828 = vpop.permute.xlu0 %1827
    %1829 = vrot.lane.b32.xlu0 %v1087, 32
    %v1830 = vpop.permute.xlu0 %1829
    %1831 = vrot.lane.b32.xlu0 %v1088, 32
    %v1832 = vpop.permute.xlu0 %1831
    %1833 = vrot.lane.b32.xlu0 %v1089, 32
    %v1834 = vpop.permute.xlu0 %1833
    %1835 = vrot.lane.b32.xlu0 %v1090, 32
    %v1836 = vpop.permute.xlu0 %1835
    %1837 = vrot.lane.b32.xlu0 %v1091, 32
    %v1838 = vpop.permute.xlu0 %1837
    %1839 = vrot.lane.b32.xlu0 %v1092, 32
    %v1840 = vpop.permute.xlu0 %1839
    %1841 = vrot.lane.b32.xlu0 %v1093, 32
    %v1842 = vpop.permute.xlu0 %1841
    %1843 = vrot.lane.b32.xlu0 %v1094, 32
    %v1844 = vpop.permute.xlu0 %1843
    %1845 = vrot.lane.b32.xlu0 %v1095, 32
    %v1846 = vpop.permute.xlu0 %1845
    %1847 = vrot.lane.b32.xlu0 %v1096, 32
    %v1848 = vpop.permute.xlu0 %1847
    %1849 = vrot.lane.b32.xlu0 %v1097, 32
    %v1850 = vpop.permute.xlu0 %1849
    %1851 = vrot.lane.b32.xlu0 %v1098, 32
    %v1852 = vpop.permute.xlu0 %1851
    %1853 = vrot.lane.b32.xlu0 %v1099, 32
    %v1854 = vpop.permute.xlu0 %1853
    %1855 = vrot.lane.b32.xlu0 %v1100, 32
    %v1856 = vpop.permute.xlu0 %1855
    %1857 = vrot.lane.b32.xlu0 %v1101, 32
    %v1858 = vpop.permute.xlu0 %1857
    %1859 = vrot.lane.b32.xlu0 %v1102, 32
    %v1860 = vpop.permute.xlu0 %1859
    %1861 = vrot.lane.b32.xlu0 %v1103, 32
    %v1862 = vpop.permute.xlu0 %1861
    %1863 = vrot.lane.b32.xlu0 %v1104, 32
    %v1864 = vpop.permute.xlu0 %1863
    %1865 = vrot.lane.b32.xlu0 %v1105, 32
    %v1866 = vpop.permute.xlu0 %1865
    %1867 = vrot.lane.b32.xlu0 %v1106, 32
    %v1868 = vpop.permute.xlu0 %1867
    %1869 = vrot.lane.b32.xlu0 %v1107, 32
    %v1870 = vpop.permute.xlu0 %1869
    %1871 = vrot.lane.b32.xlu0 %v1108, 32
    %v1872 = vpop.permute.xlu0 %1871
    %1873 = vrot.lane.b32.xlu0 %v1109, 32
    %v1874 = vpop.permute.xlu0 %1873
    %1875 = vrot.lane.b32.xlu0 %v1110, 32
    %v1876 = vpop.permute.xlu0 %1875
    %1877 = vrot.lane.b32.xlu0 %v1111, 32
    %v1878 = vpop.permute.xlu0 %1877
    %1879 = vrot.lane.b32.xlu0 %v1112, 32
    %v1880 = vpop.permute.xlu0 %1879
    %v1883 = vsel %vm95, %v312, %v1146
    %v1886 = vsel %vm95, %v313, %v1148
    %v1889 = vsel %vm95, %v314, %v1150
    %v1892 = vsel %vm95, %v315, %v1152
    %v1895 = vsel %vm95, %v316, %v1154
    %v1898 = vsel %vm95, %v317, %v1156
    %v1901 = vsel %vm95, %v318, %v1158
    %v1904 = vsel %vm95, %v319, %v1160
    %v1907 = vsel %vm95, %v320, %v1162
    %v1910 = vsel %vm95, %v321, %v1164
    %v1913 = vsel %vm95, %v322, %v1166
    %v1916 = vsel %vm95, %v323, %v1168
    %v1919 = vsel %vm95, %v324, %v1170
    %v1922 = vsel %vm95, %v325, %v1172
    %v1925 = vsel %vm95, %v326, %v1174
    %v1928 = vsel %vm95, %v327, %v1176
    %v1931 = vsel %vm95, %v328, %v1178
    %v1934 = vsel %vm95, %v329, %v1180
    %v1937 = vsel %vm95, %v330, %v1182
    %v1940 = vsel %vm95, %v331, %v1184
    %v1943 = vsel %vm95, %v332, %v1186
    %v1946 = vsel %vm95, %v333, %v1188
    %v1949 = vsel %vm95, %v334, %v1190
    %v1952 = vsel %vm95, %v335, %v1192
    %v1955 = vsel %vm95, %v336, %v1194
    %v1958 = vsel %vm95, %v337, %v1196
    %v1961 = vsel %vm95, %v338, %v1198
    %v1964 = vsel %vm95, %v339, %v1200
    %v1967 = vsel %vm95, %v340, %v1202
    %v1970 = vsel %vm95, %v341, %v1204
    %v1973 = vsel %vm95, %v342, %v1206
    %v1976 = vsel %vm95, %v343, %v1208
    %vm1977 = vcmask 64512
    %v1979 = vsel %vm1977, %v1883, %v1242
    %v1981 = vsel %vm1977, %v1886, %v1244
    %v1983 = vsel %vm1977, %v1889, %v1246
    %v1985 = vsel %vm1977, %v1892, %v1248
    %v1987 = vsel %vm1977, %v1895, %v1250
    %v1989 = vsel %vm1977, %v1898, %v1252
    %v1991 = vsel %vm1977, %v1901, %v1254
    %v1993 = vsel %vm1977, %v1904, %v1256
    %v1995 = vsel %vm1977, %v1907, %v1258
    %v1997 = vsel %vm1977, %v1910, %v1260
    %v1999 = vsel %vm1977, %v1913, %v1262
    %v2001 = vsel %vm1977, %v1916, %v1264
    %v2003 = vsel %vm1977, %v1919, %v1266
    %v2005 = vsel %vm1977, %v1922, %v1268
    %v2007 = vsel %vm1977, %v1925, %v1270
    %v2009 = vsel %vm1977, %v1928, %v1272
    %v2011 = vsel %vm1977, %v1931, %v1274
    %v2013 = vsel %vm1977, %v1934, %v1276
    %v2015 = vsel %vm1977, %v1937, %v1278
    %v2017 = vsel %vm1977, %v1940, %v1280
    %v2019 = vsel %vm1977, %v1943, %v1282
    %v2021 = vsel %vm1977, %v1946, %v1284
    %v2023 = vsel %vm1977, %v1949, %v1286
    %v2025 = vsel %vm1977, %v1952, %v1288
    %v2027 = vsel %vm1977, %v1955, %v1290
    %v2029 = vsel %vm1977, %v1958, %v1292
    %v2031 = vsel %vm1977, %v1961, %v1294
    %v2033 = vsel %vm1977, %v1964, %v1296
    %v2035 = vsel %vm1977, %v1967, %v1298
    %v2037 = vsel %vm1977, %v1970, %v1300
    %v2039 = vsel %vm1977, %v1973, %v1302
    %v2041 = vsel %vm1977, %v1976, %v1304
    %vm2042 = vcmask 97280
    %v2044 = vsel %vm2042, %v1979, %v1338
    %v2046 = vsel %vm2042, %v1981, %v1340
    %v2048 = vsel %vm2042, %v1983, %v1342
    %v2050 = vsel %vm2042, %v1985, %v1344
    %v2052 = vsel %vm2042, %v1987, %v1346
    %v2054 = vsel %vm2042, %v1989, %v1348
    %v2056 = vsel %vm2042, %v1991, %v1350
    %v2058 = vsel %vm2042, %v1993, %v1352
    %v2060 = vsel %vm2042, %v1995, %v1354
    %v2062 = vsel %vm2042, %v1997, %v1356
    %v2064 = vsel %vm2042, %v1999, %v1358
    %v2066 = vsel %vm2042, %v2001, %v1360
    %v2068 = vsel %vm2042, %v2003, %v1362
    %v2070 = vsel %vm2042, %v2005, %v1364
    %v2072 = vsel %vm2042, %v2007, %v1366
    %v2074 = vsel %vm2042, %v2009, %v1368
    %v2076 = vsel %vm2042, %v2011, %v1370
    %v2078 = vsel %vm2042, %v2013, %v1372
    %v2080 = vsel %vm2042, %v2015, %v1374
    %v2082 = vsel %vm2042, %v2017, %v1376
    %v2084 = vsel %vm2042, %v2019, %v1378
    %v2086 = vsel %vm2042, %v2021, %v1380
    %v2088 = vsel %vm2042, %v2023, %v1382
    %v2090 = vsel %vm2042, %v2025, %v1384
    %v2092 = vsel %vm2042, %v2027, %v1386
    %v2094 = vsel %vm2042, %v2029, %v1388
    %v2096 = vsel %vm2042, %v2031, %v1390
    %v2098 = vsel %vm2042, %v2033, %v1392
    %v2100 = vsel %vm2042, %v2035, %v1394
    %v2102 = vsel %vm2042, %v2037, %v1396
    %v2104 = vsel %vm2042, %v2039, %v1398
    %v2106 = vsel %vm2042, %v2041, %v1400
    %vm2107 = vcmask 130048
    %v2109 = vsel %vm2107, %v2044, %v1434
    %v2111 = vsel %vm2107, %v2046, %v1436
    %v2113 = vsel %vm2107, %v2048, %v1438
    %v2115 = vsel %vm2107, %v2050, %v1440
    %v2117 = vsel %vm2107, %v2052, %v1442
    %v2119 = vsel %vm2107, %v2054, %v1444
    %v2121 = vsel %vm2107, %v2056, %v1446
    %v2123 = vsel %vm2107, %v2058, %v1448
    %v2125 = vsel %vm2107, %v2060, %v1450
    %v2127 = vsel %vm2107, %v2062, %v1452
    %v2129 = vsel %vm2107, %v2064, %v1454
    %v2131 = vsel %vm2107, %v2066, %v1456
    %v2133 = vsel %vm2107, %v2068, %v1458
    %v2135 = vsel %vm2107, %v2070, %v1460
    %v2137 = vsel %vm2107, %v2072, %v1462
    %v2139 = vsel %vm2107, %v2074, %v1464
    %v2141 = vsel %vm2107, %v2076, %v1466
    %v2143 = vsel %vm2107, %v2078, %v1468
    %v2145 = vsel %vm2107, %v2080, %v1470
    %v2147 = vsel %vm2107, %v2082, %v1472
    %v2149 = vsel %vm2107, %v2084, %v1474
    %v2151 = vsel %vm2107, %v2086, %v1476
    %v2153 = vsel %vm2107, %v2088, %v1478
    %v2155 = vsel %vm2107, %v2090, %v1480
    %v2157 = vsel %vm2107, %v2092, %v1482
    %v2159 = vsel %vm2107, %v2094, %v1484
    %v2161 = vsel %vm2107, %v2096, %v1486
    %v2163 = vsel %vm2107, %v2098, %v1488
    %v2165 = vsel %vm2107, %v2100, %v1490
    %v2167 = vsel %vm2107, %v2102, %v1492
    %v2169 = vsel %vm2107, %v2104, %v1494
    %v2171 = vsel %vm2107, %v2106, %v1496
    %vm2172 = vcmask 162816
    %v2174 = vsel %vm2172, %v2109, %v1530
    %v2176 = vsel %vm2172, %v2111, %v1532
    %v2178 = vsel %vm2172, %v2113, %v1534
    %v2180 = vsel %vm2172, %v2115, %v1536
    %v2182 = vsel %vm2172, %v2117, %v1538
    %v2184 = vsel %vm2172, %v2119, %v1540
    %v2186 = vsel %vm2172, %v2121, %v1542
    %v2188 = vsel %vm2172, %v2123, %v1544
    %v2190 = vsel %vm2172, %v2125, %v1546
    %v2192 = vsel %vm2172, %v2127, %v1548
    %v2194 = vsel %vm2172, %v2129, %v1550
    %v2196 = vsel %vm2172, %v2131, %v1552
    %v2198 = vsel %vm2172, %v2133, %v1554
    %v2200 = vsel %vm2172, %v2135, %v1556
    %v2202 = vsel %vm2172, %v2137, %v1558
    %v2204 = vsel %vm2172, %v2139, %v1560
    %v2206 = vsel %vm2172, %v2141, %v1562
    %v2208 = vsel %vm2172, %v2143, %v1564
    %v2210 = vsel %vm2172, %v2145, %v1566
    %v2212 = vsel %vm2172, %v2147, %v1568
    %v2214 = vsel %vm2172, %v2149, %v1570
    %v2216 = vsel %vm2172, %v2151, %v1572
    %v2218 = vsel %vm2172, %v2153, %v1574
    %v2220 = vsel %vm2172, %v2155, %v1576
    %v2222 = vsel %vm2172, %v2157, %v1578
    %v2224 = vsel %vm2172, %v2159, %v1580
    %v2226 = vsel %vm2172, %v2161, %v1582
    %v2228 = vsel %vm2172, %v2163, %v1584
    %v2230 = vsel %vm2172, %v2165, %v1586
    %v2232 = vsel %vm2172, %v2167, %v1588
    %v2234 = vsel %vm2172, %v2169, %v1590
    %v2236 = vsel %vm2172, %v2171, %v1592
    %vm2237 = vcmask 195584
    %v2239 = vsel %vm2237, %v2174, %v1626
    %v2241 = vsel %vm2237, %v2176, %v1628
    %v2243 = vsel %vm2237, %v2178, %v1630
    %v2245 = vsel %vm2237, %v2180, %v1632
    %v2247 = vsel %vm2237, %v2182, %v1634
    %v2249 = vsel %vm2237, %v2184, %v1636
    %v2251 = vsel %vm2237, %v2186, %v1638
    %v2253 = vsel %vm2237, %v2188, %v1640
    %v2255 = vsel %vm2237, %v2190, %v1642
    %v2257 = vsel %vm2237, %v2192, %v1644
    %v2259 = vsel %vm2237, %v2194, %v1646
    %v2261 = vsel %vm2237, %v2196, %v1648
    %v2263 = vsel %vm2237, %v2198, %v1650
    %v2265 = vsel %vm2237, %v2200, %v1652
    %v2267 = vsel %vm2237, %v2202, %v1654
    %v2269 = vsel %vm2237, %v2204, %v1656
    %v2271 = vsel %vm2237, %v2206, %v1658
    %v2273 = vsel %vm2237, %v2208, %v1660
    %v2275 = vsel %vm2237, %v2210, %v1662
    %v2277 = vsel %vm2237, %v2212, %v1664
    %v2279 = vsel %vm2237, %v2214, %v1666
    %v2281 = vsel %vm2237, %v2216, %v1668
    %v2283 = vsel %vm2237, %v2218, %v1670
    %v2285 = vsel %vm2237, %v2220, %v1672
    %v2287 = vsel %vm2237, %v2222, %v1674
    %v2289 = vsel %vm2237, %v2224, %v1676
    %v2291 = vsel %vm2237, %v2226, %v1678
    %v2293 = vsel %vm2237, %v2228, %v1680
    %v2295 = vsel %vm2237, %v2230, %v1682
    %v2297 = vsel %vm2237, %v2232, %v1684
    %v2299 = vsel %vm2237, %v2234, %v1686
    %v2301 = vsel %vm2237, %v2236, %v1688
    %vm2302 = vcmask 228352
    %v2304 = vsel %vm2302, %v2239, %v1722
    %v2306 = vsel %vm2302, %v2241, %v1724
    %v2308 = vsel %vm2302, %v2243, %v1726
    %v2310 = vsel %vm2302, %v2245, %v1728
    %v2312 = vsel %vm2302, %v2247, %v1730
    %v2314 = vsel %vm2302, %v2249, %v1732
    %v2316 = vsel %vm2302, %v2251, %v1734
    %v2318 = vsel %vm2302, %v2253, %v1736
    %v2320 = vsel %vm2302, %v2255, %v1738
    %v2322 = vsel %vm2302, %v2257, %v1740
    %v2324 = vsel %vm2302, %v2259, %v1742
    %v2326 = vsel %vm2302, %v2261, %v1744
    %v2328 = vsel %vm2302, %v2263, %v1746
    %v2330 = vsel %vm2302, %v2265, %v1748
    %v2332 = vsel %vm2302, %v2267, %v1750
    %v2334 = vsel %vm2302, %v2269, %v1752
    %v2336 = vsel %vm2302, %v2271, %v1754
    %v2338 = vsel %vm2302, %v2273, %v1756
    %v2340 = vsel %vm2302, %v2275, %v1758
    %v2342 = vsel %vm2302, %v2277, %v1760
    %v2344 = vsel %vm2302, %v2279, %v1762
    %v2346 = vsel %vm2302, %v2281, %v1764
    %v2348 = vsel %vm2302, %v2283, %v1766
    %v2350 = vsel %vm2302, %v2285, %v1768
    %v2352 = vsel %vm2302, %v2287, %v1770
    %v2354 = vsel %vm2302, %v2289, %v1772
    %v2356 = vsel %vm2302, %v2291, %v1774
    %v2358 = vsel %vm2302, %v2293, %v1776
    %v2360 = vsel %vm2302, %v2295, %v1778
    %v2362 = vsel %vm2302, %v2297, %v1780
    %v2364 = vsel %vm2302, %v2299, %v1782
    %v2366 = vsel %vm2302, %v2301, %v1784
    %vm2367 = vcmask 261120
    %v2369 = vsel %vm2367, %v2304, %v1818
    %v2371 = vsel %vm2367, %v2306, %v1820
    %v2373 = vsel %vm2367, %v2308, %v1822
    %v2375 = vsel %vm2367, %v2310, %v1824
    %v2377 = vsel %vm2367, %v2312, %v1826
    %v2379 = vsel %vm2367, %v2314, %v1828
    %v2381 = vsel %vm2367, %v2316, %v1830
    %v2383 = vsel %vm2367, %v2318, %v1832
    %v2385 = vsel %vm2367, %v2320, %v1834
    %v2387 = vsel %vm2367, %v2322, %v1836
    %v2389 = vsel %vm2367, %v2324, %v1838
    %v2391 = vsel %vm2367, %v2326, %v1840
    %v2393 = vsel %vm2367, %v2328, %v1842
    %v2395 = vsel %vm2367, %v2330, %v1844
    %v2397 = vsel %vm2367, %v2332, %v1846
    %v2399 = vsel %vm2367, %v2334, %v1848
    %v2401 = vsel %vm2367, %v2336, %v1850
    %v2403 = vsel %vm2367, %v2338, %v1852
    %v2405 = vsel %vm2367, %v2340, %v1854
    %v2407 = vsel %vm2367, %v2342, %v1856
    %v2409 = vsel %vm2367, %v2344, %v1858
    %v2411 = vsel %vm2367, %v2346, %v1860
    %v2413 = vsel %vm2367, %v2348, %v1862
    %v2415 = vsel %vm2367, %v2350, %v1864
    %v2417 = vsel %vm2367, %v2352, %v1866
    %v2419 = vsel %vm2367, %v2354, %v1868
    %v2421 = vsel %vm2367, %v2356, %v1870
    %v2423 = vsel %vm2367, %v2358, %v1872
    %v2425 = vsel %vm2367, %v2360, %v1874
    %v2427 = vsel %vm2367, %v2362, %v1876
    %v2429 = vsel %vm2367, %v2364, %v1878
    %v2431 = vsel %vm2367, %v2366, %v1880
    %v2432 = vld [vmem:[%s1] sm:$0xf]
    %v2433 = vld [vmem:[%s1 + $0x4] sm:$0xf]
    %v2434 = vld [vmem:[%s1 + $0x8] sm:$0xf]
    %v2435 = vld [vmem:[%s1 + $0xc] sm:$0xf]
    %v2436 = vld [vmem:[%s1 + $0x10] sm:$0x3]
    %v2442 = vunpack.c.l.b16 %v2432
    %v2443 = vunpack.c.l.b16 %v2433
    %v2444 = vunpack.c.l.b16 %v2434
    %v2445 = vunpack.c.l.b16 %v2435
    %v2446 = vunpack.c.l.b16 %v2436
    %v2447 = vpack.c.b16 %v2443, %v2442
    %v2448 = vpack.c.b16 %v2445, %v2444
    %v2449 = vpack.c.b16 %v2446, %v2446
    %vm2452 = vcmask 293888
    %v2453 = vsel %vm2452, %v2369, 0
    %v2455 = vsel %vm2452, %v2371, 0
    %v2457 = vsel %vm2452, %v2373, 0
    %v2459 = vsel %vm2452, %v2375, 0
    %v2461 = vsel %vm2452, %v2377, 0
    %v2463 = vsel %vm2452, %v2379, 0
    %v2465 = vsel %vm2452, %v2381, 0
    %v2467 = vsel %vm2452, %v2383, 0
    %v2469 = vsel %vm2452, %v2385, 0
    %v2471 = vsel %vm2452, %v2387, 0
    %v2473 = vsel %vm2452, %v2389, 0
    %v2475 = vsel %vm2452, %v2391, 0
    %v2477 = vsel %vm2452, %v2393, 0
    %v2479 = vsel %vm2452, %v2395, 0
    %v2481 = vsel %vm2452, %v2397, 0
    %v2483 = vsel %vm2452, %v2399, 0
    %v2485 = vsel %vm2452, %v2401, 0
    %v2487 = vsel %vm2452, %v2403, 0
    %v2489 = vsel %vm2452, %v2405, 0
    %v2491 = vsel %vm2452, %v2407, 0
    %v2493 = vsel %vm2452, %v2409, 0
    %v2495 = vsel %vm2452, %v2411, 0
    %v2497 = vsel %vm2452, %v2413, 0
    %v2499 = vsel %vm2452, %v2415, 0
    %v2501 = vsel %vm2452, %v2417, 0
    %v2503 = vsel %vm2452, %v2419, 0
    %v2505 = vsel %vm2452, %v2421, 0
    %v2507 = vsel %vm2452, %v2423, 0
    %v2509 = vsel %vm2452, %v2425, 0
    %v2511 = vsel %vm2452, %v2427, 0
    %v2513 = vsel %vm2452, %v2429, 0
    %v2515 = vsel %vm2452, %v2431, 0
    %vm2517 = vcmask 1041408
    %v2519 = vsel %vm2517, %v2449, 0
    %2521 = vmatprep.subr.bf16.mxu0 0
    %2522 = vmatpush1.bf16.msra.mxu0 %v2447
    %2523 = vmatprep.subr.bf16.mxu0 0
    %2524 = vmatpush1.bf16.msra.mxu0 %v2448
    %2525 = vmatprep.subr.bf16.mxu0 0
    %2526 = vmatpush1.bf16.msra.mxu0 %v2519
    %2527 = vmatprep.subr.bf16.mxu0 0
    %2528 = vmatpush1.bf16.msra.mxu0 0
    %2529 = vmatprep.subr.bf16.mxu0 0
    %2530 = vmatpush1.bf16.msra.mxu0 0
    %2531 = vmatprep.subr.bf16.mxu0 0
    %2532 = vmatpush1.bf16.msra.mxu0 0
    %2533 = vmatprep.subr.bf16.mxu0 0
    %2534 = vmatpush1.bf16.msra.mxu0 0
    %2535 = vmatprep.subr.bf16.mxu0 0
    %2536 = vmatpush1.bf16.msra.mxu0 0
    %2537 = vmatprep.subr.bf16.mxu0 0
    %2538 = vmatpush1.bf16.msra.mxu0 0
    %2539 = vmatprep.subr.bf16.mxu0 0
    %2540 = vmatpush1.bf16.msra.mxu0 0
    %2541 = vmatprep.subr.bf16.mxu0 0
    %2542 = vmatpush1.bf16.msra.mxu0 0
    %2543 = vmatprep.subr.bf16.mxu0 0
    %2544 = vmatpush1.bf16.msra.mxu0 0
    %2545 = vmatprep.subr.bf16.mxu0 0
    %2546 = vmatpush1.bf16.msra.mxu0 0
    %2547 = vmatprep.subr.bf16.mxu0 0
    %2548 = vmatpush1.bf16.msra.mxu0 0
    %2549 = vmatprep.subr.bf16.mxu0 0
    %2550 = vmatpush1.bf16.msra.mxu0 0
    %2551 = vmatprep.subr.bf16.mxu0 0
    %2552 = vmatpush1.bf16.msra.mxu0 0
    %2553 = vmatprep.mubr.bf16.mxu0 0
    %2554 = vmatmul.mubr.bf16.gmra.mrb[0].mxu0 %v2453
    %v2555 = vpop.f32.mrb[0].mxu0
    %v2556 = vadd.f32 0.0, %v2555
    %v2557 = vpop.f32.mrb[0].mxu0
    %v2558 = vpop.f32.mrb[0].mxu0
    %v2559 = vadd.f32 0.0, %v2558
    %v2560 = vpop.f32.mrb[0].mxu0
    %2561 = vmatprep.mubr.bf16.mxu0 0
    %2562 = vmatmul.mubr.bf16.gmra.mrb[0].mxu0 %v2455
    %v2563 = vpop.f32.mrb[0].mxu0
    %v2564 = vadd.f32 0.0, %v2563
    %v2565 = vpop.f32.mrb[0].mxu0
    %v2566 = vpop.f32.mrb[0].mxu0
    %v2567 = vadd.f32 0.0, %v2566
    %v2568 = vpop.f32.mrb[0].mxu0
    %2569 = vmatprep.mubr.bf16.mxu0 0
    %2570 = vmatmul.mubr.bf16.gmra.mrb[0].mxu0 %v2457
    %v2571 = vpop.f32.mrb[0].mxu0
    %v2572 = vadd.f32 0.0, %v2571
    %v2573 = vpop.f32.mrb[0].mxu0
    %v2574 = vpop.f32.mrb[0].mxu0
    %v2575 = vadd.f32 0.0, %v2574
    %v2576 = vpop.f32.mrb[0].mxu0
    %2577 = vmatprep.mubr.bf16.mxu0 0
    %2578 = vmatmul.mubr.bf16.gmra.mrb[0].mxu0 %v2459
    %v2579 = vpop.f32.mrb[0].mxu0
    %v2580 = vadd.f32 0.0, %v2579
    %v2581 = vpop.f32.mrb[0].mxu0
    %v2582 = vpop.f32.mrb[0].mxu0
    %v2583 = vadd.f32 0.0, %v2582
    %v2584 = vpop.f32.mrb[0].mxu0
    %2585 = vmatprep.mubr.bf16.mxu0 0
    %2586 = vmatmul.mubr.bf16.gmra.mrb[0].mxu0 %v2461
    %v2587 = vpop.f32.mrb[0].mxu0
    %v2588 = vadd.f32 0.0, %v2587
    %v2589 = vpop.f32.mrb[0].mxu0
    %v2590 = vpop.f32.mrb[0].mxu0
    %v2591 = vadd.f32 0.0, %v2590
    %v2592 = vpop.f32.mrb[0].mxu0
    %2593 = vmatprep.mubr.bf16.mxu0 0
    %2594 = vmatmul.mubr.bf16.gmra.mrb[0].mxu0 %v2463
    %v2595 = vpop.f32.mrb[0].mxu0
    %v2596 = vadd.f32 0.0, %v2595
    %v2597 = vpop.f32.mrb[0].mxu0
    %v2598 = vpop.f32.mrb[0].mxu0
    %v2599 = vadd.f32 0.0, %v2598
    %v2600 = vpop.f32.mrb[0].mxu0
    %2601 = vmatprep.mubr.bf16.mxu0 0
    %2602 = vmatmul.mubr.bf16.gmra.mrb[0].mxu0 %v2465
    %v2603 = vpop.f32.mrb[0].mxu0
    %v2604 = vadd.f32 0.0, %v2603
    %v2605 = vpop.f32.mrb[0].mxu0
    %v2606 = vpop.f32.mrb[0].mxu0
    %v2607 = vadd.f32 0.0, %v2606
    %v2608 = vpop.f32.mrb[0].mxu0
    %2609 = vmatprep.mubr.bf16.mxu0 0
    %2610 = vmatmul.mubr.bf16.gmra.mrb[0].mxu0 %v2467
    %v2611 = vpop.f32.mrb[0].mxu0
    %v2612 = vadd.f32 0.0, %v2611
    %v2613 = vpop.f32.mrb[0].mxu0
    %v2614 = vpop.f32.mrb[0].mxu0
    %v2615 = vadd.f32 0.0, %v2614
    %v2616 = vpop.f32.mrb[0].mxu0
    %2617 = vmatprep.mubr.bf16.mxu0 0
    %2618 = vmatmul.mubr.bf16.gmra.mrb[0].mxu0 %v2469
    %v2619 = vpop.f32.mrb[0].mxu0
    %v2620 = vadd.f32 0.0, %v2619
    %v2621 = vpop.f32.mrb[0].mxu0
    %v2622 = vpop.f32.mrb[0].mxu0
    %v2623 = vadd.f32 0.0, %v2622
    %v2624 = vpop.f32.mrb[0].mxu0
    %2625 = vmatprep.mubr.bf16.mxu0 0
    %2626 = vmatmul.mubr.bf16.gmra.mrb[0].mxu0 %v2471
    %v2627 = vpop.f32.mrb[0].mxu0
    %v2628 = vadd.f32 0.0, %v2627
    %v2629 = vpop.f32.mrb[0].mxu0
    %v2630 = vpop.f32.mrb[0].mxu0
    %v2631 = vadd.f32 0.0, %v2630
    %v2632 = vpop.f32.mrb[0].mxu0
    %2633 = vmatprep.mubr.bf16.mxu0 0
    %2634 = vmatmul.mubr.bf16.gmra.mrb[0].mxu0 %v2473
    %v2635 = vpop.f32.mrb[0].mxu0
    %v2636 = vadd.f32 0.0, %v2635
    %v2637 = vpop.f32.mrb[0].mxu0
    %v2638 = vpop.f32.mrb[0].mxu0
    %v2639 = vadd.f32 0.0, %v2638
    %v2640 = vpop.f32.mrb[0].mxu0
    %2641 = vmatprep.mubr.bf16.mxu0 0
    %2642 = vmatmul.mubr.bf16.gmra.mrb[0].mxu0 %v2475
    %v2643 = vpop.f32.mrb[0].mxu0
    %v2644 = vadd.f32 0.0, %v2643
    %v2645 = vpop.f32.mrb[0].mxu0
    %v2646 = vpop.f32.mrb[0].mxu0
    %v2647 = vadd.f32 0.0, %v2646
    %v2648 = vpop.f32.mrb[0].mxu0
    %2649 = vmatprep.mubr.bf16.mxu0 0
    %2650 = vmatmul.mubr.bf16.gmra.mrb[0].mxu0 %v2477
    %v2651 = vpop.f32.mrb[0].mxu0
    %v2652 = vadd.f32 0.0, %v2651
    %v2653 = vpop.f32.mrb[0].mxu0
    %v2654 = vpop.f32.mrb[0].mxu0
    %v2655 = vadd.f32 0.0, %v2654
    %v2656 = vpop.f32.mrb[0].mxu0
    %2657 = vmatprep.mubr.bf16.mxu0 0
    %2658 = vmatmul.mubr.bf16.gmra.mrb[0].mxu0 %v2479
    %v2659 = vpop.f32.mrb[0].mxu0
    %v2660 = vadd.f32 0.0, %v2659
    %v2661 = vpop.f32.mrb[0].mxu0
    %v2662 = vpop.f32.mrb[0].mxu0
    %v2663 = vadd.f32 0.0, %v2662
    %v2664 = vpop.f32.mrb[0].mxu0
    %2665 = vmatprep.mubr.bf16.mxu0 0
    %2666 = vmatmul.mubr.bf16.gmra.mrb[0].mxu0 %v2481
    %v2667 = vpop.f32.mrb[0].mxu0
    %v2668 = vadd.f32 0.0, %v2667
    %v2669 = vpop.f32.mrb[0].mxu0
    %v2670 = vpop.f32.mrb[0].mxu0
    %v2671 = vadd.f32 0.0, %v2670
    %v2672 = vpop.f32.mrb[0].mxu0
    %2673 = vmatprep.mubr.bf16.mxu0 0
    %2674 = vmatmul.mubr.bf16.gmra.mrb[0].mxu0 %v2483
    %v2675 = vpop.f32.mrb[0].mxu0
    %v2676 = vadd.f32 0.0, %v2675
    %v2677 = vpop.f32.mrb[0].mxu0
    %v2678 = vpop.f32.mrb[0].mxu0
    %v2679 = vadd.f32 0.0, %v2678
    %v2680 = vpop.f32.mrb[0].mxu0
    %2681 = vmatprep.mubr.bf16.mxu0 0
    %2682 = vmatmul.mubr.bf16.gmra.mrb[0].mxu0 %v2485
    %v2683 = vpop.f32.mrb[0].mxu0
    %v2684 = vadd.f32 0.0, %v2683
    %v2685 = vpop.f32.mrb[0].mxu0
    %v2686 = vpop.f32.mrb[0].mxu0
    %v2687 = vadd.f32 0.0, %v2686
    %v2688 = vpop.f32.mrb[0].mxu0
    %2689 = vmatprep.mubr.bf16.mxu0 0
    %2690 = vmatmul.mubr.bf16.gmra.mrb[0].mxu0 %v2487
    %v2691 = vpop.f32.mrb[0].mxu0
    %v2692 = vadd.f32 0.0, %v2691
    %v2693 = vpop.f32.mrb[0].mxu0
    %v2694 = vpop.f32.mrb[0].mxu0
    %v2695 = vadd.f32 0.0, %v2694
    %v2696 = vpop.f32.mrb[0].mxu0
    %2697 = vmatprep.mubr.bf16.mxu0 0
    %2698 = vmatmul.mubr.bf16.gmra.mrb[0].mxu0 %v2489
    %v2699 = vpop.f32.mrb[0].mxu0
    %v2700 = vadd.f32 0.0, %v2699
    %v2701 = vpop.f32.mrb[0].mxu0
    %v2702 = vpop.f32.mrb[0].mxu0
    %v2703 = vadd.f32 0.0, %v2702
    %v2704 = vpop.f32.mrb[0].mxu0
    %2705 = vmatprep.mubr.bf16.mxu0 0
    %2706 = vmatmul.mubr.bf16.gmra.mrb[0].mxu0 %v2491
    %v2707 = vpop.f32.mrb[0].mxu0
    %v2708 = vadd.f32 0.0, %v2707
    %v2709 = vpop.f32.mrb[0].mxu0
    %v2710 = vpop.f32.mrb[0].mxu0
    %v2711 = vadd.f32 0.0, %v2710
    %v2712 = vpop.f32.mrb[0].mxu0
    %2713 = vmatprep.mubr.bf16.mxu0 0
    %2714 = vmatmul.mubr.bf16.gmra.mrb[0].mxu0 %v2493
    %v2715 = vpop.f32.mrb[0].mxu0
    %v2716 = vadd.f32 0.0, %v2715
    %v2717 = vpop.f32.mrb[0].mxu0
    %v2718 = vpop.f32.mrb[0].mxu0
    %v2719 = vadd.f32 0.0, %v2718
    %v2720 = vpop.f32.mrb[0].mxu0
    %2721 = vmatprep.mubr.bf16.mxu0 0
    %2722 = vmatmul.mubr.bf16.gmra.mrb[0].mxu0 %v2495
    %v2723 = vpop.f32.mrb[0].mxu0
    %v2724 = vadd.f32 0.0, %v2723
    %v2725 = vpop.f32.mrb[0].mxu0
    %v2726 = vpop.f32.mrb[0].mxu0
    %v2727 = vadd.f32 0.0, %v2726
    %v2728 = vpop.f32.mrb[0].mxu0
    %2729 = vmatprep.mubr.bf16.mxu0 0
    %2730 = vmatmul.mubr.bf16.gmra.mrb[0].mxu0 %v2497
    %v2731 = vpop.f32.mrb[0].mxu0
    %v2732 = vadd.f32 0.0, %v2731
    %v2733 = vpop.f32.mrb[0].mxu0
    %v2734 = vpop.f32.mrb[0].mxu0
    %v2735 = vadd.f32 0.0, %v2734
    %v2736 = vpop.f32.mrb[0].mxu0
    %2737 = vmatprep.mubr.bf16.mxu0 0
    %2738 = vmatmul.mubr.bf16.gmra.mrb[0].mxu0 %v2499
    %v2739 = vpop.f32.mrb[0].mxu0
    %v2740 = vadd.f32 0.0, %v2739
    %v2741 = vpop.f32.mrb[0].mxu0
    %v2742 = vpop.f32.mrb[0].mxu0
    %v2743 = vadd.f32 0.0, %v2742
    %v2744 = vpop.f32.mrb[0].mxu0
    %2745 = vmatprep.mubr.bf16.mxu0 0
    %2746 = vmatmul.mubr.bf16.gmra.mrb[0].mxu0 %v2501
    %v2747 = vpop.f32.mrb[0].mxu0
    %v2748 = vadd.f32 0.0, %v2747
    %v2749 = vpop.f32.mrb[0].mxu0
    %v2750 = vpop.f32.mrb[0].mxu0
    %v2751 = vadd.f32 0.0, %v2750
    %v2752 = vpop.f32.mrb[0].mxu0
    %2753 = vmatprep.mubr.bf16.mxu0 0
    %2754 = vmatmul.mubr.bf16.gmra.mrb[0].mxu0 %v2503
    %v2755 = vpop.f32.mrb[0].mxu0
    %v2756 = vadd.f32 0.0, %v2755
    %v2757 = vpop.f32.mrb[0].mxu0
    %v2758 = vpop.f32.mrb[0].mxu0
    %v2759 = vadd.f32 0.0, %v2758
    %v2760 = vpop.f32.mrb[0].mxu0
    %2761 = vmatprep.mubr.bf16.mxu0 0
    %2762 = vmatmul.mubr.bf16.gmra.mrb[0].mxu0 %v2505
    %v2763 = vpop.f32.mrb[0].mxu0
    %v2764 = vadd.f32 0.0, %v2763
    %v2765 = vpop.f32.mrb[0].mxu0
    %v2766 = vpop.f32.mrb[0].mxu0
    %v2767 = vadd.f32 0.0, %v2766
    %v2768 = vpop.f32.mrb[0].mxu0
    %2769 = vmatprep.mubr.bf16.mxu0 0
    %2770 = vmatmul.mubr.bf16.gmra.mrb[0].mxu0 %v2507
    %v2771 = vpop.f32.mrb[0].mxu0
    %v2772 = vadd.f32 0.0, %v2771
    %v2773 = vpop.f32.mrb[0].mxu0
    %v2774 = vpop.f32.mrb[0].mxu0
    %v2775 = vadd.f32 0.0, %v2774
    %v2776 = vpop.f32.mrb[0].mxu0
    %2777 = vmatprep.mubr.bf16.mxu0 0
    %2778 = vmatmul.mubr.bf16.gmra.mrb[0].mxu0 %v2509
    %v2779 = vpop.f32.mrb[0].mxu0
    %v2780 = vadd.f32 0.0, %v2779
    %v2781 = vpop.f32.mrb[0].mxu0
    %v2782 = vpop.f32.mrb[0].mxu0
    %v2783 = vadd.f32 0.0, %v2782
    %v2784 = vpop.f32.mrb[0].mxu0
    %2785 = vmatprep.mubr.bf16.mxu0 0
    %2786 = vmatmul.mubr.bf16.gmra.mrb[0].mxu0 %v2511
    %v2787 = vpop.f32.mrb[0].mxu0
    %v2788 = vadd.f32 0.0, %v2787
    %v2789 = vpop.f32.mrb[0].mxu0
    %v2790 = vpop.f32.mrb[0].mxu0
    %v2791 = vadd.f32 0.0, %v2790
    %v2792 = vpop.f32.mrb[0].mxu0
    %2793 = vmatprep.mubr.bf16.mxu0 0
    %2794 = vmatmul.mubr.bf16.gmra.mrb[0].mxu0 %v2513
    %v2795 = vpop.f32.mrb[0].mxu0
    %v2796 = vadd.f32 0.0, %v2795
    %v2797 = vpop.f32.mrb[0].mxu0
    %v2798 = vpop.f32.mrb[0].mxu0
    %v2799 = vadd.f32 0.0, %v2798
    %v2800 = vpop.f32.mrb[0].mxu0
    %2801 = vmatprep.mubr.bf16.mxu0 0
    %2802 = vmatmul.mubr.bf16.gmra.mrb[0].mxu0 %v2515
    %v2803 = vpop.f32.mrb[0].mxu0
    %v2804 = vadd.f32 0.0, %v2803
    %v2805 = vpop.f32.mrb[0].mxu0
    %v2806 = vpop.f32.mrb[0].mxu0
    %v2807 = vadd.f32 0.0, %v2806
    %v2808 = vpop.f32.mrb[0].mxu0
    %2809 = vdwg.mxu0
    %v2810 = vadd.f32 %v2556, %v2559
    %v2811 = vadd.f32 %v2810, %v2564
    %v2812 = vadd.f32 %v2811, %v2567
    %v2813 = vadd.f32 %v2812, %v2572
    %v2814 = vadd.f32 %v2813, %v2575
    %v2815 = vadd.f32 %v2814, %v2580
    %v2816 = vadd.f32 %v2815, %v2583
    %v2817 = vadd.f32 %v2816, %v2588
    %v2818 = vadd.f32 %v2817, %v2591
    %v2819 = vadd.f32 %v2818, %v2596
    %v2820 = vadd.f32 %v2819, %v2599
    %v2821 = vadd.f32 %v2820, %v2604
    %v2822 = vadd.f32 %v2821, %v2607
    %v2823 = vadd.f32 %v2822, %v2612
    %v2824 = vadd.f32 %v2823, %v2615
    %v2825 = vadd.f32 %v2824, %v2620
    %v2826 = vadd.f32 %v2825, %v2623
    %v2827 = vadd.f32 %v2826, %v2628
    %v2828 = vadd.f32 %v2827, %v2631
    %v2829 = vadd.f32 %v2828, %v2636
    %v2830 = vadd.f32 %v2829, %v2639
    %v2831 = vadd.f32 %v2830, %v2644
    %v2832 = vadd.f32 %v2831, %v2647
    %v2833 = vadd.f32 %v2832, %v2652
    %v2834 = vadd.f32 %v2833, %v2655
    %v2835 = vadd.f32 %v2834, %v2660
    %v2836 = vadd.f32 %v2835, %v2663
    %v2837 = vadd.f32 %v2836, %v2668
    %v2838 = vadd.f32 %v2837, %v2671
    %v2839 = vadd.f32 %v2838, %v2676
    %v2840 = vadd.f32 %v2839, %v2679
    %v2841 = vadd.f32 %v2840, %v2684
    %v2842 = vadd.f32 %v2841, %v2687
    %v2843 = vadd.f32 %v2842, %v2692
    %v2844 = vadd.f32 %v2843, %v2695
    %v2845 = vadd.f32 %v2844, %v2700
    %v2846 = vadd.f32 %v2845, %v2703
    %v2847 = vadd.f32 %v2846, %v2708
    %v2848 = vadd.f32 %v2847, %v2711
    %v2849 = vadd.f32 %v2848, %v2716
    %v2850 = vadd.f32 %v2849, %v2719
    %v2851 = vadd.f32 %v2850, %v2724
    %v2852 = vadd.f32 %v2851, %v2727
    %v2853 = vadd.f32 %v2852, %v2732
    %v2854 = vadd.f32 %v2853, %v2735
    %v2855 = vadd.f32 %v2854, %v2740
    %v2856 = vadd.f32 %v2855, %v2743
    %v2857 = vadd.f32 %v2856, %v2748
    %v2858 = vadd.f32 %v2857, %v2751
    %v2859 = vadd.f32 %v2858, %v2756
    %v2860 = vadd.f32 %v2859, %v2759
    %v2861 = vadd.f32 %v2860, %v2764
    %v2862 = vadd.f32 %v2861, %v2767
    %v2863 = vadd.f32 %v2862, %v2772
    %v2864 = vadd.f32 %v2863, %v2775
    %v2865 = vadd.f32 %v2864, %v2780
    %v2866 = vadd.f32 %v2865, %v2783
    %v2867 = vadd.f32 %v2866, %v2788
    %v2868 = vadd.f32 %v2867, %v2791
    %v2869 = vadd.f32 %v2868, %v2796
    %v2870 = vadd.f32 %v2869, %v2799
    %v2871 = vadd.f32 %v2870, %v2804
    %v2872 = vadd.f32 %v2871, %v2807
    %v2873 = vrot.slane %v2872, 4
    %v2874 = vadd.f32 %v2872, %v2873
    %v2875 = vrot.slane %v2874, 2
    %v2876 = vadd.f32 %v2874, %v2875
    %v2877 = vrot.slane %v2876, 1
    %v2878 = vadd.f32 %v2876, %v2877
    %v2879 = vrcp.pop 512.0
    %v2880 = vmul.f32 %v2878, %v2879
    %v2881 = vsub.f32 %v2556, %v2880
    %v2882 = vsub.f32 %v2559, %v2880
    %v2883 = vsub.f32 %v2564, %v2880
    %v2884 = vsub.f32 %v2567, %v2880
    %v2885 = vsub.f32 %v2572, %v2880
    %v2886 = vsub.f32 %v2575, %v2880
    %v2887 = vsub.f32 %v2580, %v2880
    %v2888 = vsub.f32 %v2583, %v2880
    %v2889 = vsub.f32 %v2588, %v2880
    %v2890 = vsub.f32 %v2591, %v2880
    %v2891 = vsub.f32 %v2596, %v2880
    %v2892 = vsub.f32 %v2599, %v2880
    %v2893 = vsub.f32 %v2604, %v2880
    %v2894 = vsub.f32 %v2607, %v2880
    %v2895 = vsub.f32 %v2612, %v2880
    %v2896 = vsub.f32 %v2615, %v2880
    %v2897 = vsub.f32 %v2620, %v2880
    %v2898 = vsub.f32 %v2623, %v2880
    %v2899 = vsub.f32 %v2628, %v2880
    %v2900 = vsub.f32 %v2631, %v2880
    %v2901 = vsub.f32 %v2636, %v2880
    %v2902 = vsub.f32 %v2639, %v2880
    %v2903 = vsub.f32 %v2644, %v2880
    %v2904 = vsub.f32 %v2647, %v2880
    %v2905 = vsub.f32 %v2652, %v2880
    %v2906 = vsub.f32 %v2655, %v2880
    %v2907 = vsub.f32 %v2660, %v2880
    %v2908 = vsub.f32 %v2663, %v2880
    %v2909 = vsub.f32 %v2668, %v2880
    %v2910 = vsub.f32 %v2671, %v2880
    %v2911 = vsub.f32 %v2676, %v2880
    %v2912 = vsub.f32 %v2679, %v2880
    %v2913 = vsub.f32 %v2684, %v2880
    %v2914 = vsub.f32 %v2687, %v2880
    %v2915 = vsub.f32 %v2692, %v2880
    %v2916 = vsub.f32 %v2695, %v2880
    %v2917 = vsub.f32 %v2700, %v2880
    %v2918 = vsub.f32 %v2703, %v2880
    %v2919 = vsub.f32 %v2708, %v2880
    %v2920 = vsub.f32 %v2711, %v2880
    %v2921 = vsub.f32 %v2716, %v2880
    %v2922 = vsub.f32 %v2719, %v2880
    %v2923 = vsub.f32 %v2724, %v2880
    %v2924 = vsub.f32 %v2727, %v2880
    %v2925 = vsub.f32 %v2732, %v2880
    %v2926 = vsub.f32 %v2735, %v2880
    %v2927 = vsub.f32 %v2740, %v2880
    %v2928 = vsub.f32 %v2743, %v2880
    %v2929 = vsub.f32 %v2748, %v2880
    %v2930 = vsub.f32 %v2751, %v2880
    %v2931 = vsub.f32 %v2756, %v2880
    %v2932 = vsub.f32 %v2759, %v2880
    %v2933 = vsub.f32 %v2764, %v2880
    %v2934 = vsub.f32 %v2767, %v2880
    %v2935 = vsub.f32 %v2772, %v2880
    %v2936 = vsub.f32 %v2775, %v2880
    %v2937 = vsub.f32 %v2780, %v2880
    %v2938 = vsub.f32 %v2783, %v2880
    %v2939 = vsub.f32 %v2788, %v2880
    %v2940 = vsub.f32 %v2791, %v2880
    %v2941 = vsub.f32 %v2796, %v2880
    %v2942 = vsub.f32 %v2799, %v2880
    %v2943 = vsub.f32 %v2804, %v2880
    %v2944 = vsub.f32 %v2807, %v2880
    %v2945 = vmul.f32 %v2881, %v2881
    %v2946 = vmul.f32 %v2882, %v2882
    %v2947 = vmul.f32 %v2883, %v2883
    %v2948 = vmul.f32 %v2884, %v2884
    %v2949 = vmul.f32 %v2885, %v2885
    %v2950 = vmul.f32 %v2886, %v2886
    %v2951 = vmul.f32 %v2887, %v2887
    %v2952 = vmul.f32 %v2888, %v2888
    %v2953 = vmul.f32 %v2889, %v2889
    %v2954 = vmul.f32 %v2890, %v2890
    %v2955 = vmul.f32 %v2891, %v2891
    %v2956 = vmul.f32 %v2892, %v2892
    %v2957 = vmul.f32 %v2893, %v2893
    %v2958 = vmul.f32 %v2894, %v2894
    %v2959 = vmul.f32 %v2895, %v2895
    %v2960 = vmul.f32 %v2896, %v2896
    %v2961 = vmul.f32 %v2897, %v2897
    %v2962 = vmul.f32 %v2898, %v2898
    %v2963 = vmul.f32 %v2899, %v2899
    %v2964 = vmul.f32 %v2900, %v2900
    %v2965 = vmul.f32 %v2901, %v2901
    %v2966 = vmul.f32 %v2902, %v2902
    %v2967 = vmul.f32 %v2903, %v2903
    %v2968 = vmul.f32 %v2904, %v2904
    %v2969 = vmul.f32 %v2905, %v2905
    %v2970 = vmul.f32 %v2906, %v2906
    %v2971 = vmul.f32 %v2907, %v2907
    %v2972 = vmul.f32 %v2908, %v2908
    %v2973 = vmul.f32 %v2909, %v2909
    %v2974 = vmul.f32 %v2910, %v2910
    %v2975 = vmul.f32 %v2911, %v2911
    %v2976 = vmul.f32 %v2912, %v2912
    %v2977 = vmul.f32 %v2913, %v2913
    %v2978 = vmul.f32 %v2914, %v2914
    %v2979 = vmul.f32 %v2915, %v2915
    %v2980 = vmul.f32 %v2916, %v2916
    %v2981 = vmul.f32 %v2917, %v2917
    %v2982 = vmul.f32 %v2918, %v2918
    %v2983 = vmul.f32 %v2919, %v2919
    %v2984 = vmul.f32 %v2920, %v2920
    %v2985 = vmul.f32 %v2921, %v2921
    %v2986 = vmul.f32 %v2922, %v2922
    %v2987 = vmul.f32 %v2923, %v2923
    %v2988 = vmul.f32 %v2924, %v2924
    %v2989 = vmul.f32 %v2925, %v2925
    %v2990 = vmul.f32 %v2926, %v2926
    %v2991 = vmul.f32 %v2927, %v2927
    %v2992 = vmul.f32 %v2928, %v2928
    %v2993 = vmul.f32 %v2929, %v2929
    %v2994 = vmul.f32 %v2930, %v2930
    %v2995 = vmul.f32 %v2931, %v2931
    %v2996 = vmul.f32 %v2932, %v2932
    %v2997 = vmul.f32 %v2933, %v2933
    %v2998 = vmul.f32 %v2934, %v2934
    %v2999 = vmul.f32 %v2935, %v2935
    %v3000 = vmul.f32 %v2936, %v2936
    %v3001 = vmul.f32 %v2937, %v2937
    %v3002 = vmul.f32 %v2938, %v2938
    %v3003 = vmul.f32 %v2939, %v2939
    %v3004 = vmul.f32 %v2940, %v2940
    %v3005 = vmul.f32 %v2941, %v2941
    %v3006 = vmul.f32 %v2942, %v2942
    %v3007 = vmul.f32 %v2943, %v2943
    %v3008 = vmul.f32 %v2944, %v2944
    %v3009 = vadd.f32 %v2945, %v2946
    %v3010 = vadd.f32 %v3009, %v2947
    %v3011 = vadd.f32 %v3010, %v2948
    %v3012 = vadd.f32 %v3011, %v2949
    %v3013 = vadd.f32 %v3012, %v2950
    %v3014 = vadd.f32 %v3013, %v2951
    %v3015 = vadd.f32 %v3014, %v2952
    %v3016 = vadd.f32 %v3015, %v2953
    %v3017 = vadd.f32 %v3016, %v2954
    %v3018 = vadd.f32 %v3017, %v2955
    %v3019 = vadd.f32 %v3018, %v2956
    %v3020 = vadd.f32 %v3019, %v2957
    %v3021 = vadd.f32 %v3020, %v2958
    %v3022 = vadd.f32 %v3021, %v2959
    %v3023 = vadd.f32 %v3022, %v2960
    %v3024 = vadd.f32 %v3023, %v2961
    %v3025 = vadd.f32 %v3024, %v2962
    %v3026 = vadd.f32 %v3025, %v2963
    %v3027 = vadd.f32 %v3026, %v2964
    %v3028 = vadd.f32 %v3027, %v2965
    %v3029 = vadd.f32 %v3028, %v2966
    %v3030 = vadd.f32 %v3029, %v2967
    %v3031 = vadd.f32 %v3030, %v2968
    %v3032 = vadd.f32 %v3031, %v2969
    %v3033 = vadd.f32 %v3032, %v2970
    %v3034 = vadd.f32 %v3033, %v2971
    %v3035 = vadd.f32 %v3034, %v2972
    %v3036 = vadd.f32 %v3035, %v2973
    %v3037 = vadd.f32 %v3036, %v2974
    %v3038 = vadd.f32 %v3037, %v2975
    %v3039 = vadd.f32 %v3038, %v2976
    %v3040 = vadd.f32 %v3039, %v2977
    %v3041 = vadd.f32 %v3040, %v2978
    %v3042 = vadd.f32 %v3041, %v2979
    %v3043 = vadd.f32 %v3042, %v2980
    %v3044 = vadd.f32 %v3043, %v2981
    %v3045 = vadd.f32 %v3044, %v2982
    %v3046 = vadd.f32 %v3045, %v2983
    %v3047 = vadd.f32 %v3046, %v2984
    %v3048 = vadd.f32 %v3047, %v2985
    %v3049 = vadd.f32 %v3048, %v2986
    %v3050 = vadd.f32 %v3049, %v2987
    %v3051 = vadd.f32 %v3050, %v2988
    %v3052 = vadd.f32 %v3051, %v2989
    %v3053 = vadd.f32 %v3052, %v2990
    %v3054 = vadd.f32 %v3053, %v2991
    %v3055 = vadd.f32 %v3054, %v2992
    %v3056 = vadd.f32 %v3055, %v2993
    %v3057 = vadd.f32 %v3056, %v2994
    %v3058 = vadd.f32 %v3057, %v2995
    %v3059 = vadd.f32 %v3058, %v2996
    %v3060 = vadd.f32 %v3059, %v2997
    %v3061 = vadd.f32 %v3060, %v2998
    %v3062 = vadd.f32 %v3061, %v2999
    %v3063 = vadd.f32 %v3062, %v3000
    %v3064 = vadd.f32 %v3063, %v3001
    %v3065 = vadd.f32 %v3064, %v3002
    %v3066 = vadd.f32 %v3065, %v3003
    %v3067 = vadd.f32 %v3066, %v3004
    %v3068 = vadd.f32 %v3067, %v3005
    %v3069 = vadd.f32 %v3068, %v3006
    %v3070 = vadd.f32 %v3069, %v3007
    %v3071 = vadd.f32 %v3070, %v3008
    %v3072 = vrot.slane %v3071, 4
    %v3073 = vadd.f32 %v3071, %v3072
    %v3074 = vrot.slane %v3073, 2
    %v3075 = vadd.f32 %v3073, %v3074
    %v3076 = vrot.slane %v3075, 1
    %v3077 = vadd.f32 %v3075, %v3076
    %v3078 = vmul.f32 %v3077, %v2879
    %v3079 = vld [vmem:[%s2] sm:$0x1]
    %v3080 = vadd.f32 %v3078, 1e-05
    %v3081 = vrsqrt.pop %v3080
    %v3082 = vmul.f32 %v3079, %v3081
    %v3083 = vld [vmem:[%s3] sm:$0x1]
    %v3084 = vmul.f32 %v2880, %v3082
    %v3085 = vsub.f32 %v3083, %v3084
    %v3087 = vlaneseq
    %v3088 = vshrl.u32 %v3087, 7
    %v3089 = vsub.s32 0, %v3088
    %v3090 = vrot.slane %v3082, %v3089
    %v3092 = vmul.f32 %v2556, %v3090
    %v3093 = vmul.f32 %v2559, %v3090
    %v3094 = vmul.f32 %v2564, %v3090
    %v3095 = vmul.f32 %v2567, %v3090
    %v3096 = vmul.f32 %v2572, %v3090
    %v3097 = vmul.f32 %v2575, %v3090
    %v3098 = vmul.f32 %v2580, %v3090
    %v3099 = vmul.f32 %v2583, %v3090
    %v3100 = vmul.f32 %v2588, %v3090
    %v3101 = vmul.f32 %v2591, %v3090
    %v3102 = vmul.f32 %v2596, %v3090
    %v3103 = vmul.f32 %v2599, %v3090
    %v3104 = vmul.f32 %v2604, %v3090
    %v3105 = vmul.f32 %v2607, %v3090
    %v3106 = vmul.f32 %v2612, %v3090
    %v3107 = vmul.f32 %v2615, %v3090
    %v3108 = vmul.f32 %v2620, %v3090
    %v3109 = vmul.f32 %v2623, %v3090
    %v3110 = vmul.f32 %v2628, %v3090
    %v3111 = vmul.f32 %v2631, %v3090
    %v3112 = vmul.f32 %v2636, %v3090
    %v3113 = vmul.f32 %v2639, %v3090
    %v3114 = vmul.f32 %v2644, %v3090
    %v3115 = vmul.f32 %v2647, %v3090
    %v3116 = vmul.f32 %v2652, %v3090
    %v3117 = vmul.f32 %v2655, %v3090
    %v3118 = vmul.f32 %v2660, %v3090
    %v3119 = vmul.f32 %v2663, %v3090
    %v3120 = vmul.f32 %v2668, %v3090
    %v3121 = vmul.f32 %v2671, %v3090
    %v3122 = vmul.f32 %v2676, %v3090
    %v3123 = vmul.f32 %v2679, %v3090
    %v3124 = vmul.f32 %v2684, %v3090
    %v3125 = vmul.f32 %v2687, %v3090
    %v3126 = vmul.f32 %v2692, %v3090
    %v3127 = vmul.f32 %v2695, %v3090
    %v3128 = vmul.f32 %v2700, %v3090
    %v3129 = vmul.f32 %v2703, %v3090
    %v3130 = vmul.f32 %v2708, %v3090
    %v3131 = vmul.f32 %v2711, %v3090
    %v3132 = vmul.f32 %v2716, %v3090
    %v3133 = vmul.f32 %v2719, %v3090
    %v3134 = vmul.f32 %v2724, %v3090
    %v3135 = vmul.f32 %v2727, %v3090
    %v3136 = vmul.f32 %v2732, %v3090
    %v3137 = vmul.f32 %v2735, %v3090
    %v3138 = vmul.f32 %v2740, %v3090
    %v3139 = vmul.f32 %v2743, %v3090
    %v3140 = vmul.f32 %v2748, %v3090
    %v3141 = vmul.f32 %v2751, %v3090
    %v3142 = vmul.f32 %v2756, %v3090
    %v3143 = vmul.f32 %v2759, %v3090
    %v3144 = vmul.f32 %v2764, %v3090
    %v3145 = vmul.f32 %v2767, %v3090
    %v3146 = vmul.f32 %v2772, %v3090
    %v3147 = vmul.f32 %v2775, %v3090
    %v3148 = vmul.f32 %v2780, %v3090
    %v3149 = vmul.f32 %v2783, %v3090
    %v3150 = vmul.f32 %v2788, %v3090
    %v3151 = vmul.f32 %v2791, %v3090
    %v3152 = vmul.f32 %v2796, %v3090
    %v3153 = vmul.f32 %v2799, %v3090
    %v3154 = vmul.f32 %v2804, %v3090
    %v3155 = vmul.f32 %v2807, %v3090
    %v3157 = vlaneseq
    %v3158 = vshrl.u32 %v3157, 7
    %v3159 = vsub.s32 0, %v3158
    %v3160 = vrot.slane %v3085, %v3159
    %v3162 = vadd.f32 %v3092, %v3160
    %v3163 = vadd.f32 %v3093, %v3160
    %v3164 = vadd.f32 %v3094, %v3160
    %v3165 = vadd.f32 %v3095, %v3160
    %v3166 = vadd.f32 %v3096, %v3160
    %v3167 = vadd.f32 %v3097, %v3160
    %v3168 = vadd.f32 %v3098, %v3160
    %v3169 = vadd.f32 %v3099, %v3160
    %v3170 = vadd.f32 %v3100, %v3160
    %v3171 = vadd.f32 %v3101, %v3160
    %v3172 = vadd.f32 %v3102, %v3160
    %v3173 = vadd.f32 %v3103, %v3160
    %v3174 = vadd.f32 %v3104, %v3160
    %v3175 = vadd.f32 %v3105, %v3160
    %v3176 = vadd.f32 %v3106, %v3160
    %v3177 = vadd.f32 %v3107, %v3160
    %v3178 = vadd.f32 %v3108, %v3160
    %v3179 = vadd.f32 %v3109, %v3160
    %v3180 = vadd.f32 %v3110, %v3160
    %v3181 = vadd.f32 %v3111, %v3160
    %v3182 = vadd.f32 %v3112, %v3160
    %v3183 = vadd.f32 %v3113, %v3160
    %v3184 = vadd.f32 %v3114, %v3160
    %v3185 = vadd.f32 %v3115, %v3160
    %v3186 = vadd.f32 %v3116, %v3160
    %v3187 = vadd.f32 %v3117, %v3160
    %v3188 = vadd.f32 %v3118, %v3160
    %v3189 = vadd.f32 %v3119, %v3160
    %v3190 = vadd.f32 %v3120, %v3160
    %v3191 = vadd.f32 %v3121, %v3160
    %v3192 = vadd.f32 %v3122, %v3160
    %v3193 = vadd.f32 %v3123, %v3160
    %v3194 = vadd.f32 %v3124, %v3160
    %v3195 = vadd.f32 %v3125, %v3160
    %v3196 = vadd.f32 %v3126, %v3160
    %v3197 = vadd.f32 %v3127, %v3160
    %v3198 = vadd.f32 %v3128, %v3160
    %v3199 = vadd.f32 %v3129, %v3160
    %v3200 = vadd.f32 %v3130, %v3160
    %v3201 = vadd.f32 %v3131, %v3160
    %v3202 = vadd.f32 %v3132, %v3160
    %v3203 = vadd.f32 %v3133, %v3160
    %v3204 = vadd.f32 %v3134, %v3160
    %v3205 = vadd.f32 %v3135, %v3160
    %v3206 = vadd.f32 %v3136, %v3160
    %v3207 = vadd.f32 %v3137, %v3160
    %v3208 = vadd.f32 %v3138, %v3160
    %v3209 = vadd.f32 %v3139, %v3160
    %v3210 = vadd.f32 %v3140, %v3160
    %v3211 = vadd.f32 %v3141, %v3160
    %v3212 = vadd.f32 %v3142, %v3160
    %v3213 = vadd.f32 %v3143, %v3160
    %v3214 = vadd.f32 %v3144, %v3160
    %v3215 = vadd.f32 %v3145, %v3160
    %v3216 = vadd.f32 %v3146, %v3160
    %v3217 = vadd.f32 %v3147, %v3160
    %v3218 = vadd.f32 %v3148, %v3160
    %v3219 = vadd.f32 %v3149, %v3160
    %v3220 = vadd.f32 %v3150, %v3160
    %v3221 = vadd.f32 %v3151, %v3160
    %v3222 = vadd.f32 %v3152, %v3160
    %v3223 = vadd.f32 %v3153, %v3160
    %v3224 = vadd.f32 %v3154, %v3160
    %v3225 = vadd.f32 %v3155, %v3160
    %v3226 = vmax.f32 %v3162, 0.0
    %v3227 = vmax.f32 %v3163, 0.0
    %v3228 = vmax.f32 %v3164, 0.0
    %v3229 = vmax.f32 %v3165, 0.0
    %v3230 = vmax.f32 %v3166, 0.0
    %v3231 = vmax.f32 %v3167, 0.0
    %v3232 = vmax.f32 %v3168, 0.0
    %v3233 = vmax.f32 %v3169, 0.0
    %v3234 = vmax.f32 %v3170, 0.0
    %v3235 = vmax.f32 %v3171, 0.0
    %v3236 = vmax.f32 %v3172, 0.0
    %v3237 = vmax.f32 %v3173, 0.0
    %v3238 = vmax.f32 %v3174, 0.0
    %v3239 = vmax.f32 %v3175, 0.0
    %v3240 = vmax.f32 %v3176, 0.0
    %v3241 = vmax.f32 %v3177, 0.0
    %v3242 = vmax.f32 %v3178, 0.0
    %v3243 = vmax.f32 %v3179, 0.0
    %v3244 = vmax.f32 %v3180, 0.0
    %v3245 = vmax.f32 %v3181, 0.0
    %v3246 = vmax.f32 %v3182, 0.0
    %v3247 = vmax.f32 %v3183, 0.0
    %v3248 = vmax.f32 %v3184, 0.0
    %v3249 = vmax.f32 %v3185, 0.0
    %v3250 = vmax.f32 %v3186, 0.0
    %v3251 = vmax.f32 %v3187, 0.0
    %v3252 = vmax.f32 %v3188, 0.0
    %v3253 = vmax.f32 %v3189, 0.0
    %v3254 = vmax.f32 %v3190, 0.0
    %v3255 = vmax.f32 %v3191, 0.0
    %v3256 = vmax.f32 %v3192, 0.0
    %v3257 = vmax.f32 %v3193, 0.0
    %v3258 = vmax.f32 %v3194, 0.0
    %v3259 = vmax.f32 %v3195, 0.0
    %v3260 = vmax.f32 %v3196, 0.0
    %v3261 = vmax.f32 %v3197, 0.0
    %v3262 = vmax.f32 %v3198, 0.0
    %v3263 = vmax.f32 %v3199, 0.0
    %v3264 = vmax.f32 %v3200, 0.0
    %v3265 = vmax.f32 %v3201, 0.0
    %v3266 = vmax.f32 %v3202, 0.0
    %v3267 = vmax.f32 %v3203, 0.0
    %v3268 = vmax.f32 %v3204, 0.0
    %v3269 = vmax.f32 %v3205, 0.0
    %v3270 = vmax.f32 %v3206, 0.0
    %v3271 = vmax.f32 %v3207, 0.0
    %v3272 = vmax.f32 %v3208, 0.0
    %v3273 = vmax.f32 %v3209, 0.0
    %v3274 = vmax.f32 %v3210, 0.0
    %v3275 = vmax.f32 %v3211, 0.0
    %v3276 = vmax.f32 %v3212, 0.0
    %v3277 = vmax.f32 %v3213, 0.0
    %v3278 = vmax.f32 %v3214, 0.0
    %v3279 = vmax.f32 %v3215, 0.0
    %v3280 = vmax.f32 %v3216, 0.0
    %v3281 = vmax.f32 %v3217, 0.0
    %v3282 = vmax.f32 %v3218, 0.0
    %v3283 = vmax.f32 %v3219, 0.0
    %v3284 = vmax.f32 %v3220, 0.0
    %v3285 = vmax.f32 %v3221, 0.0
    %v3286 = vmax.f32 %v3222, 0.0
    %v3287 = vmax.f32 %v3223, 0.0
    %v3288 = vmax.f32 %v3224, 0.0
    %v3289 = vmax.f32 %v3225, 0.0
    %3290 = vst [vmem:[#allocation3] sm:$0xff] 0.0
    %3291 = vst [vmem:[#allocation3 + $0x8] sm:$0xff] 0.0
    %3292 = vst [vmem:[#allocation3 + $0x10] sm:$0x3] 0.0
    %3293 = vst [vmem:[#allocation3 + $0x1b0] sm:$0xff] 0.0
    %3294 = vst [vmem:[#allocation3 + $0x1b8] sm:$0xff] 0.0
    %3295 = vst [vmem:[#allocation3 + $0x1c0] sm:$0x3] 0.0
    %s3296 = scalar_lea.vmem [#allocation3], 408
    %3297 = vst [vmem:[%s3296] sm:$0xff] 0.0
    %3298 = vst [vmem:[%s3296 + $0x8] sm:$0xff] 0.0
    %3299 = vst [vmem:[%s3296 + $0x10] sm:$0x3] 0.0
    %3300 = vst [vmem:[%s3296 + $0x1b0] sm:$0xff] 0.0
    %3301 = vst [vmem:[%s3296 + $0x1b8] sm:$0xff] 0.0
    %3302 = vst [vmem:[%s3296 + $0x1c0] sm:$0x3] 0.0
    %3303 = vst [vmem:[#allocation3] sm:$0x1] 0.0
    %3304 = vst [vmem:[#allocation3 + $0x18] sm:$0x1] 0.0
    %3305 = vst [vmem:[#allocation3 + $0x30] sm:$0x1] 0.0
    %3306 = vst [vmem:[#allocation3 + $0x48] sm:$0x1] 0.0
    %3307 = vst [vmem:[#allocation3 + $0x60] sm:$0x1] 0.0
    %3308 = vst [vmem:[#allocation3 + $0x78] sm:$0x1] 0.0
    %3309 = vst [vmem:[#allocation3 + $0x90] sm:$0x1] 0.0
    %3310 = vst [vmem:[#allocation3 + $0xa8] sm:$0x1] 0.0
    %3311 = vst [vmem:[#allocation3 + $0xc0] sm:$0x1] 0.0
    %3312 = vst [vmem:[#allocation3 + $0xd8] sm:$0x1] 0.0
    %3313 = vst [vmem:[#allocation3 + $0xf0] sm:$0x1] 0.0
    %3314 = vst [vmem:[#allocation3 + $0x108] sm:$0x1] 0.0
    %3315 = vst [vmem:[#allocation3 + $0x120] sm:$0x1] 0.0
    %3316 = vst [vmem:[#allocation3 + $0x138] sm:$0x1] 0.0
    %3317 = vst [vmem:[#allocation3 + $0x150] sm:$0x1] 0.0
    %3318 = vst [vmem:[#allocation3 + $0x168] sm:$0x1] 0.0
    %3319 = vst [vmem:[#allocation3 + $0x180] sm:$0x1] 0.0
    %3320 = vst [vmem:[#allocation3 + $0x198] sm:$0x1] 0.0
    %3321 = vst [vmem:[#allocation3 + $0x1b0] sm:$0x1] 0.0
    %3322 = vst [vmem:[#allocation3 + $0x1c8] sm:$0x1] 0.0
    %3323 = vst [vmem:[#allocation3 + $0x1e0] sm:$0x1] 0.0
    %3324 = vst [vmem:[#allocation3 + $0x1f8] sm:$0x1] 0.0
    %3325 = vst [vmem:[#allocation3 + $0x210] sm:$0x1] 0.0
    %3326 = vst [vmem:[#allocation3 + $0x228] sm:$0x1] 0.0
    %3327 = vst [vmem:[#allocation3 + $0x240] sm:$0x1] 0.0
    %3328 = vst [vmem:[#allocation3 + $0x258] sm:$0x1] 0.0
    %3329 = vst [vmem:[#allocation3 + $0x270] sm:$0x1] 0.0
    %3330 = vst [vmem:[#allocation3 + $0x288] sm:$0x1] 0.0
    %3331 = vst [vmem:[#allocation3 + $0x2a0] sm:$0x1] 0.0
    %3332 = vst [vmem:[#allocation3 + $0x2b8] sm:$0x1] 0.0
    %3333 = vst [vmem:[#allocation3 + $0x2d0] sm:$0x1] 0.0
    %3334 = vst [vmem:[#allocation3 + $0x2e8] sm:$0x1] 0.0
    %3335 = vst [vmem:[#allocation3 + $0x300] sm:$0x1] 0.0
    %3336 = vst [vmem:[#allocation3 + $0x318] sm:$0x1] 0.0
    %3337 = vst [vmem:[#allocation3 + $0x330] sm:$0x1] 0.0
    %3338 = vst [vmem:[#allocation3 + $0x348] sm:$0x1] 0.0
    %3339 = vst [vmem:[#allocation3 + $0x11] sm:$0x1] 0.0
    %3340 = vst [vmem:[#allocation3 + $0x29] sm:$0x1] 0.0
    %3341 = vst [vmem:[#allocation3 + $0x41] sm:$0x1] 0.0
    %3342 = vst [vmem:[#allocation3 + $0x59] sm:$0x1] 0.0
    %3343 = vst [vmem:[#allocation3 + $0x71] sm:$0x1] 0.0
    %3344 = vst [vmem:[#allocation3 + $0x89] sm:$0x1] 0.0
    %3345 = vst [vmem:[#allocation3 + $0xa1] sm:$0x1] 0.0
    %3346 = vst [vmem:[#allocation3 + $0xb9] sm:$0x1] 0.0
    %3347 = vst [vmem:[#allocation3 + $0xd1] sm:$0x1] 0.0
    %3348 = vst [vmem:[#allocation3 + $0xe9] sm:$0x1] 0.0
    %3349 = vst [vmem:[#allocation3 + $0x101] sm:$0x1] 0.0
    %3350 = vst [vmem:[#allocation3 + $0x119] sm:$0x1] 0.0
    %3351 = vst [vmem:[#allocation3 + $0x131] sm:$0x1] 0.0
    %3352 = vst [vmem:[#allocation3 + $0x149] sm:$0x1] 0.0
    %3353 = vst [vmem:[#allocation3 + $0x161] sm:$0x1] 0.0
    %3354 = vst [vmem:[#allocation3 + $0x179] sm:$0x1] 0.0
    %3355 = vst [vmem:[#allocation3 + $0x191] sm:$0x1] 0.0
    %3356 = vst [vmem:[#allocation3 + $0x1a9] sm:$0x1] 0.0
    %3357 = vst [vmem:[#allocation3 + $0x1c1] sm:$0x1] 0.0
    %3358 = vst [vmem:[#allocation3 + $0x1d9] sm:$0x1] 0.0
    %3359 = vst [vmem:[#allocation3 + $0x1f1] sm:$0x1] 0.0
    %3360 = vst [vmem:[#allocation3 + $0x209] sm:$0x1] 0.0
    %3361 = vst [vmem:[#allocation3 + $0x221] sm:$0x1] 0.0
    %3362 = vst [vmem:[#allocation3 + $0x239] sm:$0x1] 0.0
    %3363 = vst [vmem:[#allocation3 + $0x251] sm:$0x1] 0.0
    %3364 = vst [vmem:[#allocation3 + $0x269] sm:$0x1] 0.0
    %3365 = vst [vmem:[#allocation3 + $0x281] sm:$0x1] 0.0
    %3366 = vst [vmem:[#allocation3 + $0x299] sm:$0x1] 0.0
    %3367 = vst [vmem:[#allocation3 + $0x2b1] sm:$0x1] 0.0
    %3368 = vst [vmem:[#allocation3 + $0x2c9] sm:$0x1] 0.0
    %3369 = vst [vmem:[#allocation3 + $0x2e1] sm:$0x1] 0.0
    %3370 = vst [vmem:[#allocation3 + $0x2f9] sm:$0x1] 0.0
    %3371 = vst [vmem:[#allocation3 + $0x311] sm:$0x1] 0.0
    %3372 = vst [vmem:[#allocation3 + $0x329] sm:$0x1] 0.0
    %3373 = vst [vmem:[#allocation3 + $0x341] sm:$0x1] 0.0
    %3374 = vst [vmem:[#allocation3 + $0x359] sm:$0x1] 0.0
    %s3375 = scalar_lea.vmem [#allocation3], 24
    %3376 = vst [vmem:[%s3375 + $0x1] sm:$0xff] %v3226
    %3377 = vst [vmem:[%s3375 + $0x9] sm:$0xff] %v3227
    %3378 = vst [vmem:[%s3375 + $0x19] sm:$0xff] %v3228
    %3379 = vst [vmem:[%s3375 + $0x21] sm:$0xff] %v3229
    %3380 = vst [vmem:[%s3375 + $0x31] sm:$0xff] %v3230
    %3381 = vst [vmem:[%s3375 + $0x39] sm:$0xff] %v3231
    %3382 = vst [vmem:[%s3375 + $0x49] sm:$0xff] %v3232
    %3383 = vst [vmem:[%s3375 + $0x51] sm:$0xff] %v3233
    %3384 = vst [vmem:[%s3375 + $0x61] sm:$0xff] %v3234
    %3385 = vst [vmem:[%s3375 + $0x69] sm:$0xff] %v3235
    %3386 = vst [vmem:[%s3375 + $0x79] sm:$0xff] %v3236
    %3387 = vst [vmem:[%s3375 + $0x81] sm:$0xff] %v3237
    %3388 = vst [vmem:[%s3375 + $0x91] sm:$0xff] %v3238
    %3389 = vst [vmem:[%s3375 + $0x99] sm:$0xff] %v3239
    %3390 = vst [vmem:[%s3375 + $0xa9] sm:$0xff] %v3240
    %3391 = vst [vmem:[%s3375 + $0xb1] sm:$0xff] %v3241
    %3392 = vst [vmem:[%s3375 + $0xc1] sm:$0xff] %v3242
    %3393 = vst [vmem:[%s3375 + $0xc9] sm:$0xff] %v3243
    %3394 = vst [vmem:[%s3375 + $0xd9] sm:$0xff] %v3244
    %3395 = vst [vmem:[%s3375 + $0xe1] sm:$0xff] %v3245
    %3396 = vst [vmem:[%s3375 + $0xf1] sm:$0xff] %v3246
    %3397 = vst [vmem:[%s3375 + $0xf9] sm:$0xff] %v3247
    %3398 = vst [vmem:[%s3375 + $0x109] sm:$0xff] %v3248
    %3399 = vst [vmem:[%s3375 + $0x111] sm:$0xff] %v3249
    %3400 = vst [vmem:[%s3375 + $0x121] sm:$0xff] %v3250
    %3401 = vst [vmem:[%s3375 + $0x129] sm:$0xff] %v3251
    %3402 = vst [vmem:[%s3375 + $0x139] sm:$0xff] %v3252
    %3403 = vst [vmem:[%s3375 + $0x141] sm:$0xff] %v3253
    %3404 = vst [vmem:[%s3375 + $0x151] sm:$0xff] %v3254
    %3405 = vst [vmem:[%s3375 + $0x159] sm:$0xff] %v3255
    %3406 = vst [vmem:[%s3375 + $0x169] sm:$0xff] %v3256
    %3407 = vst [vmem:[%s3375 + $0x171] sm:$0xff] %v3257
    %3408 = vst [vmem:[%s3375 + $0x1b1] sm:$0xff] %v3258
    %3409 = vst [vmem:[%s3375 + $0x1b9] sm:$0xff] %v3259
    %3410 = vst [vmem:[%s3375 + $0x1c9] sm:$0xff] %v3260
    %3411 = vst [vmem:[%s3375 + $0x1d1] sm:$0xff] %v3261
    %3412 = vst [vmem:[%s3375 + $0x1e1] sm:$0xff] %v3262
    %3413 = vst [vmem:[%s3375 + $0x1e9] sm:$0xff] %v3263
    %3414 = vst [vmem:[%s3375 + $0x1f9] sm:$0xff] %v3264
    %3415 = vst [vmem:[%s3375 + $0x201] sm:$0xff] %v3265
    %3416 = vst [vmem:[%s3375 + $0x211] sm:$0xff] %v3266
    %3417 = vst [vmem:[%s3375 + $0x219] sm:$0xff] %v3267
    %3418 = vst [vmem:[%s3375 + $0x229] sm:$0xff] %v3268
    %3419 = vst [vmem:[%s3375 + $0x231] sm:$0xff] %v3269
    %3420 = vst [vmem:[%s3375 + $0x241] sm:$0xff] %v3270
    %3421 = vst [vmem:[%s3375 + $0x249] sm:$0xff] %v3271
    %3422 = vst [vmem:[%s3375 + $0x259] sm:$0xff] %v3272
    %3423 = vst [vmem:[%s3375 + $0x261] sm:$0xff] %v3273
    %3424 = vst [vmem:[%s3375 + $0x271] sm:$0xff] %v3274
    %3425 = vst [vmem:[%s3375 + $0x279] sm:$0xff] %v3275
    %3426 = vst [vmem:[%s3375 + $0x289] sm:$0xff] %v3276
    %3427 = vst [vmem:[%s3375 + $0x291] sm:$0xff] %v3277
    %3428 = vst [vmem:[%s3375 + $0x2a1] sm:$0xff] %v3278
    %3429 = vst [vmem:[%s3375 + $0x2a9] sm:$0xff] %v3279
    %3430 = vst [vmem:[%s3375 + $0x2b9] sm:$0xff] %v3280
    %3431 = vst [vmem:[%s3375 + $0x2c1] sm:$0xff] %v3281
    %3432 = vst [vmem:[%s3375 + $0x2d1] sm:$0xff] %v3282
    %3433 = vst [vmem:[%s3375 + $0x2d9] sm:$0xff] %v3283
    %3434 = vst [vmem:[%s3375 + $0x2e9] sm:$0xff] %v3284
    %3435 = vst [vmem:[%s3375 + $0x2f1] sm:$0xff] %v3285
    %3436 = vst [vmem:[%s3375 + $0x301] sm:$0xff] %v3286
    %3437 = vst [vmem:[%s3375 + $0x309] sm:$0xff] %v3287
    %3438 = vst [vmem:[%s3375 + $0x319] sm:$0xff] %v3288
    %3439 = vst [vmem:[%s3375 + $0x321] sm:$0xff] %v3289
    %v3440 = vld [vmem:[#allocation3] sm:$0xff]
    %v3441 = vld [vmem:[#allocation3 + $0x8] sm:$0xff]
    %v3442 = vld [vmem:[#allocation3 + $0x18] sm:$0xff]
    %v3443 = vld [vmem:[#allocation3 + $0x20] sm:$0xff]
    %v3444 = vld [vmem:[#allocation3 + $0x30] sm:$0xff]
    %v3445 = vld [vmem:[#allocation3 + $0x38] sm:$0xff]
    %v3446 = vld [vmem:[#allocation3 + $0x48] sm:$0xff]
    %v3447 = vld [vmem:[#allocation3 + $0x50] sm:$0xff]
    %v3448 = vld [vmem:[#allocation3 + $0x60] sm:$0xff]
    %v3449 = vld [vmem:[#allocation3 + $0x68] sm:$0xff]
    %v3450 = vld [vmem:[#allocation3 + $0x78] sm:$0xff]
    %v3451 = vld [vmem:[#allocation3 + $0x80] sm:$0xff]
    %v3452 = vld [vmem:[#allocation3 + $0x90] sm:$0xff]
    %v3453 = vld [vmem:[#allocation3 + $0x98] sm:$0xff]
    %v3454 = vld [vmem:[#allocation3 + $0xa8] sm:$0xff]
    %v3455 = vld [vmem:[#allocation3 + $0xb0] sm:$0xff]
    %v3456 = vld [vmem:[#allocation3 + $0xc0] sm:$0xff]
    %v3457 = vld [vmem:[#allocation3 + $0xc8] sm:$0xff]
    %v3458 = vld [vmem:[#allocation3 + $0xd8] sm:$0xff]
    %v3459 = vld [vmem:[#allocation3 + $0xe0] sm:$0xff]
    %v3460 = vld [vmem:[#allocation3 + $0xf0] sm:$0xff]
    %v3461 = vld [vmem:[#allocation3 + $0xf8] sm:$0xff]
    %v3462 = vld [vmem:[#allocation3 + $0x108] sm:$0xff]
    %v3463 = vld [vmem:[#allocation3 + $0x110] sm:$0xff]
    %v3464 = vld [vmem:[#allocation3 + $0x120] sm:$0xff]
    %v3465 = vld [vmem:[#allocation3 + $0x128] sm:$0xff]
    %v3466 = vld [vmem:[#allocation3 + $0x138] sm:$0xff]
    %v3467 = vld [vmem:[#allocation3 + $0x140] sm:$0xff]
    %v3468 = vld [vmem:[#allocation3 + $0x150] sm:$0xff]
    %v3469 = vld [vmem:[#allocation3 + $0x158] sm:$0xff]
    %v3470 = vld [vmem:[#allocation3 + $0x168] sm:$0xff]
    %v3471 = vld [vmem:[#allocation3 + $0x170] sm:$0xff]
    %v3472 = vld [vmem:[#allocation3 + $0x1b0] sm:$0xff]
    %v3473 = vld [vmem:[#allocation3 + $0x1b8] sm:$0xff]
    %v3474 = vld [vmem:[#allocation3 + $0x1c8] sm:$0xff]
    %v3475 = vld [vmem:[#allocation3 + $0x1d0] sm:$0xff]
    %v3476 = vld [vmem:[#allocation3 + $0x1e0] sm:$0xff]
    %v3477 = vld [vmem:[#allocation3 + $0x1e8] sm:$0xff]
    %v3478 = vld [vmem:[#allocation3 + $0x1f8] sm:$0xff]
    %v3479 = vld [vmem:[#allocation3 + $0x200] sm:$0xff]
    %v3480 = vld [vmem:[#allocation3 + $0x210] sm:$0xff]
    %v3481 = vld [vmem:[#allocation3 + $0x218] sm:$0xff]
    %v3482 = vld [vmem:[#allocation3 + $0x228] sm:$0xff]
    %v3483 = vld [vmem:[#allocation3 + $0x230] sm:$0xff]
    %v3484 = vld [vmem:[#allocation3 + $0x240] sm:$0xff]
    %v3485 = vld [vmem:[#allocation3 + $0x248] sm:$0xff]
    %v3486 = vld [vmem:[#allocation3 + $0x258] sm:$0xff]
    %v3487 = vld [vmem:[#allocation3 + $0x260] sm:$0xff]
    %v3488 = vld [vmem:[#allocation3 + $0x270] sm:$0xff]
    %v3489 = vld [vmem:[#allocation3 + $0x278] sm:$0xff]
    %v3490 = vld [vmem:[#allocation3 + $0x288] sm:$0xff]
    %v3491 = vld [vmem:[#allocation3 + $0x290] sm:$0xff]
    %v3492 = vld [vmem:[#allocation3 + $0x2a0] sm:$0xff]
    %v3493 = vld [vmem:[#allocation3 + $0x2a8] sm:$0xff]
    %v3494 = vld [vmem:[#allocation3 + $0x2b8] sm:$0xff]
    %v3495 = vld [vmem:[#allocation3 + $0x2c0] sm:$0xff]
    %v3496 = vld [vmem:[#allocation3 + $0x2d0] sm:$0xff]
    %v3497 = vld [vmem:[#allocation3 + $0x2d8] sm:$0xff]
    %v3498 = vld [vmem:[#allocation3 + $0x2e8] sm:$0xff]
    %v3499 = vld [vmem:[#allocation3 + $0x2f0] sm:$0xff]
    %v3500 = vld [vmem:[#allocation3 + $0x300] sm:$0xff]
    %v3501 = vld [vmem:[#allocation3 + $0x308] sm:$0xff]
    %v3502 = vld [vmem:[#allocation3 + $0x318] sm:$0xff]
    %v3503 = vld [vmem:[#allocation3 + $0x320] sm:$0xff]
    %v3504 = vpack.c.bf16 %v3441, %v3440
    %v3505 = vpack.c.bf16 %v3443, %v3442
    %v3506 = vpack.c.bf16 %v3445, %v3444
    %v3507 = vpack.c.bf16 %v3447, %v3446
    %v3508 = vpack.c.bf16 %v3449, %v3448
    %v3509 = vpack.c.bf16 %v3451, %v3450
    %v3510 = vpack.c.bf16 %v3453, %v3452
    %v3511 = vpack.c.bf16 %v3455, %v3454
    %v3512 = vpack.c.bf16 %v3457, %v3456
    %v3513 = vpack.c.bf16 %v3459, %v3458
    %v3514 = vpack.c.bf16 %v3461, %v3460
    %v3515 = vpack.c.bf16 %v3463, %v3462
    %v3516 = vpack.c.bf16 %v3465, %v3464
    %v3517 = vpack.c.bf16 %v3467, %v3466
    %v3518 = vpack.c.bf16 %v3469, %v3468
    %v3519 = vpack.c.bf16 %v3471, %v3470
    %v3520 = vpack.c.bf16 %v3473, %v3472
    %v3521 = vpack.c.bf16 %v3475, %v3474
    %v3522 = vpack.c.bf16 %v3477, %v3476
    %v3523 = vpack.c.bf16 %v3479, %v3478
    %v3524 = vpack.c.bf16 %v3481, %v3480
    %v3525 = vpack.c.bf16 %v3483, %v3482
    %v3526 = vpack.c.bf16 %v3485, %v3484
    %v3527 = vpack.c.bf16 %v3487, %v3486
    %v3528 = vpack.c.bf16 %v3489, %v3488
    %v3529 = vpack.c.bf16 %v3491, %v3490
    %v3530 = vpack.c.bf16 %v3493, %v3492
    %v3531 = vpack.c.bf16 %v3495, %v3494
    %v3532 = vpack.c.bf16 %v3497, %v3496
    %v3533 = vpack.c.bf16 %v3499, %v3498
    %v3534 = vpack.c.bf16 %v3501, %v3500
    %v3535 = vpack.c.bf16 %v3503, %v3502
    %v3536 = vld [vmem:[#allocation3 + $0x1] sm:$0xff]
    %v3537 = vld [vmem:[#allocation3 + $0x9] sm:$0xff]
    %v3538 = vld [vmem:[#allocation3 + $0x19] sm:$0xff]
    %v3539 = vld [vmem:[#allocation3 + $0x21] sm:$0xff]
    %v3540 = vld [vmem:[#allocation3 + $0x31] sm:$0xff]
    %v3541 = vld [vmem:[#allocation3 + $0x39] sm:$0xff]
    %v3542 = vld [vmem:[#allocation3 + $0x49] sm:$0xff]
    %v3543 = vld [vmem:[#allocation3 + $0x51] sm:$0xff]
    %v3544 = vld [vmem:[#allocation3 + $0x61] sm:$0xff]
    %v3545 = vld [vmem:[#allocation3 + $0x69] sm:$0xff]
    %v3546 = vld [vmem:[#allocation3 + $0x79] sm:$0xff]
    %v3547 = vld [vmem:[#allocation3 + $0x81] sm:$0xff]
    %v3548 = vld [vmem:[#allocation3 + $0x91] sm:$0xff]
    %v3549 = vld [vmem:[#allocation3 + $0x99] sm:$0xff]
    %v3550 = vld [vmem:[#allocation3 + $0xa9] sm:$0xff]
    %v3551 = vld [vmem:[#allocation3 + $0xb1] sm:$0xff]
    %v3552 = vld [vmem:[#allocation3 + $0xc1] sm:$0xff]
    %v3553 = vld [vmem:[#allocation3 + $0xc9] sm:$0xff]
    %v3554 = vld [vmem:[#allocation3 + $0xd9] sm:$0xff]
    %v3555 = vld [vmem:[#allocation3 + $0xe1] sm:$0xff]
    %v3556 = vld [vmem:[#allocation3 + $0xf1] sm:$0xff]
    %v3557 = vld [vmem:[#allocation3 + $0xf9] sm:$0xff]
    %v3558 = vld [vmem:[#allocation3 + $0x109] sm:$0xff]
    %v3559 = vld [vmem:[#allocation3 + $0x111] sm:$0xff]
    %v3560 = vld [vmem:[#allocation3 + $0x121] sm:$0xff]
    %v3561 = vld [vmem:[#allocation3 + $0x129] sm:$0xff]
    %v3562 = vld [vmem:[#allocation3 + $0x139] sm:$0xff]
    %v3563 = vld [vmem:[#allocation3 + $0x141] sm:$0xff]
    %v3564 = vld [vmem:[#allocation3 + $0x151] sm:$0xff]
    %v3565 = vld [vmem:[#allocation3 + $0x159] sm:$0xff]
    %v3566 = vld [vmem:[#allocation3 + $0x169] sm:$0xff]
    %v3567 = vld [vmem:[#allocation3 + $0x171] sm:$0xff]
    %v3568 = vld [vmem:[#allocation3 + $0x1b1] sm:$0xff]
    %v3569 = vld [vmem:[#allocation3 + $0x1b9] sm:$0xff]
    %v3570 = vld [vmem:[#allocation3 + $0x1c9] sm:$0xff]
    %v3571 = vld [vmem:[#allocation3 + $0x1d1] sm:$0xff]
    %v3572 = vld [vmem:[#allocation3 + $0x1e1] sm:$0xff]
    %v3573 = vld [vmem:[#allocation3 + $0x1e9] sm:$0xff]
    %v3574 = vld [vmem:[#allocation3 + $0x1f9] sm:$0xff]
    %v3575 = vld [vmem:[#allocation3 + $0x201] sm:$0xff]
    %v3576 = vld [vmem:[#allocation3 + $0x211] sm:$0xff]
    %v3577 = vld [vmem:[#allocation3 + $0x219] sm:$0xff]
    %v3578 = vld [vmem:[#allocation3 + $0x229] sm:$0xff]
    %v3579 = vld [vmem:[#allocation3 + $0x231] sm:$0xff]
    %v3580 = vld [vmem:[#allocation3 + $0x241] sm:$0xff]
    %v3581 = vld [vmem:[#allocation3 + $0x249] sm:$0xff]
    %v3582 = vld [vmem:[#allocation3 + $0x259] sm:$0xff]
    %v3583 = vld [vmem:[#allocation3 + $0x261] sm:$0xff]
    %v3584 = vld [vmem:[#allocation3 + $0x271] sm:$0xff]
    %v3585 = vld [vmem:[#allocation3 + $0x279] sm:$0xff]
    %v3586 = vld [vmem:[#allocation3 + $0x289] sm:$0xff]
    %v3587 = vld [vmem:[#allocation3 + $0x291] sm:$0xff]
    %v3588 = vld [vmem:[#allocation3 + $0x2a1] sm:$0xff]
    %v3589 = vld [vmem:[#allocation3 + $0x2a9] sm:$0xff]
    %v3590 = vld [vmem:[#allocation3 + $0x2b9] sm:$0xff]
    %v3591 = vld [vmem:[#allocation3 + $0x2c1] sm:$0xff]
    %v3592 = vld [vmem:[#allocation3 + $0x2d1] sm:$0xff]
    %v3593 = vld [vmem:[#allocation3 + $0x2d9] sm:$0xff]
    %v3594 = vld [vmem:[#allocation3 + $0x2e9] sm:$0xff]
    %v3595 = vld [vmem:[#allocation3 + $0x2f1] sm:$0xff]
    %v3596 = vld [vmem:[#allocation3 + $0x301] sm:$0xff]
    %v3597 = vld [vmem:[#allocation3 + $0x309] sm:$0xff]
    %v3598 = vld [vmem:[#allocation3 + $0x319] sm:$0xff]
    %v3599 = vld [vmem:[#allocation3 + $0x321] sm:$0xff]
    %v3600 = vpack.c.bf16 %v3537, %v3536
    %v3601 = vpack.c.bf16 %v3539, %v3538
    %v3602 = vpack.c.bf16 %v3541, %v3540
    %v3603 = vpack.c.bf16 %v3543, %v3542
    %v3604 = vpack.c.bf16 %v3545, %v3544
    %v3605 = vpack.c.bf16 %v3547, %v3546
    %v3606 = vpack.c.bf16 %v3549, %v3548
    %v3607 = vpack.c.bf16 %v3551, %v3550
    %v3608 = vpack.c.bf16 %v3553, %v3552
    %v3609 = vpack.c.bf16 %v3555, %v3554
    %v3610 = vpack.c.bf16 %v3557, %v3556
    %v3611 = vpack.c.bf16 %v3559, %v3558
    %v3612 = vpack.c.bf16 %v3561, %v3560
    %v3613 = vpack.c.bf16 %v3563, %v3562
    %v3614 = vpack.c.bf16 %v3565, %v3564
    %v3615 = vpack.c.bf16 %v3567, %v3566
    %v3616 = vpack.c.bf16 %v3569, %v3568
    %v3617 = vpack.c.bf16 %v3571, %v3570
    %v3618 = vpack.c.bf16 %v3573, %v3572
    %v3619 = vpack.c.bf16 %v3575, %v3574
    %v3620 = vpack.c.bf16 %v3577, %v3576
    %v3621 = vpack.c.bf16 %v3579, %v3578
    %v3622 = vpack.c.bf16 %v3581, %v3580
    %v3623 = vpack.c.bf16 %v3583, %v3582
    %v3624 = vpack.c.bf16 %v3585, %v3584
    %v3625 = vpack.c.bf16 %v3587, %v3586
    %v3626 = vpack.c.bf16 %v3589, %v3588
    %v3627 = vpack.c.bf16 %v3591, %v3590
    %v3628 = vpack.c.bf16 %v3593, %v3592
    %v3629 = vpack.c.bf16 %v3595, %v3594
    %v3630 = vpack.c.bf16 %v3597, %v3596
    %v3631 = vpack.c.bf16 %v3599, %v3598
    %v3632 = vld [vmem:[#allocation3 + $0x2] sm:$0xff]
    %v3633 = vld [vmem:[#allocation3 + $0xa] sm:$0xff]
    %v3634 = vld [vmem:[#allocation3 + $0x1a] sm:$0xff]
    %v3635 = vld [vmem:[#allocation3 + $0x22] sm:$0xff]
    %v3636 = vld [vmem:[#allocation3 + $0x32] sm:$0xff]
    %v3637 = vld [vmem:[#allocation3 + $0x3a] sm:$0xff]
    %v3638 = vld [vmem:[#allocation3 + $0x4a] sm:$0xff]
    %v3639 = vld [vmem:[#allocation3 + $0x52] sm:$0xff]
    %v3640 = vld [vmem:[#allocation3 + $0x62] sm:$0xff]
    %v3641 = vld [vmem:[#allocation3 + $0x6a] sm:$0xff]
    %v3642 = vld [vmem:[#allocation3 + $0x7a] sm:$0xff]
    %v3643 = vld [vmem:[#allocation3 + $0x82] sm:$0xff]
    %v3644 = vld [vmem:[#allocation3 + $0x92] sm:$0xff]
    %v3645 = vld [vmem:[#allocation3 + $0x9a] sm:$0xff]
    %v3646 = vld [vmem:[#allocation3 + $0xaa] sm:$0xff]
    %v3647 = vld [vmem:[#allocation3 + $0xb2] sm:$0xff]
    %v3648 = vld [vmem:[#allocation3 + $0xc2] sm:$0xff]
    %v3649 = vld [vmem:[#allocation3 + $0xca] sm:$0xff]
    %v3650 = vld [vmem:[#allocation3 + $0xda] sm:$0xff]
    %v3651 = vld [vmem:[#allocation3 + $0xe2] sm:$0xff]
    %v3652 = vld [vmem:[#allocation3 + $0xf2] sm:$0xff]
    %v3653 = vld [vmem:[#allocation3 + $0xfa] sm:$0xff]
    %v3654 = vld [vmem:[#allocation3 + $0x10a] sm:$0xff]
    %v3655 = vld [vmem:[#allocation3 + $0x112] sm:$0xff]
    %v3656 = vld [vmem:[#allocation3 + $0x122] sm:$0xff]
    %v3657 = vld [vmem:[#allocation3 + $0x12a] sm:$0xff]
    %v3658 = vld [vmem:[#allocation3 + $0x13a] sm:$0xff]
    %v3659 = vld [vmem:[#allocation3 + $0x142] sm:$0xff]
    %v3660 = vld [vmem:[#allocation3 + $0x152] sm:$0xff]
    %v3661 = vld [vmem:[#allocation3 + $0x15a] sm:$0xff]
    %v3662 = vld [vmem:[#allocation3 + $0x16a] sm:$0xff]
    %v3663 = vld [vmem:[#allocation3 + $0x172] sm:$0xff]
    %v3664 = vld [vmem:[#allocation3 + $0x1b2] sm:$0xff]
    %v3665 = vld [vmem:[#allocation3 + $0x1ba] sm:$0xff]
    %v3666 = vld [vmem:[#allocation3 + $0x1ca] sm:$0xff]
    %v3667 = vld [vmem:[#allocation3 + $0x1d2] sm:$0xff]
    %v3668 = vld [vmem:[#allocation3 + $0x1e2] sm:$0xff]
    %v3669 = vld [vmem:[#allocation3 + $0x1ea] sm:$0xff]
    %v3670 = vld [vmem:[#allocation3 + $0x1fa] sm:$0xff]
    %v3671 = vld [vmem:[#allocation3 + $0x202] sm:$0xff]
    %v3672 = vld [vmem:[#allocation3 + $0x212] sm:$0xff]
    %v3673 = vld [vmem:[#allocation3 + $0x21a] sm:$0xff]
    %v3674 = vld [vmem:[#allocation3 + $0x22a] sm:$0xff]
    %v3675 = vld [vmem:[#allocation3 + $0x232] sm:$0xff]
    %v3676 = vld [vmem:[#allocation3 + $0x242] sm:$0xff]
    %v3677 = vld [vmem:[#allocation3 + $0x24a] sm:$0xff]
    %v3678 = vld [vmem:[#allocation3 + $0x25a] sm:$0xff]
    %v3679 = vld [vmem:[#allocation3 + $0x262] sm:$0xff]
    %v3680 = vld [vmem:[#allocation3 + $0x272] sm:$0xff]
    %v3681 = vld [vmem:[#allocation3 + $0x27a] sm:$0xff]
    %v3682 = vld [vmem:[#allocation3 + $0x28a] sm:$0xff]
    %v3683 = vld [vmem:[#allocation3 + $0x292] sm:$0xff]
    %v3684 = vld [vmem:[#allocation3 + $0x2a2] sm:$0xff]
    %v3685 = vld [vmem:[#allocation3 + $0x2aa] sm:$0xff]
    %v3686 = vld [vmem:[#allocation3 + $0x2ba] sm:$0xff]
    %v3687 = vld [vmem:[#allocation3 + $0x2c2] sm:$0xff]
    %v3688 = vld [vmem:[#allocation3 + $0x2d2] sm:$0xff]
    %v3689 = vld [vmem:[#allocation3 + $0x2da] sm:$0xff]
    %v3690 = vld [vmem:[#allocation3 + $0x2ea] sm:$0xff]
    %v3691 = vld [vmem:[#allocation3 + $0x2f2] sm:$0xff]
    %v3692 = vld [vmem:[#allocation3 + $0x302] sm:$0xff]
    %v3693 = vld [vmem:[#allocation3 + $0x30a] sm:$0xff]
    %v3694 = vld [vmem:[#allocation3 + $0x31a] sm:$0xff]
    %v3695 = vld [vmem:[#allocation3 + $0x322] sm:$0xff]
    %v3696 = vpack.c.bf16 %v3633, %v3632
    %v3697 = vpack.c.bf16 %v3635, %v3634
    %v3698 = vpack.c.bf16 %v3637, %v3636
    %v3699 = vpack.c.bf16 %v3639, %v3638
    %v3700 = vpack.c.bf16 %v3641, %v3640
    %v3701 = vpack.c.bf16 %v3643, %v3642
    %v3702 = vpack.c.bf16 %v3645, %v3644
    %v3703 = vpack.c.bf16 %v3647, %v3646
    %v3704 = vpack.c.bf16 %v3649, %v3648
    %v3705 = vpack.c.bf16 %v3651, %v3650
    %v3706 = vpack.c.bf16 %v3653, %v3652
    %v3707 = vpack.c.bf16 %v3655, %v3654
    %v3708 = vpack.c.bf16 %v3657, %v3656
    %v3709 = vpack.c.bf16 %v3659, %v3658
    %v3710 = vpack.c.bf16 %v3661, %v3660
    %v3711 = vpack.c.bf16 %v3663, %v3662
    %v3712 = vpack.c.bf16 %v3665, %v3664
    %v3713 = vpack.c.bf16 %v3667, %v3666
    %v3714 = vpack.c.bf16 %v3669, %v3668
    %v3715 = vpack.c.bf16 %v3671, %v3670
    %v3716 = vpack.c.bf16 %v3673, %v3672
    %v3717 = vpack.c.bf16 %v3675, %v3674
    %v3718 = vpack.c.bf16 %v3677, %v3676
    %v3719 = vpack.c.bf16 %v3679, %v3678
    %v3720 = vpack.c.bf16 %v3681, %v3680
    %v3721 = vpack.c.bf16 %v3683, %v3682
    %v3722 = vpack.c.bf16 %v3685, %v3684
    %v3723 = vpack.c.bf16 %v3687, %v3686
    %v3724 = vpack.c.bf16 %v3689, %v3688
    %v3725 = vpack.c.bf16 %v3691, %v3690
    %v3726 = vpack.c.bf16 %v3693, %v3692
    %v3727 = vpack.c.bf16 %v3695, %v3694
    %v3728 = vld [vmem:[%s3375] sm:$0xff]
    %v3729 = vld [vmem:[%s3375 + $0x8] sm:$0xff]
    %v3730 = vld [vmem:[%s3375 + $0x18] sm:$0xff]
    %v3731 = vld [vmem:[%s3375 + $0x20] sm:$0xff]
    %v3732 = vld [vmem:[%s3375 + $0x30] sm:$0xff]
    %v3733 = vld [vmem:[%s3375 + $0x38] sm:$0xff]
    %v3734 = vld [vmem:[%s3375 + $0x48] sm:$0xff]
    %v3735 = vld [vmem:[%s3375 + $0x50] sm:$0xff]
    %v3736 = vld [vmem:[%s3375 + $0x60] sm:$0xff]
    %v3737 = vld [vmem:[%s3375 + $0x68] sm:$0xff]
    %v3738 = vld [vmem:[%s3375 + $0x78] sm:$0xff]
    %v3739 = vld [vmem:[%s3375 + $0x80] sm:$0xff]
    %v3740 = vld [vmem:[%s3375 + $0x90] sm:$0xff]
    %v3741 = vld [vmem:[%s3375 + $0x98] sm:$0xff]
    %v3742 = vld [vmem:[%s3375 + $0xa8] sm:$0xff]
    %v3743 = vld [vmem:[%s3375 + $0xb0] sm:$0xff]
    %v3744 = vld [vmem:[%s3375 + $0xc0] sm:$0xff]
    %v3745 = vld [vmem:[%s3375 + $0xc8] sm:$0xff]
    %v3746 = vld [vmem:[%s3375 + $0xd8] sm:$0xff]
    %v3747 = vld [vmem:[%s3375 + $0xe0] sm:$0xff]
    %v3748 = vld [vmem:[%s3375 + $0xf0] sm:$0xff]
    %v3749 = vld [vmem:[%s3375 + $0xf8] sm:$0xff]
    %v3750 = vld [vmem:[%s3375 + $0x108] sm:$0xff]
    %v3751 = vld [vmem:[%s3375 + $0x110] sm:$0xff]
    %v3752 = vld [vmem:[%s3375 + $0x120] sm:$0xff]
    %v3753 = vld [vmem:[%s3375 + $0x128] sm:$0xff]
    %v3754 = vld [vmem:[%s3375 + $0x138] sm:$0xff]
    %v3755 = vld [vmem:[%s3375 + $0x140] sm:$0xff]
    %v3756 = vld [vmem:[%s3375 + $0x150] sm:$0xff]
    %v3757 = vld [vmem:[%s3375 + $0x158] sm:$0xff]
    %v3758 = vld [vmem:[%s3375 + $0x168] sm:$0xff]
    %v3759 = vld [vmem:[%s3375 + $0x170] sm:$0xff]
    %v3760 = vld [vmem:[%s3375 + $0x1b0] sm:$0xff]
    %v3761 = vld [vmem:[%s3375 + $0x1b8] sm:$0xff]
    %v3762 = vld [vmem:[%s3375 + $0x1c8] sm:$0xff]
    %v3763 = vld [vmem:[%s3375 + $0x1d0] sm:$0xff]
    %v3764 = vld [vmem:[%s3375 + $0x1e0] sm:$0xff]
    %v3765 = vld [vmem:[%s3375 + $0x1e8] sm:$0xff]
    %v3766 = vld [vmem:[%s3375 + $0x1f8] sm:$0xff]
    %v3767 = vld [vmem:[%s3375 + $0x200] sm:$0xff]
    %v3768 = vld [vmem:[%s3375 + $0x210] sm:$0xff]
    %v3769 = vld [vmem:[%s3375 + $0x218] sm:$0xff]
    %v3770 = vld [vmem:[%s3375 + $0x228] sm:$0xff]
    %v3771 = vld [vmem:[%s3375 + $0x230] sm:$0xff]
    %v3772 = vld [vmem:[%s3375 + $0x240] sm:$0xff]
    %v3773 = vld [vmem:[%s3375 + $0x248] sm:$0xff]
    %v3774 = vld [vmem:[%s3375 + $0x258] sm:$0xff]
    %v3775 = vld [vmem:[%s3375 + $0x260] sm:$0xff]
    %v3776 = vld [vmem:[%s3375 + $0x270] sm:$0xff]
    %v3777 = vld [vmem:[%s3375 + $0x278] sm:$0xff]
    %v3778 = vld [vmem:[%s3375 + $0x288] sm:$0xff]
    %v3779 = vld [vmem:[%s3375 + $0x290] sm:$0xff]
    %v3780 = vld [vmem:[%s3375 + $0x2a0] sm:$0xff]
    %v3781 = vld [vmem:[%s3375 + $0x2a8] sm:$0xff]
    %v3782 = vld [vmem:[%s3375 + $0x2b8] sm:$0xff]
    %v3783 = vld [vmem:[%s3375 + $0x2c0] sm:$0xff]
    %v3784 = vld [vmem:[%s3375 + $0x2d0] sm:$0xff]
    %v3785 = vld [vmem:[%s3375 + $0x2d8] sm:$0xff]
    %v3786 = vld [vmem:[%s3375 + $0x2e8] sm:$0xff]
    %v3787 = vld [vmem:[%s3375 + $0x2f0] sm:$0xff]
    %v3788 = vld [vmem:[%s3375 + $0x300] sm:$0xff]
    %v3789 = vld [vmem:[%s3375 + $0x308] sm:$0xff]
    %v3790 = vld [vmem:[%s3375 + $0x318] sm:$0xff]
    %v3791 = vld [vmem:[%s3375 + $0x320] sm:$0xff]
    %v3792 = vpack.c.bf16 %v3729, %v3728
    %v3793 = vpack.c.bf16 %v3731, %v3730
    %v3794 = vpack.c.bf16 %v3733, %v3732
    %v3795 = vpack.c.bf16 %v3735, %v3734
    %v3796 = vpack.c.bf16 %v3737, %v3736
    %v3797 = vpack.c.bf16 %v3739, %v3738
    %v3798 = vpack.c.bf16 %v3741, %v3740
    %v3799 = vpack.c.bf16 %v3743, %v3742
    %v3800 = vpack.c.bf16 %v3745, %v3744
    %v3801 = vpack.c.bf16 %v3747, %v3746
    %v3802 = vpack.c.bf16 %v3749, %v3748
    %v3803 = vpack.c.bf16 %v3751, %v3750
    %v3804 = vpack.c.bf16 %v3753, %v3752
    %v3805 = vpack.c.bf16 %v3755, %v3754
    %v3806 = vpack.c.bf16 %v3757, %v3756
    %v3807 = vpack.c.bf16 %v3759, %v3758
    %v3808 = vpack.c.bf16 %v3761, %v3760
    %v3809 = vpack.c.bf16 %v3763, %v3762
    %v3810 = vpack.c.bf16 %v3765, %v3764
    %v3811 = vpack.c.bf16 %v3767, %v3766
    %v3812 = vpack.c.bf16 %v3769, %v3768
    %v3813 = vpack.c.bf16 %v3771, %v3770
    %v3814 = vpack.c.bf16 %v3773, %v3772
    %v3815 = vpack.c.bf16 %v3775, %v3774
    %v3816 = vpack.c.bf16 %v3777, %v3776
    %v3817 = vpack.c.bf16 %v3779, %v3778
    %v3818 = vpack.c.bf16 %v3781, %v3780
    %v3819 = vpack.c.bf16 %v3783, %v3782
    %v3820 = vpack.c.bf16 %v3785, %v3784
    %v3821 = vpack.c.bf16 %v3787, %v3786
    %v3822 = vpack.c.bf16 %v3789, %v3788
    %v3823 = vpack.c.bf16 %v3791, %v3790
    %v3824 = vld [vmem:[%s3375 + $0x1] sm:$0xff]
    %v3825 = vld [vmem:[%s3375 + $0x9] sm:$0xff]
    %v3826 = vld [vmem:[%s3375 + $0x19] sm:$0xff]
    %v3827 = vld [vmem:[%s3375 + $0x21] sm:$0xff]
    %v3828 = vld [vmem:[%s3375 + $0x31] sm:$0xff]
    %v3829 = vld [vmem:[%s3375 + $0x39] sm:$0xff]
    %v3830 = vld [vmem:[%s3375 + $0x49] sm:$0xff]
    %v3831 = vld [vmem:[%s3375 + $0x51] sm:$0xff]
    %v3832 = vld [vmem:[%s3375 + $0x61] sm:$0xff]
    %v3833 = vld [vmem:[%s3375 + $0x69] sm:$0xff]
    %v3834 = vld [vmem:[%s3375 + $0x79] sm:$0xff]
    %v3835 = vld [vmem:[%s3375 + $0x81] sm:$0xff]
    %v3836 = vld [vmem:[%s3375 + $0x91] sm:$0xff]
    %v3837 = vld [vmem:[%s3375 + $0x99] sm:$0xff]
    %v3838 = vld [vmem:[%s3375 + $0xa9] sm:$0xff]
    %v3839 = vld [vmem:[%s3375 + $0xb1] sm:$0xff]
    %v3840 = vld [vmem:[%s3375 + $0xc1] sm:$0xff]
    %v3841 = vld [vmem:[%s3375 + $0xc9] sm:$0xff]
    %v3842 = vld [vmem:[%s3375 + $0xd9] sm:$0xff]
    %v3843 = vld [vmem:[%s3375 + $0xe1] sm:$0xff]
    %v3844 = vld [vmem:[%s3375 + $0xf1] sm:$0xff]
    %v3845 = vld [vmem:[%s3375 + $0xf9] sm:$0xff]
    %v3846 = vld [vmem:[%s3375 + $0x109] sm:$0xff]
    %v3847 = vld [vmem:[%s3375 + $0x111] sm:$0xff]
    %v3848 = vld [vmem:[%s3375 + $0x121] sm:$0xff]
    %v3849 = vld [vmem:[%s3375 + $0x129] sm:$0xff]
    %v3850 = vld [vmem:[%s3375 + $0x139] sm:$0xff]
    %v3851 = vld [vmem:[%s3375 + $0x141] sm:$0xff]
    %v3852 = vld [vmem:[%s3375 + $0x151] sm:$0xff]
    %v3853 = vld [vmem:[%s3375 + $0x159] sm:$0xff]
    %v3854 = vld [vmem:[%s3375 + $0x169] sm:$0xff]
    %v3855 = vld [vmem:[%s3375 + $0x171] sm:$0xff]
    %v3856 = vld [vmem:[%s3375 + $0x1b1] sm:$0xff]
    %v3857 = vld [vmem:[%s3375 + $0x1b9] sm:$0xff]
    %v3858 = vld [vmem:[%s3375 + $0x1c9] sm:$0xff]
    %v3859 = vld [vmem:[%s3375 + $0x1d1] sm:$0xff]
    %v3860 = vld [vmem:[%s3375 + $0x1e1] sm:$0xff]
    %v3861 = vld [vmem:[%s3375 + $0x1e9] sm:$0xff]
    %v3862 = vld [vmem:[%s3375 + $0x1f9] sm:$0xff]
    %v3863 = vld [vmem:[%s3375 + $0x201] sm:$0xff]
    %v3864 = vld [vmem:[%s3375 + $0x211] sm:$0xff]
    %v3865 = vld [vmem:[%s3375 + $0x219] sm:$0xff]
    %v3866 = vld [vmem:[%s3375 + $0x229] sm:$0xff]
    %v3867 = vld [vmem:[%s3375 + $0x231] sm:$0xff]
    %v3868 = vld [vmem:[%s3375 + $0x241] sm:$0xff]
    %v3869 = vld [vmem:[%s3375 + $0x249] sm:$0xff]
    %v3870 = vld [vmem:[%s3375 + $0x259] sm:$0xff]
    %v3871 = vld [vmem:[%s3375 + $0x261] sm:$0xff]
    %v3872 = vld [vmem:[%s3375 + $0x271] sm:$0xff]
    %v3873 = vld [vmem:[%s3375 + $0x279] sm:$0xff]
    %v3874 = vld [vmem:[%s3375 + $0x289] sm:$0xff]
    %v3875 = vld [vmem:[%s3375 + $0x291] sm:$0xff]
    %v3876 = vld [vmem:[%s3375 + $0x2a1] sm:$0xff]
    %v3877 = vld [vmem:[%s3375 + $0x2a9] sm:$0xff]
    %v3878 = vld [vmem:[%s3375 + $0x2b9] sm:$0xff]
    %v3879 = vld [vmem:[%s3375 + $0x2c1] sm:$0xff]
    %v3880 = vld [vmem:[%s3375 + $0x2d1] sm:$0xff]
    %v3881 = vld [vmem:[%s3375 + $0x2d9] sm:$0xff]
    %v3882 = vld [vmem:[%s3375 + $0x2e9] sm:$0xff]
    %v3883 = vld [vmem:[%s3375 + $0x2f1] sm:$0xff]
    %v3884 = vld [vmem:[%s3375 + $0x301] sm:$0xff]
    %v3885 = vld [vmem:[%s3375 + $0x309] sm:$0xff]
    %v3886 = vld [vmem:[%s3375 + $0x319] sm:$0xff]
    %v3887 = vld [vmem:[%s3375 + $0x321] sm:$0xff]
    %v3888 = vpack.c.bf16 %v3825, %v3824
    %v3889 = vpack.c.bf16 %v3827, %v3826
    %v3890 = vpack.c.bf16 %v3829, %v3828
    %v3891 = vpack.c.bf16 %v3831, %v3830
    %v3892 = vpack.c.bf16 %v3833, %v3832
    %v3893 = vpack.c.bf16 %v3835, %v3834
    %v3894 = vpack.c.bf16 %v3837, %v3836
    %v3895 = vpack.c.bf16 %v3839, %v3838
    %v3896 = vpack.c.bf16 %v3841, %v3840
    %v3897 = vpack.c.bf16 %v3843, %v3842
    %v3898 = vpack.c.bf16 %v3845, %v3844
    %v3899 = vpack.c.bf16 %v3847, %v3846
    %v3900 = vpack.c.bf16 %v3849, %v3848
    %v3901 = vpack.c.bf16 %v3851, %v3850
    %v3902 = vpack.c.bf16 %v3853, %v3852
    %v3903 = vpack.c.bf16 %v3855, %v3854
    %v3904 = vpack.c.bf16 %v3857, %v3856
    %v3905 = vpack.c.bf16 %v3859, %v3858
    %v3906 = vpack.c.bf16 %v3861, %v3860
    %v3907 = vpack.c.bf16 %v3863, %v3862
    %v3908 = vpack.c.bf16 %v3865, %v3864
    %v3909 = vpack.c.bf16 %v3867, %v3866
    %v3910 = vpack.c.bf16 %v3869, %v3868
    %v3911 = vpack.c.bf16 %v3871, %v3870
    %v3912 = vpack.c.bf16 %v3873, %v3872
    %v3913 = vpack.c.bf16 %v3875, %v3874
    %v3914 = vpack.c.bf16 %v3877, %v3876
    %v3915 = vpack.c.bf16 %v3879, %v3878
    %v3916 = vpack.c.bf16 %v3881, %v3880
    %v3917 = vpack.c.bf16 %v3883, %v3882
    %v3918 = vpack.c.bf16 %v3885, %v3884
    %v3919 = vpack.c.bf16 %v3887, %v3886
    %v3920 = vld [vmem:[%s3375 + $0x2] sm:$0xff]
    %v3921 = vld [vmem:[%s3375 + $0xa] sm:$0xff]
    %v3922 = vld [vmem:[%s3375 + $0x1a] sm:$0xff]
    %v3923 = vld [vmem:[%s3375 + $0x22] sm:$0xff]
    %v3924 = vld [vmem:[%s3375 + $0x32] sm:$0xff]
    %v3925 = vld [vmem:[%s3375 + $0x3a] sm:$0xff]
    %v3926 = vld [vmem:[%s3375 + $0x4a] sm:$0xff]
    %v3927 = vld [vmem:[%s3375 + $0x52] sm:$0xff]
    %v3928 = vld [vmem:[%s3375 + $0x62] sm:$0xff]
    %v3929 = vld [vmem:[%s3375 + $0x6a] sm:$0xff]
    %v3930 = vld [vmem:[%s3375 + $0x7a] sm:$0xff]
    %v3931 = vld [vmem:[%s3375 + $0x82] sm:$0xff]
    %v3932 = vld [vmem:[%s3375 + $0x92] sm:$0xff]
    %v3933 = vld [vmem:[%s3375 + $0x9a] sm:$0xff]
    %v3934 = vld [vmem:[%s3375 + $0xaa] sm:$0xff]
    %v3935 = vld [vmem:[%s3375 + $0xb2] sm:$0xff]
    %v3936 = vld [vmem:[%s3375 + $0xc2] sm:$0xff]
    %v3937 = vld [vmem:[%s3375 + $0xca] sm:$0xff]
    %v3938 = vld [vmem:[%s3375 + $0xda] sm:$0xff]
    %v3939 = vld [vmem:[%s3375 + $0xe2] sm:$0xff]
    %v3940 = vld [vmem:[%s3375 + $0xf2] sm:$0xff]
    %v3941 = vld [vmem:[%s3375 + $0xfa] sm:$0xff]
    %v3942 = vld [vmem:[%s3375 + $0x10a] sm:$0xff]
    %v3943 = vld [vmem:[%s3375 + $0x112] sm:$0xff]
    %v3944 = vld [vmem:[%s3375 + $0x122] sm:$0xff]
    %v3945 = vld [vmem:[%s3375 + $0x12a] sm:$0xff]
    %v3946 = vld [vmem:[%s3375 + $0x13a] sm:$0xff]
    %v3947 = vld [vmem:[%s3375 + $0x142] sm:$0xff]
    %v3948 = vld [vmem:[%s3375 + $0x152] sm:$0xff]
    %v3949 = vld [vmem:[%s3375 + $0x15a] sm:$0xff]
    %v3950 = vld [vmem:[%s3375 + $0x16a] sm:$0xff]
    %v3951 = vld [vmem:[%s3375 + $0x172] sm:$0xff]
    %v3952 = vld [vmem:[%s3375 + $0x1b2] sm:$0xff]
    %v3953 = vld [vmem:[%s3375 + $0x1ba] sm:$0xff]
    %v3954 = vld [vmem:[%s3375 + $0x1ca] sm:$0xff]
    %v3955 = vld [vmem:[%s3375 + $0x1d2] sm:$0xff]
    %v3956 = vld [vmem:[%s3375 + $0x1e2] sm:$0xff]
    %v3957 = vld [vmem:[%s3375 + $0x1ea] sm:$0xff]
    %v3958 = vld [vmem:[%s3375 + $0x1fa] sm:$0xff]
    %v3959 = vld [vmem:[%s3375 + $0x202] sm:$0xff]
    %v3960 = vld [vmem:[%s3375 + $0x212] sm:$0xff]
    %v3961 = vld [vmem:[%s3375 + $0x21a] sm:$0xff]
    %v3962 = vld [vmem:[%s3375 + $0x22a] sm:$0xff]
    %v3963 = vld [vmem:[%s3375 + $0x232] sm:$0xff]
    %v3964 = vld [vmem:[%s3375 + $0x242] sm:$0xff]
    %v3965 = vld [vmem:[%s3375 + $0x24a] sm:$0xff]
    %v3966 = vld [vmem:[%s3375 + $0x25a] sm:$0xff]
    %v3967 = vld [vmem:[%s3375 + $0x262] sm:$0xff]
    %v3968 = vld [vmem:[%s3375 + $0x272] sm:$0xff]
    %v3969 = vld [vmem:[%s3375 + $0x27a] sm:$0xff]
    %v3970 = vld [vmem:[%s3375 + $0x28a] sm:$0xff]
    %v3971 = vld [vmem:[%s3375 + $0x292] sm:$0xff]
    %v3972 = vld [vmem:[%s3375 + $0x2a2] sm:$0xff]
    %v3973 = vld [vmem:[%s3375 + $0x2aa] sm:$0xff]
    %v3974 = vld [vmem:[%s3375 + $0x2ba] sm:$0xff]
    %v3975 = vld [vmem:[%s3375 + $0x2c2] sm:$0xff]
    %v3976 = vld [vmem:[%s3375 + $0x2d2] sm:$0xff]
    %v3977 = vld [vmem:[%s3375 + $0x2da] sm:$0xff]
    %v3978 = vld [vmem:[%s3375 + $0x2ea] sm:$0xff]
    %v3979 = vld [vmem:[%s3375 + $0x2f2] sm:$0xff]
    %v3980 = vld [vmem:[%s3375 + $0x302] sm:$0xff]
    %v3981 = vld [vmem:[%s3375 + $0x30a] sm:$0xff]
    %v3982 = vld [vmem:[%s3375 + $0x31a] sm:$0xff]
    %v3983 = vld [vmem:[%s3375 + $0x322] sm:$0xff]
    %v3984 = vpack.c.bf16 %v3921, %v3920
    %v3985 = vpack.c.bf16 %v3923, %v3922
    %v3986 = vpack.c.bf16 %v3925, %v3924
    %v3987 = vpack.c.bf16 %v3927, %v3926
    %v3988 = vpack.c.bf16 %v3929, %v3928
    %v3989 = vpack.c.bf16 %v3931, %v3930
    %v3990 = vpack.c.bf16 %v3933, %v3932
    %v3991 = vpack.c.bf16 %v3935, %v3934
    %v3992 = vpack.c.bf16 %v3937, %v3936
    %v3993 = vpack.c.bf16 %v3939, %v3938
    %v3994 = vpack.c.bf16 %v3941, %v3940
    %v3995 = vpack.c.bf16 %v3943, %v3942
    %v3996 = vpack.c.bf16 %v3945, %v3944
    %v3997 = vpack.c.bf16 %v3947, %v3946
    %v3998 = vpack.c.bf16 %v3949, %v3948
    %v3999 = vpack.c.bf16 %v3951, %v3950
    %v4000 = vpack.c.bf16 %v3953, %v3952
    %v4001 = vpack.c.bf16 %v3955, %v3954
    %v4002 = vpack.c.bf16 %v3957, %v3956
    %v4003 = vpack.c.bf16 %v3959, %v3958
    %v4004 = vpack.c.bf16 %v3961, %v3960
    %v4005 = vpack.c.bf16 %v3963, %v3962
    %v4006 = vpack.c.bf16 %v3965, %v3964
    %v4007 = vpack.c.bf16 %v3967, %v3966
    %v4008 = vpack.c.bf16 %v3969, %v3968
    %v4009 = vpack.c.bf16 %v3971, %v3970
    %v4010 = vpack.c.bf16 %v3973, %v3972
    %v4011 = vpack.c.bf16 %v3975, %v3974
    %v4012 = vpack.c.bf16 %v3977, %v3976
    %v4013 = vpack.c.bf16 %v3979, %v3978
    %v4014 = vpack.c.bf16 %v3981, %v3980
    %v4015 = vpack.c.bf16 %v3983, %v3982
    %s4016 = scalar_lea.vmem [#allocation3], 48
    %v4017 = vld [vmem:[%s4016] sm:$0xff]
    %v4018 = vld [vmem:[%s4016 + $0x8] sm:$0xff]
    %v4019 = vld [vmem:[%s4016 + $0x18] sm:$0xff]
    %v4020 = vld [vmem:[%s4016 + $0x20] sm:$0xff]
    %v4021 = vld [vmem:[%s4016 + $0x30] sm:$0xff]
    %v4022 = vld [vmem:[%s4016 + $0x38] sm:$0xff]
    %v4023 = vld [vmem:[%s4016 + $0x48] sm:$0xff]
    %v4024 = vld [vmem:[%s4016 + $0x50] sm:$0xff]
    %v4025 = vld [vmem:[%s4016 + $0x60] sm:$0xff]
    %v4026 = vld [vmem:[%s4016 + $0x68] sm:$0xff]
    %v4027 = vld [vmem:[%s4016 + $0x78] sm:$0xff]
    %v4028 = vld [vmem:[%s4016 + $0x80] sm:$0xff]
    %v4029 = vld [vmem:[%s4016 + $0x90] sm:$0xff]
    %v4030 = vld [vmem:[%s4016 + $0x98] sm:$0xff]
    %v4031 = vld [vmem:[%s4016 + $0xa8] sm:$0xff]
    %v4032 = vld [vmem:[%s4016 + $0xb0] sm:$0xff]
    %v4033 = vld [vmem:[%s4016 + $0xc0] sm:$0xff]
    %v4034 = vld [vmem:[%s4016 + $0xc8] sm:$0xff]
    %v4035 = vld [vmem:[%s4016 + $0xd8] sm:$0xff]
    %v4036 = vld [vmem:[%s4016 + $0xe0] sm:$0xff]
    %v4037 = vld [vmem:[%s4016 + $0xf0] sm:$0xff]
    %v4038 = vld [vmem:[%s4016 + $0xf8] sm:$0xff]
    %v4039 = vld [vmem:[%s4016 + $0x108] sm:$0xff]
    %v4040 = vld [vmem:[%s4016 + $0x110] sm:$0xff]
    %v4041 = vld [vmem:[%s4016 + $0x120] sm:$0xff]
    %v4042 = vld [vmem:[%s4016 + $0x128] sm:$0xff]
    %v4043 = vld [vmem:[%s4016 + $0x138] sm:$0xff]
    %v4044 = vld [vmem:[%s4016 + $0x140] sm:$0xff]
    %v4045 = vld [vmem:[%s4016 + $0x150] sm:$0xff]
    %v4046 = vld [vmem:[%s4016 + $0x158] sm:$0xff]
    %v4047 = vld [vmem:[%s4016 + $0x168] sm:$0xff]
    %v4048 = vld [vmem:[%s4016 + $0x170] sm:$0xff]
    %v4049 = vld [vmem:[%s4016 + $0x1b0] sm:$0xff]
    %v4050 = vld [vmem:[%s4016 + $0x1b8] sm:$0xff]
    %v4051 = vld [vmem:[%s4016 + $0x1c8] sm:$0xff]
    %v4052 = vld [vmem:[%s4016 + $0x1d0] sm:$0xff]
    %v4053 = vld [vmem:[%s4016 + $0x1e0] sm:$0xff]
    %v4054 = vld [vmem:[%s4016 + $0x1e8] sm:$0xff]
    %v4055 = vld [vmem:[%s4016 + $0x1f8] sm:$0xff]
    %v4056 = vld [vmem:[%s4016 + $0x200] sm:$0xff]
    %v4057 = vld [vmem:[%s4016 + $0x210] sm:$0xff]
    %v4058 = vld [vmem:[%s4016 + $0x218] sm:$0xff]
    %v4059 = vld [vmem:[%s4016 + $0x228] sm:$0xff]
    %v4060 = vld [vmem:[%s4016 + $0x230] sm:$0xff]
    %v4061 = vld [vmem:[%s4016 + $0x240] sm:$0xff]
    %v4062 = vld [vmem:[%s4016 + $0x248] sm:$0xff]
    %v4063 = vld [vmem:[%s4016 + $0x258] sm:$0xff]
    %v4064 = vld [vmem:[%s4016 + $0x260] sm:$0xff]
    %v4065 = vld [vmem:[%s4016 + $0x270] sm:$0xff]
    %v4066 = vld [vmem:[%s4016 + $0x278] sm:$0xff]
    %v4067 = vld [vmem:[%s4016 + $0x288] sm:$0xff]
    %v4068 = vld [vmem:[%s4016 + $0x290] sm:$0xff]
    %v4069 = vld [vmem:[%s4016 + $0x2a0] sm:$0xff]
    %v4070 = vld [vmem:[%s4016 + $0x2a8] sm:$0xff]
    %v4071 = vld [vmem:[%s4016 + $0x2b8] sm:$0xff]
    %v4072 = vld [vmem:[%s4016 + $0x2c0] sm:$0xff]
    %v4073 = vld [vmem:[%s4016 + $0x2d0] sm:$0xff]
    %v4074 = vld [vmem:[%s4016 + $0x2d8] sm:$0xff]
    %v4075 = vld [vmem:[%s4016 + $0x2e8] sm:$0xff]
    %v4076 = vld [vmem:[%s4016 + $0x2f0] sm:$0xff]
    %v4077 = vld [vmem:[%s4016 + $0x300] sm:$0xff]
    %v4078 = vld [vmem:[%s4016 + $0x308] sm:$0xff]
    %v4079 = vld [vmem:[%s4016 + $0x318] sm:$0xff]
    %v4080 = vld [vmem:[%s4016 + $0x320] sm:$0xff]
    %v4081 = vpack.c.bf16 %v4018, %v4017
    %v4082 = vpack.c.bf16 %v4020, %v4019
    %v4083 = vpack.c.bf16 %v4022, %v4021
    %v4084 = vpack.c.bf16 %v4024, %v4023
    %v4085 = vpack.c.bf16 %v4026, %v4025
    %v4086 = vpack.c.bf16 %v4028, %v4027
    %v4087 = vpack.c.bf16 %v4030, %v4029
    %v4088 = vpack.c.bf16 %v4032, %v4031
    %v4089 = vpack.c.bf16 %v4034, %v4033
    %v4090 = vpack.c.bf16 %v4036, %v4035
    %v4091 = vpack.c.bf16 %v4038, %v4037
    %v4092 = vpack.c.bf16 %v4040, %v4039
    %v4093 = vpack.c.bf16 %v4042, %v4041
    %v4094 = vpack.c.bf16 %v4044, %v4043
    %v4095 = vpack.c.bf16 %v4046, %v4045
    %v4096 = vpack.c.bf16 %v4048, %v4047
    %v4097 = vpack.c.bf16 %v4050, %v4049
    %v4098 = vpack.c.bf16 %v4052, %v4051
    %v4099 = vpack.c.bf16 %v4054, %v4053
    %v4100 = vpack.c.bf16 %v4056, %v4055
    %v4101 = vpack.c.bf16 %v4058, %v4057
    %v4102 = vpack.c.bf16 %v4060, %v4059
    %v4103 = vpack.c.bf16 %v4062, %v4061
    %v4104 = vpack.c.bf16 %v4064, %v4063
    %v4105 = vpack.c.bf16 %v4066, %v4065
    %v4106 = vpack.c.bf16 %v4068, %v4067
    %v4107 = vpack.c.bf16 %v4070, %v4069
    %v4108 = vpack.c.bf16 %v4072, %v4071
    %v4109 = vpack.c.bf16 %v4074, %v4073
    %v4110 = vpack.c.bf16 %v4076, %v4075
    %v4111 = vpack.c.bf16 %v4078, %v4077
    %v4112 = vpack.c.bf16 %v4080, %v4079
    %v4113 = vld [vmem:[%s4016 + $0x1] sm:$0xff]
    %v4114 = vld [vmem:[%s4016 + $0x9] sm:$0xff]
    %v4115 = vld [vmem:[%s4016 + $0x19] sm:$0xff]
    %v4116 = vld [vmem:[%s4016 + $0x21] sm:$0xff]
    %v4117 = vld [vmem:[%s4016 + $0x31] sm:$0xff]
    %v4118 = vld [vmem:[%s4016 + $0x39] sm:$0xff]
    %v4119 = vld [vmem:[%s4016 + $0x49] sm:$0xff]
    %v4120 = vld [vmem:[%s4016 + $0x51] sm:$0xff]
    %v4121 = vld [vmem:[%s4016 + $0x61] sm:$0xff]
    %v4122 = vld [vmem:[%s4016 + $0x69] sm:$0xff]
    %v4123 = vld [vmem:[%s4016 + $0x79] sm:$0xff]
    %v4124 = vld [vmem:[%s4016 + $0x81] sm:$0xff]
    %v4125 = vld [vmem:[%s4016 + $0x91] sm:$0xff]
    %v4126 = vld [vmem:[%s4016 + $0x99] sm:$0xff]
    %v4127 = vld [vmem:[%s4016 + $0xa9] sm:$0xff]
    %v4128 = vld [vmem:[%s4016 + $0xb1] sm:$0xff]
    %v4129 = vld [vmem:[%s4016 + $0xc1] sm:$0xff]
    %v4130 = vld [vmem:[%s4016 + $0xc9] sm:$0xff]
    %v4131 = vld [vmem:[%s4016 + $0xd9] sm:$0xff]
    %v4132 = vld [vmem:[%s4016 + $0xe1] sm:$0xff]
    %v4133 = vld [vmem:[%s4016 + $0xf1] sm:$0xff]
    %v4134 = vld [vmem:[%s4016 + $0xf9] sm:$0xff]
    %v4135 = vld [vmem:[%s4016 + $0x109] sm:$0xff]
    %v4136 = vld [vmem:[%s4016 + $0x111] sm:$0xff]
    %v4137 = vld [vmem:[%s4016 + $0x121] sm:$0xff]
    %v4138 = vld [vmem:[%s4016 + $0x129] sm:$0xff]
    %v4139 = vld [vmem:[%s4016 + $0x139] sm:$0xff]
    %v4140 = vld [vmem:[%s4016 + $0x141] sm:$0xff]
    %v4141 = vld [vmem:[%s4016 + $0x151] sm:$0xff]
    %v4142 = vld [vmem:[%s4016 + $0x159] sm:$0xff]
    %v4143 = vld [vmem:[%s4016 + $0x169] sm:$0xff]
    %v4144 = vld [vmem:[%s4016 + $0x171] sm:$0xff]
    %v4145 = vld [vmem:[%s4016 + $0x1b1] sm:$0xff]
    %v4146 = vld [vmem:[%s4016 + $0x1b9] sm:$0xff]
    %v4147 = vld [vmem:[%s4016 + $0x1c9] sm:$0xff]
    %v4148 = vld [vmem:[%s4016 + $0x1d1] sm:$0xff]
    %v4149 = vld [vmem:[%s4016 + $0x1e1] sm:$0xff]
    %v4150 = vld [vmem:[%s4016 + $0x1e9] sm:$0xff]
    %v4151 = vld [vmem:[%s4016 + $0x1f9] sm:$0xff]
    %v4152 = vld [vmem:[%s4016 + $0x201] sm:$0xff]
    %v4153 = vld [vmem:[%s4016 + $0x211] sm:$0xff]
    %v4154 = vld [vmem:[%s4016 + $0x219] sm:$0xff]
    %v4155 = vld [vmem:[%s4016 + $0x229] sm:$0xff]
    %v4156 = vld [vmem:[%s4016 + $0x231] sm:$0xff]
    %v4157 = vld [vmem:[%s4016 + $0x241] sm:$0xff]
    %v4158 = vld [vmem:[%s4016 + $0x249] sm:$0xff]
    %v4159 = vld [vmem:[%s4016 + $0x259] sm:$0xff]
    %v4160 = vld [vmem:[%s4016 + $0x261] sm:$0xff]
    %v4161 = vld [vmem:[%s4016 + $0x271] sm:$0xff]
    %v4162 = vld [vmem:[%s4016 + $0x279] sm:$0xff]
    %v4163 = vld [vmem:[%s4016 + $0x289] sm:$0xff]
    %v4164 = vld [vmem:[%s4016 + $0x291] sm:$0xff]
    %v4165 = vld [vmem:[%s4016 + $0x2a1] sm:$0xff]
    %v4166 = vld [vmem:[%s4016 + $0x2a9] sm:$0xff]
    %v4167 = vld [vmem:[%s4016 + $0x2b9] sm:$0xff]
    %v4168 = vld [vmem:[%s4016 + $0x2c1] sm:$0xff]
    %v4169 = vld [vmem:[%s4016 + $0x2d1] sm:$0xff]
    %v4170 = vld [vmem:[%s4016 + $0x2d9] sm:$0xff]
    %v4171 = vld [vmem:[%s4016 + $0x2e9] sm:$0xff]
    %v4172 = vld [vmem:[%s4016 + $0x2f1] sm:$0xff]
    %v4173 = vld [vmem:[%s4016 + $0x301] sm:$0xff]
    %v4174 = vld [vmem:[%s4016 + $0x309] sm:$0xff]
    %v4175 = vld [vmem:[%s4016 + $0x319] sm:$0xff]
    %v4176 = vld [vmem:[%s4016 + $0x321] sm:$0xff]
    %v4177 = vpack.c.bf16 %v4114, %v4113
    %v4178 = vpack.c.bf16 %v4116, %v4115
    %v4179 = vpack.c.bf16 %v4118, %v4117
    %v4180 = vpack.c.bf16 %v4120, %v4119
    %v4181 = vpack.c.bf16 %v4122, %v4121
    %v4182 = vpack.c.bf16 %v4124, %v4123
    %v4183 = vpack.c.bf16 %v4126, %v4125
    %v4184 = vpack.c.bf16 %v4128, %v4127
    %v4185 = vpack.c.bf16 %v4130, %v4129
    %v4186 = vpack.c.bf16 %v4132, %v4131
    %v4187 = vpack.c.bf16 %v4134, %v4133
    %v4188 = vpack.c.bf16 %v4136, %v4135
    %v4189 = vpack.c.bf16 %v4138, %v4137
    %v4190 = vpack.c.bf16 %v4140, %v4139
    %v4191 = vpack.c.bf16 %v4142, %v4141
    %v4192 = vpack.c.bf16 %v4144, %v4143
    %v4193 = vpack.c.bf16 %v4146, %v4145
    %v4194 = vpack.c.bf16 %v4148, %v4147
    %v4195 = vpack.c.bf16 %v4150, %v4149
    %v4196 = vpack.c.bf16 %v4152, %v4151
    %v4197 = vpack.c.bf16 %v4154, %v4153
    %v4198 = vpack.c.bf16 %v4156, %v4155
    %v4199 = vpack.c.bf16 %v4158, %v4157
    %v4200 = vpack.c.bf16 %v4160, %v4159
    %v4201 = vpack.c.bf16 %v4162, %v4161
    %v4202 = vpack.c.bf16 %v4164, %v4163
    %v4203 = vpack.c.bf16 %v4166, %v4165
    %v4204 = vpack.c.bf16 %v4168, %v4167
    %v4205 = vpack.c.bf16 %v4170, %v4169
    %v4206 = vpack.c.bf16 %v4172, %v4171
    %v4207 = vpack.c.bf16 %v4174, %v4173
    %v4208 = vpack.c.bf16 %v4176, %v4175
    %v4209 = vld [vmem:[%s4016 + $0x2] sm:$0xff]
    %v4210 = vld [vmem:[%s4016 + $0xa] sm:$0xff]
    %v4211 = vld [vmem:[%s4016 + $0x1a] sm:$0xff]
    %v4212 = vld [vmem:[%s4016 + $0x22] sm:$0xff]
    %v4213 = vld [vmem:[%s4016 + $0x32] sm:$0xff]
    %v4214 = vld [vmem:[%s4016 + $0x3a] sm:$0xff]
    %v4215 = vld [vmem:[%s4016 + $0x4a] sm:$0xff]
    %v4216 = vld [vmem:[%s4016 + $0x52] sm:$0xff]
    %v4217 = vld [vmem:[%s4016 + $0x62] sm:$0xff]
    %v4218 = vld [vmem:[%s4016 + $0x6a] sm:$0xff]
    %v4219 = vld [vmem:[%s4016 + $0x7a] sm:$0xff]
    %v4220 = vld [vmem:[%s4016 + $0x82] sm:$0xff]
    %v4221 = vld [vmem:[%s4016 + $0x92] sm:$0xff]
    %v4222 = vld [vmem:[%s4016 + $0x9a] sm:$0xff]
    %v4223 = vld [vmem:[%s4016 + $0xaa] sm:$0xff]
    %v4224 = vld [vmem:[%s4016 + $0xb2] sm:$0xff]
    %v4225 = vld [vmem:[%s4016 + $0xc2] sm:$0xff]
    %v4226 = vld [vmem:[%s4016 + $0xca] sm:$0xff]
    %v4227 = vld [vmem:[%s4016 + $0xda] sm:$0xff]
    %v4228 = vld [vmem:[%s4016 + $0xe2] sm:$0xff]
    %v4229 = vld [vmem:[%s4016 + $0xf2] sm:$0xff]
    %v4230 = vld [vmem:[%s4016 + $0xfa] sm:$0xff]
    %v4231 = vld [vmem:[%s4016 + $0x10a] sm:$0xff]
    %v4232 = vld [vmem:[%s4016 + $0x112] sm:$0xff]
    %v4233 = vld [vmem:[%s4016 + $0x122] sm:$0xff]
    %v4234 = vld [vmem:[%s4016 + $0x12a] sm:$0xff]
    %v4235 = vld [vmem:[%s4016 + $0x13a] sm:$0xff]
    %v4236 = vld [vmem:[%s4016 + $0x142] sm:$0xff]
    %v4237 = vld [vmem:[%s4016 + $0x152] sm:$0xff]
    %v4238 = vld [vmem:[%s4016 + $0x15a] sm:$0xff]
    %v4239 = vld [vmem:[%s4016 + $0x16a] sm:$0xff]
    %v4240 = vld [vmem:[%s4016 + $0x172] sm:$0xff]
    %v4241 = vld [vmem:[%s4016 + $0x1b2] sm:$0xff]
    %v4242 = vld [vmem:[%s4016 + $0x1ba] sm:$0xff]
    %v4243 = vld [vmem:[%s4016 + $0x1ca] sm:$0xff]
    %v4244 = vld [vmem:[%s4016 + $0x1d2] sm:$0xff]
    %v4245 = vld [vmem:[%s4016 + $0x1e2] sm:$0xff]
    %v4246 = vld [vmem:[%s4016 + $0x1ea] sm:$0xff]
    %v4247 = vld [vmem:[%s4016 + $0x1fa] sm:$0xff]
    %v4248 = vld [vmem:[%s4016 + $0x202] sm:$0xff]
    %v4249 = vld [vmem:[%s4016 + $0x212] sm:$0xff]
    %v4250 = vld [vmem:[%s4016 + $0x21a] sm:$0xff]
    %v4251 = vld [vmem:[%s4016 + $0x22a] sm:$0xff]
    %v4252 = vld [vmem:[%s4016 + $0x232] sm:$0xff]
    %v4253 = vld [vmem:[%s4016 + $0x242] sm:$0xff]
    %v4254 = vld [vmem:[%s4016 + $0x24a] sm:$0xff]
    %v4255 = vld [vmem:[%s4016 + $0x25a] sm:$0xff]
    %v4256 = vld [vmem:[%s4016 + $0x262] sm:$0xff]
    %v4257 = vld [vmem:[%s4016 + $0x272] sm:$0xff]
    %v4258 = vld [vmem:[%s4016 + $0x27a] sm:$0xff]
    %v4259 = vld [vmem:[%s4016 + $0x28a] sm:$0xff]
    %v4260 = vld [vmem:[%s4016 + $0x292] sm:$0xff]
    %v4261 = vld [vmem:[%s4016 + $0x2a2] sm:$0xff]
    %v4262 = vld [vmem:[%s4016 + $0x2aa] sm:$0xff]
    %v4263 = vld [vmem:[%s4016 + $0x2ba] sm:$0xff]
    %v4264 = vld [vmem:[%s4016 + $0x2c2] sm:$0xff]
    %v4265 = vld [vmem:[%s4016 + $0x2d2] sm:$0xff]
    %v4266 = vld [vmem:[%s4016 + $0x2da] sm:$0xff]
    %v4267 = vld [vmem:[%s4016 + $0x2ea] sm:$0xff]
    %v4268 = vld [vmem:[%s4016 + $0x2f2] sm:$0xff]
    %v4269 = vld [vmem:[%s4016 + $0x302] sm:$0xff]
    %v4270 = vld [vmem:[%s4016 + $0x30a] sm:$0xff]
    %v4271 = vld [vmem:[%s4016 + $0x31a] sm:$0xff]
    %v4272 = vld [vmem:[%s4016 + $0x322] sm:$0xff]
    %v4273 = vpack.c.bf16 %v4210, %v4209
    %v4274 = vpack.c.bf16 %v4212, %v4211
    %v4275 = vpack.c.bf16 %v4214, %v4213
    %v4276 = vpack.c.bf16 %v4216, %v4215
    %v4277 = vpack.c.bf16 %v4218, %v4217
    %v4278 = vpack.c.bf16 %v4220, %v4219
    %v4279 = vpack.c.bf16 %v4222, %v4221
    %v4280 = vpack.c.bf16 %v4224, %v4223
    %v4281 = vpack.c.bf16 %v4226, %v4225
    %v4282 = vpack.c.bf16 %v4228, %v4227
    %v4283 = vpack.c.bf16 %v4230, %v4229
    %v4284 = vpack.c.bf16 %v4232, %v4231
    %v4285 = vpack.c.bf16 %v4234, %v4233
    %v4286 = vpack.c.bf16 %v4236, %v4235
    %v4287 = vpack.c.bf16 %v4238, %v4237
    %v4288 = vpack.c.bf16 %v4240, %v4239
    %v4289 = vpack.c.bf16 %v4242, %v4241
    %v4290 = vpack.c.bf16 %v4244, %v4243
    %v4291 = vpack.c.bf16 %v4246, %v4245
    %v4292 = vpack.c.bf16 %v4248, %v4247
    %v4293 = vpack.c.bf16 %v4250, %v4249
    %v4294 = vpack.c.bf16 %v4252, %v4251
    %v4295 = vpack.c.bf16 %v4254, %v4253
    %v4296 = vpack.c.bf16 %v4256, %v4255
    %v4297 = vpack.c.bf16 %v4258, %v4257
    %v4298 = vpack.c.bf16 %v4260, %v4259
    %v4299 = vpack.c.bf16 %v4262, %v4261
    %v4300 = vpack.c.bf16 %v4264, %v4263
    %v4301 = vpack.c.bf16 %v4266, %v4265
    %v4302 = vpack.c.bf16 %v4268, %v4267
    %v4303 = vpack.c.bf16 %v4270, %v4269
    %v4304 = vpack.c.bf16 %v4272, %v4271
    %v4305 = vld [vmem:[%s4] sm:$0xf]
    %v4306 = vld [vmem:[%s4 + $0x4] sm:$0xf]
    %v4307 = vld [vmem:[%s4 + $0x8] sm:$0xf]
    %v4308 = vld [vmem:[%s4 + $0xc] sm:$0xf]
    %v4309 = vld [vmem:[%s4 + $0x10] sm:$0xf]
    %v4310 = vld [vmem:[%s4 + $0x14] sm:$0xf]
    %v4311 = vld [vmem:[%s4 + $0x18] sm:$0xf]
    %v4312 = vld [vmem:[%s4 + $0x1c] sm:$0xf]
    %v4313 = vld [vmem:[%s4 + $0x20] sm:$0xf]
    %v4314 = vld [vmem:[%s4 + $0x24] sm:$0xf]
    %v4315 = vld [vmem:[%s4 + $0x28] sm:$0xf]
    %v4316 = vld [vmem:[%s4 + $0x2c] sm:$0xf]
    %v4317 = vld [vmem:[%s4 + $0x30] sm:$0xf]
    %v4318 = vld [vmem:[%s4 + $0x34] sm:$0xf]
    %v4319 = vld [vmem:[%s4 + $0x38] sm:$0xf]
    %v4320 = vld [vmem:[%s4 + $0x3c] sm:$0xf]
    %v4321 = vld [vmem:[%s4 + $0x40] sm:$0xf]
    %v4322 = vld [vmem:[%s4 + $0x44] sm:$0xf]
    %v4323 = vld [vmem:[%s4 + $0x48] sm:$0xf]
    %v4324 = vld [vmem:[%s4 + $0x4c] sm:$0xf]
    %v4325 = vld [vmem:[%s4 + $0x50] sm:$0xf]
    %v4326 = vld [vmem:[%s4 + $0x54] sm:$0xf]
    %v4327 = vld [vmem:[%s4 + $0x58] sm:$0xf]
    %v4328 = vld [vmem:[%s4 + $0x5c] sm:$0xf]
    %v4329 = vld [vmem:[%s4 + $0x60] sm:$0xf]
    %v4330 = vld [vmem:[%s4 + $0x64] sm:$0xf]
    %v4331 = vld [vmem:[%s4 + $0x68] sm:$0xf]
    %v4332 = vld [vmem:[%s4 + $0x6c] sm:$0xf]
    %v4333 = vld [vmem:[%s4 + $0x70] sm:$0xf]
    %v4334 = vld [vmem:[%s4 + $0x74] sm:$0xf]
    %v4335 = vld [vmem:[%s4 + $0x78] sm:$0xf]
    %v4336 = vld [vmem:[%s4 + $0x7c] sm:$0xf]
    %v4337 = vld [vmem:[%s4 + $0x80] sm:$0xf]
    %v4338 = vld [vmem:[%s4 + $0x84] sm:$0xf]
    %v4339 = vld [vmem:[%s4 + $0x88] sm:$0xf]
    %v4340 = vld [vmem:[%s4 + $0x8c] sm:$0xf]
    %v4341 = vld [vmem:[%s4 + $0x90] sm:$0xf]
    %v4342 = vld [vmem:[%s4 + $0x94] sm:$0xf]
    %v4343 = vld [vmem:[%s4 + $0x98] sm:$0xf]
    %v4344 = vld [vmem:[%s4 + $0x9c] sm:$0xf]
    %v4345 = vld [vmem:[%s4 + $0xa0] sm:$0xf]
    %v4346 = vld [vmem:[%s4 + $0xa4] sm:$0xf]
    %v4347 = vld [vmem:[%s4 + $0xa8] sm:$0xf]
    %v4348 = vld [vmem:[%s4 + $0xac] sm:$0xf]
    %v4349 = vld [vmem:[%s4 + $0xb0] sm:$0xf]
    %v4350 = vld [vmem:[%s4 + $0xb4] sm:$0xf]
    %v4351 = vld [vmem:[%s4 + $0xb8] sm:$0xf]
    %v4352 = vld [vmem:[%s4 + $0xbc] sm:$0xf]
    %v4353 = vld [vmem:[%s4 + $0xc0] sm:$0xf]
    %v4354 = vld [vmem:[%s4 + $0xc4] sm:$0xf]
    %v4355 = vld [vmem:[%s4 + $0xc8] sm:$0xf]
    %v4356 = vld [vmem:[%s4 + $0xcc] sm:$0xf]
    %v4357 = vld [vmem:[%s4 + $0xd0] sm:$0xf]
    %v4358 = vld [vmem:[%s4 + $0xd4] sm:$0xf]
    %v4359 = vld [vmem:[%s4 + $0xd8] sm:$0xf]
    %v4360 = vld [vmem:[%s4 + $0xdc] sm:$0xf]
    %v4361 = vld [vmem:[%s4 + $0xe0] sm:$0xf]
    %v4362 = vld [vmem:[%s4 + $0xe4] sm:$0xf]
    %v4363 = vld [vmem:[%s4 + $0xe8] sm:$0xf]
    %v4364 = vld [vmem:[%s4 + $0xec] sm:$0xf]
    %v4365 = vld [vmem:[%s4 + $0xf0] sm:$0xf]
    %v4366 = vld [vmem:[%s4 + $0xf4] sm:$0xf]
    %v4367 = vld [vmem:[%s4 + $0xf8] sm:$0xf]
    %v4368 = vld [vmem:[%s4 + $0xfc] sm:$0xf]
    %v4369 = vld [vmem:[%s4 + $0x100] sm:$0xf]
    %v4370 = vld [vmem:[%s4 + $0x104] sm:$0xf]
    %v4371 = vld [vmem:[%s4 + $0x108] sm:$0xf]
    %v4372 = vld [vmem:[%s4 + $0x10c] sm:$0xf]
    %v4373 = vld [vmem:[%s4 + $0x110] sm:$0xf]
    %v4374 = vld [vmem:[%s4 + $0x114] sm:$0xf]
    %v4375 = vld [vmem:[%s4 + $0x118] sm:$0xf]
    %v4376 = vld [vmem:[%s4 + $0x11c] sm:$0xf]
    %v4377 = vld [vmem:[%s4 + $0x120] sm:$0xf]
    %v4378 = vld [vmem:[%s4 + $0x124] sm:$0xf]
    %v4379 = vld [vmem:[%s4 + $0x128] sm:$0xf]
    %v4380 = vld [vmem:[%s4 + $0x12c] sm:$0xf]
    %v4381 = vld [vmem:[%s4 + $0x130] sm:$0xf]
    %v4382 = vld [vmem:[%s4 + $0x134] sm:$0xf]
    %v4383 = vld [vmem:[%s4 + $0x138] sm:$0xf]
    %v4384 = vld [vmem:[%s4 + $0x13c] sm:$0xf]
    %v4385 = vld [vmem:[%s4 + $0x140] sm:$0xf]
    %v4386 = vld [vmem:[%s4 + $0x144] sm:$0xf]
    %v4387 = vld [vmem:[%s4 + $0x148] sm:$0xf]
    %v4388 = vld [vmem:[%s4 + $0x14c] sm:$0xf]
    %v4389 = vld [vmem:[%s4 + $0x150] sm:$0xf]
    %v4390 = vld [vmem:[%s4 + $0x154] sm:$0xf]
    %v4391 = vld [vmem:[%s4 + $0x158] sm:$0xf]
    %v4392 = vld [vmem:[%s4 + $0x15c] sm:$0xf]
    %v4393 = vld [vmem:[%s4 + $0x160] sm:$0xf]
    %v4394 = vld [vmem:[%s4 + $0x164] sm:$0xf]
    %v4395 = vld [vmem:[%s4 + $0x168] sm:$0xf]
    %v4396 = vld [vmem:[%s4 + $0x16c] sm:$0xf]
    %v4397 = vld [vmem:[%s4 + $0x170] sm:$0xf]
    %v4398 = vld [vmem:[%s4 + $0x174] sm:$0xf]
    %v4399 = vld [vmem:[%s4 + $0x178] sm:$0xf]
    %v4400 = vld [vmem:[%s4 + $0x17c] sm:$0xf]
    %v4401 = vld [vmem:[%s4 + $0x180] sm:$0xf]
    %v4402 = vld [vmem:[%s4 + $0x184] sm:$0xf]
    %v4403 = vld [vmem:[%s4 + $0x188] sm:$0xf]
    %v4404 = vld [vmem:[%s4 + $0x18c] sm:$0xf]
    %v4405 = vld [vmem:[%s4 + $0x190] sm:$0xf]
    %v4406 = vld [vmem:[%s4 + $0x194] sm:$0xf]
    %v4407 = vld [vmem:[%s4 + $0x198] sm:$0xf]
    %v4408 = vld [vmem:[%s4 + $0x19c] sm:$0xf]
    %v4409 = vld [vmem:[%s4 + $0x1a0] sm:$0xf]
    %v4410 = vld [vmem:[%s4 + $0x1a4] sm:$0xf]
    %v4411 = vld [vmem:[%s4 + $0x1a8] sm:$0xf]
    %v4412 = vld [vmem:[%s4 + $0x1ac] sm:$0xf]
    %v4413 = vld [vmem:[%s4 + $0x1b0] sm:$0xf]
    %v4414 = vld [vmem:[%s4 + $0x1b4] sm:$0xf]
    %v4415 = vld [vmem:[%s4 + $0x1b8] sm:$0xf]
    %v4416 = vld [vmem:[%s4 + $0x1bc] sm:$0xf]
    %v4417 = vld [vmem:[%s4 + $0x1c0] sm:$0xf]
    %v4418 = vld [vmem:[%s4 + $0x1c4] sm:$0xf]
    %v4419 = vld [vmem:[%s4 + $0x1c8] sm:$0xf]
    %v4420 = vld [vmem:[%s4 + $0x1cc] sm:$0xf]
    %v4421 = vld [vmem:[%s4 + $0x1d0] sm:$0xf]
    %v4422 = vld [vmem:[%s4 + $0x1d4] sm:$0xf]
    %v4423 = vld [vmem:[%s4 + $0x1d8] sm:$0xf]
    %v4424 = vld [vmem:[%s4 + $0x1dc] sm:$0xf]
    %v4425 = vld [vmem:[%s4 + $0x1e0] sm:$0xf]
    %v4426 = vld [vmem:[%s4 + $0x1e4] sm:$0xf]
    %v4427 = vld [vmem:[%s4 + $0x1e8] sm:$0xf]
    %v4428 = vld [vmem:[%s4 + $0x1ec] sm:$0xf]
    %v4429 = vld [vmem:[%s4 + $0x1f0] sm:$0xf]
    %v4430 = vld [vmem:[%s4 + $0x1f4] sm:$0xf]
    %v4431 = vld [vmem:[%s4 + $0x1f8] sm:$0xf]
    %v4432 = vld [vmem:[%s4 + $0x1fc] sm:$0xf]
    %v4433 = vld [vmem:[%s4 + $0x200] sm:$0xf]
    %v4434 = vld [vmem:[%s4 + $0x204] sm:$0xf]
    %v4435 = vld [vmem:[%s4 + $0x208] sm:$0xf]
    %v4436 = vld [vmem:[%s4 + $0x20c] sm:$0xf]
    %v4437 = vld [vmem:[%s4 + $0x210] sm:$0xf]
    %v4438 = vld [vmem:[%s4 + $0x214] sm:$0xf]
    %v4439 = vld [vmem:[%s4 + $0x218] sm:$0xf]
    %v4440 = vld [vmem:[%s4 + $0x21c] sm:$0xf]
    %v4441 = vld [vmem:[%s4 + $0x220] sm:$0xf]
    %v4442 = vld [vmem:[%s4 + $0x224] sm:$0xf]
    %v4443 = vld [vmem:[%s4 + $0x228] sm:$0xf]
    %v4444 = vld [vmem:[%s4 + $0x22c] sm:$0xf]
    %v4445 = vld [vmem:[%s4 + $0x230] sm:$0xf]
    %v4446 = vld [vmem:[%s4 + $0x234] sm:$0xf]
    %v4447 = vld [vmem:[%s4 + $0x238] sm:$0xf]
    %v4448 = vld [vmem:[%s4 + $0x23c] sm:$0xf]
    %v4593 = vunpack.c.l.b16 %v4305
    %v4594 = vunpack.c.l.b16 %v4306
    %v4595 = vunpack.c.l.b16 %v4307
    %v4596 = vunpack.c.l.b16 %v4308
    %v4597 = vunpack.c.l.b16 %v4309
    %v4598 = vunpack.c.l.b16 %v4310
    %v4599 = vunpack.c.l.b16 %v4311
    %v4600 = vunpack.c.l.b16 %v4312
    %v4601 = vunpack.c.l.b16 %v4313
    %v4602 = vunpack.c.l.b16 %v4314
    %v4603 = vunpack.c.l.b16 %v4315
    %v4604 = vunpack.c.l.b16 %v4316
    %v4605 = vunpack.c.l.b16 %v4317
    %v4606 = vunpack.c.l.b16 %v4318
    %v4607 = vunpack.c.l.b16 %v4319
    %v4608 = vunpack.c.l.b16 %v4320
    %v4609 = vunpack.c.l.b16 %v4321
    %v4610 = vunpack.c.l.b16 %v4322
    %v4611 = vunpack.c.l.b16 %v4323
    %v4612 = vunpack.c.l.b16 %v4324
    %v4613 = vunpack.c.l.b16 %v4325
    %v4614 = vunpack.c.l.b16 %v4326
    %v4615 = vunpack.c.l.b16 %v4327
    %v4616 = vunpack.c.l.b16 %v4328
    %v4617 = vunpack.c.l.b16 %v4329
    %v4618 = vunpack.c.l.b16 %v4330
    %v4619 = vunpack.c.l.b16 %v4331
    %v4620 = vunpack.c.l.b16 %v4332
    %v4621 = vunpack.c.l.b16 %v4333
    %v4622 = vunpack.c.l.b16 %v4334
    %v4623 = vunpack.c.l.b16 %v4335
    %v4624 = vunpack.c.l.b16 %v4336
    %v4625 = vunpack.c.l.b16 %v4337
    %v4626 = vunpack.c.l.b16 %v4338
    %v4627 = vunpack.c.l.b16 %v4339
    %v4628 = vunpack.c.l.b16 %v4340
    %v4629 = vunpack.c.l.b16 %v4341
    %v4630 = vunpack.c.l.b16 %v4342
    %v4631 = vunpack.c.l.b16 %v4343
    %v4632 = vunpack.c.l.b16 %v4344
    %v4633 = vunpack.c.l.b16 %v4345
    %v4634 = vunpack.c.l.b16 %v4346
    %v4635 = vunpack.c.l.b16 %v4347
    %v4636 = vunpack.c.l.b16 %v4348
    %v4637 = vunpack.c.l.b16 %v4349
    %v4638 = vunpack.c.l.b16 %v4350
    %v4639 = vunpack.c.l.b16 %v4351
    %v4640 = vunpack.c.l.b16 %v4352
    %v4641 = vunpack.c.l.b16 %v4353
    %v4642 = vunpack.c.l.b16 %v4354
    %v4643 = vunpack.c.l.b16 %v4355
    %v4644 = vunpack.c.l.b16 %v4356
    %v4645 = vunpack.c.l.b16 %v4357
    %v4646 = vunpack.c.l.b16 %v4358
    %v4647 = vunpack.c.l.b16 %v4359
    %v4648 = vunpack.c.l.b16 %v4360
    %v4649 = vunpack.c.l.b16 %v4361
    %v4650 = vunpack.c.l.b16 %v4362
    %v4651 = vunpack.c.l.b16 %v4363
    %v4652 = vunpack.c.l.b16 %v4364
    %v4653 = vunpack.c.l.b16 %v4365
    %v4654 = vunpack.c.l.b16 %v4366
    %v4655 = vunpack.c.l.b16 %v4367
    %v4656 = vunpack.c.l.b16 %v4368
    %v4657 = vunpack.c.l.b16 %v4369
    %v4658 = vunpack.c.l.b16 %v4370
    %v4659 = vunpack.c.l.b16 %v4371
    %v4660 = vunpack.c.l.b16 %v4372
    %v4661 = vunpack.c.l.b16 %v4373
    %v4662 = vunpack.c.l.b16 %v4374
    %v4663 = vunpack.c.l.b16 %v4375
    %v4664 = vunpack.c.l.b16 %v4376
    %v4665 = vunpack.c.l.b16 %v4377
    %v4666 = vunpack.c.l.b16 %v4378
    %v4667 = vunpack.c.l.b16 %v4379
    %v4668 = vunpack.c.l.b16 %v4380
    %v4669 = vunpack.c.l.b16 %v4381
    %v4670 = vunpack.c.l.b16 %v4382
    %v4671 = vunpack.c.l.b16 %v4383
    %v4672 = vunpack.c.l.b16 %v4384
    %v4673 = vunpack.c.l.b16 %v4385
    %v4674 = vunpack.c.l.b16 %v4386
    %v4675 = vunpack.c.l.b16 %v4387
    %v4676 = vunpack.c.l.b16 %v4388
    %v4677 = vunpack.c.l.b16 %v4389
    %v4678 = vunpack.c.l.b16 %v4390
    %v4679 = vunpack.c.l.b16 %v4391
    %v4680 = vunpack.c.l.b16 %v4392
    %v4681 = vunpack.c.l.b16 %v4393
    %v4682 = vunpack.c.l.b16 %v4394
    %v4683 = vunpack.c.l.b16 %v4395
    %v4684 = vunpack.c.l.b16 %v4396
    %v4685 = vunpack.c.l.b16 %v4397
    %v4686 = vunpack.c.l.b16 %v4398
    %v4687 = vunpack.c.l.b16 %v4399
    %v4688 = vunpack.c.l.b16 %v4400
    %v4689 = vunpack.c.l.b16 %v4401
    %v4690 = vunpack.c.l.b16 %v4402
    %v4691 = vunpack.c.l.b16 %v4403
    %v4692 = vunpack.c.l.b16 %v4404
    %v4693 = vunpack.c.l.b16 %v4405
    %v4694 = vunpack.c.l.b16 %v4406
    %v4695 = vunpack.c.l.b16 %v4407
    %v4696 = vunpack.c.l.b16 %v4408
    %v4697 = vunpack.c.l.b16 %v4409
    %v4698 = vunpack.c.l.b16 %v4410
    %v4699 = vunpack.c.l.b16 %v4411
    %v4700 = vunpack.c.l.b16 %v4412
    %v4701 = vunpack.c.l.b16 %v4413
    %v4702 = vunpack.c.l.b16 %v4414
    %v4703 = vunpack.c.l.b16 %v4415
    %v4704 = vunpack.c.l.b16 %v4416
    %v4705 = vunpack.c.l.b16 %v4417
    %v4706 = vunpack.c.l.b16 %v4418
    %v4707 = vunpack.c.l.b16 %v4419
    %v4708 = vunpack.c.l.b16 %v4420
    %v4709 = vunpack.c.l.b16 %v4421
    %v4710 = vunpack.c.l.b16 %v4422
    %v4711 = vunpack.c.l.b16 %v4423
    %v4712 = vunpack.c.l.b16 %v4424
    %v4713 = vunpack.c.l.b16 %v4425
    %v4714 = vunpack.c.l.b16 %v4426
    %v4715 = vunpack.c.l.b16 %v4427
    %v4716 = vunpack.c.l.b16 %v4428
    %v4717 = vunpack.c.l.b16 %v4429
    %v4718 = vunpack.c.l.b16 %v4430
    %v4719 = vunpack.c.l.b16 %v4431
    %v4720 = vunpack.c.l.b16 %v4432
    %v4721 = vunpack.c.l.b16 %v4433
    %v4722 = vunpack.c.l.b16 %v4434
    %v4723 = vunpack.c.l.b16 %v4435
    %v4724 = vunpack.c.l.b16 %v4436
    %v4725 = vunpack.c.l.b16 %v4437
    %v4726 = vunpack.c.l.b16 %v4438
    %v4727 = vunpack.c.l.b16 %v4439
    %v4728 = vunpack.c.l.b16 %v4440
    %v4729 = vunpack.c.l.b16 %v4441
    %v4730 = vunpack.c.l.b16 %v4442
    %v4731 = vunpack.c.l.b16 %v4443
    %v4732 = vunpack.c.l.b16 %v4444
    %v4733 = vunpack.c.l.b16 %v4445
    %v4734 = vunpack.c.l.b16 %v4446
    %v4735 = vunpack.c.l.b16 %v4447
    %v4736 = vunpack.c.l.b16 %v4448
    %v4737 = vpack.c.b16 %v4594, %v4593
    %v4738 = vpack.c.b16 %v4596, %v4595
    %v4739 = vpack.c.b16 %v4598, %v4597
    %v4740 = vpack.c.b16 %v4600, %v4599
    %v4741 = vpack.c.b16 %v4602, %v4601
    %v4742 = vpack.c.b16 %v4604, %v4603
    %v4743 = vpack.c.b16 %v4606, %v4605
    %v4744 = vpack.c.b16 %v4608, %v4607
    %v4745 = vpack.c.b16 %v4610, %v4609
    %v4746 = vpack.c.b16 %v4612, %v4611
    %v4747 = vpack.c.b16 %v4614, %v4613
    %v4748 = vpack.c.b16 %v4616, %v4615
    %v4749 = vpack.c.b16 %v4618, %v4617
    %v4750 = vpack.c.b16 %v4620, %v4619
    %v4751 = vpack.c.b16 %v4622, %v4621
    %v4752 = vpack.c.b16 %v4624, %v4623
    %v4753 = vpack.c.b16 %v4626, %v4625
    %v4754 = vpack.c.b16 %v4628, %v4627
    %v4755 = vpack.c.b16 %v4630, %v4629
    %v4756 = vpack.c.b16 %v4632, %v4631
    %v4757 = vpack.c.b16 %v4634, %v4633
    %v4758 = vpack.c.b16 %v4636, %v4635
    %v4759 = vpack.c.b16 %v4638, %v4637
    %v4760 = vpack.c.b16 %v4640, %v4639
    %v4761 = vpack.c.b16 %v4642, %v4641
    %v4762 = vpack.c.b16 %v4644, %v4643
    %v4763 = vpack.c.b16 %v4646, %v4645
    %v4764 = vpack.c.b16 %v4648, %v4647
    %v4765 = vpack.c.b16 %v4650, %v4649
    %v4766 = vpack.c.b16 %v4652, %v4651
    %v4767 = vpack.c.b16 %v4654, %v4653
    %v4768 = vpack.c.b16 %v4656, %v4655
    %v4769 = vpack.c.b16 %v4658, %v4657
    %v4770 = vpack.c.b16 %v4660, %v4659
    %v4771 = vpack.c.b16 %v4662, %v4661
    %v4772 = vpack.c.b16 %v4664, %v4663
    %v4773 = vpack.c.b16 %v4666, %v4665
    %v4774 = vpack.c.b16 %v4668, %v4667
    %v4775 = vpack.c.b16 %v4670, %v4669
    %v4776 = vpack.c.b16 %v4672, %v4671
    %v4777 = vpack.c.b16 %v4674, %v4673
    %v4778 = vpack.c.b16 %v4676, %v4675
    %v4779 = vpack.c.b16 %v4678, %v4677
    %v4780 = vpack.c.b16 %v4680, %v4679
    %v4781 = vpack.c.b16 %v4682, %v4681
    %v4782 = vpack.c.b16 %v4684, %v4683
    %v4783 = vpack.c.b16 %v4686, %v4685
    %v4784 = vpack.c.b16 %v4688, %v4687
    %v4785 = vpack.c.b16 %v4690, %v4689
    %v4786 = vpack.c.b16 %v4692, %v4691
    %v4787 = vpack.c.b16 %v4694, %v4693
    %v4788 = vpack.c.b16 %v4696, %v4695
    %v4789 = vpack.c.b16 %v4698, %v4697
    %v4790 = vpack.c.b16 %v4700, %v4699
    %v4791 = vpack.c.b16 %v4702, %v4701
    %v4792 = vpack.c.b16 %v4704, %v4703
    %v4793 = vpack.c.b16 %v4706, %v4705
    %v4794 = vpack.c.b16 %v4708, %v4707
    %v4795 = vpack.c.b16 %v4710, %v4709
    %v4796 = vpack.c.b16 %v4712, %v4711
    %v4797 = vpack.c.b16 %v4714, %v4713
    %v4798 = vpack.c.b16 %v4716, %v4715
    %v4799 = vpack.c.b16 %v4718, %v4717
    %v4800 = vpack.c.b16 %v4720, %v4719
    %v4801 = vpack.c.b16 %v4722, %v4721
    %v4802 = vpack.c.b16 %v4724, %v4723
    %v4803 = vpack.c.b16 %v4726, %v4725
    %v4804 = vpack.c.b16 %v4728, %v4727
    %v4805 = vpack.c.b16 %v4730, %v4729
    %v4806 = vpack.c.b16 %v4732, %v4731
    %v4807 = vpack.c.b16 %v4734, %v4733
    %v4808 = vpack.c.b16 %v4736, %v4735
    %4881 = vmatprep.subr.bf16.mxu0 0
    %4882 = vmatpush1.bf16.msra.mxu0 %v4737
    %4883 = vmatprep.subr.bf16.mxu0 0
    %4884 = vmatpush1.bf16.msra.mxu0 %v4738
    %4885 = vmatprep.subr.bf16.mxu0 0
    %4886 = vmatpush1.bf16.msra.mxu0 %v4739
    %4887 = vmatprep.subr.bf16.mxu0 0
    %4888 = vmatpush1.bf16.msra.mxu0 %v4740
    %4889 = vmatprep.subr.bf16.mxu0 0
    %4890 = vmatpush1.bf16.msra.mxu0 %v4741
    %4891 = vmatprep.subr.bf16.mxu0 0
    %4892 = vmatpush1.bf16.msra.mxu0 %v4742
    %4893 = vmatprep.subr.bf16.mxu0 0
    %4894 = vmatpush1.bf16.msra.mxu0 %v4743
    %4895 = vmatprep.subr.bf16.mxu0 0
    %4896 = vmatpush1.bf16.msra.mxu0 %v4744
    %4897 = vmatprep.subr.bf16.mxu0 0
    %4898 = vmatpush1.bf16.msra.mxu0 %v4745
    %4899 = vmatprep.subr.bf16.mxu0 0
    %4900 = vmatpush1.bf16.msra.mxu0 %v4746
    %4901 = vmatprep.subr.bf16.mxu0 0
    %4902 = vmatpush1.bf16.msra.mxu0 %v4747
    %4903 = vmatprep.subr.bf16.mxu0 0
    %4904 = vmatpush1.bf16.msra.mxu0 %v4748
    %4905 = vmatprep.subr.bf16.mxu0 0
    %4906 = vmatpush1.bf16.msra.mxu0 %v4749
    %4907 = vmatprep.subr.bf16.mxu0 0
    %4908 = vmatpush1.bf16.msra.mxu0 %v4750
    %4909 = vmatprep.subr.bf16.mxu0 0
    %4910 = vmatpush1.bf16.msra.mxu0 %v4751
    %4911 = vmatprep.subr.bf16.mxu0 0
    %4912 = vmatpush1.bf16.msra.mxu0 %v4752
    %4913 = vmatprep.mubr.bf16.mxu0 %v3600
    %4914 = vmatmul.mubr.bf16.gmra.mrb[0].mxu0 %v3504
    %v4915 = vpop.f32.mrb[0].mxu0
    %v4916 = vadd.f32 0.0, %v4915
    %v4917 = vpop.f32.mrb[0].mxu0
    %v4918 = vpop.f32.mrb[0].mxu0
    %v4919 = vadd.f32 0.0, %v4918
    %v4920 = vpop.f32.mrb[0].mxu0
    %4921 = vmatprep.mubr.bf16.mxu0 %v3601
    %4922 = vmatmul.mubr.bf16.gmra.mrb[0].mxu0 %v3505
    %v4923 = vpop.f32.mrb[0].mxu0
    %v4924 = vadd.f32 0.0, %v4923
    %v4925 = vpop.f32.mrb[0].mxu0
    %v4926 = vpop.f32.mrb[0].mxu0
    %v4927 = vadd.f32 0.0, %v4926
    %v4928 = vpop.f32.mrb[0].mxu0
    %4929 = vmatprep.mubr.bf16.mxu0 %v3602
    %4930 = vmatmul.mubr.bf16.gmra.mrb[0].mxu0 %v3506
    %v4931 = vpop.f32.mrb[0].mxu0
    %v4932 = vadd.f32 0.0, %v4931
    %v4933 = vpop.f32.mrb[0].mxu0
    %v4934 = vpop.f32.mrb[0].mxu0
    %v4935 = vadd.f32 0.0, %v4934
    %v4936 = vpop.f32.mrb[0].mxu0
    %4937 = vmatprep.mubr.bf16.mxu0 %v3603
    %4938 = vmatmul.mubr.bf16.gmra.mrb[0].mxu0 %v3507
    %v4939 = vpop.f32.mrb[0].mxu0
    %v4940 = vadd.f32 0.0, %v4939
    %v4941 = vpop.f32.mrb[0].mxu0
    %v4942 = vpop.f32.mrb[0].mxu0
    %v4943 = vadd.f32 0.0, %v4942
    %v4944 = vpop.f32.mrb[0].mxu0
    %4945 = vmatprep.mubr.bf16.mxu0 %v3604
    %4946 = vmatmul.mubr.bf16.gmra.mrb[0].mxu0 %v3508
    %v4947 = vpop.f32.mrb[0].mxu0
    %v4948 = vadd.f32 0.0, %v4947
    %v4949 = vpop.f32.mrb[0].mxu0
    %v4950 = vpop.f32.mrb[0].mxu0
    %v4951 = vadd.f32 0.0, %v4950
    %v4952 = vpop.f32.mrb[0].mxu0
    %4953 = vmatprep.mubr.bf16.mxu0 %v3605
    %4954 = vmatmul.mubr.bf16.gmra.mrb[0].mxu0 %v3509
    %v4955 = vpop.f32.mrb[0].mxu0
    %v4956 = vadd.f32 0.0, %v4955
    %v4957 = vpop.f32.mrb[0].mxu0
    %v4958 = vpop.f32.mrb[0].mxu0
    %v4959 = vadd.f32 0.0, %v4958
    %v4960 = vpop.f32.mrb[0].mxu0
    %4961 = vmatprep.mubr.bf16.mxu0 %v3606
    %4962 = vmatmul.mubr.bf16.gmra.mrb[0].mxu0 %v3510
    %v4963 = vpop.f32.mrb[0].mxu0
    %v4964 = vadd.f32 0.0, %v4963
    %v4965 = vpop.f32.mrb[0].mxu0
    %v4966 = vpop.f32.mrb[0].mxu0
    %v4967 = vadd.f32 0.0, %v4966
    %v4968 = vpop.f32.mrb[0].mxu0
    %4969 = vmatprep.mubr.bf16.mxu0 %v3607
    %4970 = vmatmul.mubr.bf16.gmra.mrb[0].mxu0 %v3511
    %v4971 = vpop.f32.mrb[0].mxu0
    %v4972 = vadd.f32 0.0, %v4971
    %v4973 = vpop.f32.mrb[0].mxu0
    %v4974 = vpop.f32.mrb[0].mxu0
    %v4975 = vadd.f32 0.0, %v4974
    %v4976 = vpop.f32.mrb[0].mxu0
    %4977 = vmatprep.mubr.bf16.mxu0 %v3608
    %4978 = vmatmul.mubr.bf16.gmra.mrb[0].mxu0 %v3512
    %v4979 = vpop.f32.mrb[0].mxu0
    %v4980 = vadd.f32 0.0, %v4979
    %v4981 = vpop.f32.mrb[0].mxu0
    %v4982 = vpop.f32.mrb[0].mxu0
    %v4983 = vadd.f32 0.0, %v4982
    %v4984 = vpop.f32.mrb[0].mxu0
    %4985 = vmatprep.mubr.bf16.mxu0 %v3609
    %4986 = vmatmul.mubr.bf16.gmra.mrb[0].mxu0 %v3513
    %v4987 = vpop.f32.mrb[0].mxu0
    %v4988 = vadd.f32 0.0, %v4987
    %v4989 = vpop.f32.mrb[0].mxu0
    %v4990 = vpop.f32.mrb[0].mxu0
    %v4991 = vadd.f32 0.0, %v4990
    %v4992 = vpop.f32.mrb[0].mxu0
    %4993 = vmatprep.mubr.bf16.mxu0 %v3610
    %4994 = vmatmul.mubr.bf16.gmra.mrb[0].mxu0 %v3514
    %v4995 = vpop.f32.mrb[0].mxu0
    %v4996 = vadd.f32 0.0, %v4995
    %v4997 = vpop.f32.mrb[0].mxu0
    %v4998 = vpop.f32.mrb[0].mxu0
    %v4999 = vadd.f32 0.0, %v4998
    %v5000 = vpop.f32.mrb[0].mxu0
    %5001 = vmatprep.mubr.bf16.mxu0 %v3611
    %5002 = vmatmul.mubr.bf16.gmra.mrb[0].mxu0 %v3515
    %v5003 = vpop.f32.mrb[0].mxu0
    %v5004 = vadd.f32 0.0, %v5003
    %v5005 = vpop.f32.mrb[0].mxu0
    %v5006 = vpop.f32.mrb[0].mxu0
    %v5007 = vadd.f32 0.0, %v5006
    %v5008 = vpop.f32.mrb[0].mxu0
    %5009 = vmatprep.mubr.bf16.mxu0 %v3612
    %5010 = vmatmul.mubr.bf16.gmra.mrb[0].mxu0 %v3516
    %v5011 = vpop.f32.mrb[0].mxu0
    %v5012 = vadd.f32 0.0, %v5011
    %v5013 = vpop.f32.mrb[0].mxu0
    %v5014 = vpop.f32.mrb[0].mxu0
    %v5015 = vadd.f32 0.0, %v5014
    %v5016 = vpop.f32.mrb[0].mxu0
    %5017 = vmatprep.mubr.bf16.mxu0 %v3613
    %5018 = vmatmul.mubr.bf16.gmra.mrb[0].mxu0 %v3517
    %v5019 = vpop.f32.mrb[0].mxu0
    %v5020 = vadd.f32 0.0, %v5019
    %v5021 = vpop.f32.mrb[0].mxu0
    %v5022 = vpop.f32.mrb[0].mxu0
    %v5023 = vadd.f32 0.0, %v5022
    %v5024 = vpop.f32.mrb[0].mxu0
    %5025 = vmatprep.mubr.bf16.mxu0 %v3614
    %5026 = vmatmul.mubr.bf16.gmra.mrb[0].mxu0 %v3518
    %v5027 = vpop.f32.mrb[0].mxu0
    %v5028 = vadd.f32 0.0, %v5027
    %v5029 = vpop.f32.mrb[0].mxu0
    %v5030 = vpop.f32.mrb[0].mxu0
    %v5031 = vadd.f32 0.0, %v5030
    %v5032 = vpop.f32.mrb[0].mxu0
    %5033 = vmatprep.mubr.bf16.mxu0 %v3615
    %5034 = vmatmul.mubr.bf16.gmra.mrb[0].mxu0 %v3519
    %v5035 = vpop.f32.mrb[0].mxu0
    %v5036 = vadd.f32 0.0, %v5035
    %v5037 = vpop.f32.mrb[0].mxu0
    %v5038 = vpop.f32.mrb[0].mxu0
    %v5039 = vadd.f32 0.0, %v5038
    %v5040 = vpop.f32.mrb[0].mxu0
    %5041 = vmatprep.mubr.bf16.mxu0 %v3616
    %5042 = vmatmul.mubr.bf16.gmra.mrb[0].mxu0 %v3520
    %v5043 = vpop.f32.mrb[0].mxu0
    %v5044 = vadd.f32 0.0, %v5043
    %v5045 = vpop.f32.mrb[0].mxu0
    %v5046 = vpop.f32.mrb[0].mxu0
    %v5047 = vadd.f32 0.0, %v5046
    %v5048 = vpop.f32.mrb[0].mxu0
    %5049 = vmatprep.mubr.bf16.mxu0 %v3617
    %5050 = vmatmul.mubr.bf16.gmra.mrb[0].mxu0 %v3521
    %v5051 = vpop.f32.mrb[0].mxu0
    %v5052 = vadd.f32 0.0, %v5051
    %v5053 = vpop.f32.mrb[0].mxu0
    %v5054 = vpop.f32.mrb[0].mxu0
    %v5055 = vadd.f32 0.0, %v5054
    %v5056 = vpop.f32.mrb[0].mxu0
    %5057 = vmatprep.mubr.bf16.mxu0 %v3618
    %5058 = vmatmul.mubr.bf16.gmra.mrb[0].mxu0 %v3522
    %v5059 = vpop.f32.mrb[0].mxu0
    %v5060 = vadd.f32 0.0, %v5059
    %v5061 = vpop.f32.mrb[0].mxu0
    %v5062 = vpop.f32.mrb[0].mxu0
    %v5063 = vadd.f32 0.0, %v5062
    %v5064 = vpop.f32.mrb[0].mxu0
    %5065 = vmatprep.mubr.bf16.mxu0 %v3619
    %5066 = vmatmul.mubr.bf16.gmra.mrb[0].mxu0 %v3523
    %v5067 = vpop.f32.mrb[0].mxu0
    %v5068 = vadd.f32 0.0, %v5067
    %v5069 = vpop.f32.mrb[0].mxu0
    %v5070 = vpop.f32.mrb[0].mxu0
    %v5071 = vadd.f32 0.0, %v5070
    %v5072 = vpop.f32.mrb[0].mxu0
    %5073 = vmatprep.mubr.bf16.mxu0 %v3620
    %5074 = vmatmul.mubr.bf16.gmra.mrb[0].mxu0 %v3524
    %v5075 = vpop.f32.mrb[0].mxu0
    %v5076 = vadd.f32 0.0, %v5075
    %v5077 = vpop.f32.mrb[0].mxu0
    %v5078 = vpop.f32.mrb[0].mxu0
    %v5079 = vadd.f32 0.0, %v5078
    %v5080 = vpop.f32.mrb[0].mxu0
    %5081 = vmatprep.mubr.bf16.mxu0 %v3621
    %5082 = vmatmul.mubr.bf16.gmra.mrb[0].mxu0 %v3525
    %v5083 = vpop.f32.mrb[0].mxu0
    %v5084 = vadd.f32 0.0, %v5083
    %v5085 = vpop.f32.mrb[0].mxu0
    %v5086 = vpop.f32.mrb[0].mxu0
    %v5087 = vadd.f32 0.0, %v5086
    %v5088 = vpop.f32.mrb[0].mxu0
    %5089 = vmatprep.mubr.bf16.mxu0 %v3622
    %5090 = vmatmul.mubr.bf16.gmra.mrb[0].mxu0 %v3526
    %v5091 = vpop.f32.mrb[0].mxu0
    %v5092 = vadd.f32 0.0, %v5091
    %v5093 = vpop.f32.mrb[0].mxu0
    %v5094 = vpop.f32.mrb[0].mxu0
    %v5095 = vadd.f32 0.0, %v5094
    %v5096 = vpop.f32.mrb[0].mxu0
    %5097 = vmatprep.mubr.bf16.mxu0 %v3623
    %5098 = vmatmul.mubr.bf16.gmra.mrb[0].mxu0 %v3527
    %v5099 = vpop.f32.mrb[0].mxu0
    %v5100 = vadd.f32 0.0, %v5099
    %v5101 = vpop.f32.mrb[0].mxu0
    %v5102 = vpop.f32.mrb[0].mxu0
    %v5103 = vadd.f32 0.0, %v5102
    %v5104 = vpop.f32.mrb[0].mxu0
    %5105 = vmatprep.mubr.bf16.mxu0 %v3624
    %5106 = vmatmul.mubr.bf16.gmra.mrb[0].mxu0 %v3528
    %v5107 = vpop.f32.mrb[0].mxu0
    %v5108 = vadd.f32 0.0, %v5107
    %v5109 = vpop.f32.mrb[0].mxu0
    %v5110 = vpop.f32.mrb[0].mxu0
    %v5111 = vadd.f32 0.0, %v5110
    %v5112 = vpop.f32.mrb[0].mxu0
    %5113 = vmatprep.mubr.bf16.mxu0 %v3625
    %5114 = vmatmul.mubr.bf16.gmra.mrb[0].mxu0 %v3529
    %v5115 = vpop.f32.mrb[0].mxu0
    %v5116 = vadd.f32 0.0, %v5115
    %v5117 = vpop.f32.mrb[0].mxu0
    %v5118 = vpop.f32.mrb[0].mxu0
    %v5119 = vadd.f32 0.0, %v5118
    %v5120 = vpop.f32.mrb[0].mxu0
    %5121 = vmatprep.mubr.bf16.mxu0 %v3626
    %5122 = vmatmul.mubr.bf16.gmra.mrb[0].mxu0 %v3530
    %v5123 = vpop.f32.mrb[0].mxu0
    %v5124 = vadd.f32 0.0, %v5123
    %v5125 = vpop.f32.mrb[0].mxu0
    %v5126 = vpop.f32.mrb[0].mxu0
    %v5127 = vadd.f32 0.0, %v5126
    %v5128 = vpop.f32.mrb[0].mxu0
    %5129 = vmatprep.mubr.bf16.mxu0 %v3627
    %5130 = vmatmul.mubr.bf16.gmra.mrb[0].mxu0 %v3531
    %v5131 = vpop.f32.mrb[0].mxu0
    %v5132 = vadd.f32 0.0, %v5131
    %v5133 = vpop.f32.mrb[0].mxu0
    %v5134 = vpop.f32.mrb[0].mxu0
    %v5135 = vadd.f32 0.0, %v5134
    %v5136 = vpop.f32.mrb[0].mxu0
    %5137 = vmatprep.mubr.bf16.mxu0 %v3628
    %5138 = vmatmul.mubr.bf16.gmra.mrb[0].mxu0 %v3532
    %v5139 = vpop.f32.mrb[0].mxu0
    %v5140 = vadd.f32 0.0, %v5139
    %v5141 = vpop.f32.mrb[0].mxu0
    %v5142 = vpop.f32.mrb[0].mxu0
    %v5143 = vadd.f32 0.0, %v5142
    %v5144 = vpop.f32.mrb[0].mxu0
    %5145 = vmatprep.mubr.bf16.mxu0 %v3629
    %5146 = vmatmul.mubr.bf16.gmra.mrb[0].mxu0 %v3533
    %v5147 = vpop.f32.mrb[0].mxu0
    %v5148 = vadd.f32 0.0, %v5147
    %v5149 = vpop.f32.mrb[0].mxu0
    %v5150 = vpop.f32.mrb[0].mxu0
    %v5151 = vadd.f32 0.0, %v5150
    %v5152 = vpop.f32.mrb[0].mxu0
    %5153 = vmatprep.mubr.bf16.mxu0 %v3630
    %5154 = vmatmul.mubr.bf16.gmra.mrb[0].mxu0 %v3534
    %v5155 = vpop.f32.mrb[0].mxu0
    %v5156 = vadd.f32 0.0, %v5155
    %v5157 = vpop.f32.mrb[0].mxu0
    %v5158 = vpop.f32.mrb[0].mxu0
    %v5159 = vadd.f32 0.0, %v5158
    %v5160 = vpop.f32.mrb[0].mxu0
    %5161 = vmatprep.mubr.bf16.mxu0 %v3631
    %5162 = vmatmul.mubr.bf16.gmra.mrb[0].mxu0 %v3535
    %v5163 = vpop.f32.mrb[0].mxu0
    %v5164 = vadd.f32 0.0, %v5163
    %v5165 = vpop.f32.mrb[0].mxu0
    %v5166 = vpop.f32.mrb[0].mxu0
    %v5167 = vadd.f32 0.0, %v5166
    %v5168 = vpop.f32.mrb[0].mxu0
    %5169 = vdwg.mxu0
    %5170 = vmatprep.subr.bf16.mxu0 0
    %5171 = vmatpush1.bf16.msra.mxu0 %v4753
    %5172 = vmatprep.subr.bf16.mxu0 0
    %5173 = vmatpush1.bf16.msra.mxu0 %v4754
    %5174 = vmatprep.subr.bf16.mxu0 0
    %5175 = vmatpush1.bf16.msra.mxu0 %v4755
    %5176 = vmatprep.subr.bf16.mxu0 0
    %5177 = vmatpush1.bf16.msra.mxu0 %v4756
    %5178 = vmatprep.subr.bf16.mxu0 0
    %5179 = vmatpush1.bf16.msra.mxu0 %v4757
    %5180 = vmatprep.subr.bf16.mxu0 0
    %5181 = vmatpush1.bf16.msra.mxu0 %v4758
    %5182 = vmatprep.subr.bf16.mxu0 0
    %5183 = vmatpush1.bf16.msra.mxu0 %v4759
    %5184 = vmatprep.subr.bf16.mxu0 0
    %5185 = vmatpush1.bf16.msra.mxu0 %v4760
    %5186 = vmatprep.subr.bf16.mxu0 0
    %5187 = vmatpush1.bf16.msra.mxu0 %v4761
    %5188 = vmatprep.subr.bf16.mxu0 0
    %5189 = vmatpush1.bf16.msra.mxu0 %v4762
    %5190 = vmatprep.subr.bf16.mxu0 0
    %5191 = vmatpush1.bf16.msra.mxu0 %v4763
    %5192 = vmatprep.subr.bf16.mxu0 0
    %5193 = vmatpush1.bf16.msra.mxu0 %v4764
    %5194 = vmatprep.subr.bf16.mxu0 0
    %5195 = vmatpush1.bf16.msra.mxu0 %v4765
    %5196 = vmatprep.subr.bf16.mxu0 0
    %5197 = vmatpush1.bf16.msra.mxu0 %v4766
    %5198 = vmatprep.subr.bf16.mxu0 0
    %5199 = vmatpush1.bf16.msra.mxu0 %v4767
    %5200 = vmatprep.subr.bf16.mxu0 0
    %5201 = vmatpush1.bf16.msra.mxu0 %v4768
    %5202 = vmatprep.mubr.bf16.mxu0 %v3792
    %5203 = vmatmul.mubr.bf16.gmra.mrb[0].mxu0 %v3696
    %v5204 = vpop.f32.mrb[0].mxu0
    %v5205 = vadd.f32 %v4916, %v5204
    %v5206 = vpop.f32.mrb[0].mxu0
    %v5207 = vpop.f32.mrb[0].mxu0
    %v5208 = vadd.f32 %v4919, %v5207
    %v5209 = vpop.f32.mrb[0].mxu0
    %5210 = vmatprep.mubr.bf16.mxu0 %v3793
    %5211 = vmatmul.mubr.bf16.gmra.mrb[0].mxu0 %v3697
    %v5212 = vpop.f32.mrb[0].mxu0
    %v5213 = vadd.f32 %v4924, %v5212
    %v5214 = vpop.f32.mrb[0].mxu0
    %v5215 = vpop.f32.mrb[0].mxu0
    %v5216 = vadd.f32 %v4927, %v5215
    %v5217 = vpop.f32.mrb[0].mxu0
    %5218 = vmatprep.mubr.bf16.mxu0 %v3794
    %5219 = vmatmul.mubr.bf16.gmra.mrb[0].mxu0 %v3698
    %v5220 = vpop.f32.mrb[0].mxu0
    %v5221 = vadd.f32 %v4932, %v5220
    %v5222 = vpop.f32.mrb[0].mxu0
    %v5223 = vpop.f32.mrb[0].mxu0
    %v5224 = vadd.f32 %v4935, %v5223
    %v5225 = vpop.f32.mrb[0].mxu0
    %5226 = vmatprep.mubr.bf16.mxu0 %v3795
    %5227 = vmatmul.mubr.bf16.gmra.mrb[0].mxu0 %v3699
    %v5228 = vpop.f32.mrb[0].mxu0
    %v5229 = vadd.f32 %v4940, %v5228
    %v5230 = vpop.f32.mrb[0].mxu0
    %v5231 = vpop.f32.mrb[0].mxu0
    %v5232 = vadd.f32 %v4943, %v5231
    %v5233 = vpop.f32.mrb[0].mxu0
    %5234 = vmatprep.mubr.bf16.mxu0 %v3796
    %5235 = vmatmul.mubr.bf16.gmra.mrb[0].mxu0 %v3700
    %v5236 = vpop.f32.mrb[0].mxu0
    %v5237 = vadd.f32 %v4948, %v5236
    %v5238 = vpop.f32.mrb[0].mxu0
    %v5239 = vpop.f32.mrb[0].mxu0
    %v5240 = vadd.f32 %v4951, %v5239
    %v5241 = vpop.f32.mrb[0].mxu0
    %5242 = vmatprep.mubr.bf16.mxu0 %v3797
    %5243 = vmatmul.mubr.bf16.gmra.mrb[0].mxu0 %v3701
    %v5244 = vpop.f32.mrb[0].mxu0
    %v5245 = vadd.f32 %v4956, %v5244
    %v5246 = vpop.f32.mrb[0].mxu0
    %v5247 = vpop.f32.mrb[0].mxu0
    %v5248 = vadd.f32 %v4959, %v5247
    %v5249 = vpop.f32.mrb[0].mxu0
    %5250 = vmatprep.mubr.bf16.mxu0 %v3798
    %5251 = vmatmul.mubr.bf16.gmra.mrb[0].mxu0 %v3702
    %v5252 = vpop.f32.mrb[0].mxu0
    %v5253 = vadd.f32 %v4964, %v5252
    %v5254 = vpop.f32.mrb[0].mxu0
    %v5255 = vpop.f32.mrb[0].mxu0
    %v5256 = vadd.f32 %v4967, %v5255
    %v5257 = vpop.f32.mrb[0].mxu0
    %5258 = vmatprep.mubr.bf16.mxu0 %v3799
    %5259 = vmatmul.mubr.bf16.gmra.mrb[0].mxu0 %v3703
    %v5260 = vpop.f32.mrb[0].mxu0
    %v5261 = vadd.f32 %v4972, %v5260
    %v5262 = vpop.f32.mrb[0].mxu0
    %v5263 = vpop.f32.mrb[0].mxu0
    %v5264 = vadd.f32 %v4975, %v5263
    %v5265 = vpop.f32.mrb[0].mxu0
    %5266 = vmatprep.mubr.bf16.mxu0 %v3800
    %5267 = vmatmul.mubr.bf16.gmra.mrb[0].mxu0 %v3704
    %v5268 = vpop.f32.mrb[0].mxu0
    %v5269 = vadd.f32 %v4980, %v5268
    %v5270 = vpop.f32.mrb[0].mxu0
    %v5271 = vpop.f32.mrb[0].mxu0
    %v5272 = vadd.f32 %v4983, %v5271
    %v5273 = vpop.f32.mrb[0].mxu0
    %5274 = vmatprep.mubr.bf16.mxu0 %v3801
    %5275 = vmatmul.mubr.bf16.gmra.mrb[0].mxu0 %v3705
    %v5276 = vpop.f32.mrb[0].mxu0
    %v5277 = vadd.f32 %v4988, %v5276
    %v5278 = vpop.f32.mrb[0].mxu0
    %v5279 = vpop.f32.mrb[0].mxu0
    %v5280 = vadd.f32 %v4991, %v5279
    %v5281 = vpop.f32.mrb[0].mxu0
    %5282 = vmatprep.mubr.bf16.mxu0 %v3802
    %5283 = vmatmul.mubr.bf16.gmra.mrb[0].mxu0 %v3706
    %v5284 = vpop.f32.mrb[0].mxu0
    %v5285 = vadd.f32 %v4996, %v5284
    %v5286 = vpop.f32.mrb[0].mxu0
    %v5287 = vpop.f32.mrb[0].mxu0
    %v5288 = vadd.f32 %v4999, %v5287
    %v5289 = vpop.f32.mrb[0].mxu0
    %5290 = vmatprep.mubr.bf16.mxu0 %v3803
    %5291 = vmatmul.mubr.bf16.gmra.mrb[0].mxu0 %v3707
    %v5292 = vpop.f32.mrb[0].mxu0
    %v5293 = vadd.f32 %v5004, %v5292
    %v5294 = vpop.f32.mrb[0].mxu0
    %v5295 = vpop.f32.mrb[0].mxu0
    %v5296 = vadd.f32 %v5007, %v5295
    %v5297 = vpop.f32.mrb[0].mxu0
    %5298 = vmatprep.mubr.bf16.mxu0 %v3804
    %5299 = vmatmul.mubr.bf16.gmra.mrb[0].mxu0 %v3708
    %v5300 = vpop.f32.mrb[0].mxu0
    %v5301 = vadd.f32 %v5012, %v5300
    %v5302 = vpop.f32.mrb[0].mxu0
    %v5303 = vpop.f32.mrb[0].mxu0
    %v5304 = vadd.f32 %v5015, %v5303
    %v5305 = vpop.f32.mrb[0].mxu0
    %5306 = vmatprep.mubr.bf16.mxu0 %v3805
    %5307 = vmatmul.mubr.bf16.gmra.mrb[0].mxu0 %v3709
    %v5308 = vpop.f32.mrb[0].mxu0
    %v5309 = vadd.f32 %v5020, %v5308
    %v5310 = vpop.f32.mrb[0].mxu0
    %v5311 = vpop.f32.mrb[0].mxu0
    %v5312 = vadd.f32 %v5023, %v5311
    %v5313 = vpop.f32.mrb[0].mxu0
    %5314 = vmatprep.mubr.bf16.mxu0 %v3806
    %5315 = vmatmul.mubr.bf16.gmra.mrb[0].mxu0 %v3710
    %v5316 = vpop.f32.mrb[0].mxu0
    %v5317 = vadd.f32 %v5028, %v5316
    %v5318 = vpop.f32.mrb[0].mxu0
    %v5319 = vpop.f32.mrb[0].mxu0
    %v5320 = vadd.f32 %v5031, %v5319
    %v5321 = vpop.f32.mrb[0].mxu0
    %5322 = vmatprep.mubr.bf16.mxu0 %v3807
    %5323 = vmatmul.mubr.bf16.gmra.mrb[0].mxu0 %v3711
    %v5324 = vpop.f32.mrb[0].mxu0
    %v5325 = vadd.f32 %v5036, %v5324
    %v5326 = vpop.f32.mrb[0].mxu0
    %v5327 = vpop.f32.mrb[0].mxu0
    %v5328 = vadd.f32 %v5039, %v5327
    %v5329 = vpop.f32.mrb[0].mxu0
    %5330 = vmatprep.mubr.bf16.mxu0 %v3808
    %5331 = vmatmul.mubr.bf16.gmra.mrb[0].mxu0 %v3712
    %v5332 = vpop.f32.mrb[0].mxu0
    %v5333 = vadd.f32 %v5044, %v5332
    %v5334 = vpop.f32.mrb[0].mxu0
    %v5335 = vpop.f32.mrb[0].mxu0
    %v5336 = vadd.f32 %v5047, %v5335
    %v5337 = vpop.f32.mrb[0].mxu0
    %5338 = vmatprep.mubr.bf16.mxu0 %v3809
    %5339 = vmatmul.mubr.bf16.gmra.mrb[0].mxu0 %v3713
    %v5340 = vpop.f32.mrb[0].mxu0
    %v5341 = vadd.f32 %v5052, %v5340
    %v5342 = vpop.f32.mrb[0].mxu0
    %v5343 = vpop.f32.mrb[0].mxu0
    %v5344 = vadd.f32 %v5055, %v5343
    %v5345 = vpop.f32.mrb[0].mxu0
    %5346 = vmatprep.mubr.bf16.mxu0 %v3810
    %5347 = vmatmul.mubr.bf16.gmra.mrb[0].mxu0 %v3714
    %v5348 = vpop.f32.mrb[0].mxu0
    %v5349 = vadd.f32 %v5060, %v5348
    %v5350 = vpop.f32.mrb[0].mxu0
    %v5351 = vpop.f32.mrb[0].mxu0
    %v5352 = vadd.f32 %v5063, %v5351
    %v5353 = vpop.f32.mrb[0].mxu0
    %5354 = vmatprep.mubr.bf16.mxu0 %v3811
    %5355 = vmatmul.mubr.bf16.gmra.mrb[0].mxu0 %v3715
    %v5356 = vpop.f32.mrb[0].mxu0
    %v5357 = vadd.f32 %v5068, %v5356
    %v5358 = vpop.f32.mrb[0].mxu0
    %v5359 = vpop.f32.mrb[0].mxu0
    %v5360 = vadd.f32 %v5071, %v5359
    %v5361 = vpop.f32.mrb[0].mxu0
    %5362 = vmatprep.mubr.bf16.mxu0 %v3812
    %5363 = vmatmul.mubr.bf16.gmra.mrb[0].mxu0 %v3716
    %v5364 = vpop.f32.mrb[0].mxu0
    %v5365 = vadd.f32 %v5076, %v5364
    %v5366 = vpop.f32.mrb[0].mxu0
    %v5367 = vpop.f32.mrb[0].mxu0
    %v5368 = vadd.f32 %v5079, %v5367
    %v5369 = vpop.f32.mrb[0].mxu0
    %5370 = vmatprep.mubr.bf16.mxu0 %v3813
    %5371 = vmatmul.mubr.bf16.gmra.mrb[0].mxu0 %v3717
    %v5372 = vpop.f32.mrb[0].mxu0
    %v5373 = vadd.f32 %v5084, %v5372
    %v5374 = vpop.f32.mrb[0].mxu0
    %v5375 = vpop.f32.mrb[0].mxu0
    %v5376 = vadd.f32 %v5087, %v5375
    %v5377 = vpop.f32.mrb[0].mxu0
    %5378 = vmatprep.mubr.bf16.mxu0 %v3814
    %5379 = vmatmul.mubr.bf16.gmra.mrb[0].mxu0 %v3718
    %v5380 = vpop.f32.mrb[0].mxu0
    %v5381 = vadd.f32 %v5092, %v5380
    %v5382 = vpop.f32.mrb[0].mxu0
    %v5383 = vpop.f32.mrb[0].mxu0
    %v5384 = vadd.f32 %v5095, %v5383
    %v5385 = vpop.f32.mrb[0].mxu0
    %5386 = vmatprep.mubr.bf16.mxu0 %v3815
    %5387 = vmatmul.mubr.bf16.gmra.mrb[0].mxu0 %v3719
    %v5388 = vpop.f32.mrb[0].mxu0
    %v5389 = vadd.f32 %v5100, %v5388
    %v5390 = vpop.f32.mrb[0].mxu0
    %v5391 = vpop.f32.mrb[0].mxu0
    %v5392 = vadd.f32 %v5103, %v5391
    %v5393 = vpop.f32.mrb[0].mxu0
    %5394 = vmatprep.mubr.bf16.mxu0 %v3816
    %5395 = vmatmul.mubr.bf16.gmra.mrb[0].mxu0 %v3720
    %v5396 = vpop.f32.mrb[0].mxu0
    %v5397 = vadd.f32 %v5108, %v5396
    %v5398 = vpop.f32.mrb[0].mxu0
    %v5399 = vpop.f32.mrb[0].mxu0
    %v5400 = vadd.f32 %v5111, %v5399
    %v5401 = vpop.f32.mrb[0].mxu0
    %5402 = vmatprep.mubr.bf16.mxu0 %v3817
    %5403 = vmatmul.mubr.bf16.gmra.mrb[0].mxu0 %v3721
    %v5404 = vpop.f32.mrb[0].mxu0
    %v5405 = vadd.f32 %v5116, %v5404
    %v5406 = vpop.f32.mrb[0].mxu0
    %v5407 = vpop.f32.mrb[0].mxu0
    %v5408 = vadd.f32 %v5119, %v5407
    %v5409 = vpop.f32.mrb[0].mxu0
    %5410 = vmatprep.mubr.bf16.mxu0 %v3818
    %5411 = vmatmul.mubr.bf16.gmra.mrb[0].mxu0 %v3722
    %v5412 = vpop.f32.mrb[0].mxu0
    %v5413 = vadd.f32 %v5124, %v5412
    %v5414 = vpop.f32.mrb[0].mxu0
    %v5415 = vpop.f32.mrb[0].mxu0
    %v5416 = vadd.f32 %v5127, %v5415
    %v5417 = vpop.f32.mrb[0].mxu0
    %5418 = vmatprep.mubr.bf16.mxu0 %v3819
    %5419 = vmatmul.mubr.bf16.gmra.mrb[0].mxu0 %v3723
    %v5420 = vpop.f32.mrb[0].mxu0
    %v5421 = vadd.f32 %v5132, %v5420
    %v5422 = vpop.f32.mrb[0].mxu0
    %v5423 = vpop.f32.mrb[0].mxu0
    %v5424 = vadd.f32 %v5135, %v5423
    %v5425 = vpop.f32.mrb[0].mxu0
    %5426 = vmatprep.mubr.bf16.mxu0 %v3820
    %5427 = vmatmul.mubr.bf16.gmra.mrb[0].mxu0 %v3724
    %v5428 = vpop.f32.mrb[0].mxu0
    %v5429 = vadd.f32 %v5140, %v5428
    %v5430 = vpop.f32.mrb[0].mxu0
    %v5431 = vpop.f32.mrb[0].mxu0
    %v5432 = vadd.f32 %v5143, %v5431
    %v5433 = vpop.f32.mrb[0].mxu0
    %5434 = vmatprep.mubr.bf16.mxu0 %v3821
    %5435 = vmatmul.mubr.bf16.gmra.mrb[0].mxu0 %v3725
    %v5436 = vpop.f32.mrb[0].mxu0
    %v5437 = vadd.f32 %v5148, %v5436
    %v5438 = vpop.f32.mrb[0].mxu0
    %v5439 = vpop.f32.mrb[0].mxu0
    %v5440 = vadd.f32 %v5151, %v5439
    %v5441 = vpop.f32.mrb[0].mxu0
    %5442 = vmatprep.mubr.bf16.mxu0 %v3822
    %5443 = vmatmul.mubr.bf16.gmra.mrb[0].mxu0 %v3726
    %v5444 = vpop.f32.mrb[0].mxu0
    %v5445 = vadd.f32 %v5156, %v5444
    %v5446 = vpop.f32.mrb[0].mxu0
    %v5447 = vpop.f32.mrb[0].mxu0
    %v5448 = vadd.f32 %v5159, %v5447
    %v5449 = vpop.f32.mrb[0].mxu0
    %5450 = vmatprep.mubr.bf16.mxu0 %v3823
    %5451 = vmatmul.mubr.bf16.gmra.mrb[0].mxu0 %v3727
    %v5452 = vpop.f32.mrb[0].mxu0
    %v5453 = vadd.f32 %v5164, %v5452
    %v5454 = vpop.f32.mrb[0].mxu0
    %v5455 = vpop.f32.mrb[0].mxu0
    %v5456 = vadd.f32 %v5167, %v5455
    %v5457 = vpop.f32.mrb[0].mxu0
    %5458 = vdwg.mxu0
    %5459 = vmatprep.subr.bf16.mxu0 0
    %5460 = vmatpush1.bf16.msra.mxu0 %v4769
    %5461 = vmatprep.subr.bf16.mxu0 0
    %5462 = vmatpush1.bf16.msra.mxu0 %v4770
    %5463 = vmatprep.subr.bf16.mxu0 0
    %5464 = vmatpush1.bf16.msra.mxu0 %v4771
    %5465 = vmatprep.subr.bf16.mxu0 0
    %5466 = vmatpush1.bf16.msra.mxu0 %v4772
    %5467 = vmatprep.subr.bf16.mxu0 0
    %5468 = vmatpush1.bf16.msra.mxu0 %v4773
    %5469 = vmatprep.subr.bf16.mxu0 0
    %5470 = vmatpush1.bf16.msra.mxu0 %v4774
    %5471 = vmatprep.subr.bf16.mxu0 0
    %5472 = vmatpush1.bf16.msra.mxu0 %v4775
    %5473 = vmatprep.subr.bf16.mxu0 0
    %5474 = vmatpush1.bf16.msra.mxu0 %v4776
    %5475 = vmatprep.subr.bf16.mxu0 0
    %5476 = vmatpush1.bf16.msra.mxu0 %v4777
    %5477 = vmatprep.subr.bf16.mxu0 0
    %5478 = vmatpush1.bf16.msra.mxu0 %v4778
    %5479 = vmatprep.subr.bf16.mxu0 0
    %5480 = vmatpush1.bf16.msra.mxu0 %v4779
    %5481 = vmatprep.subr.bf16.mxu0 0
    %5482 = vmatpush1.bf16.msra.mxu0 %v4780
    %5483 = vmatprep.subr.bf16.mxu0 0
    %5484 = vmatpush1.bf16.msra.mxu0 %v4781
    %5485 = vmatprep.subr.bf16.mxu0 0
    %5486 = vmatpush1.bf16.msra.mxu0 %v4782
    %5487 = vmatprep.subr.bf16.mxu0 0
    %5488 = vmatpush1.bf16.msra.mxu0 %v4783
    %5489 = vmatprep.subr.bf16.mxu0 0
    %5490 = vmatpush1.bf16.msra.mxu0 %v4784
    %5491 = vmatprep.mubr.bf16.mxu0 %v3984
    %5492 = vmatmul.mubr.bf16.gmra.mrb[0].mxu0 %v3888
    %v5493 = vpop.f32.mrb[0].mxu0
    %v5494 = vadd.f32 %v5205, %v5493
    %v5495 = vpop.f32.mrb[0].mxu0
    %v5496 = vpop.f32.mrb[0].mxu0
    %v5497 = vadd.f32 %v5208, %v5496
    %v5498 = vpop.f32.mrb[0].mxu0
    %5499 = vmatprep.mubr.bf16.mxu0 %v3985
    %5500 = vmatmul.mubr.bf16.gmra.mrb[0].mxu0 %v3889
    %v5501 = vpop.f32.mrb[0].mxu0
    %v5502 = vadd.f32 %v5213, %v5501
    %v5503 = vpop.f32.mrb[0].mxu0
    %v5504 = vpop.f32.mrb[0].mxu0
    %v5505 = vadd.f32 %v5216, %v5504
    %v5506 = vpop.f32.mrb[0].mxu0
    %5507 = vmatprep.mubr.bf16.mxu0 %v3986
    %5508 = vmatmul.mubr.bf16.gmra.mrb[0].mxu0 %v3890
    %v5509 = vpop.f32.mrb[0].mxu0
    %v5510 = vadd.f32 %v5221, %v5509
    %v5511 = vpop.f32.mrb[0].mxu0
    %v5512 = vpop.f32.mrb[0].mxu0
    %v5513 = vadd.f32 %v5224, %v5512
    %v5514 = vpop.f32.mrb[0].mxu0
    %5515 = vmatprep.mubr.bf16.mxu0 %v3987
    %5516 = vmatmul.mubr.bf16.gmra.mrb[0].mxu0 %v3891
    %v5517 = vpop.f32.mrb[0].mxu0
    %v5518 = vadd.f32 %v5229, %v5517
    %v5519 = vpop.f32.mrb[0].mxu0
    %v5520 = vpop.f32.mrb[0].mxu0
    %v5521 = vadd.f32 %v5232, %v5520
    %v5522 = vpop.f32.mrb[0].mxu0
    %5523 = vmatprep.mubr.bf16.mxu0 %v3988
    %5524 = vmatmul.mubr.bf16.gmra.mrb[0].mxu0 %v3892
    %v5525 = vpop.f32.mrb[0].mxu0
    %v5526 = vadd.f32 %v5237, %v5525
    %v5527 = vpop.f32.mrb[0].mxu0
    %v5528 = vpop.f32.mrb[0].mxu0
    %v5529 = vadd.f32 %v5240, %v5528
    %v5530 = vpop.f32.mrb[0].mxu0
    %5531 = vmatprep.mubr.bf16.mxu0 %v3989
    %5532 = vmatmul.mubr.bf16.gmra.mrb[0].mxu0 %v3893
    %v5533 = vpop.f32.mrb[0].mxu0
    %v5534 = vadd.f32 %v5245, %v5533
    %v5535 = vpop.f32.mrb[0].mxu0
    %v5536 = vpop.f32.mrb[0].mxu0
    %v5537 = vadd.f32 %v5248, %v5536
    %v5538 = vpop.f32.mrb[0].mxu0
    %5539 = vmatprep.mubr.bf16.mxu0 %v3990
    %5540 = vmatmul.mubr.bf16.gmra.mrb[0].mxu0 %v3894
    %v5541 = vpop.f32.mrb[0].mxu0
    %v5542 = vadd.f32 %v5253, %v5541
    %v5543 = vpop.f32.mrb[0].mxu0
    %v5544 = vpop.f32.mrb[0].mxu0
    %v5545 = vadd.f32 %v5256, %v5544
    %v5546 = vpop.f32.mrb[0].mxu0
    %5547 = vmatprep.mubr.bf16.mxu0 %v3991
    %5548 = vmatmul.mubr.bf16.gmra.mrb[0].mxu0 %v3895
    %v5549 = vpop.f32.mrb[0].mxu0
    %v5550 = vadd.f32 %v5261, %v5549
    %v5551 = vpop.f32.mrb[0].mxu0
    %v5552 = vpop.f32.mrb[0].mxu0
    %v5553 = vadd.f32 %v5264, %v5552
    %v5554 = vpop.f32.mrb[0].mxu0
    %5555 = vmatprep.mubr.bf16.mxu0 %v3992
    %5556 = vmatmul.mubr.bf16.gmra.mrb[0].mxu0 %v3896
    %v5557 = vpop.f32.mrb[0].mxu0
    %v5558 = vadd.f32 %v5269, %v5557
    %v5559 = vpop.f32.mrb[0].mxu0
    %v5560 = vpop.f32.mrb[0].mxu0
    %v5561 = vadd.f32 %v5272, %v5560
    %v5562 = vpop.f32.mrb[0].mxu0
    %5563 = vmatprep.mubr.bf16.mxu0 %v3993
    %5564 = vmatmul.mubr.bf16.gmra.mrb[0].mxu0 %v3897
    %v5565 = vpop.f32.mrb[0].mxu0
    %v5566 = vadd.f32 %v5277, %v5565
    %v5567 = vpop.f32.mrb[0].mxu0
    %v5568 = vpop.f32.mrb[0].mxu0
    %v5569 = vadd.f32 %v5280, %v5568
    %v5570 = vpop.f32.mrb[0].mxu0
    %5571 = vmatprep.mubr.bf16.mxu0 %v3994
    %5572 = vmatmul.mubr.bf16.gmra.mrb[0].mxu0 %v3898
    %v5573 = vpop.f32.mrb[0].mxu0
    %v5574 = vadd.f32 %v5285, %v5573
    %v5575 = vpop.f32.mrb[0].mxu0
    %v5576 = vpop.f32.mrb[0].mxu0
    %v5577 = vadd.f32 %v5288, %v5576
    %v5578 = vpop.f32.mrb[0].mxu0
    %5579 = vmatprep.mubr.bf16.mxu0 %v3995
    %5580 = vmatmul.mubr.bf16.gmra.mrb[0].mxu0 %v3899
    %v5581 = vpop.f32.mrb[0].mxu0
    %v5582 = vadd.f32 %v5293, %v5581
    %v5583 = vpop.f32.mrb[0].mxu0
    %v5584 = vpop.f32.mrb[0].mxu0
    %v5585 = vadd.f32 %v5296, %v5584
    %v5586 = vpop.f32.mrb[0].mxu0
    %5587 = vmatprep.mubr.bf16.mxu0 %v3996
    %5588 = vmatmul.mubr.bf16.gmra.mrb[0].mxu0 %v3900
    %v5589 = vpop.f32.mrb[0].mxu0
    %v5590 = vadd.f32 %v5301, %v5589
    %v5591 = vpop.f32.mrb[0].mxu0
    %v5592 = vpop.f32.mrb[0].mxu0
    %v5593 = vadd.f32 %v5304, %v5592
    %v5594 = vpop.f32.mrb[0].mxu0
    %5595 = vmatprep.mubr.bf16.mxu0 %v3997
    %5596 = vmatmul.mubr.bf16.gmra.mrb[0].mxu0 %v3901
    %v5597 = vpop.f32.mrb[0].mxu0
    %v5598 = vadd.f32 %v5309, %v5597
    %v5599 = vpop.f32.mrb[0].mxu0
    %v5600 = vpop.f32.mrb[0].mxu0
    %v5601 = vadd.f32 %v5312, %v5600
    %v5602 = vpop.f32.mrb[0].mxu0
    %5603 = vmatprep.mubr.bf16.mxu0 %v3998
    %5604 = vmatmul.mubr.bf16.gmra.mrb[0].mxu0 %v3902
    %v5605 = vpop.f32.mrb[0].mxu0
    %v5606 = vadd.f32 %v5317, %v5605
    %v5607 = vpop.f32.mrb[0].mxu0
    %v5608 = vpop.f32.mrb[0].mxu0
    %v5609 = vadd.f32 %v5320, %v5608
    %v5610 = vpop.f32.mrb[0].mxu0
    %5611 = vmatprep.mubr.bf16.mxu0 %v3999
    %5612 = vmatmul.mubr.bf16.gmra.mrb[0].mxu0 %v3903
    %v5613 = vpop.f32.mrb[0].mxu0
    %v5614 = vadd.f32 %v5325, %v5613
    %v5615 = vpop.f32.mrb[0].mxu0
    %v5616 = vpop.f32.mrb[0].mxu0
    %v5617 = vadd.f32 %v5328, %v5616
    %v5618 = vpop.f32.mrb[0].mxu0
    %5619 = vmatprep.mubr.bf16.mxu0 %v4000
    %5620 = vmatmul.mubr.bf16.gmra.mrb[0].mxu0 %v3904
    %v5621 = vpop.f32.mrb[0].mxu0
    %v5622 = vadd.f32 %v5333, %v5621
    %v5623 = vpop.f32.mrb[0].mxu0
    %v5624 = vpop.f32.mrb[0].mxu0
    %v5625 = vadd.f32 %v5336, %v5624
    %v5626 = vpop.f32.mrb[0].mxu0
    %5627 = vmatprep.mubr.bf16.mxu0 %v4001
    %5628 = vmatmul.mubr.bf16.gmra.mrb[0].mxu0 %v3905
    %v5629 = vpop.f32.mrb[0].mxu0
    %v5630 = vadd.f32 %v5341, %v5629
    %v5631 = vpop.f32.mrb[0].mxu0
    %v5632 = vpop.f32.mrb[0].mxu0
    %v5633 = vadd.f32 %v5344, %v5632
    %v5634 = vpop.f32.mrb[0].mxu0
    %5635 = vmatprep.mubr.bf16.mxu0 %v4002
    %5636 = vmatmul.mubr.bf16.gmra.mrb[0].mxu0 %v3906
    %v5637 = vpop.f32.mrb[0].mxu0
    %v5638 = vadd.f32 %v5349, %v5637
    %v5639 = vpop.f32.mrb[0].mxu0
    %v5640 = vpop.f32.mrb[0].mxu0
    %v5641 = vadd.f32 %v5352, %v5640
    %v5642 = vpop.f32.mrb[0].mxu0
    %5643 = vmatprep.mubr.bf16.mxu0 %v4003
    %5644 = vmatmul.mubr.bf16.gmra.mrb[0].mxu0 %v3907
    %v5645 = vpop.f32.mrb[0].mxu0
    %v5646 = vadd.f32 %v5357, %v5645
    %v5647 = vpop.f32.mrb[0].mxu0
    %v5648 = vpop.f32.mrb[0].mxu0
    %v5649 = vadd.f32 %v5360, %v5648
    %v5650 = vpop.f32.mrb[0].mxu0
    %5651 = vmatprep.mubr.bf16.mxu0 %v4004
    %5652 = vmatmul.mubr.bf16.gmra.mrb[0].mxu0 %v3908
    %v5653 = vpop.f32.mrb[0].mxu0
    %v5654 = vadd.f32 %v5365, %v5653
    %v5655 = vpop.f32.mrb[0].mxu0
    %v5656 = vpop.f32.mrb[0].mxu0
    %v5657 = vadd.f32 %v5368, %v5656
    %v5658 = vpop.f32.mrb[0].mxu0
    %5659 = vmatprep.mubr.bf16.mxu0 %v4005
    %5660 = vmatmul.mubr.bf16.gmra.mrb[0].mxu0 %v3909
    %v5661 = vpop.f32.mrb[0].mxu0
    %v5662 = vadd.f32 %v5373, %v5661
    %v5663 = vpop.f32.mrb[0].mxu0
    %v5664 = vpop.f32.mrb[0].mxu0
    %v5665 = vadd.f32 %v5376, %v5664
    %v5666 = vpop.f32.mrb[0].mxu0
    %5667 = vmatprep.mubr.bf16.mxu0 %v4006
    %5668 = vmatmul.mubr.bf16.gmra.mrb[0].mxu0 %v3910
    %v5669 = vpop.f32.mrb[0].mxu0
    %v5670 = vadd.f32 %v5381, %v5669
    %v5671 = vpop.f32.mrb[0].mxu0
    %v5672 = vpop.f32.mrb[0].mxu0
    %v5673 = vadd.f32 %v5384, %v5672
    %v5674 = vpop.f32.mrb[0].mxu0
    %5675 = vmatprep.mubr.bf16.mxu0 %v4007
    %5676 = vmatmul.mubr.bf16.gmra.mrb[0].mxu0 %v3911
    %v5677 = vpop.f32.mrb[0].mxu0
    %v5678 = vadd.f32 %v5389, %v5677
    %v5679 = vpop.f32.mrb[0].mxu0
    %v5680 = vpop.f32.mrb[0].mxu0
    %v5681 = vadd.f32 %v5392, %v5680
    %v5682 = vpop.f32.mrb[0].mxu0
    %5683 = vmatprep.mubr.bf16.mxu0 %v4008
    %5684 = vmatmul.mubr.bf16.gmra.mrb[0].mxu0 %v3912
    %v5685 = vpop.f32.mrb[0].mxu0
    %v5686 = vadd.f32 %v5397, %v5685
    %v5687 = vpop.f32.mrb[0].mxu0
    %v5688 = vpop.f32.mrb[0].mxu0
    %v5689 = vadd.f32 %v5400, %v5688
    %v5690 = vpop.f32.mrb[0].mxu0
    %5691 = vmatprep.mubr.bf16.mxu0 %v4009
    %5692 = vmatmul.mubr.bf16.gmra.mrb[0].mxu0 %v3913
    %v5693 = vpop.f32.mrb[0].mxu0
    %v5694 = vadd.f32 %v5405, %v5693
    %v5695 = vpop.f32.mrb[0].mxu0
    %v5696 = vpop.f32.mrb[0].mxu0
    %v5697 = vadd.f32 %v5408, %v5696
    %v5698 = vpop.f32.mrb[0].mxu0
    %5699 = vmatprep.mubr.bf16.mxu0 %v4010
    %5700 = vmatmul.mubr.bf16.gmra.mrb[0].mxu0 %v3914
    %v5701 = vpop.f32.mrb[0].mxu0
    %v5702 = vadd.f32 %v5413, %v5701
    %v5703 = vpop.f32.mrb[0].mxu0
    %v5704 = vpop.f32.mrb[0].mxu0
    %v5705 = vadd.f32 %v5416, %v5704
    %v5706 = vpop.f32.mrb[0].mxu0
    %5707 = vmatprep.mubr.bf16.mxu0 %v4011
    %5708 = vmatmul.mubr.bf16.gmra.mrb[0].mxu0 %v3915
    %v5709 = vpop.f32.mrb[0].mxu0
    %v5710 = vadd.f32 %v5421, %v5709
    %v5711 = vpop.f32.mrb[0].mxu0
    %v5712 = vpop.f32.mrb[0].mxu0
    %v5713 = vadd.f32 %v5424, %v5712
    %v5714 = vpop.f32.mrb[0].mxu0
    %5715 = vmatprep.mubr.bf16.mxu0 %v4012
    %5716 = vmatmul.mubr.bf16.gmra.mrb[0].mxu0 %v3916
    %v5717 = vpop.f32.mrb[0].mxu0
    %v5718 = vadd.f32 %v5429, %v5717
    %v5719 = vpop.f32.mrb[0].mxu0
    %v5720 = vpop.f32.mrb[0].mxu0
    %v5721 = vadd.f32 %v5432, %v5720
    %v5722 = vpop.f32.mrb[0].mxu0
    %5723 = vmatprep.mubr.bf16.mxu0 %v4013
    %5724 = vmatmul.mubr.bf16.gmra.mrb[0].mxu0 %v3917
    %v5725 = vpop.f32.mrb[0].mxu0
    %v5726 = vadd.f32 %v5437, %v5725
    %v5727 = vpop.f32.mrb[0].mxu0
    %v5728 = vpop.f32.mrb[0].mxu0
    %v5729 = vadd.f32 %v5440, %v5728
    %v5730 = vpop.f32.mrb[0].mxu0
    %5731 = vmatprep.mubr.bf16.mxu0 %v4014
    %5732 = vmatmul.mubr.bf16.gmra.mrb[0].mxu0 %v3918
    %v5733 = vpop.f32.mrb[0].mxu0
    %v5734 = vadd.f32 %v5445, %v5733
    %v5735 = vpop.f32.mrb[0].mxu0
    %v5736 = vpop.f32.mrb[0].mxu0
    %v5737 = vadd.f32 %v5448, %v5736
    %v5738 = vpop.f32.mrb[0].mxu0
    %5739 = vmatprep.mubr.bf16.mxu0 %v4015
    %5740 = vmatmul.mubr.bf16.gmra.mrb[0].mxu0 %v3919
    %v5741 = vpop.f32.mrb[0].mxu0
    %v5742 = vadd.f32 %v5453, %v5741
    %v5743 = vpop.f32.mrb[0].mxu0
    %v5744 = vpop.f32.mrb[0].mxu0
    %v5745 = vadd.f32 %v5456, %v5744
    %v5746 = vpop.f32.mrb[0].mxu0
    %5747 = vdwg.mxu0
    %5748 = vmatprep.subr.bf16.mxu0 0
    %5749 = vmatpush1.bf16.msra.mxu0 %v4785
    %5750 = vmatprep.subr.bf16.mxu0 0
    %5751 = vmatpush1.bf16.msra.mxu0 %v4786
    %5752 = vmatprep.subr.bf16.mxu0 0
    %5753 = vmatpush1.bf16.msra.mxu0 %v4787
    %5754 = vmatprep.subr.bf16.mxu0 0
    %5755 = vmatpush1.bf16.msra.mxu0 %v4788
    %5756 = vmatprep.subr.bf16.mxu0 0
    %5757 = vmatpush1.bf16.msra.mxu0 %v4789
    %5758 = vmatprep.subr.bf16.mxu0 0
    %5759 = vmatpush1.bf16.msra.mxu0 %v4790
    %5760 = vmatprep.subr.bf16.mxu0 0
    %5761 = vmatpush1.bf16.msra.mxu0 %v4791
    %5762 = vmatprep.subr.bf16.mxu0 0
    %5763 = vmatpush1.bf16.msra.mxu0 %v4792
    %5764 = vmatprep.subr.bf16.mxu0 0
    %5765 = vmatpush1.bf16.msra.mxu0 %v4793
    %5766 = vmatprep.subr.bf16.mxu0 0
    %5767 = vmatpush1.bf16.msra.mxu0 %v4794
    %5768 = vmatprep.subr.bf16.mxu0 0
    %5769 = vmatpush1.bf16.msra.mxu0 %v4795
    %5770 = vmatprep.subr.bf16.mxu0 0
    %5771 = vmatpush1.bf16.msra.mxu0 %v4796
    %5772 = vmatprep.subr.bf16.mxu0 0
    %5773 = vmatpush1.bf16.msra.mxu0 %v4797
    %5774 = vmatprep.subr.bf16.mxu0 0
    %5775 = vmatpush1.bf16.msra.mxu0 %v4798
    %5776 = vmatprep.subr.bf16.mxu0 0
    %5777 = vmatpush1.bf16.msra.mxu0 %v4799
    %5778 = vmatprep.subr.bf16.mxu0 0
    %5779 = vmatpush1.bf16.msra.mxu0 %v4800
    %5780 = vmatprep.mubr.bf16.mxu0 %v4177
    %5781 = vmatmul.mubr.bf16.gmra.mrb[0].mxu0 %v4081
    %v5782 = vpop.f32.mrb[0].mxu0
    %v5783 = vadd.f32 %v5494, %v5782
    %v5784 = vpop.f32.mrb[0].mxu0
    %v5785 = vpop.f32.mrb[0].mxu0
    %v5786 = vadd.f32 %v5497, %v5785
    %v5787 = vpop.f32.mrb[0].mxu0
    %5788 = vmatprep.mubr.bf16.mxu0 %v4178
    %5789 = vmatmul.mubr.bf16.gmra.mrb[0].mxu0 %v4082
    %v5790 = vpop.f32.mrb[0].mxu0
    %v5791 = vadd.f32 %v5502, %v5790
    %v5792 = vpop.f32.mrb[0].mxu0
    %v5793 = vpop.f32.mrb[0].mxu0
    %v5794 = vadd.f32 %v5505, %v5793
    %v5795 = vpop.f32.mrb[0].mxu0
    %5796 = vmatprep.mubr.bf16.mxu0 %v4179
    %5797 = vmatmul.mubr.bf16.gmra.mrb[0].mxu0 %v4083
    %v5798 = vpop.f32.mrb[0].mxu0
    %v5799 = vadd.f32 %v5510, %v5798
    %v5800 = vpop.f32.mrb[0].mxu0
    %v5801 = vpop.f32.mrb[0].mxu0
    %v5802 = vadd.f32 %v5513, %v5801
    %v5803 = vpop.f32.mrb[0].mxu0
    %5804 = vmatprep.mubr.bf16.mxu0 %v4180
    %5805 = vmatmul.mubr.bf16.gmra.mrb[0].mxu0 %v4084
    %v5806 = vpop.f32.mrb[0].mxu0
    %v5807 = vadd.f32 %v5518, %v5806
    %v5808 = vpop.f32.mrb[0].mxu0
    %v5809 = vpop.f32.mrb[0].mxu0
    %v5810 = vadd.f32 %v5521, %v5809
    %v5811 = vpop.f32.mrb[0].mxu0
    %5812 = vmatprep.mubr.bf16.mxu0 %v4181
    %5813 = vmatmul.mubr.bf16.gmra.mrb[0].mxu0 %v4085
    %v5814 = vpop.f32.mrb[0].mxu0
    %v5815 = vadd.f32 %v5526, %v5814
    %v5816 = vpop.f32.mrb[0].mxu0
    %v5817 = vpop.f32.mrb[0].mxu0
    %v5818 = vadd.f32 %v5529, %v5817
    %v5819 = vpop.f32.mrb[0].mxu0
    %5820 = vmatprep.mubr.bf16.mxu0 %v4182
    %5821 = vmatmul.mubr.bf16.gmra.mrb[0].mxu0 %v4086
    %v5822 = vpop.f32.mrb[0].mxu0
    %v5823 = vadd.f32 %v5534, %v5822
    %v5824 = vpop.f32.mrb[0].mxu0
    %v5825 = vpop.f32.mrb[0].mxu0
    %v5826 = vadd.f32 %v5537, %v5825
    %v5827 = vpop.f32.mrb[0].mxu0
    %5828 = vmatprep.mubr.bf16.mxu0 %v4183
    %5829 = vmatmul.mubr.bf16.gmra.mrb[0].mxu0 %v4087
    %v5830 = vpop.f32.mrb[0].mxu0
    %v5831 = vadd.f32 %v5542, %v5830
    %v5832 = vpop.f32.mrb[0].mxu0
    %v5833 = vpop.f32.mrb[0].mxu0
    %v5834 = vadd.f32 %v5545, %v5833
    %v5835 = vpop.f32.mrb[0].mxu0
    %5836 = vmatprep.mubr.bf16.mxu0 %v4184
    %5837 = vmatmul.mubr.bf16.gmra.mrb[0].mxu0 %v4088
    %v5838 = vpop.f32.mrb[0].mxu0
    %v5839 = vadd.f32 %v5550, %v5838
    %v5840 = vpop.f32.mrb[0].mxu0
    %v5841 = vpop.f32.mrb[0].mxu0
    %v5842 = vadd.f32 %v5553, %v5841
    %v5843 = vpop.f32.mrb[0].mxu0
    %5844 = vmatprep.mubr.bf16.mxu0 %v4185
    %5845 = vmatmul.mubr.bf16.gmra.mrb[0].mxu0 %v4089
    %v5846 = vpop.f32.mrb[0].mxu0
    %v5847 = vadd.f32 %v5558, %v5846
    %v5848 = vpop.f32.mrb[0].mxu0
    %v5849 = vpop.f32.mrb[0].mxu0
    %v5850 = vadd.f32 %v5561, %v5849
    %v5851 = vpop.f32.mrb[0].mxu0
    %5852 = vmatprep.mubr.bf16.mxu0 %v4186
    %5853 = vmatmul.mubr.bf16.gmra.mrb[0].mxu0 %v4090
    %v5854 = vpop.f32.mrb[0].mxu0
    %v5855 = vadd.f32 %v5566, %v5854
    %v5856 = vpop.f32.mrb[0].mxu0
    %v5857 = vpop.f32.mrb[0].mxu0
    %v5858 = vadd.f32 %v5569, %v5857
    %v5859 = vpop.f32.mrb[0].mxu0
    %5860 = vmatprep.mubr.bf16.mxu0 %v4187
    %5861 = vmatmul.mubr.bf16.gmra.mrb[0].mxu0 %v4091
    %v5862 = vpop.f32.mrb[0].mxu0
    %v5863 = vadd.f32 %v5574, %v5862
    %v5864 = vpop.f32.mrb[0].mxu0
    %v5865 = vpop.f32.mrb[0].mxu0
    %v5866 = vadd.f32 %v5577, %v5865
    %v5867 = vpop.f32.mrb[0].mxu0
    %5868 = vmatprep.mubr.bf16.mxu0 %v4188
    %5869 = vmatmul.mubr.bf16.gmra.mrb[0].mxu0 %v4092
    %v5870 = vpop.f32.mrb[0].mxu0
    %v5871 = vadd.f32 %v5582, %v5870
    %v5872 = vpop.f32.mrb[0].mxu0
    %v5873 = vpop.f32.mrb[0].mxu0
    %v5874 = vadd.f32 %v5585, %v5873
    %v5875 = vpop.f32.mrb[0].mxu0
    %5876 = vmatprep.mubr.bf16.mxu0 %v4189
    %5877 = vmatmul.mubr.bf16.gmra.mrb[0].mxu0 %v4093
    %v5878 = vpop.f32.mrb[0].mxu0
    %v5879 = vadd.f32 %v5590, %v5878
    %v5880 = vpop.f32.mrb[0].mxu0
    %v5881 = vpop.f32.mrb[0].mxu0
    %v5882 = vadd.f32 %v5593, %v5881
    %v5883 = vpop.f32.mrb[0].mxu0
    %5884 = vmatprep.mubr.bf16.mxu0 %v4190
    %5885 = vmatmul.mubr.bf16.gmra.mrb[0].mxu0 %v4094
    %v5886 = vpop.f32.mrb[0].mxu0
    %v5887 = vadd.f32 %v5598, %v5886
    %v5888 = vpop.f32.mrb[0].mxu0
    %v5889 = vpop.f32.mrb[0].mxu0
    %v5890 = vadd.f32 %v5601, %v5889
    %v5891 = vpop.f32.mrb[0].mxu0
    %5892 = vmatprep.mubr.bf16.mxu0 %v4191
    %5893 = vmatmul.mubr.bf16.gmra.mrb[0].mxu0 %v4095
    %v5894 = vpop.f32.mrb[0].mxu0
    %v5895 = vadd.f32 %v5606, %v5894
    %v5896 = vpop.f32.mrb[0].mxu0
    %v5897 = vpop.f32.mrb[0].mxu0
    %v5898 = vadd.f32 %v5609, %v5897
    %v5899 = vpop.f32.mrb[0].mxu0
    %5900 = vmatprep.mubr.bf16.mxu0 %v4192
    %5901 = vmatmul.mubr.bf16.gmra.mrb[0].mxu0 %v4096
    %v5902 = vpop.f32.mrb[0].mxu0
    %v5903 = vadd.f32 %v5614, %v5902
    %v5904 = vpop.f32.mrb[0].mxu0
    %v5905 = vpop.f32.mrb[0].mxu0
    %v5906 = vadd.f32 %v5617, %v5905
    %v5907 = vpop.f32.mrb[0].mxu0
    %5908 = vmatprep.mubr.bf16.mxu0 %v4193
    %5909 = vmatmul.mubr.bf16.gmra.mrb[0].mxu0 %v4097
    %v5910 = vpop.f32.mrb[0].mxu0
    %v5911 = vadd.f32 %v5622, %v5910
    %v5912 = vpop.f32.mrb[0].mxu0
    %v5913 = vpop.f32.mrb[0].mxu0
    %v5914 = vadd.f32 %v5625, %v5913
    %v5915 = vpop.f32.mrb[0].mxu0
    %5916 = vmatprep.mubr.bf16.mxu0 %v4194
    %5917 = vmatmul.mubr.bf16.gmra.mrb[0].mxu0 %v4098
    %v5918 = vpop.f32.mrb[0].mxu0
    %v5919 = vadd.f32 %v5630, %v5918
    %v5920 = vpop.f32.mrb[0].mxu0
    %v5921 = vpop.f32.mrb[0].mxu0
    %v5922 = vadd.f32 %v5633, %v5921
    %v5923 = vpop.f32.mrb[0].mxu0
    %5924 = vmatprep.mubr.bf16.mxu0 %v4195
    %5925 = vmatmul.mubr.bf16.gmra.mrb[0].mxu0 %v4099
    %v5926 = vpop.f32.mrb[0].mxu0
    %v5927 = vadd.f32 %v5638, %v5926
    %v5928 = vpop.f32.mrb[0].mxu0
    %v5929 = vpop.f32.mrb[0].mxu0
    %v5930 = vadd.f32 %v5641, %v5929
    %v5931 = vpop.f32.mrb[0].mxu0
    %5932 = vmatprep.mubr.bf16.mxu0 %v4196
    %5933 = vmatmul.mubr.bf16.gmra.mrb[0].mxu0 %v4100
    %v5934 = vpop.f32.mrb[0].mxu0
    %v5935 = vadd.f32 %v5646, %v5934
    %v5936 = vpop.f32.mrb[0].mxu0
    %v5937 = vpop.f32.mrb[0].mxu0
    %v5938 = vadd.f32 %v5649, %v5937
    %v5939 = vpop.f32.mrb[0].mxu0
    %5940 = vmatprep.mubr.bf16.mxu0 %v4197
    %5941 = vmatmul.mubr.bf16.gmra.mrb[0].mxu0 %v4101
    %v5942 = vpop.f32.mrb[0].mxu0
    %v5943 = vadd.f32 %v5654, %v5942
    %v5944 = vpop.f32.mrb[0].mxu0
    %v5945 = vpop.f32.mrb[0].mxu0
    %v5946 = vadd.f32 %v5657, %v5945
    %v5947 = vpop.f32.mrb[0].mxu0
    %5948 = vmatprep.mubr.bf16.mxu0 %v4198
    %5949 = vmatmul.mubr.bf16.gmra.mrb[0].mxu0 %v4102
    %v5950 = vpop.f32.mrb[0].mxu0
    %v5951 = vadd.f32 %v5662, %v5950
    %v5952 = vpop.f32.mrb[0].mxu0
    %v5953 = vpop.f32.mrb[0].mxu0
    %v5954 = vadd.f32 %v5665, %v5953
    %v5955 = vpop.f32.mrb[0].mxu0
    %5956 = vmatprep.mubr.bf16.mxu0 %v4199
    %5957 = vmatmul.mubr.bf16.gmra.mrb[0].mxu0 %v4103
    %v5958 = vpop.f32.mrb[0].mxu0
    %v5959 = vadd.f32 %v5670, %v5958
    %v5960 = vpop.f32.mrb[0].mxu0
    %v5961 = vpop.f32.mrb[0].mxu0
    %v5962 = vadd.f32 %v5673, %v5961
    %v5963 = vpop.f32.mrb[0].mxu0
    %5964 = vmatprep.mubr.bf16.mxu0 %v4200
    %5965 = vmatmul.mubr.bf16.gmra.mrb[0].mxu0 %v4104
    %v5966 = vpop.f32.mrb[0].mxu0
    %v5967 = vadd.f32 %v5678, %v5966
    %v5968 = vpop.f32.mrb[0].mxu0
    %v5969 = vpop.f32.mrb[0].mxu0
    %v5970 = vadd.f32 %v5681, %v5969
    %v5971 = vpop.f32.mrb[0].mxu0
    %5972 = vmatprep.mubr.bf16.mxu0 %v4201
    %5973 = vmatmul.mubr.bf16.gmra.mrb[0].mxu0 %v4105
    %v5974 = vpop.f32.mrb[0].mxu0
    %v5975 = vadd.f32 %v5686, %v5974
    %v5976 = vpop.f32.mrb[0].mxu0
    %v5977 = vpop.f32.mrb[0].mxu0
    %v5978 = vadd.f32 %v5689, %v5977
    %v5979 = vpop.f32.mrb[0].mxu0
    %5980 = vmatprep.mubr.bf16.mxu0 %v4202
    %5981 = vmatmul.mubr.bf16.gmra.mrb[0].mxu0 %v4106
    %v5982 = vpop.f32.mrb[0].mxu0
    %v5983 = vadd.f32 %v5694, %v5982
    %v5984 = vpop.f32.mrb[0].mxu0
    %v5985 = vpop.f32.mrb[0].mxu0
    %v5986 = vadd.f32 %v5697, %v5985
    %v5987 = vpop.f32.mrb[0].mxu0
    %5988 = vmatprep.mubr.bf16.mxu0 %v4203
    %5989 = vmatmul.mubr.bf16.gmra.mrb[0].mxu0 %v4107
    %v5990 = vpop.f32.mrb[0].mxu0
    %v5991 = vadd.f32 %v5702, %v5990
    %v5992 = vpop.f32.mrb[0].mxu0
    %v5993 = vpop.f32.mrb[0].mxu0
    %v5994 = vadd.f32 %v5705, %v5993
    %v5995 = vpop.f32.mrb[0].mxu0
    %5996 = vmatprep.mubr.bf16.mxu0 %v4204
    %5997 = vmatmul.mubr.bf16.gmra.mrb[0].mxu0 %v4108
    %v5998 = vpop.f32.mrb[0].mxu0
    %v5999 = vadd.f32 %v5710, %v5998
    %v6000 = vpop.f32.mrb[0].mxu0
    %v6001 = vpop.f32.mrb[0].mxu0
    %v6002 = vadd.f32 %v5713, %v6001
    %v6003 = vpop.f32.mrb[0].mxu0
    %6004 = vmatprep.mubr.bf16.mxu0 %v4205
    %6005 = vmatmul.mubr.bf16.gmra.mrb[0].mxu0 %v4109
    %v6006 = vpop.f32.mrb[0].mxu0
    %v6007 = vadd.f32 %v5718, %v6006
    %v6008 = vpop.f32.mrb[0].mxu0
    %v6009 = vpop.f32.mrb[0].mxu0
    %v6010 = vadd.f32 %v5721, %v6009
    %v6011 = vpop.f32.mrb[0].mxu0
    %6012 = vmatprep.mubr.bf16.mxu0 %v4206
    %6013 = vmatmul.mubr.bf16.gmra.mrb[0].mxu0 %v4110
    %v6014 = vpop.f32.mrb[0].mxu0
    %v6015 = vadd.f32 %v5726, %v6014
    %v6016 = vpop.f32.mrb[0].mxu0
    %v6017 = vpop.f32.mrb[0].mxu0
    %v6018 = vadd.f32 %v5729, %v6017
    %v6019 = vpop.f32.mrb[0].mxu0
    %6020 = vmatprep.mubr.bf16.mxu0 %v4207
    %6021 = vmatmul.mubr.bf16.gmra.mrb[0].mxu0 %v4111
    %v6022 = vpop.f32.mrb[0].mxu0
    %v6023 = vadd.f32 %v5734, %v6022
    %v6024 = vpop.f32.mrb[0].mxu0
    %v6025 = vpop.f32.mrb[0].mxu0
    %v6026 = vadd.f32 %v5737, %v6025
    %v6027 = vpop.f32.mrb[0].mxu0
    %6028 = vmatprep.mubr.bf16.mxu0 %v4208
    %6029 = vmatmul.mubr.bf16.gmra.mrb[0].mxu0 %v4112
    %v6030 = vpop.f32.mrb[0].mxu0
    %v6031 = vadd.f32 %v5742, %v6030
    %v6032 = vpop.f32.mrb[0].mxu0
    %v6033 = vpop.f32.mrb[0].mxu0
    %v6034 = vadd.f32 %v5745, %v6033
    %v6035 = vpop.f32.mrb[0].mxu0
    %6036 = vdwg.mxu0
    %6037 = vmatprep.subr.bf16.mxu0 0
    %6038 = vmatpush1.bf16.msra.mxu0 %v4801
    %6039 = vmatprep.subr.bf16.mxu0 0
    %6040 = vmatpush1.bf16.msra.mxu0 %v4802
    %6041 = vmatprep.subr.bf16.mxu0 0
    %6042 = vmatpush1.bf16.msra.mxu0 %v4803
    %6043 = vmatprep.subr.bf16.mxu0 0
    %6044 = vmatpush1.bf16.msra.mxu0 %v4804
    %6045 = vmatprep.subr.bf16.mxu0 0
    %6046 = vmatpush1.bf16.msra.mxu0 %v4805
    %6047 = vmatprep.subr.bf16.mxu0 0
    %6048 = vmatpush1.bf16.msra.mxu0 %v4806
    %6049 = vmatprep.subr.bf16.mxu0 0
    %6050 = vmatpush1.bf16.msra.mxu0 %v4807
    %6051 = vmatprep.subr.bf16.mxu0 0
    %6052 = vmatpush1.bf16.msra.mxu0 %v4808
    %6053 = vmatprep.subr.bf16.mxu0 0
    %6054 = vmatpush1.bf16.msra.mxu0 0
    %6055 = vmatprep.subr.bf16.mxu0 0
    %6056 = vmatpush1.bf16.msra.mxu0 0
    %6057 = vmatprep.subr.bf16.mxu0 0
    %6058 = vmatpush1.bf16.msra.mxu0 0
    %6059 = vmatprep.subr.bf16.mxu0 0
    %6060 = vmatpush1.bf16.msra.mxu0 0
    %6061 = vmatprep.subr.bf16.mxu0 0
    %6062 = vmatpush1.bf16.msra.mxu0 0
    %6063 = vmatprep.subr.bf16.mxu0 0
    %6064 = vmatpush1.bf16.msra.mxu0 0
    %6065 = vmatprep.subr.bf16.mxu0 0
    %6066 = vmatpush1.bf16.msra.mxu0 0
    %6067 = vmatprep.subr.bf16.mxu0 0
    %6068 = vmatpush1.bf16.msra.mxu0 0
    %6069 = vmatprep.mubr.bf16.mxu0 0
    %6070 = vmatmul.mubr.bf16.gmra.mrb[0].mxu0 %v4273
    %v6071 = vpop.f32.mrb[0].mxu0
    %v6072 = vadd.f32 %v5783, %v6071
    %v6073 = vpop.f32.mrb[0].mxu0
    %v6074 = vpop.f32.mrb[0].mxu0
    %v6075 = vadd.f32 %v5786, %v6074
    %v6076 = vpop.f32.mrb[0].mxu0
    %6077 = vmatprep.mubr.bf16.mxu0 0
    %6078 = vmatmul.mubr.bf16.gmra.mrb[0].mxu0 %v4274
    %v6079 = vpop.f32.mrb[0].mxu0
    %v6080 = vadd.f32 %v5791, %v6079
    %v6081 = vpop.f32.mrb[0].mxu0
    %v6082 = vpop.f32.mrb[0].mxu0
    %v6083 = vadd.f32 %v5794, %v6082
    %v6084 = vpop.f32.mrb[0].mxu0
    %6085 = vmatprep.mubr.bf16.mxu0 0
    %6086 = vmatmul.mubr.bf16.gmra.mrb[0].mxu0 %v4275
    %v6087 = vpop.f32.mrb[0].mxu0
    %v6088 = vadd.f32 %v5799, %v6087
    %v6089 = vpop.f32.mrb[0].mxu0
    %v6090 = vpop.f32.mrb[0].mxu0
    %v6091 = vadd.f32 %v5802, %v6090
    %v6092 = vpop.f32.mrb[0].mxu0
    %6093 = vmatprep.mubr.bf16.mxu0 0
    %6094 = vmatmul.mubr.bf16.gmra.mrb[0].mxu0 %v4276
    %v6095 = vpop.f32.mrb[0].mxu0
    %v6096 = vadd.f32 %v5807, %v6095
    %v6097 = vpop.f32.mrb[0].mxu0
    %v6098 = vpop.f32.mrb[0].mxu0
    %v6099 = vadd.f32 %v5810, %v6098
    %v6100 = vpop.f32.mrb[0].mxu0
    %6101 = vmatprep.mubr.bf16.mxu0 0
    %6102 = vmatmul.mubr.bf16.gmra.mrb[0].mxu0 %v4277
    %v6103 = vpop.f32.mrb[0].mxu0
    %v6104 = vadd.f32 %v5815, %v6103
    %v6105 = vpop.f32.mrb[0].mxu0
    %v6106 = vpop.f32.mrb[0].mxu0
    %v6107 = vadd.f32 %v5818, %v6106
    %v6108 = vpop.f32.mrb[0].mxu0
    %6109 = vmatprep.mubr.bf16.mxu0 0
    %6110 = vmatmul.mubr.bf16.gmra.mrb[0].mxu0 %v4278
    %v6111 = vpop.f32.mrb[0].mxu0
    %v6112 = vadd.f32 %v5823, %v6111
    %v6113 = vpop.f32.mrb[0].mxu0
    %v6114 = vpop.f32.mrb[0].mxu0
    %v6115 = vadd.f32 %v5826, %v6114
    %v6116 = vpop.f32.mrb[0].mxu0
    %6117 = vmatprep.mubr.bf16.mxu0 0
    %6118 = vmatmul.mubr.bf16.gmra.mrb[0].mxu0 %v4279
    %v6119 = vpop.f32.mrb[0].mxu0
    %v6120 = vadd.f32 %v5831, %v6119
    %v6121 = vpop.f32.mrb[0].mxu0
    %v6122 = vpop.f32.mrb[0].mxu0
    %v6123 = vadd.f32 %v5834, %v6122
    %v6124 = vpop.f32.mrb[0].mxu0
    %6125 = vmatprep.mubr.bf16.mxu0 0
    %6126 = vmatmul.mubr.bf16.gmra.mrb[0].mxu0 %v4280
    %v6127 = vpop.f32.mrb[0].mxu0
    %v6128 = vadd.f32 %v5839, %v6127
    %v6129 = vpop.f32.mrb[0].mxu0
    %v6130 = vpop.f32.mrb[0].mxu0
    %v6131 = vadd.f32 %v5842, %v6130
    %v6132 = vpop.f32.mrb[0].mxu0
    %6133 = vmatprep.mubr.bf16.mxu0 0
    %6134 = vmatmul.mubr.bf16.gmra.mrb[0].mxu0 %v4281
    %v6135 = vpop.f32.mrb[0].mxu0
    %v6136 = vadd.f32 %v5847, %v6135
    %v6137 = vpop.f32.mrb[0].mxu0
    %v6138 = vpop.f32.mrb[0].mxu0
    %v6139 = vadd.f32 %v5850, %v6138
    %v6140 = vpop.f32.mrb[0].mxu0
    %6141 = vmatprep.mubr.bf16.mxu0 0
    %6142 = vmatmul.mubr.bf16.gmra.mrb[0].mxu0 %v4282
    %v6143 = vpop.f32.mrb[0].mxu0
    %v6144 = vadd.f32 %v5855, %v6143
    %v6145 = vpop.f32.mrb[0].mxu0
    %v6146 = vpop.f32.mrb[0].mxu0
    %v6147 = vadd.f32 %v5858, %v6146
    %v6148 = vpop.f32.mrb[0].mxu0
    %6149 = vmatprep.mubr.bf16.mxu0 0
    %6150 = vmatmul.mubr.bf16.gmra.mrb[0].mxu0 %v4283
    %v6151 = vpop.f32.mrb[0].mxu0
    %v6152 = vadd.f32 %v5863, %v6151
    %v6153 = vpop.f32.mrb[0].mxu0
    %v6154 = vpop.f32.mrb[0].mxu0
    %v6155 = vadd.f32 %v5866, %v6154
    %v6156 = vpop.f32.mrb[0].mxu0
    %6157 = vmatprep.mubr.bf16.mxu0 0
    %6158 = vmatmul.mubr.bf16.gmra.mrb[0].mxu0 %v4284
    %v6159 = vpop.f32.mrb[0].mxu0
    %v6160 = vadd.f32 %v5871, %v6159
    %v6161 = vpop.f32.mrb[0].mxu0
    %v6162 = vpop.f32.mrb[0].mxu0
    %v6163 = vadd.f32 %v5874, %v6162
    %v6164 = vpop.f32.mrb[0].mxu0
    %6165 = vmatprep.mubr.bf16.mxu0 0
    %6166 = vmatmul.mubr.bf16.gmra.mrb[0].mxu0 %v4285
    %v6167 = vpop.f32.mrb[0].mxu0
    %v6168 = vadd.f32 %v5879, %v6167
    %v6169 = vpop.f32.mrb[0].mxu0
    %v6170 = vpop.f32.mrb[0].mxu0
    %v6171 = vadd.f32 %v5882, %v6170
    %v6172 = vpop.f32.mrb[0].mxu0
    %6173 = vmatprep.mubr.bf16.mxu0 0
    %6174 = vmatmul.mubr.bf16.gmra.mrb[0].mxu0 %v4286
    %v6175 = vpop.f32.mrb[0].mxu0
    %v6176 = vadd.f32 %v5887, %v6175
    %v6177 = vpop.f32.mrb[0].mxu0
    %v6178 = vpop.f32.mrb[0].mxu0
    %v6179 = vadd.f32 %v5890, %v6178
    %v6180 = vpop.f32.mrb[0].mxu0
    %6181 = vmatprep.mubr.bf16.mxu0 0
    %6182 = vmatmul.mubr.bf16.gmra.mrb[0].mxu0 %v4287
    %v6183 = vpop.f32.mrb[0].mxu0
    %v6184 = vadd.f32 %v5895, %v6183
    %v6185 = vpop.f32.mrb[0].mxu0
    %v6186 = vpop.f32.mrb[0].mxu0
    %v6187 = vadd.f32 %v5898, %v6186
    %v6188 = vpop.f32.mrb[0].mxu0
    %6189 = vmatprep.mubr.bf16.mxu0 0
    %6190 = vmatmul.mubr.bf16.gmra.mrb[0].mxu0 %v4288
    %v6191 = vpop.f32.mrb[0].mxu0
    %v6192 = vadd.f32 %v5903, %v6191
    %v6193 = vpop.f32.mrb[0].mxu0
    %v6194 = vpop.f32.mrb[0].mxu0
    %v6195 = vadd.f32 %v5906, %v6194
    %v6196 = vpop.f32.mrb[0].mxu0
    %6197 = vmatprep.mubr.bf16.mxu0 0
    %6198 = vmatmul.mubr.bf16.gmra.mrb[0].mxu0 %v4289
    %v6199 = vpop.f32.mrb[0].mxu0
    %v6200 = vadd.f32 %v5911, %v6199
    %v6201 = vpop.f32.mrb[0].mxu0
    %v6202 = vpop.f32.mrb[0].mxu0
    %v6203 = vadd.f32 %v5914, %v6202
    %v6204 = vpop.f32.mrb[0].mxu0
    %6205 = vmatprep.mubr.bf16.mxu0 0
    %6206 = vmatmul.mubr.bf16.gmra.mrb[0].mxu0 %v4290
    %v6207 = vpop.f32.mrb[0].mxu0
    %v6208 = vadd.f32 %v5919, %v6207
    %v6209 = vpop.f32.mrb[0].mxu0
    %v6210 = vpop.f32.mrb[0].mxu0
    %v6211 = vadd.f32 %v5922, %v6210
    %v6212 = vpop.f32.mrb[0].mxu0
    %6213 = vmatprep.mubr.bf16.mxu0 0
    %6214 = vmatmul.mubr.bf16.gmra.mrb[0].mxu0 %v4291
    %v6215 = vpop.f32.mrb[0].mxu0
    %v6216 = vadd.f32 %v5927, %v6215
    %v6217 = vpop.f32.mrb[0].mxu0
    %v6218 = vpop.f32.mrb[0].mxu0
    %v6219 = vadd.f32 %v5930, %v6218
    %v6220 = vpop.f32.mrb[0].mxu0
    %6221 = vmatprep.mubr.bf16.mxu0 0
    %6222 = vmatmul.mubr.bf16.gmra.mrb[0].mxu0 %v4292
    %v6223 = vpop.f32.mrb[0].mxu0
    %v6224 = vadd.f32 %v5935, %v6223
    %v6225 = vpop.f32.mrb[0].mxu0
    %v6226 = vpop.f32.mrb[0].mxu0
    %v6227 = vadd.f32 %v5938, %v6226
    %v6228 = vpop.f32.mrb[0].mxu0
    %6229 = vmatprep.mubr.bf16.mxu0 0
    %6230 = vmatmul.mubr.bf16.gmra.mrb[0].mxu0 %v4293
    %v6231 = vpop.f32.mrb[0].mxu0
    %v6232 = vadd.f32 %v5943, %v6231
    %v6233 = vpop.f32.mrb[0].mxu0
    %v6234 = vpop.f32.mrb[0].mxu0
    %v6235 = vadd.f32 %v5946, %v6234
    %v6236 = vpop.f32.mrb[0].mxu0
    %6237 = vmatprep.mubr.bf16.mxu0 0
    %6238 = vmatmul.mubr.bf16.gmra.mrb[0].mxu0 %v4294
    %v6239 = vpop.f32.mrb[0].mxu0
    %v6240 = vadd.f32 %v5951, %v6239
    %v6241 = vpop.f32.mrb[0].mxu0
    %v6242 = vpop.f32.mrb[0].mxu0
    %v6243 = vadd.f32 %v5954, %v6242
    %v6244 = vpop.f32.mrb[0].mxu0
    %6245 = vmatprep.mubr.bf16.mxu0 0
    %6246 = vmatmul.mubr.bf16.gmra.mrb[0].mxu0 %v4295
    %v6247 = vpop.f32.mrb[0].mxu0
    %v6248 = vadd.f32 %v5959, %v6247
    %v6249 = vpop.f32.mrb[0].mxu0
    %v6250 = vpop.f32.mrb[0].mxu0
    %v6251 = vadd.f32 %v5962, %v6250
    %v6252 = vpop.f32.mrb[0].mxu0
    %6253 = vmatprep.mubr.bf16.mxu0 0
    %6254 = vmatmul.mubr.bf16.gmra.mrb[0].mxu0 %v4296
    %v6255 = vpop.f32.mrb[0].mxu0
    %v6256 = vadd.f32 %v5967, %v6255
    %v6257 = vpop.f32.mrb[0].mxu0
    %v6258 = vpop.f32.mrb[0].mxu0
    %v6259 = vadd.f32 %v5970, %v6258
    %v6260 = vpop.f32.mrb[0].mxu0
    %6261 = vmatprep.mubr.bf16.mxu0 0
    %6262 = vmatmul.mubr.bf16.gmra.mrb[0].mxu0 %v4297
    %v6263 = vpop.f32.mrb[0].mxu0
    %v6264 = vadd.f32 %v5975, %v6263
    %v6265 = vpop.f32.mrb[0].mxu0
    %v6266 = vpop.f32.mrb[0].mxu0
    %v6267 = vadd.f32 %v5978, %v6266
    %v6268 = vpop.f32.mrb[0].mxu0
    %6269 = vmatprep.mubr.bf16.mxu0 0
    %6270 = vmatmul.mubr.bf16.gmra.mrb[0].mxu0 %v4298
    %v6271 = vpop.f32.mrb[0].mxu0
    %v6272 = vadd.f32 %v5983, %v6271
    %v6273 = vpop.f32.mrb[0].mxu0
    %v6274 = vpop.f32.mrb[0].mxu0
    %v6275 = vadd.f32 %v5986, %v6274
    %v6276 = vpop.f32.mrb[0].mxu0
    %6277 = vmatprep.mubr.bf16.mxu0 0
    %6278 = vmatmul.mubr.bf16.gmra.mrb[0].mxu0 %v4299
    %v6279 = vpop.f32.mrb[0].mxu0
    %v6280 = vadd.f32 %v5991, %v6279
    %v6281 = vpop.f32.mrb[0].mxu0
    %v6282 = vpop.f32.mrb[0].mxu0
    %v6283 = vadd.f32 %v5994, %v6282
    %v6284 = vpop.f32.mrb[0].mxu0
    %6285 = vmatprep.mubr.bf16.mxu0 0
    %6286 = vmatmul.mubr.bf16.gmra.mrb[0].mxu0 %v4300
    %v6287 = vpop.f32.mrb[0].mxu0
    %v6288 = vadd.f32 %v5999, %v6287
    %v6289 = vpop.f32.mrb[0].mxu0
    %v6290 = vpop.f32.mrb[0].mxu0
    %v6291 = vadd.f32 %v6002, %v6290
    %v6292 = vpop.f32.mrb[0].mxu0
    %6293 = vmatprep.mubr.bf16.mxu0 0
    %6294 = vmatmul.mubr.bf16.gmra.mrb[0].mxu0 %v4301
    %v6295 = vpop.f32.mrb[0].mxu0
    %v6296 = vadd.f32 %v6007, %v6295
    %v6297 = vpop.f32.mrb[0].mxu0
    %v6298 = vpop.f32.mrb[0].mxu0
    %v6299 = vadd.f32 %v6010, %v6298
    %v6300 = vpop.f32.mrb[0].mxu0
    %6301 = vmatprep.mubr.bf16.mxu0 0
    %6302 = vmatmul.mubr.bf16.gmra.mrb[0].mxu0 %v4302
    %v6303 = vpop.f32.mrb[0].mxu0
    %v6304 = vadd.f32 %v6015, %v6303
    %v6305 = vpop.f32.mrb[0].mxu0
    %v6306 = vpop.f32.mrb[0].mxu0
    %v6307 = vadd.f32 %v6018, %v6306
    %v6308 = vpop.f32.mrb[0].mxu0
    %6309 = vmatprep.mubr.bf16.mxu0 0
    %6310 = vmatmul.mubr.bf16.gmra.mrb[0].mxu0 %v4303
    %v6311 = vpop.f32.mrb[0].mxu0
    %v6312 = vadd.f32 %v6023, %v6311
    %v6313 = vpop.f32.mrb[0].mxu0
    %v6314 = vpop.f32.mrb[0].mxu0
    %v6315 = vadd.f32 %v6026, %v6314
    %v6316 = vpop.f32.mrb[0].mxu0
    %6317 = vmatprep.mubr.bf16.mxu0 0
    %6318 = vmatmul.mubr.bf16.gmra.mrb[0].mxu0 %v4304
    %v6319 = vpop.f32.mrb[0].mxu0
    %v6320 = vadd.f32 %v6031, %v6319
    %v6321 = vpop.f32.mrb[0].mxu0
    %v6322 = vpop.f32.mrb[0].mxu0
    %v6323 = vadd.f32 %v6034, %v6322
    %v6324 = vpop.f32.mrb[0].mxu0
    %6325 = vdwg.mxu0
    %v6326 = vadd.f32 %v6072, %v6075
    %v6327 = vadd.f32 %v6326, %v6080
    %v6328 = vadd.f32 %v6327, %v6083
    %v6329 = vadd.f32 %v6328, %v6088
    %v6330 = vadd.f32 %v6329, %v6091
    %v6331 = vadd.f32 %v6330, %v6096
    %v6332 = vadd.f32 %v6331, %v6099
    %v6333 = vadd.f32 %v6332, %v6104
    %v6334 = vadd.f32 %v6333, %v6107
    %v6335 = vadd.f32 %v6334, %v6112
    %v6336 = vadd.f32 %v6335, %v6115
    %v6337 = vadd.f32 %v6336, %v6120
    %v6338 = vadd.f32 %v6337, %v6123
    %v6339 = vadd.f32 %v6338, %v6128
    %v6340 = vadd.f32 %v6339, %v6131
    %v6341 = vadd.f32 %v6340, %v6136
    %v6342 = vadd.f32 %v6341, %v6139
    %v6343 = vadd.f32 %v6342, %v6144
    %v6344 = vadd.f32 %v6343, %v6147
    %v6345 = vadd.f32 %v6344, %v6152
    %v6346 = vadd.f32 %v6345, %v6155
    %v6347 = vadd.f32 %v6346, %v6160
    %v6348 = vadd.f32 %v6347, %v6163
    %v6349 = vadd.f32 %v6348, %v6168
    %v6350 = vadd.f32 %v6349, %v6171
    %v6351 = vadd.f32 %v6350, %v6176
    %v6352 = vadd.f32 %v6351, %v6179
    %v6353 = vadd.f32 %v6352, %v6184
    %v6354 = vadd.f32 %v6353, %v6187
    %v6355 = vadd.f32 %v6354, %v6192
    %v6356 = vadd.f32 %v6355, %v6195
    %v6357 = vadd.f32 %v6356, %v6200
    %v6358 = vadd.f32 %v6357, %v6203
    %v6359 = vadd.f32 %v6358, %v6208
    %v6360 = vadd.f32 %v6359, %v6211
    %v6361 = vadd.f32 %v6360, %v6216
    %v6362 = vadd.f32 %v6361, %v6219
    %v6363 = vadd.f32 %v6362, %v6224
    %v6364 = vadd.f32 %v6363, %v6227
    %v6365 = vadd.f32 %v6364, %v6232
    %v6366 = vadd.f32 %v6365, %v6235
    %v6367 = vadd.f32 %v6366, %v6240
    %v6368 = vadd.f32 %v6367, %v6243
    %v6369 = vadd.f32 %v6368, %v6248
    %v6370 = vadd.f32 %v6369, %v6251
    %v6371 = vadd.f32 %v6370, %v6256
    %v6372 = vadd.f32 %v6371, %v6259
    %v6373 = vadd.f32 %v6372, %v6264
    %v6374 = vadd.f32 %v6373, %v6267
    %v6375 = vadd.f32 %v6374, %v6272
    %v6376 = vadd.f32 %v6375, %v6275
    %v6377 = vadd.f32 %v6376, %v6280
    %v6378 = vadd.f32 %v6377, %v6283
    %v6379 = vadd.f32 %v6378, %v6288
    %v6380 = vadd.f32 %v6379, %v6291
    %v6381 = vadd.f32 %v6380, %v6296
    %v6382 = vadd.f32 %v6381, %v6299
    %v6383 = vadd.f32 %v6382, %v6304
    %v6384 = vadd.f32 %v6383, %v6307
    %v6385 = vadd.f32 %v6384, %v6312
    %v6386 = vadd.f32 %v6385, %v6315
    %v6387 = vadd.f32 %v6386, %v6320
    %v6388 = vadd.f32 %v6387, %v6323
    %v6389 = vrot.slane %v6388, 4
    %v6390 = vadd.f32 %v6388, %v6389
    %v6391 = vrot.slane %v6390, 2
    %v6392 = vadd.f32 %v6390, %v6391
    %v6393 = vrot.slane %v6392, 1
    %v6394 = vadd.f32 %v6392, %v6393
    %v6395 = vmul.f32 %v6394, %v2879
    %v6396 = vsub.f32 %v6072, %v6395
    %v6397 = vsub.f32 %v6075, %v6395
    %v6398 = vsub.f32 %v6080, %v6395
    %v6399 = vsub.f32 %v6083, %v6395
    %v6400 = vsub.f32 %v6088, %v6395
    %v6401 = vsub.f32 %v6091, %v6395
    %v6402 = vsub.f32 %v6096, %v6395
    %v6403 = vsub.f32 %v6099, %v6395
    %v6404 = vsub.f32 %v6104, %v6395
    %v6405 = vsub.f32 %v6107, %v6395
    %v6406 = vsub.f32 %v6112, %v6395
    %v6407 = vsub.f32 %v6115, %v6395
    %v6408 = vsub.f32 %v6120, %v6395
    %v6409 = vsub.f32 %v6123, %v6395
    %v6410 = vsub.f32 %v6128, %v6395
    %v6411 = vsub.f32 %v6131, %v6395
    %v6412 = vsub.f32 %v6136, %v6395
    %v6413 = vsub.f32 %v6139, %v6395
    %v6414 = vsub.f32 %v6144, %v6395
    %v6415 = vsub.f32 %v6147, %v6395
    %v6416 = vsub.f32 %v6152, %v6395
    %v6417 = vsub.f32 %v6155, %v6395
    %v6418 = vsub.f32 %v6160, %v6395
    %v6419 = vsub.f32 %v6163, %v6395
    %v6420 = vsub.f32 %v6168, %v6395
    %v6421 = vsub.f32 %v6171, %v6395
    %v6422 = vsub.f32 %v6176, %v6395
    %v6423 = vsub.f32 %v6179, %v6395
    %v6424 = vsub.f32 %v6184, %v6395
    %v6425 = vsub.f32 %v6187, %v6395
    %v6426 = vsub.f32 %v6192, %v6395
    %v6427 = vsub.f32 %v6195, %v6395
    %v6428 = vsub.f32 %v6200, %v6395
    %v6429 = vsub.f32 %v6203, %v6395
    %v6430 = vsub.f32 %v6208, %v6395
    %v6431 = vsub.f32 %v6211, %v6395
    %v6432 = vsub.f32 %v6216, %v6395
    %v6433 = vsub.f32 %v6219, %v6395
    %v6434 = vsub.f32 %v6224, %v6395
    %v6435 = vsub.f32 %v6227, %v6395
    %v6436 = vsub.f32 %v6232, %v6395
    %v6437 = vsub.f32 %v6235, %v6395
    %v6438 = vsub.f32 %v6240, %v6395
    %v6439 = vsub.f32 %v6243, %v6395
    %v6440 = vsub.f32 %v6248, %v6395
    %v6441 = vsub.f32 %v6251, %v6395
    %v6442 = vsub.f32 %v6256, %v6395
    %v6443 = vsub.f32 %v6259, %v6395
    %v6444 = vsub.f32 %v6264, %v6395
    %v6445 = vsub.f32 %v6267, %v6395
    %v6446 = vsub.f32 %v6272, %v6395
    %v6447 = vsub.f32 %v6275, %v6395
    %v6448 = vsub.f32 %v6280, %v6395
    %v6449 = vsub.f32 %v6283, %v6395
    %v6450 = vsub.f32 %v6288, %v6395
    %v6451 = vsub.f32 %v6291, %v6395
    %v6452 = vsub.f32 %v6296, %v6395
    %v6453 = vsub.f32 %v6299, %v6395
    %v6454 = vsub.f32 %v6304, %v6395
    %v6455 = vsub.f32 %v6307, %v6395
    %v6456 = vsub.f32 %v6312, %v6395
    %v6457 = vsub.f32 %v6315, %v6395
    %v6458 = vsub.f32 %v6320, %v6395
    %v6459 = vsub.f32 %v6323, %v6395
    %v6460 = vmul.f32 %v6396, %v6396
    %v6461 = vmul.f32 %v6397, %v6397
    %v6462 = vmul.f32 %v6398, %v6398
    %v6463 = vmul.f32 %v6399, %v6399
    %v6464 = vmul.f32 %v6400, %v6400
    %v6465 = vmul.f32 %v6401, %v6401
    %v6466 = vmul.f32 %v6402, %v6402
    %v6467 = vmul.f32 %v6403, %v6403
    %v6468 = vmul.f32 %v6404, %v6404
    %v6469 = vmul.f32 %v6405, %v6405
    %v6470 = vmul.f32 %v6406, %v6406
    %v6471 = vmul.f32 %v6407, %v6407
    %v6472 = vmul.f32 %v6408, %v6408
    %v6473 = vmul.f32 %v6409, %v6409
    %v6474 = vmul.f32 %v6410, %v6410
    %v6475 = vmul.f32 %v6411, %v6411
    %v6476 = vmul.f32 %v6412, %v6412
    %v6477 = vmul.f32 %v6413, %v6413
    %v6478 = vmul.f32 %v6414, %v6414
    %v6479 = vmul.f32 %v6415, %v6415
    %v6480 = vmul.f32 %v6416, %v6416
    %v6481 = vmul.f32 %v6417, %v6417
    %v6482 = vmul.f32 %v6418, %v6418
    %v6483 = vmul.f32 %v6419, %v6419
    %v6484 = vmul.f32 %v6420, %v6420
    %v6485 = vmul.f32 %v6421, %v6421
    %v6486 = vmul.f32 %v6422, %v6422
    %v6487 = vmul.f32 %v6423, %v6423
    %v6488 = vmul.f32 %v6424, %v6424
    %v6489 = vmul.f32 %v6425, %v6425
    %v6490 = vmul.f32 %v6426, %v6426
    %v6491 = vmul.f32 %v6427, %v6427
    %v6492 = vmul.f32 %v6428, %v6428
    %v6493 = vmul.f32 %v6429, %v6429
    %v6494 = vmul.f32 %v6430, %v6430
    %v6495 = vmul.f32 %v6431, %v6431
    %v6496 = vmul.f32 %v6432, %v6432
    %v6497 = vmul.f32 %v6433, %v6433
    %v6498 = vmul.f32 %v6434, %v6434
    %v6499 = vmul.f32 %v6435, %v6435
    %v6500 = vmul.f32 %v6436, %v6436
    %v6501 = vmul.f32 %v6437, %v6437
    %v6502 = vmul.f32 %v6438, %v6438
    %v6503 = vmul.f32 %v6439, %v6439
    %v6504 = vmul.f32 %v6440, %v6440
    %v6505 = vmul.f32 %v6441, %v6441
    %v6506 = vmul.f32 %v6442, %v6442
    %v6507 = vmul.f32 %v6443, %v6443
    %v6508 = vmul.f32 %v6444, %v6444
    %v6509 = vmul.f32 %v6445, %v6445
    %v6510 = vmul.f32 %v6446, %v6446
    %v6511 = vmul.f32 %v6447, %v6447
    %v6512 = vmul.f32 %v6448, %v6448
    %v6513 = vmul.f32 %v6449, %v6449
    %v6514 = vmul.f32 %v6450, %v6450
    %v6515 = vmul.f32 %v6451, %v6451
    %v6516 = vmul.f32 %v6452, %v6452
    %v6517 = vmul.f32 %v6453, %v6453
    %v6518 = vmul.f32 %v6454, %v6454
    %v6519 = vmul.f32 %v6455, %v6455
    %v6520 = vmul.f32 %v6456, %v6456
    %v6521 = vmul.f32 %v6457, %v6457
    %v6522 = vmul.f32 %v6458, %v6458
    %v6523 = vmul.f32 %v6459, %v6459
    %v6524 = vadd.f32 %v6460, %v6461
    %v6525 = vadd.f32 %v6524, %v6462
    %v6526 = vadd.f32 %v6525, %v6463
    %v6527 = vadd.f32 %v6526, %v6464
    %v6528 = vadd.f32 %v6527, %v6465
    %v6529 = vadd.f32 %v6528, %v6466
    %v6530 = vadd.f32 %v6529, %v6467
    %v6531 = vadd.f32 %v6530, %v6468
    %v6532 = vadd.f32 %v6531, %v6469
    %v6533 = vadd.f32 %v6532, %v6470
    %v6534 = vadd.f32 %v6533, %v6471
    %v6535 = vadd.f32 %v6534, %v6472
    %v6536 = vadd.f32 %v6535, %v6473
    %v6537 = vadd.f32 %v6536, %v6474
    %v6538 = vadd.f32 %v6537, %v6475
    %v6539 = vadd.f32 %v6538, %v6476
    %v6540 = vadd.f32 %v6539, %v6477
    %v6541 = vadd.f32 %v6540, %v6478
    %v6542 = vadd.f32 %v6541, %v6479
    %v6543 = vadd.f32 %v6542, %v6480
    %v6544 = vadd.f32 %v6543, %v6481
    %v6545 = vadd.f32 %v6544, %v6482
    %v6546 = vadd.f32 %v6545, %v6483
    %v6547 = vadd.f32 %v6546, %v6484
    %v6548 = vadd.f32 %v6547, %v6485
    %v6549 = vadd.f32 %v6548, %v6486
    %v6550 = vadd.f32 %v6549, %v6487
    %v6551 = vadd.f32 %v6550, %v6488
    %v6552 = vadd.f32 %v6551, %v6489
    %v6553 = vadd.f32 %v6552, %v6490
    %v6554 = vadd.f32 %v6553, %v6491
    %v6555 = vadd.f32 %v6554, %v6492
    %v6556 = vadd.f32 %v6555, %v6493
    %v6557 = vadd.f32 %v6556, %v6494
    %v6558 = vadd.f32 %v6557, %v6495
    %v6559 = vadd.f32 %v6558, %v6496
    %v6560 = vadd.f32 %v6559, %v6497
    %v6561 = vadd.f32 %v6560, %v6498
    %v6562 = vadd.f32 %v6561, %v6499
    %v6563 = vadd.f32 %v6562, %v6500
    %v6564 = vadd.f32 %v6563, %v6501
    %v6565 = vadd.f32 %v6564, %v6502
    %v6566 = vadd.f32 %v6565, %v6503
    %v6567 = vadd.f32 %v6566, %v6504
    %v6568 = vadd.f32 %v6567, %v6505
    %v6569 = vadd.f32 %v6568, %v6506
    %v6570 = vadd.f32 %v6569, %v6507
    %v6571 = vadd.f32 %v6570, %v6508
    %v6572 = vadd.f32 %v6571, %v6509
    %v6573 = vadd.f32 %v6572, %v6510
    %v6574 = vadd.f32 %v6573, %v6511
    %v6575 = vadd.f32 %v6574, %v6512
    %v6576 = vadd.f32 %v6575, %v6513
    %v6577 = vadd.f32 %v6576, %v6514
    %v6578 = vadd.f32 %v6577, %v6515
    %v6579 = vadd.f32 %v6578, %v6516
    %v6580 = vadd.f32 %v6579, %v6517
    %v6581 = vadd.f32 %v6580, %v6518
    %v6582 = vadd.f32 %v6581, %v6519
    %v6583 = vadd.f32 %v6582, %v6520
    %v6584 = vadd.f32 %v6583, %v6521
    %v6585 = vadd.f32 %v6584, %v6522
    %v6586 = vadd.f32 %v6585, %v6523
    %v6587 = vrot.slane %v6586, 4
    %v6588 = vadd.f32 %v6586, %v6587
    %v6589 = vrot.slane %v6588, 2
    %v6590 = vadd.f32 %v6588, %v6589
    %v6591 = vrot.slane %v6590, 1
    %v6592 = vadd.f32 %v6590, %v6591
    %v6593 = vmul.f32 %v6592, %v2879
    %v6594 = vld [vmem:[%s5] sm:$0x1]
    %v6595 = vadd.f32 %v6593, 1e-05
    %v6596 = vrsqrt.pop %v6595
    %v6597 = vmul.f32 %v6594, %v6596
    %v6598 = vld [vmem:[%s6] sm:$0x1]
    %v6599 = vmul.f32 %v6395, %v6597
    %v6600 = vsub.f32 %v6598, %v6599
    %v6602 = vlaneseq
    %v6603 = vshrl.u32 %v6602, 7
    %v6604 = vsub.s32 0, %v6603
    %v6605 = vrot.slane %v6597, %v6604
    %v6607 = vmul.f32 %v6072, %v6605
    %v6608 = vmul.f32 %v6075, %v6605
    %v6609 = vmul.f32 %v6080, %v6605
    %v6610 = vmul.f32 %v6083, %v6605
    %v6611 = vmul.f32 %v6088, %v6605
    %v6612 = vmul.f32 %v6091, %v6605
    %v6613 = vmul.f32 %v6096, %v6605
    %v6614 = vmul.f32 %v6099, %v6605
    %v6615 = vmul.f32 %v6104, %v6605
    %v6616 = vmul.f32 %v6107, %v6605
    %v6617 = vmul.f32 %v6112, %v6605
    %v6618 = vmul.f32 %v6115, %v6605
    %v6619 = vmul.f32 %v6120, %v6605
    %v6620 = vmul.f32 %v6123, %v6605
    %v6621 = vmul.f32 %v6128, %v6605
    %v6622 = vmul.f32 %v6131, %v6605
    %v6623 = vmul.f32 %v6136, %v6605
    %v6624 = vmul.f32 %v6139, %v6605
    %v6625 = vmul.f32 %v6144, %v6605
    %v6626 = vmul.f32 %v6147, %v6605
    %v6627 = vmul.f32 %v6152, %v6605
    %v6628 = vmul.f32 %v6155, %v6605
    %v6629 = vmul.f32 %v6160, %v6605
    %v6630 = vmul.f32 %v6163, %v6605
    %v6631 = vmul.f32 %v6168, %v6605
    %v6632 = vmul.f32 %v6171, %v6605
    %v6633 = vmul.f32 %v6176, %v6605
    %v6634 = vmul.f32 %v6179, %v6605
    %v6635 = vmul.f32 %v6184, %v6605
    %v6636 = vmul.f32 %v6187, %v6605
    %v6637 = vmul.f32 %v6192, %v6605
    %v6638 = vmul.f32 %v6195, %v6605
    %v6639 = vmul.f32 %v6200, %v6605
    %v6640 = vmul.f32 %v6203, %v6605
    %v6641 = vmul.f32 %v6208, %v6605
    %v6642 = vmul.f32 %v6211, %v6605
    %v6643 = vmul.f32 %v6216, %v6605
    %v6644 = vmul.f32 %v6219, %v6605
    %v6645 = vmul.f32 %v6224, %v6605
    %v6646 = vmul.f32 %v6227, %v6605
    %v6647 = vmul.f32 %v6232, %v6605
    %v6648 = vmul.f32 %v6235, %v6605
    %v6649 = vmul.f32 %v6240, %v6605
    %v6650 = vmul.f32 %v6243, %v6605
    %v6651 = vmul.f32 %v6248, %v6605
    %v6652 = vmul.f32 %v6251, %v6605
    %v6653 = vmul.f32 %v6256, %v6605
    %v6654 = vmul.f32 %v6259, %v6605
    %v6655 = vmul.f32 %v6264, %v6605
    %v6656 = vmul.f32 %v6267, %v6605
    %v6657 = vmul.f32 %v6272, %v6605
    %v6658 = vmul.f32 %v6275, %v6605
    %v6659 = vmul.f32 %v6280, %v6605
    %v6660 = vmul.f32 %v6283, %v6605
    %v6661 = vmul.f32 %v6288, %v6605
    %v6662 = vmul.f32 %v6291, %v6605
    %v6663 = vmul.f32 %v6296, %v6605
    %v6664 = vmul.f32 %v6299, %v6605
    %v6665 = vmul.f32 %v6304, %v6605
    %v6666 = vmul.f32 %v6307, %v6605
    %v6667 = vmul.f32 %v6312, %v6605
    %v6668 = vmul.f32 %v6315, %v6605
    %v6669 = vmul.f32 %v6320, %v6605
    %v6670 = vmul.f32 %v6323, %v6605
    %v6672 = vlaneseq
    %v6673 = vshrl.u32 %v6672, 7
    %v6674 = vsub.s32 0, %v6673
    %v6675 = vrot.slane %v6600, %v6674
    %v6677 = vadd.f32 %v6607, %v6675
    %v6678 = vadd.f32 %v6608, %v6675
    %v6679 = vadd.f32 %v6609, %v6675
    %v6680 = vadd.f32 %v6610, %v6675
    %v6681 = vadd.f32 %v6611, %v6675
    %v6682 = vadd.f32 %v6612, %v6675
    %v6683 = vadd.f32 %v6613, %v6675
    %v6684 = vadd.f32 %v6614, %v6675
    %v6685 = vadd.f32 %v6615, %v6675
    %v6686 = vadd.f32 %v6616, %v6675
    %v6687 = vadd.f32 %v6617, %v6675
    %v6688 = vadd.f32 %v6618, %v6675
    %v6689 = vadd.f32 %v6619, %v6675
    %v6690 = vadd.f32 %v6620, %v6675
    %v6691 = vadd.f32 %v6621, %v6675
    %v6692 = vadd.f32 %v6622, %v6675
    %v6693 = vadd.f32 %v6623, %v6675
    %v6694 = vadd.f32 %v6624, %v6675
    %v6695 = vadd.f32 %v6625, %v6675
    %v6696 = vadd.f32 %v6626, %v6675
    %v6697 = vadd.f32 %v6627, %v6675
    %v6698 = vadd.f32 %v6628, %v6675
    %v6699 = vadd.f32 %v6629, %v6675
    %v6700 = vadd.f32 %v6630, %v6675
    %v6701 = vadd.f32 %v6631, %v6675
    %v6702 = vadd.f32 %v6632, %v6675
    %v6703 = vadd.f32 %v6633, %v6675
    %v6704 = vadd.f32 %v6634, %v6675
    %v6705 = vadd.f32 %v6635, %v6675
    %v6706 = vadd.f32 %v6636, %v6675
    %v6707 = vadd.f32 %v6637, %v6675
    %v6708 = vadd.f32 %v6638, %v6675
    %v6709 = vadd.f32 %v6639, %v6675
    %v6710 = vadd.f32 %v6640, %v6675
    %v6711 = vadd.f32 %v6641, %v6675
    %v6712 = vadd.f32 %v6642, %v6675
    %v6713 = vadd.f32 %v6643, %v6675
    %v6714 = vadd.f32 %v6644, %v6675
    %v6715 = vadd.f32 %v6645, %v6675
    %v6716 = vadd.f32 %v6646, %v6675
    %v6717 = vadd.f32 %v6647, %v6675
    %v6718 = vadd.f32 %v6648, %v6675
    %v6719 = vadd.f32 %v6649, %v6675
    %v6720 = vadd.f32 %v6650, %v6675
    %v6721 = vadd.f32 %v6651, %v6675
    %v6722 = vadd.f32 %v6652, %v6675
    %v6723 = vadd.f32 %v6653, %v6675
    %v6724 = vadd.f32 %v6654, %v6675
    %v6725 = vadd.f32 %v6655, %v6675
    %v6726 = vadd.f32 %v6656, %v6675
    %v6727 = vadd.f32 %v6657, %v6675
    %v6728 = vadd.f32 %v6658, %v6675
    %v6729 = vadd.f32 %v6659, %v6675
    %v6730 = vadd.f32 %v6660, %v6675
    %v6731 = vadd.f32 %v6661, %v6675
    %v6732 = vadd.f32 %v6662, %v6675
    %v6733 = vadd.f32 %v6663, %v6675
    %v6734 = vadd.f32 %v6664, %v6675
    %v6735 = vadd.f32 %v6665, %v6675
    %v6736 = vadd.f32 %v6666, %v6675
    %v6737 = vadd.f32 %v6667, %v6675
    %v6738 = vadd.f32 %v6668, %v6675
    %v6739 = vadd.f32 %v6669, %v6675
    %v6740 = vadd.f32 %v6670, %v6675
    %v6741 = vmax.f32 %v6677, 0.0
    %v6742 = vmax.f32 %v6678, 0.0
    %v6743 = vmax.f32 %v6679, 0.0
    %v6744 = vmax.f32 %v6680, 0.0
    %v6745 = vmax.f32 %v6681, 0.0
    %v6746 = vmax.f32 %v6682, 0.0
    %v6747 = vmax.f32 %v6683, 0.0
    %v6748 = vmax.f32 %v6684, 0.0
    %v6749 = vmax.f32 %v6685, 0.0
    %v6750 = vmax.f32 %v6686, 0.0
    %v6751 = vmax.f32 %v6687, 0.0
    %v6752 = vmax.f32 %v6688, 0.0
    %v6753 = vmax.f32 %v6689, 0.0
    %v6754 = vmax.f32 %v6690, 0.0
    %v6755 = vmax.f32 %v6691, 0.0
    %v6756 = vmax.f32 %v6692, 0.0
    %v6757 = vmax.f32 %v6693, 0.0
    %v6758 = vmax.f32 %v6694, 0.0
    %v6759 = vmax.f32 %v6695, 0.0
    %v6760 = vmax.f32 %v6696, 0.0
    %v6761 = vmax.f32 %v6697, 0.0
    %v6762 = vmax.f32 %v6698, 0.0
    %v6763 = vmax.f32 %v6699, 0.0
    %v6764 = vmax.f32 %v6700, 0.0
    %v6765 = vmax.f32 %v6701, 0.0
    %v6766 = vmax.f32 %v6702, 0.0
    %v6767 = vmax.f32 %v6703, 0.0
    %v6768 = vmax.f32 %v6704, 0.0
    %v6769 = vmax.f32 %v6705, 0.0
    %v6770 = vmax.f32 %v6706, 0.0
    %v6771 = vmax.f32 %v6707, 0.0
    %v6772 = vmax.f32 %v6708, 0.0
    %v6773 = vmax.f32 %v6709, 0.0
    %v6774 = vmax.f32 %v6710, 0.0
    %v6775 = vmax.f32 %v6711, 0.0
    %v6776 = vmax.f32 %v6712, 0.0
    %v6777 = vmax.f32 %v6713, 0.0
    %v6778 = vmax.f32 %v6714, 0.0
    %v6779 = vmax.f32 %v6715, 0.0
    %v6780 = vmax.f32 %v6716, 0.0
    %v6781 = vmax.f32 %v6717, 0.0
    %v6782 = vmax.f32 %v6718, 0.0
    %v6783 = vmax.f32 %v6719, 0.0
    %v6784 = vmax.f32 %v6720, 0.0
    %v6785 = vmax.f32 %v6721, 0.0
    %v6786 = vmax.f32 %v6722, 0.0
    %v6787 = vmax.f32 %v6723, 0.0
    %v6788 = vmax.f32 %v6724, 0.0
    %v6789 = vmax.f32 %v6725, 0.0
    %v6790 = vmax.f32 %v6726, 0.0
    %v6791 = vmax.f32 %v6727, 0.0
    %v6792 = vmax.f32 %v6728, 0.0
    %v6793 = vmax.f32 %v6729, 0.0
    %v6794 = vmax.f32 %v6730, 0.0
    %v6795 = vmax.f32 %v6731, 0.0
    %v6796 = vmax.f32 %v6732, 0.0
    %v6797 = vmax.f32 %v6733, 0.0
    %v6798 = vmax.f32 %v6734, 0.0
    %v6799 = vmax.f32 %v6735, 0.0
    %v6800 = vmax.f32 %v6736, 0.0
    %v6801 = vmax.f32 %v6737, 0.0
    %v6802 = vmax.f32 %v6738, 0.0
    %v6803 = vmax.f32 %v6739, 0.0
    %v6804 = vmax.f32 %v6740, 0.0
    %6805 = vst [vmem:[#allocation6] sm:$0xff] %v6741
    %6806 = vst [vmem:[#allocation6 + $0x8] sm:$0xff] %v6742
    %6807 = vst [vmem:[#allocation6 + $0x10] sm:$0xff] %v6743
    %6808 = vst [vmem:[#allocation6 + $0x18] sm:$0xff] %v6744
    %6809 = vst [vmem:[#allocation6 + $0x20] sm:$0xff] %v6745
    %6810 = vst [vmem:[#allocation6 + $0x28] sm:$0xff] %v6746
    %6811 = vst [vmem:[#allocation6 + $0x30] sm:$0xff] %v6747
    %6812 = vst [vmem:[#allocation6 + $0x38] sm:$0xff] %v6748
    %6813 = vst [vmem:[#allocation6 + $0x40] sm:$0xff] %v6749
    %6814 = vst [vmem:[#allocation6 + $0x48] sm:$0xff] %v6750
    %6815 = vst [vmem:[#allocation6 + $0x50] sm:$0xff] %v6751
    %6816 = vst [vmem:[#allocation6 + $0x58] sm:$0xff] %v6752
    %6817 = vst [vmem:[#allocation6 + $0x60] sm:$0xff] %v6753
    %6818 = vst [vmem:[#allocation6 + $0x68] sm:$0xff] %v6754
    %6819 = vst [vmem:[#allocation6 + $0x70] sm:$0xff] %v6755
    %6820 = vst [vmem:[#allocation6 + $0x78] sm:$0xff] %v6756
    %6821 = vst [vmem:[#allocation6 + $0x80] sm:$0xff] %v6757
    %6822 = vst [vmem:[#allocation6 + $0x88] sm:$0xff] %v6758
    %6823 = vst [vmem:[#allocation6 + $0x90] sm:$0xff] %v6759
    %6824 = vst [vmem:[#allocation6 + $0x98] sm:$0xff] %v6760
    %6825 = vst [vmem:[#allocation6 + $0xa0] sm:$0xff] %v6761
    %6826 = vst [vmem:[#allocation6 + $0xa8] sm:$0xff] %v6762
    %6827 = vst [vmem:[#allocation6 + $0xb0] sm:$0xff] %v6763
    %6828 = vst [vmem:[#allocation6 + $0xb8] sm:$0xff] %v6764
    %6829 = vst [vmem:[#allocation6 + $0xc0] sm:$0xff] %v6765
    %6830 = vst [vmem:[#allocation6 + $0xc8] sm:$0xff] %v6766
    %6831 = vst [vmem:[#allocation6 + $0xd0] sm:$0xff] %v6767
    %6832 = vst [vmem:[#allocation6 + $0xd8] sm:$0xff] %v6768
    %6833 = vst [vmem:[#allocation6 + $0xe0] sm:$0xff] %v6769
    %6834 = vst [vmem:[#allocation6 + $0xe8] sm:$0xff] %v6770
    %6835 = vst [vmem:[#allocation6 + $0xf0] sm:$0xff] %v6771
    %6836 = vst [vmem:[#allocation6 + $0xf8] sm:$0xff] %v6772
    %6837 = vst [vmem:[#allocation6 + $0x100] sm:$0xff] %v6773
    %6838 = vst [vmem:[#allocation6 + $0x108] sm:$0xff] %v6774
    %6839 = vst [vmem:[#allocation6 + $0x110] sm:$0xff] %v6775
    %6840 = vst [vmem:[#allocation6 + $0x118] sm:$0xff] %v6776
    %6841 = vst [vmem:[#allocation6 + $0x120] sm:$0xff] %v6777
    %6842 = vst [vmem:[#allocation6 + $0x128] sm:$0xff] %v6778
    %6843 = vst [vmem:[#allocation6 + $0x130] sm:$0xff] %v6779
    %6844 = vst [vmem:[#allocation6 + $0x138] sm:$0xff] %v6780
    %6845 = vst [vmem:[#allocation6 + $0x140] sm:$0xff] %v6781
    %6846 = vst [vmem:[#allocation6 + $0x148] sm:$0xff] %v6782
    %6847 = vst [vmem:[#allocation6 + $0x150] sm:$0xff] %v6783
    %6848 = vst [vmem:[#allocation6 + $0x158] sm:$0xff] %v6784
    %6849 = vst [vmem:[#allocation6 + $0x160] sm:$0xff] %v6785
    %6850 = vst [vmem:[#allocation6 + $0x168] sm:$0xff] %v6786
    %6851 = vst [vmem:[#allocation6 + $0x170] sm:$0xff] %v6787
    %6852 = vst [vmem:[#allocation6 + $0x178] sm:$0xff] %v6788
    %6853 = vst [vmem:[#allocation6 + $0x180] sm:$0xff] %v6789
    %6854 = vst [vmem:[#allocation6 + $0x188] sm:$0xff] %v6790
    %6855 = vst [vmem:[#allocation6 + $0x190] sm:$0xff] %v6791
    %6856 = vst [vmem:[#allocation6 + $0x198] sm:$0xff] %v6792
    %6857 = vst [vmem:[#allocation6 + $0x1a0] sm:$0xff] %v6793
    %6858 = vst [vmem:[#allocation6 + $0x1a8] sm:$0xff] %v6794
    %6859 = vst [vmem:[#allocation6 + $0x1b0] sm:$0xff] %v6795
    %6860 = vst [vmem:[#allocation6 + $0x1b8] sm:$0xff] %v6796
    %6861 = vst [vmem:[#allocation6 + $0x1c0] sm:$0xff] %v6797
    %6862 = vst [vmem:[#allocation6 + $0x1c8] sm:$0xff] %v6798
    %6863 = vst [vmem:[#allocation6 + $0x1d0] sm:$0xff] %v6799
    %6864 = vst [vmem:[#allocation6 + $0x1d8] sm:$0xff] %v6800
    %6865 = vst [vmem:[#allocation6 + $0x1e0] sm:$0xff] %v6801
    %6866 = vst [vmem:[#allocation6 + $0x1e8] sm:$0xff] %v6802
    %6867 = vst [vmem:[#allocation6 + $0x1f0] sm:$0xff] %v6803
    %6868 = vst [vmem:[#allocation6 + $0x1f8] sm:$0xff] %v6804
    %v6869 = vld [vmem:[#allocation6] ss:$2 sm:$0xff]
    %s6870 = scalar_lea.vmem [#allocation6], 16
    %v6871 = vld [vmem:[%s6870] ss:$2 sm:$0xff]
    %s6872 = scalar_lea.vmem [#allocation6], 32
    %v6873 = vld [vmem:[%s6872] ss:$2 sm:$0xff]
    %s6874 = scalar_lea.vmem [#allocation6], 48
    %v6875 = vld [vmem:[%s6874] ss:$2 sm:$0xff]
    %s6876 = scalar_lea.vmem [#allocation6], 64
    %v6877 = vld [vmem:[%s6876] ss:$2 sm:$0xff]
    %s6878 = scalar_lea.vmem [#allocation6], 80
    %v6879 = vld [vmem:[%s6878] ss:$2 sm:$0xff]
    %s6880 = scalar_lea.vmem [#allocation6], 96
    %v6881 = vld [vmem:[%s6880] ss:$2 sm:$0xff]
    %s6882 = scalar_lea.vmem [#allocation6], 112
    %v6883 = vld [vmem:[%s6882] ss:$2 sm:$0xff]
    %s6884 = scalar_lea.vmem [#allocation6], 128
    %v6885 = vld [vmem:[%s6884] ss:$2 sm:$0xff]
    %s6886 = scalar_lea.vmem [#allocation6], 144
    %v6887 = vld [vmem:[%s6886] ss:$2 sm:$0xff]
    %s6888 = scalar_lea.vmem [#allocation6], 160
    %v6889 = vld [vmem:[%s6888] ss:$2 sm:$0xff]
    %s6890 = scalar_lea.vmem [#allocation6], 176
    %v6891 = vld [vmem:[%s6890] ss:$2 sm:$0xff]
    %s6892 = scalar_lea.vmem [#allocation6], 192
    %v6893 = vld [vmem:[%s6892] ss:$2 sm:$0xff]
    %s6894 = scalar_lea.vmem [#allocation6], 208
    %v6895 = vld [vmem:[%s6894] ss:$2 sm:$0xff]
    %s6896 = scalar_lea.vmem [#allocation6], 224
    %v6897 = vld [vmem:[%s6896] ss:$2 sm:$0xff]
    %s6898 = scalar_lea.vmem [#allocation6], 240
    %v6899 = vld [vmem:[%s6898] ss:$2 sm:$0xff]
    %s6900 = scalar_lea.vmem [#allocation6], 256
    %v6901 = vld [vmem:[%s6900] ss:$2 sm:$0xff]
    %s6902 = scalar_lea.vmem [#allocation6], 272
    %v6903 = vld [vmem:[%s6902] ss:$2 sm:$0xff]
    %s6904 = scalar_lea.vmem [#allocation6], 288
    %v6905 = vld [vmem:[%s6904] ss:$2 sm:$0xff]
    %s6906 = scalar_lea.vmem [#allocation6], 304
    %v6907 = vld [vmem:[%s6906] ss:$2 sm:$0xff]
    %s6908 = scalar_lea.vmem [#allocation6], 320
    %v6909 = vld [vmem:[%s6908] ss:$2 sm:$0xff]
    %s6910 = scalar_lea.vmem [#allocation6], 336
    %v6911 = vld [vmem:[%s6910] ss:$2 sm:$0xff]
    %s6912 = scalar_lea.vmem [#allocation6], 352
    %v6913 = vld [vmem:[%s6912] ss:$2 sm:$0xff]
    %s6914 = scalar_lea.vmem [#allocation6], 368
    %v6915 = vld [vmem:[%s6914] ss:$2 sm:$0xff]
    %s6916 = scalar_lea.vmem [#allocation6], 384
    %v6917 = vld [vmem:[%s6916] ss:$2 sm:$0xff]
    %s6918 = scalar_lea.vmem [#allocation6], 400
    %v6919 = vld [vmem:[%s6918] ss:$2 sm:$0xff]
    %s6920 = scalar_lea.vmem [#allocation6], 416
    %v6921 = vld [vmem:[%s6920] ss:$2 sm:$0xff]
    %s6922 = scalar_lea.vmem [#allocation6], 432
    %v6923 = vld [vmem:[%s6922] ss:$2 sm:$0xff]
    %s6924 = scalar_lea.vmem [#allocation6], 448
    %v6925 = vld [vmem:[%s6924] ss:$2 sm:$0xff]
    %s6926 = scalar_lea.vmem [#allocation6], 464
    %v6927 = vld [vmem:[%s6926] ss:$2 sm:$0xff]
    %s6928 = scalar_lea.vmem [#allocation6], 480
    %v6929 = vld [vmem:[%s6928] ss:$2 sm:$0xff]
    %s6930 = scalar_lea.vmem [#allocation6], 496
    %v6931 = vld [vmem:[%s6930] ss:$2 sm:$0xff]
    %s6932 = scalar_lea.vmem [#allocation6], 1
    %v6933 = vld [vmem:[%s6932] ss:$2 sm:$0xff]
    %s6934 = scalar_lea.vmem [#allocation6], 17
    %v6935 = vld [vmem:[%s6934] ss:$2 sm:$0xff]
    %s6936 = scalar_lea.vmem [#allocation6], 33
    %v6937 = vld [vmem:[%s6936] ss:$2 sm:$0xff]
    %s6938 = scalar_lea.vmem [#allocation6], 49
    %v6939 = vld [vmem:[%s6938] ss:$2 sm:$0xff]
    %s6940 = scalar_lea.vmem [#allocation6], 65
    %v6941 = vld [vmem:[%s6940] ss:$2 sm:$0xff]
    %s6942 = scalar_lea.vmem [#allocation6], 81
    %v6943 = vld [vmem:[%s6942] ss:$2 sm:$0xff]
    %s6944 = scalar_lea.vmem [#allocation6], 97
    %v6945 = vld [vmem:[%s6944] ss:$2 sm:$0xff]
    %s6946 = scalar_lea.vmem [#allocation6], 113
    %v6947 = vld [vmem:[%s6946] ss:$2 sm:$0xff]
    %s6948 = scalar_lea.vmem [#allocation6], 129
    %v6949 = vld [vmem:[%s6948] ss:$2 sm:$0xff]
    %s6950 = scalar_lea.vmem [#allocation6], 145
    %v6951 = vld [vmem:[%s6950] ss:$2 sm:$0xff]
    %s6952 = scalar_lea.vmem [#allocation6], 161
    %v6953 = vld [vmem:[%s6952] ss:$2 sm:$0xff]
    %s6954 = scalar_lea.vmem [#allocation6], 177
    %v6955 = vld [vmem:[%s6954] ss:$2 sm:$0xff]
    %s6956 = scalar_lea.vmem [#allocation6], 193
    %v6957 = vld [vmem:[%s6956] ss:$2 sm:$0xff]
    %s6958 = scalar_lea.vmem [#allocation6], 209
    %v6959 = vld [vmem:[%s6958] ss:$2 sm:$0xff]
    %s6960 = scalar_lea.vmem [#allocation6], 225
    %v6961 = vld [vmem:[%s6960] ss:$2 sm:$0xff]
    %s6962 = scalar_lea.vmem [#allocation6], 241
    %v6963 = vld [vmem:[%s6962] ss:$2 sm:$0xff]
    %s6964 = scalar_lea.vmem [#allocation6], 257
    %v6965 = vld [vmem:[%s6964] ss:$2 sm:$0xff]
    %s6966 = scalar_lea.vmem [#allocation6], 273
    %v6967 = vld [vmem:[%s6966] ss:$2 sm:$0xff]
    %s6968 = scalar_lea.vmem [#allocation6], 289
    %v6969 = vld [vmem:[%s6968] ss:$2 sm:$0xff]
    %s6970 = scalar_lea.vmem [#allocation6], 305
    %v6971 = vld [vmem:[%s6970] ss:$2 sm:$0xff]
    %s6972 = scalar_lea.vmem [#allocation6], 321
    %v6973 = vld [vmem:[%s6972] ss:$2 sm:$0xff]
    %s6974 = scalar_lea.vmem [#allocation6], 337
    %v6975 = vld [vmem:[%s6974] ss:$2 sm:$0xff]
    %s6976 = scalar_lea.vmem [#allocation6], 353
    %v6977 = vld [vmem:[%s6976] ss:$2 sm:$0xff]
    %s6978 = scalar_lea.vmem [#allocation6], 369
    %v6979 = vld [vmem:[%s6978] ss:$2 sm:$0xff]
    %s6980 = scalar_lea.vmem [#allocation6], 385
    %v6981 = vld [vmem:[%s6980] ss:$2 sm:$0xff]
    %s6982 = scalar_lea.vmem [#allocation6], 401
    %v6983 = vld [vmem:[%s6982] ss:$2 sm:$0xff]
    %s6984 = scalar_lea.vmem [#allocation6], 417
    %v6985 = vld [vmem:[%s6984] ss:$2 sm:$0xff]
    %s6986 = scalar_lea.vmem [#allocation6], 433
    %v6987 = vld [vmem:[%s6986] ss:$2 sm:$0xff]
    %s6988 = scalar_lea.vmem [#allocation6], 449
    %v6989 = vld [vmem:[%s6988] ss:$2 sm:$0xff]
    %s6990 = scalar_lea.vmem [#allocation6], 465
    %v6991 = vld [vmem:[%s6990] ss:$2 sm:$0xff]
    %s6992 = scalar_lea.vmem [#allocation6], 481
    %v6993 = vld [vmem:[%s6992] ss:$2 sm:$0xff]
    %s6994 = scalar_lea.vmem [#allocation6], 497
    %v6995 = vld [vmem:[%s6994] ss:$2 sm:$0xff]
    %v6996 = vmax.f32 %v6869, %v6933
    %v6997 = vmax.f32 %v6871, %v6935
    %v6998 = vmax.f32 %v6873, %v6937
    %v6999 = vmax.f32 %v6875, %v6939
    %v7000 = vmax.f32 %v6877, %v6941
    %v7001 = vmax.f32 %v6879, %v6943
    %v7002 = vmax.f32 %v6881, %v6945
    %v7003 = vmax.f32 %v6883, %v6947
    %v7004 = vmax.f32 %v6885, %v6949
    %v7005 = vmax.f32 %v6887, %v6951
    %v7006 = vmax.f32 %v6889, %v6953
    %v7007 = vmax.f32 %v6891, %v6955
    %v7008 = vmax.f32 %v6893, %v6957
    %v7009 = vmax.f32 %v6895, %v6959
    %v7010 = vmax.f32 %v6897, %v6961
    %v7011 = vmax.f32 %v6899, %v6963
    %v7012 = vmax.f32 %v6901, %v6965
    %v7013 = vmax.f32 %v6903, %v6967
    %v7014 = vmax.f32 %v6905, %v6969
    %v7015 = vmax.f32 %v6907, %v6971
    %v7016 = vmax.f32 %v6909, %v6973
    %v7017 = vmax.f32 %v6911, %v6975
    %v7018 = vmax.f32 %v6913, %v6977
    %v7019 = vmax.f32 %v6915, %v6979
    %v7020 = vmax.f32 %v6917, %v6981
    %v7021 = vmax.f32 %v6919, %v6983
    %v7022 = vmax.f32 %v6921, %v6985
    %v7023 = vmax.f32 %v6923, %v6987
    %v7024 = vmax.f32 %v6925, %v6989
    %v7025 = vmax.f32 %v6927, %v6991
    %v7026 = vmax.f32 %v6929, %v6993
    %v7027 = vmax.f32 %v6931, %v6995
    %v7028 = vmax.f32 %v6996, %v6997
    %v7029 = vmax.f32 %v6998, %v6999
    %v7030 = vmax.f32 %v7000, %v7001
    %v7031 = vmax.f32 %v7002, %v7003
    %v7032 = vmax.f32 %v7004, %v7005
    %v7033 = vmax.f32 %v7006, %v7007
    %v7034 = vmax.f32 %v7008, %v7009
    %v7035 = vmax.f32 %v7010, %v7011
    %v7036 = vmax.f32 %v7012, %v7013
    %v7037 = vmax.f32 %v7014, %v7015
    %v7038 = vmax.f32 %v7016, %v7017
    %v7039 = vmax.f32 %v7018, %v7019
    %v7040 = vmax.f32 %v7020, %v7021
    %v7041 = vmax.f32 %v7022, %v7023
    %v7042 = vmax.f32 %v7024, %v7025
    %v7043 = vmax.f32 %v7026, %v7027
    %7044 = vst [vmem:[#allocation4] sm:$0xff] %v7028
    %7045 = vst [vmem:[#allocation4 + $0x8] sm:$0xff] %v7029
    %7046 = vst [vmem:[#allocation4 + $0x10] sm:$0xff] %v7030
    %7047 = vst [vmem:[#allocation4 + $0x18] sm:$0xff] %v7031
    %7048 = vst [vmem:[#allocation4 + $0x20] sm:$0xff] %v7032
    %7049 = vst [vmem:[#allocation4 + $0x28] sm:$0xff] %v7033
    %7050 = vst [vmem:[#allocation4 + $0x30] sm:$0xff] %v7034
    %7051 = vst [vmem:[#allocation4 + $0x38] sm:$0xff] %v7035
    %7052 = vst [vmem:[#allocation4 + $0x40] sm:$0xff] %v7036
    %7053 = vst [vmem:[#allocation4 + $0x48] sm:$0xff] %v7037
    %7054 = vst [vmem:[#allocation4 + $0x50] sm:$0xff] %v7038
    %7055 = vst [vmem:[#allocation4 + $0x58] sm:$0xff] %v7039
    %7056 = vst [vmem:[#allocation4 + $0x60] sm:$0xff] %v7040
    %7057 = vst [vmem:[#allocation4 + $0x68] sm:$0xff] %v7041
    %7058 = vst [vmem:[#allocation4 + $0x70] sm:$0xff] %v7042
    %7059 = vst [vmem:[#allocation4 + $0x78] sm:$0xff] %v7043
    // Predicated region
    $region30: #{tpu_custom_call.1} parent=1 // pred_check
      _
    $region31: #{tpu_custom_call.1} parent=1 // pred_check_branch
      %7061 = sbr.rel (0) target = $region33
    $region32: #{tpu_custom_call.1} parent=1 // pred_region
      %s7063 = ssub.s32 2048, 2048
      %7064 = vsyncadd [#allocation5], %s7063
      %s7065 = sshll.u32 [#allocation4], 4
      %s7066 = int_to_ptr.vmem [resolvable:$true] %s7065
      %7071 = dma.vmem_to_hbm [thread:$0]  %s7066, 2048, %s7, [#allocation5], 128, 128, 8
    $region33: #{tpu_custom_call.1} parent=1 // pred_fallthru
      _
    // Predicated region
    $region34: #{tpu_custom_call.1} parent=1 // pred_check
      _
    $region35: #{tpu_custom_call.1} parent=1 // pred_check_branch
      %7073 = sbr.rel (0) target = $region37
    $region36: #{tpu_custom_call.1} parent=1 // pred_region
      %s7075 = ssub.s32 8192, 8192
      %7076 = vsyncadd [#allocation7], %s7075
      %s7077 = sshll.u32 [#allocation6], 4
      %s7078 = int_to_ptr.vmem [resolvable:$true] %s7077
      %7083 = dma.vmem_to_hbm [thread:$0]  %s7078, 8192, %s8, [#allocation7], 128, 128, 8
    $region37: #{tpu_custom_call.1} parent=1 // pred_fallthru
      _
    // Predicated region
    $region38: #{tpu_custom_call.1} parent=1 // pred_check
      _
    $region39: #{tpu_custom_call.1} parent=1 // pred_check_branch
      %7085 = sbr.rel (0) target = $region41
    $region40: #{tpu_custom_call.1} parent=1 // pred_region
      %7086 = dma.done [#allocation5], 2048
    $region41: #{tpu_custom_call.1} parent=1 // pred_fallthru
      _
    // Predicated region
    $region42: #{tpu_custom_call.1} parent=1 // pred_check
      _
    $region43: #{tpu_custom_call.1} parent=1 // pred_check_branch
      %7088 = sbr.rel (0) target = $region45
    $region44: #{tpu_custom_call.1} parent=1 // pred_region
      %7089 = dma.done [#allocation7], 8192
    $region45: #{tpu_custom_call.1} parent=1 // pred_fallthru
      _
    %7090 = vsyncpa [#allocation5], 1
    %7091 = vsyncpa [#allocation7], 1

</llo_original>
